<compile_context>
chip_gen: v6e
topology: v6e:2x2x1
jax: 0.10.0
libtpu: 0.0.40
codegen_flags: <defaults>
</compile_context>

<pallas_src>
import jax
import jax.numpy as jnp
from jax.experimental import pallas as pl
from jax.experimental.pallas import tpu as pltpu


# ---------------------------------------------------------------------------
# Host/XLA-side packing of the PyTorch-style weights into matmul operands.
# ---------------------------------------------------------------------------

def _conv_pack(w, b, H, W, n_blk, ph_major_rows=False):
    """Pack Conv2d(3x3,valid)+MaxPool2d(2,2)+ReLU into banded/selection mats."""
    w = w.astype(jnp.float32)
    b = b.astype(jnp.float32)
    OC, IC, KH, KW = w.shape
    OH, OW = H - 2, W - 2
    PH, PW = OH // 2, OW // 2

    # band[kh][ic*W + x + kw, oc*OW + x] = w[oc, ic, kh, kw]
    bands = []
    for kh in range(KH):
        acc = jnp.zeros((IC * W, OC * OW), jnp.float32)
        for kw in range(KW):
            shift = jnp.eye(W, OW, k=-kw, dtype=jnp.float32)   # [x+kw, x] = 1
            acc = acc + jnp.kron(w[:, :, kh, kw].T, shift)
        bands.append(acc)
    band = jnp.stack(bands, axis=0)                            # (3, IC*W, OC*OW)

    # swt[oc*OW + 2*pw, oc*PW + pw] = 1   (last row dropped; it is all zero)
    e = jnp.zeros((OW, PW), jnp.float32)
    e = e.at[2 * jnp.arange(PW), jnp.arange(PW)].set(1.0)
    swt = jnp.kron(jnp.eye(OC, dtype=jnp.float32), e)[:-1, :]  # (OC*OW-1, OC*PW)

    # sh[row_out, n*H + 2*ph] = 1 ; rows are (n,ph)-major or (ph,n)-major.
    r_out = n_blk * PH
    rows = jnp.arange(r_out)
    if ph_major_rows:
        n_idx, ph_idx = rows % n_blk, rows // n_blk
    else:
        n_idx, ph_idx = rows // PH, rows % PH
    sh = jnp.zeros((r_out, n_blk * H - 3), jnp.float32)
    sh = sh.at[rows, n_idx * H + 2 * ph_idx].set(1.0)

    bias_row = jnp.repeat(b, PW)[None, :]                      # (1, OC*PW)
    return band, swt, sh, bias_row


def _fc_pack(params, oc3=8, ph3=10, pw3=10):
    w1, b1 = params["fc1_0"]          # (500, 800) torch layout (out, in)
    w2, b2 = params["fc1_2"]          # (500, 500)
    w3, b3 = params["fc1_3"]          # (5, 500)
    hid = w1.shape[0]
    # w1r[ph, oc*pw3 + pw, k] = w1[k, oc*ph3*pw3 + ph*pw3 + pw]  (torch flatten)
    w1r = (w1.astype(jnp.float32)
             .reshape(hid, oc3, ph3, pw3)      # (k, oc, ph, pw)
             .transpose(2, 1, 3, 0)            # (ph, oc, pw, k)
             .reshape(ph3, oc3 * pw3, hid))
    w2r = w2.astype(jnp.float32).T             # (500, 500)
    w3r = w3.astype(jnp.float32).T             # (500, 5)
    return (w1r, b1.astype(jnp.float32)[None, :],
            w2r, b2.astype(jnp.float32)[None, :],
            w3r, b3.astype(jnp.float32)[None, :])


def pack_operands(params, n_blk):
    p1 = _conv_pack(*params["conv1"], H=100, W=100, n_blk=n_blk)
    p2 = _conv_pack(*params["conv2"], H=49, W=49, n_blk=n_blk)
    p3 = _conv_pack(*params["conv3"], H=23, W=23, n_blk=n_blk,
                    ph_major_rows=True)
    return p1 + p2 + p3 + _fc_pack(params)


# ---------------------------------------------------------------------------
# The single fused kernel: 3x (conv + pool + relu) + FC head.
# ---------------------------------------------------------------------------

def _siamese_kernel(x_ref,
                    b1_ref, s1_ref, r1_ref, c1b_ref,
                    b2_ref, s2_ref, r2_ref, c2b_ref,
                    b3_ref, s3_ref, r3_ref, c3b_ref,
                    w1_ref, fb1_ref, w2_ref, fb2_ref, w3_ref, fb3_ref,
                    out_ref):
    f32 = jnp.float32

    def conv_pool_relu(x, band_ref, swt_ref, sh_ref, bias_ref):
        conv = (jnp.dot(x[:-2, :], band_ref[0], preferred_element_type=f32) +
                jnp.dot(x[1:-1, :], band_ref[1], preferred_element_type=f32) +
                jnp.dot(x[2:, :], band_ref[2], preferred_element_type=f32))
        m = jnp.maximum(conv[:-1, :], conv[1:, :])       # pool row candidates
        swt = swt_ref[...]
        p = jnp.maximum(jnp.dot(m[:, :-1], swt, preferred_element_type=f32),
                        jnp.dot(m[:, 1:], swt, preferred_element_type=f32))
        y = jnp.dot(sh_ref[...], p, preferred_element_type=f32)
        return jnp.maximum(y + bias_ref[...], 0.0)

    x = x_ref[0]                                                 # (B*100, 100)
    x = conv_pool_relu(x, b1_ref, s1_ref, r1_ref, c1b_ref)       # (B*49, 4*49)
    x = conv_pool_relu(x, b2_ref, s2_ref, r2_ref, c2b_ref)       # (B*23, 8*23)
    z = conv_pool_relu(x, b3_ref, s3_ref, r3_ref, c3b_ref)       # (10*B, 8*10)

    n_blk = out_ref.shape[1]
    n_ph = w1_ref.shape[0]                                       # 10
    h = None
    for ph in range(n_ph):                   # torch-order flatten folded in
        t = jnp.dot(z[ph * n_blk:(ph + 1) * n_blk, :], w1_ref[ph],
                    preferred_element_type=f32)
        h = t if h is None else h + t
    h = jnp.maximum(h + fb1_ref[...], 0.0)                       # Linear + ReLU
    h = jnp.dot(h, w2_ref[...], preferred_element_type=f32) + fb2_ref[...]
    out = jnp.dot(h, w3_ref[...], preferred_element_type=f32) + fb3_ref[...]
    out_ref[0] = out


# ---------------------------------------------------------------------------
# Model wrapper.
# ---------------------------------------------------------------------------

def siamese_forward(params, input1, input2):
    n_blk, c, hh, ww = input1.shape
    assert (c, hh, ww) == (1, 100, 100) and input2.shape == input1.shape
    # Both towers in one pass; tower index becomes the (parallel) grid axis.
    x = jnp.concatenate([input1, input2], axis=0).astype(jnp.float32)
    x = x.reshape(2, n_blk * hh, ww)                  # (towers, B*100, 100)

    operands = (x,) + pack_operands(params, n_blk)

    def full_spec(a):
        return pl.BlockSpec(a.shape, lambda i: (0,) * a.ndim)

    in_specs = ([pl.BlockSpec((1, n_blk * hh, ww), lambda i: (i, 0, 0))]
                + [full_spec(a) for a in operands[1:]])

    out = pl.pallas_call(
        _siamese_kernel,
        out_shape=jax.ShapeDtypeStruct((2, n_blk, 5), jnp.float32),
        grid=(2,),
        in_specs=in_specs,
        out_specs=pl.BlockSpec((1, n_blk, 5), lambda i: (i, 0, 0)),
        compiler_params=pltpu.CompilerParams(
            dimension_semantics=("parallel",),
            vmem_limit_bytes=48 * 1024 * 1024),
    )(*operands)
    return out[0], out[1]


def init_params(key):
    def conv_init(k, oc, ic, kh, kw):
        k1, k2 = jax.random.split(k)
        bound = 1.0 / jnp.sqrt(ic * kh * kw)
        w = jax.random.uniform(k1, (oc, ic, kh, kw), jnp.float32, -bound, bound)
        b = jax.random.uniform(k2, (oc,), jnp.float32, -bound, bound)
        return w, b

    def linear_init(k, out_f, in_f):
        k1, k2 = jax.random.split(k)
        bound = 1.0 / jnp.sqrt(in_f)
        w = jax.random.uniform(k1, (out_f, in_f), jnp.float32, -bound, bound)
        b = jax.random.uniform(k2, (out_f,), jnp.float32, -bound, bound)
        return w, b

    ks = jax.random.split(key, 6)
    return {
        "conv1": conv_init(ks[0], 4, 1, 3, 3),
        "conv2": conv_init(ks[1], 8, 4, 3, 3),
        "conv3": conv_init(ks[2], 8, 8, 3, 3),
        "fc1_0": linear_init(ks[3], 500, 800),
        "fc1_2": linear_init(ks[4], 500, 500),
        "fc1_3": linear_init(ks[5], 5, 500),
    }


# Pure-JAX reference (for a loose numerical sanity check).
def _reference_forward_once(params, x_nchw):
    x = x_nchw.astype(jnp.float32)
    for name in ("conv1", "conv2", "conv3"):
        w, b = params[name]
        x = jax.lax.conv_general_dilated(
            x, w, (1, 1), "VALID",
            dimension_numbers=("NCHW", "OIHW", "NCHW"))
        x = x + b[None, :, None, None]
        x = jax.lax.reduce_window(x, -jnp.inf, jax.lax.max,
                                  (1, 1, 2, 2), (1, 1, 2, 2), "VALID")
        x = jnp.maximum(x, 0.0)
    flat = x.reshape(x.shape[0], -1)
    w1, b1 = params["fc1_0"]
    w2, b2 = params["fc1_2"]
    w3, b3 = params["fc1_3"]
    h = jnp.maximum(flat @ w1.T + b1, 0.0)
    h = h @ w2.T + b2
    return h @ w3.T + b3


if __name__ == "__main__":
    key = jax.random.PRNGKey(0)
    kp, k1, k2 = jax.random.split(key, 3)
    params = init_params(kp)

    # 100x100 input: 100 ->conv-> 98 ->pool-> 49 ->conv-> 47 ->pool-> 23
    #                ->conv-> 21 ->pool-> 10  =>  8*10*10 = 800 = fc1 in_features.
    x1 = jax.random.normal(k1, (2, 1, 100, 100), jnp.float32)
    x2 = jax.random.normal(k2, (2, 1, 100, 100), jnp.float32)

    fwd = jax.jit(siamese_forward)
    o1, o2 = fwd(params, x1, x2)
    o1, o2 = jax.block_until_ready((o1, o2))
    assert o1.shape == (2, 5) and o2.shape == (2, 5)
    assert o1.dtype == jnp.float32 and o2.dtype == jnp.float32

    # Loose-tolerance parity check against plain XLA (MXU vs XLA f32 rounding).
    r1 = _reference_forward_once(params, x1)
    r2 = _reference_forward_once(params, x2)
    assert jnp.allclose(o1, r1, atol=1e-2, rtol=1e-2), (o1, r1)
    assert jnp.allclose(o2, r2, atol=1e-2, rtol=1e-2), (o2, r2)

    print("KERNEL_OK")
</pallas_src>

<mosaic_0001>
module attributes {stable_mosaic.version = 11 : i64} {
  func.func @_siamese_kernel(%arg0: i32, %arg1: memref<1x200x100xf32, #tpu.memory_space<vmem>>, %arg2: memref<3x100x392xf32, #tpu.memory_space<vmem>>, %arg3: memref<391x196xf32, #tpu.memory_space<vmem>>, %arg4: memref<98x197xf32, #tpu.memory_space<vmem>>, %arg5: memref<1x196xf32, #tpu.memory_space<vmem>>, %arg6: memref<3x196x376xf32, #tpu.memory_space<vmem>>, %arg7: memref<375x184xf32, #tpu.memory_space<vmem>>, %arg8: memref<46x95xf32, #tpu.memory_space<vmem>>, %arg9: memref<1x184xf32, #tpu.memory_space<vmem>>, %arg10: memref<3x184x168xf32, #tpu.memory_space<vmem>>, %arg11: memref<167x80xf32, #tpu.memory_space<vmem>>, %arg12: memref<20x43xf32, #tpu.memory_space<vmem>>, %arg13: memref<1x80xf32, #tpu.memory_space<vmem>>, %arg14: memref<10x80x500xf32, #tpu.memory_space<vmem>>, %arg15: memref<1x500xf32, #tpu.memory_space<vmem>>, %arg16: memref<500x500xf32, #tpu.memory_space<vmem>>, %arg17: memref<1x500xf32, #tpu.memory_space<vmem>>, %arg18: memref<500x5xf32, #tpu.memory_space<vmem>>, %arg19: memref<1x5xf32, #tpu.memory_space<vmem>>, %arg20: memref<1x2x5xf32, #tpu.memory_space<vmem>>) attributes {dimension_semantics = [#tpu.dimension_semantics<parallel>], iteration_bounds = array<i64: 2>, scalar_prefetch = 0 : i64, scratch_operands = 0 : i64, tpu.core_type = #tpu.core_type<tc>, window_params = [{transform_indices = @transform_0, window_bounds = array<i64: 1, 200, 100>}, {pipeline_mode = #tpu.pipeline_mode<synchronous>, transform_indices = @transform_1, window_bounds = array<i64: 3, 100, 392>}, {pipeline_mode = #tpu.pipeline_mode<synchronous>, transform_indices = @transform_2, window_bounds = array<i64: 391, 196>}, {pipeline_mode = #tpu.pipeline_mode<synchronous>, transform_indices = @transform_3, window_bounds = array<i64: 98, 197>}, {pipeline_mode = #tpu.pipeline_mode<synchronous>, transform_indices = @transform_4, window_bounds = array<i64: 1, 196>}, {pipeline_mode = #tpu.pipeline_mode<synchronous>, transform_indices = @transform_5, window_bounds = array<i64: 3, 196, 376>}, {pipeline_mode = #tpu.pipeline_mode<synchronous>, transform_indices = @transform_6, window_bounds = array<i64: 375, 184>}, {pipeline_mode = #tpu.pipeline_mode<synchronous>, transform_indices = @transform_7, window_bounds = array<i64: 46, 95>}, {pipeline_mode = #tpu.pipeline_mode<synchronous>, transform_indices = @transform_8, window_bounds = array<i64: 1, 184>}, {pipeline_mode = #tpu.pipeline_mode<synchronous>, transform_indices = @transform_9, window_bounds = array<i64: 3, 184, 168>}, {pipeline_mode = #tpu.pipeline_mode<synchronous>, transform_indices = @transform_10, window_bounds = array<i64: 167, 80>}, {pipeline_mode = #tpu.pipeline_mode<synchronous>, transform_indices = @transform_11, window_bounds = array<i64: 20, 43>}, {pipeline_mode = #tpu.pipeline_mode<synchronous>, transform_indices = @transform_12, window_bounds = array<i64: 1, 80>}, {pipeline_mode = #tpu.pipeline_mode<synchronous>, transform_indices = @transform_13, window_bounds = array<i64: 10, 80, 500>}, {pipeline_mode = #tpu.pipeline_mode<synchronous>, transform_indices = @transform_14, window_bounds = array<i64: 1, 500>}, {pipeline_mode = #tpu.pipeline_mode<synchronous>, transform_indices = @transform_15, window_bounds = array<i64: 500, 500>}, {pipeline_mode = #tpu.pipeline_mode<synchronous>, transform_indices = @transform_16, window_bounds = array<i64: 1, 500>}, {pipeline_mode = #tpu.pipeline_mode<synchronous>, transform_indices = @transform_17, window_bounds = array<i64: 500, 5>}, {pipeline_mode = #tpu.pipeline_mode<synchronous>, transform_indices = @transform_18, window_bounds = array<i64: 1, 5>}, {transform_indices = @transform_19, window_bounds = array<i64: 1, 2, 5>}]} {
    %c0 = arith.constant 0 : index
    %c0_0 = arith.constant 0 : index
    %c0_1 = arith.constant 0 : index
    %0 = vector.load %arg1[%c0, %c0_0, %c0_1] : memref<1x200x100xf32, #tpu.memory_space<vmem>>, vector<1x200x100xf32>
    %1 = vector.shape_cast %0 : vector<1x200x100xf32> to vector<200x100xf32>
    %2 = vector.extract_strided_slice %1 {offsets = [0, 0], sizes = [198, 100], strides = [1, 1]} : vector<200x100xf32> to vector<198x100xf32>
    %c0_2 = arith.constant 0 : index
    %c0_3 = arith.constant 0 : index
    %c0_4 = arith.constant 0 : index
    %3 = vector.load %arg2[%c0_2, %c0_3, %c0_4] : memref<3x100x392xf32, #tpu.memory_space<vmem>>, vector<1x100x392xf32>
    %4 = vector.shape_cast %3 : vector<1x100x392xf32> to vector<100x392xf32>
    %cst = arith.constant dense<0.000000e+00> : vector<198x392xf32>
    %5 = tpu.matmul %2, %4, %cst {dimension_numbers = #tpu.dot_dimension_numbers<[1], [0], [0], [1], [0, 0, 1, 1], [], []>} : vector<198x100xf32>, vector<100x392xf32>, vector<198x392xf32> -> vector<198x392xf32>
    %6 = vector.extract_strided_slice %1 {offsets = [1, 0], sizes = [198, 100], strides = [1, 1]} : vector<200x100xf32> to vector<198x100xf32>
    %c1 = arith.constant 1 : index
    %c0_5 = arith.constant 0 : index
    %c0_6 = arith.constant 0 : index
    %7 = vector.load %arg2[%c1, %c0_5, %c0_6] : memref<3x100x392xf32, #tpu.memory_space<vmem>>, vector<1x100x392xf32>
    %8 = vector.shape_cast %7 : vector<1x100x392xf32> to vector<100x392xf32>
    %cst_7 = arith.constant dense<0.000000e+00> : vector<198x392xf32>
    %9 = tpu.matmul %6, %8, %cst_7 {dimension_numbers = #tpu.dot_dimension_numbers<[1], [0], [0], [1], [0, 0, 1, 1], [], []>} : vector<198x100xf32>, vector<100x392xf32>, vector<198x392xf32> -> vector<198x392xf32>
    %10 = arith.addf %5, %9 : vector<198x392xf32>
    %11 = vector.extract_strided_slice %1 {offsets = [2, 0], sizes = [198, 100], strides = [1, 1]} : vector<200x100xf32> to vector<198x100xf32>
    %c2 = arith.constant 2 : index
    %c0_8 = arith.constant 0 : index
    %c0_9 = arith.constant 0 : index
    %12 = vector.load %arg2[%c2, %c0_8, %c0_9] : memref<3x100x392xf32, #tpu.memory_space<vmem>>, vector<1x100x392xf32>
    %13 = vector.shape_cast %12 : vector<1x100x392xf32> to vector<100x392xf32>
    %cst_10 = arith.constant dense<0.000000e+00> : vector<198x392xf32>
    %14 = tpu.matmul %11, %13, %cst_10 {dimension_numbers = #tpu.dot_dimension_numbers<[1], [0], [0], [1], [0, 0, 1, 1], [], []>} : vector<198x100xf32>, vector<100x392xf32>, vector<198x392xf32> -> vector<198x392xf32>
    %15 = arith.addf %10, %14 : vector<198x392xf32>
    %16 = vector.extract_strided_slice %15 {offsets = [0, 0], sizes = [197, 392], strides = [1, 1]} : vector<198x392xf32> to vector<197x392xf32>
    %17 = vector.extract_strided_slice %15 {offsets = [1, 0], sizes = [197, 392], strides = [1, 1]} : vector<198x392xf32> to vector<197x392xf32>
    %18 = arith.maximumf %16, %17 : vector<197x392xf32>
    %c0_11 = arith.constant 0 : index
    %c0_12 = arith.constant 0 : index
    %19 = vector.load %arg3[%c0_11, %c0_12] : memref<391x196xf32, #tpu.memory_space<vmem>>, vector<391x196xf32>
    %20 = vector.extract_strided_slice %18 {offsets = [0, 0], sizes = [197, 391], strides = [1, 1]} : vector<197x392xf32> to vector<197x391xf32>
    %cst_13 = arith.constant dense<0.000000e+00> : vector<197x196xf32>
    %21 = tpu.matmul %20, %19, %cst_13 {dimension_numbers = #tpu.dot_dimension_numbers<[1], [0], [0], [1], [0, 0, 1, 1], [], []>} : vector<197x391xf32>, vector<391x196xf32>, vector<197x196xf32> -> vector<197x196xf32>
    %22 = vector.extract_strided_slice %18 {offsets = [0, 1], sizes = [197, 391], strides = [1, 1]} : vector<197x392xf32> to vector<197x391xf32>
    %cst_14 = arith.constant dense<0.000000e+00> : vector<197x196xf32>
    %23 = tpu.matmul %22, %19, %cst_14 {dimension_numbers = #tpu.dot_dimension_numbers<[1], [0], [0], [1], [0, 0, 1, 1], [], []>} : vector<197x391xf32>, vector<391x196xf32>, vector<197x196xf32> -> vector<197x196xf32>
    %24 = arith.maximumf %21, %23 : vector<197x196xf32>
    %c0_15 = arith.constant 0 : index
    %c0_16 = arith.constant 0 : index
    %25 = vector.load %arg4[%c0_15, %c0_16] : memref<98x197xf32, #tpu.memory_space<vmem>>, vector<98x197xf32>
    %cst_17 = arith.constant dense<0.000000e+00> : vector<98x196xf32>
    %26 = tpu.matmul %25, %24, %cst_17 {dimension_numbers = #tpu.dot_dimension_numbers<[1], [0], [0], [1], [0, 0, 1, 1], [], []>} : vector<98x197xf32>, vector<197x196xf32>, vector<98x196xf32> -> vector<98x196xf32>
    %c0_18 = arith.constant 0 : index
    %c0_19 = arith.constant 0 : index
    %27 = vector.load %arg5[%c0_18, %c0_19] : memref<1x196xf32, #tpu.memory_space<vmem>>, vector<1x196xf32>
    %28 = vector.broadcast %27 : vector<1x196xf32> to vector<98x196xf32>
    %29 = arith.addf %26, %28 : vector<98x196xf32>
    %cst_20 = arith.constant 0.000000e+00 : f32
    %30 = vector.broadcast %cst_20 : f32 to vector<98x196xf32>
    %31 = arith.maximumf %29, %30 : vector<98x196xf32>
    %32 = vector.extract_strided_slice %31 {offsets = [0, 0], sizes = [96, 196], strides = [1, 1]} : vector<98x196xf32> to vector<96x196xf32>
    %c0_21 = arith.constant 0 : index
    %c0_22 = arith.constant 0 : index
    %c0_23 = arith.constant 0 : index
    %33 = vector.load %arg6[%c0_21, %c0_22, %c0_23] : memref<3x196x376xf32, #tpu.memory_space<vmem>>, vector<1x196x376xf32>
    %34 = vector.shape_cast %33 : vector<1x196x376xf32> to vector<196x376xf32>
    %cst_24 = arith.constant dense<0.000000e+00> : vector<96x376xf32>
    %35 = tpu.matmul %32, %34, %cst_24 {dimension_numbers = #tpu.dot_dimension_numbers<[1], [0], [0], [1], [0, 0, 1, 1], [], []>} : vector<96x196xf32>, vector<196x376xf32>, vector<96x376xf32> -> vector<96x376xf32>
    %36 = vector.extract_strided_slice %31 {offsets = [1, 0], sizes = [96, 196], strides = [1, 1]} : vector<98x196xf32> to vector<96x196xf32>
    %c1_25 = arith.constant 1 : index
    %c0_26 = arith.constant 0 : index
    %c0_27 = arith.constant 0 : index
    %37 = vector.load %arg6[%c1_25, %c0_26, %c0_27] : memref<3x196x376xf32, #tpu.memory_space<vmem>>, vector<1x196x376xf32>
    %38 = vector.shape_cast %37 : vector<1x196x376xf32> to vector<196x376xf32>
    %cst_28 = arith.constant dense<0.000000e+00> : vector<96x376xf32>
    %39 = tpu.matmul %36, %38, %cst_28 {dimension_numbers = #tpu.dot_dimension_numbers<[1], [0], [0], [1], [0, 0, 1, 1], [], []>} : vector<96x196xf32>, vector<196x376xf32>, vector<96x376xf32> -> vector<96x376xf32>
    %40 = arith.addf %35, %39 : vector<96x376xf32>
    %41 = vector.extract_strided_slice %31 {offsets = [2, 0], sizes = [96, 196], strides = [1, 1]} : vector<98x196xf32> to vector<96x196xf32>
    %c2_29 = arith.constant 2 : index
    %c0_30 = arith.constant 0 : index
    %c0_31 = arith.constant 0 : index
    %42 = vector.load %arg6[%c2_29, %c0_30, %c0_31] : memref<3x196x376xf32, #tpu.memory_space<vmem>>, vector<1x196x376xf32>
    %43 = vector.shape_cast %42 : vector<1x196x376xf32> to vector<196x376xf32>
    %cst_32 = arith.constant dense<0.000000e+00> : vector<96x376xf32>
    %44 = tpu.matmul %41, %43, %cst_32 {dimension_numbers = #tpu.dot_dimension_numbers<[1], [0], [0], [1], [0, 0, 1, 1], [], []>} : vector<96x196xf32>, vector<196x376xf32>, vector<96x376xf32> -> vector<96x376xf32>
    %45 = arith.addf %40, %44 : vector<96x376xf32>
    %46 = vector.extract_strided_slice %45 {offsets = [0, 0], sizes = [95, 376], strides = [1, 1]} : vector<96x376xf32> to vector<95x376xf32>
    %47 = vector.extract_strided_slice %45 {offsets = [1, 0], sizes = [95, 376], strides = [1, 1]} : vector<96x376xf32> to vector<95x376xf32>
    %48 = arith.maximumf %46, %47 : vector<95x376xf32>
    %c0_33 = arith.constant 0 : index
    %c0_34 = arith.constant 0 : index
    %49 = vector.load %arg7[%c0_33, %c0_34] : memref<375x184xf32, #tpu.memory_space<vmem>>, vector<375x184xf32>
    %50 = vector.extract_strided_slice %48 {offsets = [0, 0], sizes = [95, 375], strides = [1, 1]} : vector<95x376xf32> to vector<95x375xf32>
    %cst_35 = arith.constant dense<0.000000e+00> : vector<95x184xf32>
    %51 = tpu.matmul %50, %49, %cst_35 {dimension_numbers = #tpu.dot_dimension_numbers<[1], [0], [0], [1], [0, 0, 1, 1], [], []>} : vector<95x375xf32>, vector<375x184xf32>, vector<95x184xf32> -> vector<95x184xf32>
    %52 = vector.extract_strided_slice %48 {offsets = [0, 1], sizes = [95, 375], strides = [1, 1]} : vector<95x376xf32> to vector<95x375xf32>
    %cst_36 = arith.constant dense<0.000000e+00> : vector<95x184xf32>
    %53 = tpu.matmul %52, %49, %cst_36 {dimension_numbers = #tpu.dot_dimension_numbers<[1], [0], [0], [1], [0, 0, 1, 1], [], []>} : vector<95x375xf32>, vector<375x184xf32>, vector<95x184xf32> -> vector<95x184xf32>
    %54 = arith.maximumf %51, %53 : vector<95x184xf32>
    %c0_37 = arith.constant 0 : index
    %c0_38 = arith.constant 0 : index
    %55 = vector.load %arg8[%c0_37, %c0_38] : memref<46x95xf32, #tpu.memory_space<vmem>>, vector<46x95xf32>
    %cst_39 = arith.constant dense<0.000000e+00> : vector<46x184xf32>
    %56 = tpu.matmul %55, %54, %cst_39 {dimension_numbers = #tpu.dot_dimension_numbers<[1], [0], [0], [1], [0, 0, 1, 1], [], []>} : vector<46x95xf32>, vector<95x184xf32>, vector<46x184xf32> -> vector<46x184xf32>
    %c0_40 = arith.constant 0 : index
    %c0_41 = arith.constant 0 : index
    %57 = vector.load %arg9[%c0_40, %c0_41] : memref<1x184xf32, #tpu.memory_space<vmem>>, vector<1x184xf32>
    %58 = vector.broadcast %57 : vector<1x184xf32> to vector<46x184xf32>
    %59 = arith.addf %56, %58 : vector<46x184xf32>
    %cst_42 = arith.constant 0.000000e+00 : f32
    %60 = vector.broadcast %cst_42 : f32 to vector<46x184xf32>
    %61 = arith.maximumf %59, %60 : vector<46x184xf32>
    %62 = vector.extract_strided_slice %61 {offsets = [0, 0], sizes = [44, 184], strides = [1, 1]} : vector<46x184xf32> to vector<44x184xf32>
    %c0_43 = arith.constant 0 : index
    %c0_44 = arith.constant 0 : index
    %c0_45 = arith.constant 0 : index
    %63 = vector.load %arg10[%c0_43, %c0_44, %c0_45] : memref<3x184x168xf32, #tpu.memory_space<vmem>>, vector<1x184x168xf32>
    %64 = vector.shape_cast %63 : vector<1x184x168xf32> to vector<184x168xf32>
    %cst_46 = arith.constant dense<0.000000e+00> : vector<44x168xf32>
    %65 = tpu.matmul %62, %64, %cst_46 {dimension_numbers = #tpu.dot_dimension_numbers<[1], [0], [0], [1], [0, 0, 1, 1], [], []>} : vector<44x184xf32>, vector<184x168xf32>, vector<44x168xf32> -> vector<44x168xf32>
    %66 = vector.extract_strided_slice %61 {offsets = [1, 0], sizes = [44, 184], strides = [1, 1]} : vector<46x184xf32> to vector<44x184xf32>
    %c1_47 = arith.constant 1 : index
    %c0_48 = arith.constant 0 : index
    %c0_49 = arith.constant 0 : index
    %67 = vector.load %arg10[%c1_47, %c0_48, %c0_49] : memref<3x184x168xf32, #tpu.memory_space<vmem>>, vector<1x184x168xf32>
    %68 = vector.shape_cast %67 : vector<1x184x168xf32> to vector<184x168xf32>
    %cst_50 = arith.constant dense<0.000000e+00> : vector<44x168xf32>
    %69 = tpu.matmul %66, %68, %cst_50 {dimension_numbers = #tpu.dot_dimension_numbers<[1], [0], [0], [1], [0, 0, 1, 1], [], []>} : vector<44x184xf32>, vector<184x168xf32>, vector<44x168xf32> -> vector<44x168xf32>
    %70 = arith.addf %65, %69 : vector<44x168xf32>
    %71 = vector.extract_strided_slice %61 {offsets = [2, 0], sizes = [44, 184], strides = [1, 1]} : vector<46x184xf32> to vector<44x184xf32>
    %c2_51 = arith.constant 2 : index
    %c0_52 = arith.constant 0 : index
    %c0_53 = arith.constant 0 : index
    %72 = vector.load %arg10[%c2_51, %c0_52, %c0_53] : memref<3x184x168xf32, #tpu.memory_space<vmem>>, vector<1x184x168xf32>
    %73 = vector.shape_cast %72 : vector<1x184x168xf32> to vector<184x168xf32>
    %cst_54 = arith.constant dense<0.000000e+00> : vector<44x168xf32>
    %74 = tpu.matmul %71, %73, %cst_54 {dimension_numbers = #tpu.dot_dimension_numbers<[1], [0], [0], [1], [0, 0, 1, 1], [], []>} : vector<44x184xf32>, vector<184x168xf32>, vector<44x168xf32> -> vector<44x168xf32>
    %75 = arith.addf %70, %74 : vector<44x168xf32>
    %76 = vector.extract_strided_slice %75 {offsets = [0, 0], sizes = [43, 168], strides = [1, 1]} : vector<44x168xf32> to vector<43x168xf32>
    %77 = vector.extract_strided_slice %75 {offsets = [1, 0], sizes = [43, 168], strides = [1, 1]} : vector<44x168xf32> to vector<43x168xf32>
    %78 = arith.maximumf %76, %77 : vector<43x168xf32>
    %c0_55 = arith.constant 0 : index
    %c0_56 = arith.constant 0 : index
    %79 = vector.load %arg11[%c0_55, %c0_56] : memref<167x80xf32, #tpu.memory_space<vmem>>, vector<167x80xf32>
    %80 = vector.extract_strided_slice %78 {offsets = [0, 0], sizes = [43, 167], strides = [1, 1]} : vector<43x168xf32> to vector<43x167xf32>
    %cst_57 = arith.constant dense<0.000000e+00> : vector<43x80xf32>
    %81 = tpu.matmul %80, %79, %cst_57 {dimension_numbers = #tpu.dot_dimension_numbers<[1], [0], [0], [1], [0, 0, 1, 1], [], []>} : vector<43x167xf32>, vector<167x80xf32>, vector<43x80xf32> -> vector<43x80xf32>
    %82 = vector.extract_strided_slice %78 {offsets = [0, 1], sizes = [43, 167], strides = [1, 1]} : vector<43x168xf32> to vector<43x167xf32>
    %cst_58 = arith.constant dense<0.000000e+00> : vector<43x80xf32>
    %83 = tpu.matmul %82, %79, %cst_58 {dimension_numbers = #tpu.dot_dimension_numbers<[1], [0], [0], [1], [0, 0, 1, 1], [], []>} : vector<43x167xf32>, vector<167x80xf32>, vector<43x80xf32> -> vector<43x80xf32>
    %84 = arith.maximumf %81, %83 : vector<43x80xf32>
    %c0_59 = arith.constant 0 : index
    %c0_60 = arith.constant 0 : index
    %85 = vector.load %arg12[%c0_59, %c0_60] : memref<20x43xf32, #tpu.memory_space<vmem>>, vector<20x43xf32>
    %cst_61 = arith.constant dense<0.000000e+00> : vector<20x80xf32>
    %86 = tpu.matmul %85, %84, %cst_61 {dimension_numbers = #tpu.dot_dimension_numbers<[1], [0], [0], [1], [0, 0, 1, 1], [], []>} : vector<20x43xf32>, vector<43x80xf32>, vector<20x80xf32> -> vector<20x80xf32>
    %c0_62 = arith.constant 0 : index
    %c0_63 = arith.constant 0 : index
    %87 = vector.load %arg13[%c0_62, %c0_63] : memref<1x80xf32, #tpu.memory_space<vmem>>, vector<1x80xf32>
    %88 = vector.broadcast %87 : vector<1x80xf32> to vector<20x80xf32>
    %89 = arith.addf %86, %88 : vector<20x80xf32>
    %cst_64 = arith.constant 0.000000e+00 : f32
    %90 = vector.broadcast %cst_64 : f32 to vector<20x80xf32>
    %91 = arith.maximumf %89, %90 : vector<20x80xf32>
    %92 = vector.extract_strided_slice %91 {offsets = [0, 0], sizes = [2, 80], strides = [1, 1]} : vector<20x80xf32> to vector<2x80xf32>
    %c0_65 = arith.constant 0 : index
    %c0_66 = arith.constant 0 : index
    %c0_67 = arith.constant 0 : index
    %93 = vector.load %arg14[%c0_65, %c0_66, %c0_67] : memref<10x80x500xf32, #tpu.memory_space<vmem>>, vector<1x80x500xf32>
    %94 = vector.shape_cast %93 : vector<1x80x500xf32> to vector<80x500xf32>
    %cst_68 = arith.constant dense<0.000000e+00> : vector<2x500xf32>
    %95 = tpu.matmul %92, %94, %cst_68 {dimension_numbers = #tpu.dot_dimension_numbers<[1], [0], [0], [1], [0, 0, 1, 1], [], []>} : vector<2x80xf32>, vector<80x500xf32>, vector<2x500xf32> -> vector<2x500xf32>
    %96 = vector.extract_strided_slice %91 {offsets = [2, 0], sizes = [2, 80], strides = [1, 1]} : vector<20x80xf32> to vector<2x80xf32>
    %c1_69 = arith.constant 1 : index
    %c0_70 = arith.constant 0 : index
    %c0_71 = arith.constant 0 : index
    %97 = vector.load %arg14[%c1_69, %c0_70, %c0_71] : memref<10x80x500xf32, #tpu.memory_space<vmem>>, vector<1x80x500xf32>
    %98 = vector.shape_cast %97 : vector<1x80x500xf32> to vector<80x500xf32>
    %cst_72 = arith.constant dense<0.000000e+00> : vector<2x500xf32>
    %99 = tpu.matmul %96, %98, %cst_72 {dimension_numbers = #tpu.dot_dimension_numbers<[1], [0], [0], [1], [0, 0, 1, 1], [], []>} : vector<2x80xf32>, vector<80x500xf32>, vector<2x500xf32> -> vector<2x500xf32>
    %100 = arith.addf %95, %99 : vector<2x500xf32>
    %101 = vector.extract_strided_slice %91 {offsets = [4, 0], sizes = [2, 80], strides = [1, 1]} : vector<20x80xf32> to vector<2x80xf32>
    %c2_73 = arith.constant 2 : index
    %c0_74 = arith.constant 0 : index
    %c0_75 = arith.constant 0 : index
    %102 = vector.load %arg14[%c2_73, %c0_74, %c0_75] : memref<10x80x500xf32, #tpu.memory_space<vmem>>, vector<1x80x500xf32>
    %103 = vector.shape_cast %102 : vector<1x80x500xf32> to vector<80x500xf32>
    %cst_76 = arith.constant dense<0.000000e+00> : vector<2x500xf32>
    %104 = tpu.matmul %101, %103, %cst_76 {dimension_numbers = #tpu.dot_dimension_numbers<[1], [0], [0], [1], [0, 0, 1, 1], [], []>} : vector<2x80xf32>, vector<80x500xf32>, vector<2x500xf32> -> vector<2x500xf32>
    %105 = arith.addf %100, %104 : vector<2x500xf32>
    %106 = vector.extract_strided_slice %91 {offsets = [6, 0], sizes = [2, 80], strides = [1, 1]} : vector<20x80xf32> to vector<2x80xf32>
    %c3 = arith.constant 3 : index
    %c0_77 = arith.constant 0 : index
    %c0_78 = arith.constant 0 : index
    %107 = vector.load %arg14[%c3, %c0_77, %c0_78] : memref<10x80x500xf32, #tpu.memory_space<vmem>>, vector<1x80x500xf32>
    %108 = vector.shape_cast %107 : vector<1x80x500xf32> to vector<80x500xf32>
    %cst_79 = arith.constant dense<0.000000e+00> : vector<2x500xf32>
    %109 = tpu.matmul %106, %108, %cst_79 {dimension_numbers = #tpu.dot_dimension_numbers<[1], [0], [0], [1], [0, 0, 1, 1], [], []>} : vector<2x80xf32>, vector<80x500xf32>, vector<2x500xf32> -> vector<2x500xf32>
    %110 = arith.addf %105, %109 : vector<2x500xf32>
    %111 = vector.extract_strided_slice %91 {offsets = [8, 0], sizes = [2, 80], strides = [1, 1]} : vector<20x80xf32> to vector<2x80xf32>
    %c4 = arith.constant 4 : index
    %c0_80 = arith.constant 0 : index
    %c0_81 = arith.constant 0 : index
    %112 = vector.load %arg14[%c4, %c0_80, %c0_81] : memref<10x80x500xf32, #tpu.memory_space<vmem>>, vector<1x80x500xf32>
    %113 = vector.shape_cast %112 : vector<1x80x500xf32> to vector<80x500xf32>
    %cst_82 = arith.constant dense<0.000000e+00> : vector<2x500xf32>
    %114 = tpu.matmul %111, %113, %cst_82 {dimension_numbers = #tpu.dot_dimension_numbers<[1], [0], [0], [1], [0, 0, 1, 1], [], []>} : vector<2x80xf32>, vector<80x500xf32>, vector<2x500xf32> -> vector<2x500xf32>
    %115 = arith.addf %110, %114 : vector<2x500xf32>
    %116 = vector.extract_strided_slice %91 {offsets = [10, 0], sizes = [2, 80], strides = [1, 1]} : vector<20x80xf32> to vector<2x80xf32>
    %c5 = arith.constant 5 : index
    %c0_83 = arith.constant 0 : index
    %c0_84 = arith.constant 0 : index
    %117 = vector.load %arg14[%c5, %c0_83, %c0_84] : memref<10x80x500xf32, #tpu.memory_space<vmem>>, vector<1x80x500xf32>
    %118 = vector.shape_cast %117 : vector<1x80x500xf32> to vector<80x500xf32>
    %cst_85 = arith.constant dense<0.000000e+00> : vector<2x500xf32>
    %119 = tpu.matmul %116, %118, %cst_85 {dimension_numbers = #tpu.dot_dimension_numbers<[1], [0], [0], [1], [0, 0, 1, 1], [], []>} : vector<2x80xf32>, vector<80x500xf32>, vector<2x500xf32> -> vector<2x500xf32>
    %120 = arith.addf %115, %119 : vector<2x500xf32>
    %121 = vector.extract_strided_slice %91 {offsets = [12, 0], sizes = [2, 80], strides = [1, 1]} : vector<20x80xf32> to vector<2x80xf32>
    %c6 = arith.constant 6 : index
    %c0_86 = arith.constant 0 : index
    %c0_87 = arith.constant 0 : index
    %122 = vector.load %arg14[%c6, %c0_86, %c0_87] : memref<10x80x500xf32, #tpu.memory_space<vmem>>, vector<1x80x500xf32>
    %123 = vector.shape_cast %122 : vector<1x80x500xf32> to vector<80x500xf32>
    %cst_88 = arith.constant dense<0.000000e+00> : vector<2x500xf32>
    %124 = tpu.matmul %121, %123, %cst_88 {dimension_numbers = #tpu.dot_dimension_numbers<[1], [0], [0], [1], [0, 0, 1, 1], [], []>} : vector<2x80xf32>, vector<80x500xf32>, vector<2x500xf32> -> vector<2x500xf32>
    %125 = arith.addf %120, %124 : vector<2x500xf32>
    %126 = vector.extract_strided_slice %91 {offsets = [14, 0], sizes = [2, 80], strides = [1, 1]} : vector<20x80xf32> to vector<2x80xf32>
    %c7 = arith.constant 7 : index
    %c0_89 = arith.constant 0 : index
    %c0_90 = arith.constant 0 : index
    %127 = vector.load %arg14[%c7, %c0_89, %c0_90] : memref<10x80x500xf32, #tpu.memory_space<vmem>>, vector<1x80x500xf32>
    %128 = vector.shape_cast %127 : vector<1x80x500xf32> to vector<80x500xf32>
    %cst_91 = arith.constant dense<0.000000e+00> : vector<2x500xf32>
    %129 = tpu.matmul %126, %128, %cst_91 {dimension_numbers = #tpu.dot_dimension_numbers<[1], [0], [0], [1], [0, 0, 1, 1], [], []>} : vector<2x80xf32>, vector<80x500xf32>, vector<2x500xf32> -> vector<2x500xf32>
    %130 = arith.addf %125, %129 : vector<2x500xf32>
    %131 = vector.extract_strided_slice %91 {offsets = [16, 0], sizes = [2, 80], strides = [1, 1]} : vector<20x80xf32> to vector<2x80xf32>
    %c8 = arith.constant 8 : index
    %c0_92 = arith.constant 0 : index
    %c0_93 = arith.constant 0 : index
    %132 = vector.load %arg14[%c8, %c0_92, %c0_93] : memref<10x80x500xf32, #tpu.memory_space<vmem>>, vector<1x80x500xf32>
    %133 = vector.shape_cast %132 : vector<1x80x500xf32> to vector<80x500xf32>
    %cst_94 = arith.constant dense<0.000000e+00> : vector<2x500xf32>
    %134 = tpu.matmul %131, %133, %cst_94 {dimension_numbers = #tpu.dot_dimension_numbers<[1], [0], [0], [1], [0, 0, 1, 1], [], []>} : vector<2x80xf32>, vector<80x500xf32>, vector<2x500xf32> -> vector<2x500xf32>
    %135 = arith.addf %130, %134 : vector<2x500xf32>
    %136 = vector.extract_strided_slice %91 {offsets = [18, 0], sizes = [2, 80], strides = [1, 1]} : vector<20x80xf32> to vector<2x80xf32>
    %c9 = arith.constant 9 : index
    %c0_95 = arith.constant 0 : index
    %c0_96 = arith.constant 0 : index
    %137 = vector.load %arg14[%c9, %c0_95, %c0_96] : memref<10x80x500xf32, #tpu.memory_space<vmem>>, vector<1x80x500xf32>
    %138 = vector.shape_cast %137 : vector<1x80x500xf32> to vector<80x500xf32>
    %cst_97 = arith.constant dense<0.000000e+00> : vector<2x500xf32>
    %139 = tpu.matmul %136, %138, %cst_97 {dimension_numbers = #tpu.dot_dimension_numbers<[1], [0], [0], [1], [0, 0, 1, 1], [], []>} : vector<2x80xf32>, vector<80x500xf32>, vector<2x500xf32> -> vector<2x500xf32>
    %140 = arith.addf %135, %139 : vector<2x500xf32>
    %c0_98 = arith.constant 0 : index
    %c0_99 = arith.constant 0 : index
    %141 = vector.load %arg15[%c0_98, %c0_99] : memref<1x500xf32, #tpu.memory_space<vmem>>, vector<1x500xf32>
    %142 = vector.broadcast %141 : vector<1x500xf32> to vector<2x500xf32>
    %143 = arith.addf %140, %142 : vector<2x500xf32>
    %cst_100 = arith.constant 0.000000e+00 : f32
    %144 = vector.broadcast %cst_100 : f32 to vector<2x500xf32>
    %145 = arith.maximumf %143, %144 : vector<2x500xf32>
    %c0_101 = arith.constant 0 : index
    %c0_102 = arith.constant 0 : index
    %146 = vector.load %arg16[%c0_101, %c0_102] : memref<500x500xf32, #tpu.memory_space<vmem>>, vector<500x500xf32>
    %cst_103 = arith.constant dense<0.000000e+00> : vector<2x500xf32>
    %147 = tpu.matmul %145, %146, %cst_103 {dimension_numbers = #tpu.dot_dimension_numbers<[1], [0], [0], [1], [0, 0, 1, 1], [], []>} : vector<2x500xf32>, vector<500x500xf32>, vector<2x500xf32> -> vector<2x500xf32>
    %c0_104 = arith.constant 0 : index
    %c0_105 = arith.constant 0 : index
    %148 = vector.load %arg17[%c0_104, %c0_105] : memref<1x500xf32, #tpu.memory_space<vmem>>, vector<1x500xf32>
    %149 = vector.broadcast %148 : vector<1x500xf32> to vector<2x500xf32>
    %150 = arith.addf %147, %149 : vector<2x500xf32>
    %c0_106 = arith.constant 0 : index
    %c0_107 = arith.constant 0 : index
    %151 = vector.load %arg18[%c0_106, %c0_107] : memref<500x5xf32, #tpu.memory_space<vmem>>, vector<500x5xf32>
    %cst_108 = arith.constant dense<0.000000e+00> : vector<2x5xf32>
    %152 = tpu.matmul %150, %151, %cst_108 {dimension_numbers = #tpu.dot_dimension_numbers<[1], [0], [0], [1], [0, 0, 1, 1], [], []>} : vector<2x500xf32>, vector<500x5xf32>, vector<2x5xf32> -> vector<2x5xf32>
    %c0_109 = arith.constant 0 : index
    %c0_110 = arith.constant 0 : index
    %153 = vector.load %arg19[%c0_109, %c0_110] : memref<1x5xf32, #tpu.memory_space<vmem>>, vector<1x5xf32>
    %154 = vector.broadcast %153 : vector<1x5xf32> to vector<2x5xf32>
    %155 = arith.addf %152, %154 : vector<2x5xf32>
    %c0_111 = arith.constant 0 : index
    %c0_112 = arith.constant 0 : index
    %c0_113 = arith.constant 0 : index
    %156 = vector.load %arg20[%c0_111, %c0_112, %c0_113] : memref<1x2x5xf32, #tpu.memory_space<vmem>>, vector<1x2x5xf32>
    %157 = vector.shape_cast %156 : vector<1x2x5xf32> to vector<2x5xf32>
    %158 = vector.shape_cast %155 : vector<2x5xf32> to vector<1x2x5xf32>
    tpu.vector_store %arg20[%c0_111, %c0_112, %c0_113], %158 {strides = array<i32>} : memref<1x2x5xf32, #tpu.memory_space<vmem>>, vector<1x2x5xf32>,
    return
  }
  func.func @transform_0(%arg0: i32) -> (i32, i32, i32) {
    %c0_i32 = arith.constant 0 : i32
    %c0_i32_0 = arith.constant 0 : i32
    %c0_i32_1 = arith.constant 0 : i32
    return %arg0, %c0_i32, %c0_i32_0 : i32, i32, i32
  }
  func.func @transform_1(%arg0: i32) -> (i32, i32, i32) {
    %c0_i32 = arith.constant 0 : i32
    %c0_i32_0 = arith.constant 0 : i32
    %c0_i32_1 = arith.constant 0 : i32
    %c0_i32_2 = arith.constant 0 : i32
    return %c0_i32, %c0_i32_0, %c0_i32_1 : i32, i32, i32
  }
  func.func @transform_2(%arg0: i32) -> (i32, i32) {
    %c0_i32 = arith.constant 0 : i32
    %c0_i32_0 = arith.constant 0 : i32
    %c0_i32_1 = arith.constant 0 : i32
    return %c0_i32, %c0_i32_0 : i32, i32
  }
  func.func @transform_3(%arg0: i32) -> (i32, i32) {
    %c0_i32 = arith.constant 0 : i32
    %c0_i32_0 = arith.constant 0 : i32
    %c0_i32_1 = arith.constant 0 : i32
    return %c0_i32, %c0_i32_0 : i32, i32
  }
  func.func @transform_4(%arg0: i32) -> (i32, i32) {
    %c0_i32 = arith.constant 0 : i32
    %c0_i32_0 = arith.constant 0 : i32
    %c0_i32_1 = arith.constant 0 : i32
    return %c0_i32, %c0_i32_0 : i32, i32
  }
  func.func @transform_5(%arg0: i32) -> (i32, i32, i32) {
    %c0_i32 = arith.constant 0 : i32
    %c0_i32_0 = arith.constant 0 : i32
    %c0_i32_1 = arith.constant 0 : i32
    %c0_i32_2 = arith.constant 0 : i32
    return %c0_i32, %c0_i32_0, %c0_i32_1 : i32, i32, i32
  }
  func.func @transform_6(%arg0: i32) -> (i32, i32) {
    %c0_i32 = arith.constant 0 : i32
    %c0_i32_0 = arith.constant 0 : i32
    %c0_i32_1 = arith.constant 0 : i32
    return %c0_i32, %c0_i32_0 : i32, i32
  }
  func.func @transform_7(%arg0: i32) -> (i32, i32) {
    %c0_i32 = arith.constant 0 : i32
    %c0_i32_0 = arith.constant 0 : i32
    %c0_i32_1 = arith.constant 0 : i32
    return %c0_i32, %c0_i32_0 : i32, i32
  }
  func.func @transform_8(%arg0: i32) -> (i32, i32) {
    %c0_i32 = arith.constant 0 : i32
    %c0_i32_0 = arith.constant 0 : i32
    %c0_i32_1 = arith.constant 0 : i32
    return %c0_i32, %c0_i32_0 : i32, i32
  }
  func.func @transform_9(%arg0: i32) -> (i32, i32, i32) {
    %c0_i32 = arith.constant 0 : i32
    %c0_i32_0 = arith.constant 0 : i32
    %c0_i32_1 = arith.constant 0 : i32
    %c0_i32_2 = arith.constant 0 : i32
    return %c0_i32, %c0_i32_0, %c0_i32_1 : i32, i32, i32
  }
  func.func @transform_10(%arg0: i32) -> (i32, i32) {
    %c0_i32 = arith.constant 0 : i32
    %c0_i32_0 = arith.constant 0 : i32
    %c0_i32_1 = arith.constant 0 : i32
    return %c0_i32, %c0_i32_0 : i32, i32
  }
  func.func @transform_11(%arg0: i32) -> (i32, i32) {
    %c0_i32 = arith.constant 0 : i32
    %c0_i32_0 = arith.constant 0 : i32
    %c0_i32_1 = arith.constant 0 : i32
    return %c0_i32, %c0_i32_0 : i32, i32
  }
  func.func @transform_12(%arg0: i32) -> (i32, i32) {
    %c0_i32 = arith.constant 0 : i32
    %c0_i32_0 = arith.constant 0 : i32
    %c0_i32_1 = arith.constant 0 : i32
    return %c0_i32, %c0_i32_0 : i32, i32
  }
  func.func @transform_13(%arg0: i32) -> (i32, i32, i32) {
    %c0_i32 = arith.constant 0 : i32
    %c0_i32_0 = arith.constant 0 : i32
    %c0_i32_1 = arith.constant 0 : i32
    %c0_i32_2 = arith.constant 0 : i32
    return %c0_i32, %c0_i32_0, %c0_i32_1 : i32, i32, i32
  }
  func.func @transform_14(%arg0: i32) -> (i32, i32) {
    %c0_i32 = arith.constant 0 : i32
    %c0_i32_0 = arith.constant 0 : i32
    %c0_i32_1 = arith.constant 0 : i32
    return %c0_i32, %c0_i32_0 : i32, i32
  }
  func.func @transform_15(%arg0: i32) -> (i32, i32) {
    %c0_i32 = arith.constant 0 : i32
    %c0_i32_0 = arith.constant 0 : i32
    %c0_i32_1 = arith.constant 0 : i32
    return %c0_i32, %c0_i32_0 : i32, i32
  }
  func.func @transform_16(%arg0: i32) -> (i32, i32) {
    %c0_i32 = arith.constant 0 : i32
    %c0_i32_0 = arith.constant 0 : i32
    %c0_i32_1 = arith.constant 0 : i32
    return %c0_i32, %c0_i32_0 : i32, i32
  }
  func.func @transform_17(%arg0: i32) -> (i32, i32) {
    %c0_i32 = arith.constant 0 : i32
    %c0_i32_0 = arith.constant 0 : i32
    %c0_i32_1 = arith.constant 0 : i32
    return %c0_i32, %c0_i32_0 : i32, i32
  }
  func.func @transform_18(%arg0: i32) -> (i32, i32) {
    %c0_i32 = arith.constant 0 : i32
    %c0_i32_0 = arith.constant 0 : i32
    %c0_i32_1 = arith.constant 0 : i32
    return %c0_i32, %c0_i32_0 : i32, i32
  }
  func.func @transform_19(%arg0: i32) -> (i32, i32, i32) {
    %c0_i32 = arith.constant 0 : i32
    %c0_i32_0 = arith.constant 0 : i32
    %c0_i32_1 = arith.constant 0 : i32
    return %arg0, %c0_i32, %c0_i32_0 : i32, i32, i32
  }
}

</mosaic_0001>

<llo_original>
// kernel: siamese_forward.1
$region0: #{siamese_forward.1}
  #allocation0 [shape = 'u32[]', space=smem, size = 0x4, offset = 0x4, fixed_abs, tag = 'smem constant byte address 0x4 - core index']
  #allocation1 [shape = 'u32[144,128]{1,0:T(1,128)}', space=vmem, size = 0x12000, scoped, tag = 'internal scratch']
  %s0 = inlined_call_operand.vmem [shape: f32[2,200,100], index: 0, kind: input, shape index: {}]
  %s1 = inlined_call_operand.vmem [shape: f32[3,100,392], index: 1, kind: input, shape index: {}]
  %s2 = inlined_call_operand.vmem [shape: f32[391,196], index: 2, kind: input, shape index: {}]
  %s3 = inlined_call_operand.vmem [shape: f32[98,197], index: 3, kind: input, shape index: {}]
  %s4 = inlined_call_operand.vmem [shape: f32[1,196], index: 4, kind: input, shape index: {}]
  %s5 = inlined_call_operand.vmem [shape: f32[3,196,376], index: 5, kind: input, shape index: {}]
  %s6 = inlined_call_operand.vmem [shape: f32[375,184], index: 6, kind: input, shape index: {}]
  %s7 = inlined_call_operand.vmem [shape: f32[46,95], index: 7, kind: input, shape index: {}]
  %s8 = inlined_call_operand.vmem [shape: f32[1,184], index: 8, kind: input, shape index: {}]
  %s9 = inlined_call_operand.vmem [shape: f32[3,184,168], index: 9, kind: input, shape index: {}]
  %s10 = inlined_call_operand.vmem [shape: f32[167,80], index: 10, kind: input, shape index: {}]
  %s11 = inlined_call_operand.vmem [shape: f32[20,43], index: 11, kind: input, shape index: {}]
  %s12 = inlined_call_operand.vmem [shape: f32[1,80], index: 12, kind: input, shape index: {}]
  %s13 = inlined_call_operand.vmem [shape: f32[10,80,500], index: 13, kind: input, shape index: {}]
  %s14 = inlined_call_operand.vmem [shape: f32[1,500], index: 14, kind: input, shape index: {}]
  %s15 = inlined_call_operand.vmem [shape: f32[500,500], index: 15, kind: input, shape index: {}]
  %s16 = inlined_call_operand.vmem [shape: f32[1,500], index: 16, kind: input, shape index: {}]
  %s17 = inlined_call_operand.vmem [shape: f32[500,5], index: 17, kind: input, shape index: {}]
  %s18 = inlined_call_operand.vmem [shape: f32[1,5], index: 18, kind: input, shape index: {}]
  %s19 = inlined_call_operand.vmem [shape: f32[2,2,5], index: 19, kind: output, shape index: {}]
  %s20 = sld [smem:[#allocation0]]
  $region109: #{siamese_forward.1} parent=0
    _
  %s22 = ssub.s32 1, %s20
  %s23 = scalar_select 0, %s22, %s20
  loop: start=0, step=1, limit=4
  $region2: #{siamese_forward.1} parent=0 // loop_pre_header
    _
  $region3: #{siamese_forward.1} parent=0 // loop_header
    %s25 = sphi 0, %s29
    %p26 = scmp.ge.s32.totalorder %s25, 4
    %s35 = sphi 0, %s37
    %s38 = sphi 0, %s35
    %s39 = sphi 0, %s38
    %s55 = sphi 0, %s39
    %s59 = sphi 0, %s59
    %s61 = sphi 0, %s59
    %s62 = sphi 0, %s61
    %s76 = sphi 0, %s62
    %s80 = sphi 0, %s80
    %s82 = sphi 0, %s80
    %s83 = sphi 0, %s82
    %s97 = sphi 0, %s83
    %s101 = sphi 0, %s101
    %s103 = sphi 0, %s101
    %s104 = sphi 0, %s103
    %s118 = sphi 0, %s104
    %s122 = sphi 0, %s122
    %s124 = sphi 0, %s122
    %s125 = sphi 0, %s124
    %s139 = sphi 0, %s125
    %s143 = sphi 0, %s143
    %s145 = sphi 0, %s143
    %s146 = sphi 0, %s145
    %s160 = sphi 0, %s146
    %s164 = sphi 0, %s164
    %s166 = sphi 0, %s164
    %s167 = sphi 0, %s166
    %s181 = sphi 0, %s167
    %s185 = sphi 0, %s185
    %s187 = sphi 0, %s185
    %s188 = sphi 0, %s187
    %s202 = sphi 0, %s188
    %s206 = sphi 0, %s206
    %s208 = sphi 0, %s206
    %s209 = sphi 0, %s208
    %s223 = sphi 0, %s209
    %s227 = sphi 0, %s227
    %s229 = sphi 0, %s227
    %s230 = sphi 0, %s229
    %s244 = sphi 0, %s230
    %s248 = sphi 0, %s248
    %s250 = sphi 0, %s248
    %s251 = sphi 0, %s250
    %s265 = sphi 0, %s251
    %s269 = sphi 0, %s269
    %s271 = sphi 0, %s269
    %s272 = sphi 0, %s271
    %s286 = sphi 0, %s272
    %s290 = sphi 0, %s290
    %s292 = sphi 0, %s290
    %s293 = sphi 0, %s292
    %s307 = sphi 0, %s293
    %s311 = sphi 0, %s311
    %s313 = sphi 0, %s311
    %s314 = sphi 0, %s313
    %s328 = sphi 0, %s314
    %s332 = sphi 0, %s332
    %s334 = sphi 0, %s332
    %s335 = sphi 0, %s334
    %s349 = sphi 0, %s335
    %s353 = sphi 0, %s353
    %s355 = sphi 0, %s353
    %s356 = sphi 0, %s355
    %s370 = sphi 0, %s356
    %s374 = sphi 0, %s374
    %s376 = sphi 0, %s374
    %s377 = sphi 0, %s376
    %s391 = sphi 0, %s377
    %s395 = sphi 0, %s395
    %s397 = sphi 0, %s395
    %s398 = sphi 0, %s397
    %s412 = sphi 0, %s398
    %s416 = sphi 0, %s416
    %s418 = sphi 0, %s416
    %s419 = sphi 0, %s418
    %s433 = sphi 0, %s419
    %s439 = sphi 0, %s441
    %s442 = sphi 0, %s439
    %s443 = sphi 0, %s442
    %s459 = sphi 0, %s443
  $region4: #{siamese_forward.1} parent=0 // loop_header_branch
    %28 = sbr.rel (%p26) target = $region8
  $region5: #{siamese_forward.1} parent=0 // loop_body
    %s30 = ssub.s32 %s25, 1
    %s31 = ssub.s32 %s25, 2
    %s32 = sadd.s32 %s25, 1
    %s33 = ssub.s32 %s25, %s32
    %p34 = scmp.eq.s32.totalorder %s33, 0
    %s36 = sadd.s32 %s35, 1
    %s37 = scalar_select %p34, %s35, %s36
    %p40 = pneg %p34
    %p41 = scmp.eq.s32.totalorder %s25, 1
    %p42 = por %p40, %p41
    %p43 = scmp.ne.s32.totalorder %s35, %s38
    %p44 = scmp.eq.s32.totalorder %s25, 0
    %p45 = por %p43, %p44
    %p46 = scmp.ne.s32.totalorder %s35, %s38
    %p47 = scmp.eq.s32.totalorder %s30, 1
    %p48 = por %p46, %p47
    %p49 = scmp.ne.s32.totalorder %s38, %s39
    %p50 = scmp.eq.s32.totalorder %s30, 0
    %p51 = por %p49, %p50
    %p52 = scmp.ne.s32.totalorder %s38, %s39
    %p53 = scmp.eq.s32.totalorder %s31, 1
    %p54 = por %p52, %p53
    %p56 = scmp.ne.s32.totalorder %s39, %s55
    %p57 = scmp.eq.s32.totalorder %s31, 0
    %p58 = por %p56, %p57
    %s60 = sadd.s32 %s59, 1
    %p63 = scmp.eq.s32.totalorder %s25, 1
    %p64 = scmp.ne.s32.totalorder %s59, %s61
    %p65 = scmp.eq.s32.totalorder %s25, 0
    %p66 = por %p64, %p65
    %p67 = scmp.ne.s32.totalorder %s59, %s61
    %p68 = scmp.eq.s32.totalorder %s30, 1
    %p69 = por %p67, %p68
    %p70 = scmp.ne.s32.totalorder %s61, %s62
    %p71 = scmp.eq.s32.totalorder %s30, 0
    %p72 = por %p70, %p71
    %p73 = scmp.ne.s32.totalorder %s61, %s62
    %p74 = scmp.eq.s32.totalorder %s31, 1
    %p75 = por %p73, %p74
    %p77 = scmp.ne.s32.totalorder %s62, %s76
    %p78 = scmp.eq.s32.totalorder %s31, 0
    %p79 = por %p77, %p78
    %s81 = sadd.s32 %s80, 1
    %p84 = scmp.eq.s32.totalorder %s25, 1
    %p85 = scmp.ne.s32.totalorder %s80, %s82
    %p86 = scmp.eq.s32.totalorder %s25, 0
    %p87 = por %p85, %p86
    %p88 = scmp.ne.s32.totalorder %s80, %s82
    %p89 = scmp.eq.s32.totalorder %s30, 1
    %p90 = por %p88, %p89
    %p91 = scmp.ne.s32.totalorder %s82, %s83
    %p92 = scmp.eq.s32.totalorder %s30, 0
    %p93 = por %p91, %p92
    %p94 = scmp.ne.s32.totalorder %s82, %s83
    %p95 = scmp.eq.s32.totalorder %s31, 1
    %p96 = por %p94, %p95
    %p98 = scmp.ne.s32.totalorder %s83, %s97
    %p99 = scmp.eq.s32.totalorder %s31, 0
    %p100 = por %p98, %p99
    %s102 = sadd.s32 %s101, 1
    %p105 = scmp.eq.s32.totalorder %s25, 1
    %p106 = scmp.ne.s32.totalorder %s101, %s103
    %p107 = scmp.eq.s32.totalorder %s25, 0
    %p108 = por %p106, %p107
    %p109 = scmp.ne.s32.totalorder %s101, %s103
    %p110 = scmp.eq.s32.totalorder %s30, 1
    %p111 = por %p109, %p110
    %p112 = scmp.ne.s32.totalorder %s103, %s104
    %p113 = scmp.eq.s32.totalorder %s30, 0
    %p114 = por %p112, %p113
    %p115 = scmp.ne.s32.totalorder %s103, %s104
    %p116 = scmp.eq.s32.totalorder %s31, 1
    %p117 = por %p115, %p116
    %p119 = scmp.ne.s32.totalorder %s104, %s118
    %p120 = scmp.eq.s32.totalorder %s31, 0
    %p121 = por %p119, %p120
    %s123 = sadd.s32 %s122, 1
    %p126 = scmp.eq.s32.totalorder %s25, 1
    %p127 = scmp.ne.s32.totalorder %s122, %s124
    %p128 = scmp.eq.s32.totalorder %s25, 0
    %p129 = por %p127, %p128
    %p130 = scmp.ne.s32.totalorder %s122, %s124
    %p131 = scmp.eq.s32.totalorder %s30, 1
    %p132 = por %p130, %p131
    %p133 = scmp.ne.s32.totalorder %s124, %s125
    %p134 = scmp.eq.s32.totalorder %s30, 0
    %p135 = por %p133, %p134
    %p136 = scmp.ne.s32.totalorder %s124, %s125
    %p137 = scmp.eq.s32.totalorder %s31, 1
    %p138 = por %p136, %p137
    %p140 = scmp.ne.s32.totalorder %s125, %s139
    %p141 = scmp.eq.s32.totalorder %s31, 0
    %p142 = por %p140, %p141
    %s144 = sadd.s32 %s143, 1
    %p147 = scmp.eq.s32.totalorder %s25, 1
    %p148 = scmp.ne.s32.totalorder %s143, %s145
    %p149 = scmp.eq.s32.totalorder %s25, 0
    %p150 = por %p148, %p149
    %p151 = scmp.ne.s32.totalorder %s143, %s145
    %p152 = scmp.eq.s32.totalorder %s30, 1
    %p153 = por %p151, %p152
    %p154 = scmp.ne.s32.totalorder %s145, %s146
    %p155 = scmp.eq.s32.totalorder %s30, 0
    %p156 = por %p154, %p155
    %p157 = scmp.ne.s32.totalorder %s145, %s146
    %p158 = scmp.eq.s32.totalorder %s31, 1
    %p159 = por %p157, %p158
    %p161 = scmp.ne.s32.totalorder %s146, %s160
    %p162 = scmp.eq.s32.totalorder %s31, 0
    %p163 = por %p161, %p162
    %s165 = sadd.s32 %s164, 1
    %p168 = scmp.eq.s32.totalorder %s25, 1
    %p169 = scmp.ne.s32.totalorder %s164, %s166
    %p170 = scmp.eq.s32.totalorder %s25, 0
    %p171 = por %p169, %p170
    %p172 = scmp.ne.s32.totalorder %s164, %s166
    %p173 = scmp.eq.s32.totalorder %s30, 1
    %p174 = por %p172, %p173
    %p175 = scmp.ne.s32.totalorder %s166, %s167
    %p176 = scmp.eq.s32.totalorder %s30, 0
    %p177 = por %p175, %p176
    %p178 = scmp.ne.s32.totalorder %s166, %s167
    %p179 = scmp.eq.s32.totalorder %s31, 1
    %p180 = por %p178, %p179
    %p182 = scmp.ne.s32.totalorder %s167, %s181
    %p183 = scmp.eq.s32.totalorder %s31, 0
    %p184 = por %p182, %p183
    %s186 = sadd.s32 %s185, 1
    %p189 = scmp.eq.s32.totalorder %s25, 1
    %p190 = scmp.ne.s32.totalorder %s185, %s187
    %p191 = scmp.eq.s32.totalorder %s25, 0
    %p192 = por %p190, %p191
    %p193 = scmp.ne.s32.totalorder %s185, %s187
    %p194 = scmp.eq.s32.totalorder %s30, 1
    %p195 = por %p193, %p194
    %p196 = scmp.ne.s32.totalorder %s187, %s188
    %p197 = scmp.eq.s32.totalorder %s30, 0
    %p198 = por %p196, %p197
    %p199 = scmp.ne.s32.totalorder %s187, %s188
    %p200 = scmp.eq.s32.totalorder %s31, 1
    %p201 = por %p199, %p200
    %p203 = scmp.ne.s32.totalorder %s188, %s202
    %p204 = scmp.eq.s32.totalorder %s31, 0
    %p205 = por %p203, %p204
    %s207 = sadd.s32 %s206, 1
    %p210 = scmp.eq.s32.totalorder %s25, 1
    %p211 = scmp.ne.s32.totalorder %s206, %s208
    %p212 = scmp.eq.s32.totalorder %s25, 0
    %p213 = por %p211, %p212
    %p214 = scmp.ne.s32.totalorder %s206, %s208
    %p215 = scmp.eq.s32.totalorder %s30, 1
    %p216 = por %p214, %p215
    %p217 = scmp.ne.s32.totalorder %s208, %s209
    %p218 = scmp.eq.s32.totalorder %s30, 0
    %p219 = por %p217, %p218
    %p220 = scmp.ne.s32.totalorder %s208, %s209
    %p221 = scmp.eq.s32.totalorder %s31, 1
    %p222 = por %p220, %p221
    %p224 = scmp.ne.s32.totalorder %s209, %s223
    %p225 = scmp.eq.s32.totalorder %s31, 0
    %p226 = por %p224, %p225
    %s228 = sadd.s32 %s227, 1
    %p231 = scmp.eq.s32.totalorder %s25, 1
    %p232 = scmp.ne.s32.totalorder %s227, %s229
    %p233 = scmp.eq.s32.totalorder %s25, 0
    %p234 = por %p232, %p233
    %p235 = scmp.ne.s32.totalorder %s227, %s229
    %p236 = scmp.eq.s32.totalorder %s30, 1
    %p237 = por %p235, %p236
    %p238 = scmp.ne.s32.totalorder %s229, %s230
    %p239 = scmp.eq.s32.totalorder %s30, 0
    %p240 = por %p238, %p239
    %p241 = scmp.ne.s32.totalorder %s229, %s230
    %p242 = scmp.eq.s32.totalorder %s31, 1
    %p243 = por %p241, %p242
    %p245 = scmp.ne.s32.totalorder %s230, %s244
    %p246 = scmp.eq.s32.totalorder %s31, 0
    %p247 = por %p245, %p246
    %s249 = sadd.s32 %s248, 1
    %p252 = scmp.eq.s32.totalorder %s25, 1
    %p253 = scmp.ne.s32.totalorder %s248, %s250
    %p254 = scmp.eq.s32.totalorder %s25, 0
    %p255 = por %p253, %p254
    %p256 = scmp.ne.s32.totalorder %s248, %s250
    %p257 = scmp.eq.s32.totalorder %s30, 1
    %p258 = por %p256, %p257
    %p259 = scmp.ne.s32.totalorder %s250, %s251
    %p260 = scmp.eq.s32.totalorder %s30, 0
    %p261 = por %p259, %p260
    %p262 = scmp.ne.s32.totalorder %s250, %s251
    %p263 = scmp.eq.s32.totalorder %s31, 1
    %p264 = por %p262, %p263
    %p266 = scmp.ne.s32.totalorder %s251, %s265
    %p267 = scmp.eq.s32.totalorder %s31, 0
    %p268 = por %p266, %p267
    %s270 = sadd.s32 %s269, 1
    %p273 = scmp.eq.s32.totalorder %s25, 1
    %p274 = scmp.ne.s32.totalorder %s269, %s271
    %p275 = scmp.eq.s32.totalorder %s25, 0
    %p276 = por %p274, %p275
    %p277 = scmp.ne.s32.totalorder %s269, %s271
    %p278 = scmp.eq.s32.totalorder %s30, 1
    %p279 = por %p277, %p278
    %p280 = scmp.ne.s32.totalorder %s271, %s272
    %p281 = scmp.eq.s32.totalorder %s30, 0
    %p282 = por %p280, %p281
    %p283 = scmp.ne.s32.totalorder %s271, %s272
    %p284 = scmp.eq.s32.totalorder %s31, 1
    %p285 = por %p283, %p284
    %p287 = scmp.ne.s32.totalorder %s272, %s286
    %p288 = scmp.eq.s32.totalorder %s31, 0
    %p289 = por %p287, %p288
    %s291 = sadd.s32 %s290, 1
    %p294 = scmp.eq.s32.totalorder %s25, 1
    %p295 = scmp.ne.s32.totalorder %s290, %s292
    %p296 = scmp.eq.s32.totalorder %s25, 0
    %p297 = por %p295, %p296
    %p298 = scmp.ne.s32.totalorder %s290, %s292
    %p299 = scmp.eq.s32.totalorder %s30, 1
    %p300 = por %p298, %p299
    %p301 = scmp.ne.s32.totalorder %s292, %s293
    %p302 = scmp.eq.s32.totalorder %s30, 0
    %p303 = por %p301, %p302
    %p304 = scmp.ne.s32.totalorder %s292, %s293
    %p305 = scmp.eq.s32.totalorder %s31, 1
    %p306 = por %p304, %p305
    %p308 = scmp.ne.s32.totalorder %s293, %s307
    %p309 = scmp.eq.s32.totalorder %s31, 0
    %p310 = por %p308, %p309
    %s312 = sadd.s32 %s311, 1
    %p315 = scmp.eq.s32.totalorder %s25, 1
    %p316 = scmp.ne.s32.totalorder %s311, %s313
    %p317 = scmp.eq.s32.totalorder %s25, 0
    %p318 = por %p316, %p317
    %p319 = scmp.ne.s32.totalorder %s311, %s313
    %p320 = scmp.eq.s32.totalorder %s30, 1
    %p321 = por %p319, %p320
    %p322 = scmp.ne.s32.totalorder %s313, %s314
    %p323 = scmp.eq.s32.totalorder %s30, 0
    %p324 = por %p322, %p323
    %p325 = scmp.ne.s32.totalorder %s313, %s314
    %p326 = scmp.eq.s32.totalorder %s31, 1
    %p327 = por %p325, %p326
    %p329 = scmp.ne.s32.totalorder %s314, %s328
    %p330 = scmp.eq.s32.totalorder %s31, 0
    %p331 = por %p329, %p330
    %s333 = sadd.s32 %s332, 1
    %p336 = scmp.eq.s32.totalorder %s25, 1
    %p337 = scmp.ne.s32.totalorder %s332, %s334
    %p338 = scmp.eq.s32.totalorder %s25, 0
    %p339 = por %p337, %p338
    %p340 = scmp.ne.s32.totalorder %s332, %s334
    %p341 = scmp.eq.s32.totalorder %s30, 1
    %p342 = por %p340, %p341
    %p343 = scmp.ne.s32.totalorder %s334, %s335
    %p344 = scmp.eq.s32.totalorder %s30, 0
    %p345 = por %p343, %p344
    %p346 = scmp.ne.s32.totalorder %s334, %s335
    %p347 = scmp.eq.s32.totalorder %s31, 1
    %p348 = por %p346, %p347
    %p350 = scmp.ne.s32.totalorder %s335, %s349
    %p351 = scmp.eq.s32.totalorder %s31, 0
    %p352 = por %p350, %p351
    %s354 = sadd.s32 %s353, 1
    %p357 = scmp.eq.s32.totalorder %s25, 1
    %p358 = scmp.ne.s32.totalorder %s353, %s355
    %p359 = scmp.eq.s32.totalorder %s25, 0
    %p360 = por %p358, %p359
    %p361 = scmp.ne.s32.totalorder %s353, %s355
    %p362 = scmp.eq.s32.totalorder %s30, 1
    %p363 = por %p361, %p362
    %p364 = scmp.ne.s32.totalorder %s355, %s356
    %p365 = scmp.eq.s32.totalorder %s30, 0
    %p366 = por %p364, %p365
    %p367 = scmp.ne.s32.totalorder %s355, %s356
    %p368 = scmp.eq.s32.totalorder %s31, 1
    %p369 = por %p367, %p368
    %p371 = scmp.ne.s32.totalorder %s356, %s370
    %p372 = scmp.eq.s32.totalorder %s31, 0
    %p373 = por %p371, %p372
    %s375 = sadd.s32 %s374, 1
    %p378 = scmp.eq.s32.totalorder %s25, 1
    %p379 = scmp.ne.s32.totalorder %s374, %s376
    %p380 = scmp.eq.s32.totalorder %s25, 0
    %p381 = por %p379, %p380
    %p382 = scmp.ne.s32.totalorder %s374, %s376
    %p383 = scmp.eq.s32.totalorder %s30, 1
    %p384 = por %p382, %p383
    %p385 = scmp.ne.s32.totalorder %s376, %s377
    %p386 = scmp.eq.s32.totalorder %s30, 0
    %p387 = por %p385, %p386
    %p388 = scmp.ne.s32.totalorder %s376, %s377
    %p389 = scmp.eq.s32.totalorder %s31, 1
    %p390 = por %p388, %p389
    %p392 = scmp.ne.s32.totalorder %s377, %s391
    %p393 = scmp.eq.s32.totalorder %s31, 0
    %p394 = por %p392, %p393
    %s396 = sadd.s32 %s395, 1
    %p399 = scmp.eq.s32.totalorder %s25, 1
    %p400 = scmp.ne.s32.totalorder %s395, %s397
    %p401 = scmp.eq.s32.totalorder %s25, 0
    %p402 = por %p400, %p401
    %p403 = scmp.ne.s32.totalorder %s395, %s397
    %p404 = scmp.eq.s32.totalorder %s30, 1
    %p405 = por %p403, %p404
    %p406 = scmp.ne.s32.totalorder %s397, %s398
    %p407 = scmp.eq.s32.totalorder %s30, 0
    %p408 = por %p406, %p407
    %p409 = scmp.ne.s32.totalorder %s397, %s398
    %p410 = scmp.eq.s32.totalorder %s31, 1
    %p411 = por %p409, %p410
    %p413 = scmp.ne.s32.totalorder %s398, %s412
    %p414 = scmp.eq.s32.totalorder %s31, 0
    %p415 = por %p413, %p414
    %s417 = sadd.s32 %s416, 1
    %p420 = scmp.eq.s32.totalorder %s25, 1
    %p421 = scmp.ne.s32.totalorder %s416, %s418
    %p422 = scmp.eq.s32.totalorder %s25, 0
    %p423 = por %p421, %p422
    %p424 = scmp.ne.s32.totalorder %s416, %s418
    %p425 = scmp.eq.s32.totalorder %s30, 1
    %p426 = por %p424, %p425
    %p427 = scmp.ne.s32.totalorder %s418, %s419
    %p428 = scmp.eq.s32.totalorder %s30, 0
    %p429 = por %p427, %p428
    %p430 = scmp.ne.s32.totalorder %s418, %s419
    %p431 = scmp.eq.s32.totalorder %s31, 1
    %p432 = por %p430, %p431
    %p434 = scmp.ne.s32.totalorder %s419, %s433
    %p435 = scmp.eq.s32.totalorder %s31, 0
    %p436 = por %p434, %p435
    %s437 = ssub.s32 %s25, %s32
    %p438 = scmp.eq.s32.totalorder %s437, 0
    %s440 = sadd.s32 %s439, 1
    %s441 = scalar_select %p438, %s439, %s440
    %p444 = pneg %p438
    %p445 = scmp.eq.s32.totalorder %s25, 1
    %p446 = por %p444, %p445
    %p447 = scmp.ne.s32.totalorder %s439, %s442
    %p448 = scmp.eq.s32.totalorder %s25, 0
    %p449 = por %p447, %p448
    %p450 = scmp.ne.s32.totalorder %s439, %s442
    %p451 = scmp.eq.s32.totalorder %s30, 1
    %p452 = por %p450, %p451
    %p453 = scmp.ne.s32.totalorder %s442, %s443
    %p454 = scmp.eq.s32.totalorder %s30, 0
    %p455 = por %p453, %p454
    %p456 = scmp.ne.s32.totalorder %s442, %s443
    %p457 = scmp.eq.s32.totalorder %s31, 1
    %p458 = por %p456, %p457
    %p460 = scmp.ne.s32.totalorder %s443, %s459
    %p461 = scmp.eq.s32.totalorder %s31, 0
    %p462 = por %p460, %p461
    %p463 = scmp.le.s32.totalorder 1, %s25
    %p464 = scmp.lt.s32.totalorder %s25, 3
    %p465 = pnand %p463, %p464
    %p466 = pneg %p465
    // Predicated region
    $region9: #{siamese_forward.1} parent=5 // pred_check
      _
    $region10: #{siamese_forward.1} parent=5 // pred_check_branch
      %468 = sbr.rel (%p465) target = $region12
    $region11: #{siamese_forward.1} parent=5 // pred_region
      %s469 = ssub.s32 %s25, 1
      // Predicated region
      $region13: #{siamese_forward.1} parent=11 // pred_check
        %p470 = pneg %p72
      $region14: #{siamese_forward.1} parent=11 // pred_check_branch
        %472 = sbr.rel (%p470) target = $region16
      $region15: #{siamese_forward.1} parent=11 // pred_region
        _
      $region16: #{siamese_forward.1} parent=11 // pred_fallthru
        _
      // Predicated region
      $region17: #{siamese_forward.1} parent=11 // pred_check
        %p473 = pneg %p93
      $region18: #{siamese_forward.1} parent=11 // pred_check_branch
        %475 = sbr.rel (%p473) target = $region20
      $region19: #{siamese_forward.1} parent=11 // pred_region
        _
      $region20: #{siamese_forward.1} parent=11 // pred_fallthru
        _
      // Predicated region
      $region21: #{siamese_forward.1} parent=11 // pred_check
        %p476 = pneg %p114
      $region22: #{siamese_forward.1} parent=11 // pred_check_branch
        %478 = sbr.rel (%p476) target = $region24
      $region23: #{siamese_forward.1} parent=11 // pred_region
        _
      $region24: #{siamese_forward.1} parent=11 // pred_fallthru
        _
      // Predicated region
      $region25: #{siamese_forward.1} parent=11 // pred_check
        %p479 = pneg %p135
      $region26: #{siamese_forward.1} parent=11 // pred_check_branch
        %481 = sbr.rel (%p479) target = $region28
      $region27: #{siamese_forward.1} parent=11 // pred_region
        _
      $region28: #{siamese_forward.1} parent=11 // pred_fallthru
        _
      // Predicated region
      $region29: #{siamese_forward.1} parent=11 // pred_check
        %p482 = pneg %p156
      $region30: #{siamese_forward.1} parent=11 // pred_check_branch
        %484 = sbr.rel (%p482) target = $region32
      $region31: #{siamese_forward.1} parent=11 // pred_region
        _
      $region32: #{siamese_forward.1} parent=11 // pred_fallthru
        _
      // Predicated region
      $region33: #{siamese_forward.1} parent=11 // pred_check
        %p485 = pneg %p177
      $region34: #{siamese_forward.1} parent=11 // pred_check_branch
        %487 = sbr.rel (%p485) target = $region36
      $region35: #{siamese_forward.1} parent=11 // pred_region
        _
      $region36: #{siamese_forward.1} parent=11 // pred_fallthru
        _
      // Predicated region
      $region37: #{siamese_forward.1} parent=11 // pred_check
        %p488 = pneg %p198
      $region38: #{siamese_forward.1} parent=11 // pred_check_branch
        %490 = sbr.rel (%p488) target = $region40
      $region39: #{siamese_forward.1} parent=11 // pred_region
        _
      $region40: #{siamese_forward.1} parent=11 // pred_fallthru
        _
      // Predicated region
      $region41: #{siamese_forward.1} parent=11 // pred_check
        %p491 = pneg %p219
      $region42: #{siamese_forward.1} parent=11 // pred_check_branch
        %493 = sbr.rel (%p491) target = $region44
      $region43: #{siamese_forward.1} parent=11 // pred_region
        _
      $region44: #{siamese_forward.1} parent=11 // pred_fallthru
        _
      // Predicated region
      $region45: #{siamese_forward.1} parent=11 // pred_check
        %p494 = pneg %p240
      $region46: #{siamese_forward.1} parent=11 // pred_check_branch
        %496 = sbr.rel (%p494) target = $region48
      $region47: #{siamese_forward.1} parent=11 // pred_region
        _
      $region48: #{siamese_forward.1} parent=11 // pred_fallthru
        _
      // Predicated region
      $region49: #{siamese_forward.1} parent=11 // pred_check
        %p497 = pneg %p261
      $region50: #{siamese_forward.1} parent=11 // pred_check_branch
        %499 = sbr.rel (%p497) target = $region52
      $region51: #{siamese_forward.1} parent=11 // pred_region
        _
      $region52: #{siamese_forward.1} parent=11 // pred_fallthru
        _
      // Predicated region
      $region53: #{siamese_forward.1} parent=11 // pred_check
        %p500 = pneg %p282
      $region54: #{siamese_forward.1} parent=11 // pred_check_branch
        %502 = sbr.rel (%p500) target = $region56
      $region55: #{siamese_forward.1} parent=11 // pred_region
        _
      $region56: #{siamese_forward.1} parent=11 // pred_fallthru
        _
      // Predicated region
      $region57: #{siamese_forward.1} parent=11 // pred_check
        %p503 = pneg %p303
      $region58: #{siamese_forward.1} parent=11 // pred_check_branch
        %505 = sbr.rel (%p503) target = $region60
      $region59: #{siamese_forward.1} parent=11 // pred_region
        _
      $region60: #{siamese_forward.1} parent=11 // pred_fallthru
        _
      // Predicated region
      $region61: #{siamese_forward.1} parent=11 // pred_check
        %p506 = pneg %p324
      $region62: #{siamese_forward.1} parent=11 // pred_check_branch
        %508 = sbr.rel (%p506) target = $region64
      $region63: #{siamese_forward.1} parent=11 // pred_region
        _
      $region64: #{siamese_forward.1} parent=11 // pred_fallthru
        _
      // Predicated region
      $region65: #{siamese_forward.1} parent=11 // pred_check
        %p509 = pneg %p345
      $region66: #{siamese_forward.1} parent=11 // pred_check_branch
        %511 = sbr.rel (%p509) target = $region68
      $region67: #{siamese_forward.1} parent=11 // pred_region
        _
      $region68: #{siamese_forward.1} parent=11 // pred_fallthru
        _
      // Predicated region
      $region69: #{siamese_forward.1} parent=11 // pred_check
        %p512 = pneg %p366
      $region70: #{siamese_forward.1} parent=11 // pred_check_branch
        %514 = sbr.rel (%p512) target = $region72
      $region71: #{siamese_forward.1} parent=11 // pred_region
        _
      $region72: #{siamese_forward.1} parent=11 // pred_fallthru
        _
      // Predicated region
      $region73: #{siamese_forward.1} parent=11 // pred_check
        %p515 = pneg %p387
      $region74: #{siamese_forward.1} parent=11 // pred_check_branch
        %517 = sbr.rel (%p515) target = $region76
      $region75: #{siamese_forward.1} parent=11 // pred_region
        _
      $region76: #{siamese_forward.1} parent=11 // pred_fallthru
        _
      // Predicated region
      $region77: #{siamese_forward.1} parent=11 // pred_check
        %p518 = pneg %p408
      $region78: #{siamese_forward.1} parent=11 // pred_check_branch
        %520 = sbr.rel (%p518) target = $region80
      $region79: #{siamese_forward.1} parent=11 // pred_region
        _
      $region80: #{siamese_forward.1} parent=11 // pred_fallthru
        _
      // Predicated region
      $region81: #{siamese_forward.1} parent=11 // pred_check
        %p521 = pneg %p429
      $region82: #{siamese_forward.1} parent=11 // pred_check_branch
        %523 = sbr.rel (%p521) target = $region84
      $region83: #{siamese_forward.1} parent=11 // pred_region
        _
      $region84: #{siamese_forward.1} parent=11 // pred_fallthru
        _
    $region12: #{siamese_forward.1} parent=5 // pred_fallthru
      _
    %p524 = scmp.lt.s32.totalorder %s25, 2
    // Predicated region
    $region85: #{siamese_forward.1} parent=5 // pred_check
      %p525 = pneg %p524
    $region86: #{siamese_forward.1} parent=5 // pred_check_branch
      %527 = sbr.rel (%p525) target = $region88
    $region87: #{siamese_forward.1} parent=5 // pred_region
      // Predicated region
      $region89: #{siamese_forward.1} parent=87 // pred_check
        %p528 = pneg %p45
      $region90: #{siamese_forward.1} parent=87 // pred_check_branch
        %530 = sbr.rel (%p528) target = $region92
      $region91: #{siamese_forward.1} parent=87 // pred_region
        %p531 = scmp.lt.s32.totalorder %s25, 1
        %s532 = scalar_select %p531, %s25, 1
        %s533 = smul.addr %s532, 25
        %s534 = smul.addr %s533, 8
        %s535 = scalar_lea.vmem %s0, %s534
      $region92: #{siamese_forward.1} parent=87 // pred_fallthru
        _
    $region88: #{siamese_forward.1} parent=5 // pred_fallthru
      _
    %p536 = scmp.le.s32.totalorder 1, %s25
    %p537 = scmp.lt.s32.totalorder %s25, 3
    %p538 = pnand %p536, %p537
    %p539 = pneg %p538
    // Predicated region
    $region93: #{siamese_forward.1} parent=5 // pred_check
      _
    $region94: #{siamese_forward.1} parent=5 // pred_check_branch
      %541 = sbr.rel (%p538) target = $region96
    $region95: #{siamese_forward.1} parent=5 // pred_region
      %s542 = ssub.s32 %s25, 1
      %p543 = scmp.lt.s32.totalorder %s30, 1
      %s544 = scalar_select %p543, %s30, 1
      %s545 = smul.addr %s544, 25
      %s546 = smul.addr %s545, 8
      %s547 = scalar_lea.vmem %s0, %s546
      %p548 = pneg %p51
      %p549 = pneg %p48
      %p550 = pneg %p72
      %p551 = pneg %p69
      %p552 = pneg %p93
      %p553 = pneg %p90
      %p554 = pneg %p114
      %p555 = pneg %p111
      %p556 = pneg %p135
      %p557 = pneg %p132
      %p558 = pneg %p156
      %p559 = pneg %p153
      %p560 = pneg %p177
      %p561 = pneg %p174
      %p562 = pneg %p198
      %p563 = pneg %p195
      %p564 = pneg %p219
      %p565 = pneg %p216
      %p566 = pneg %p240
      %p567 = pneg %p237
      %p568 = pneg %p261
      %p569 = pneg %p258
      %p570 = pneg %p282
      %p571 = pneg %p279
      %p572 = pneg %p303
      %p573 = pneg %p300
      %p574 = pneg %p324
      %p575 = pneg %p321
      %p576 = pneg %p345
      %p577 = pneg %p342
      %p578 = pneg %p366
      %p579 = pneg %p363
      %p580 = pneg %p387
      %p581 = pneg %p384
      %p582 = pneg %p408
      %p583 = pneg %p405
      %p584 = pneg %p429
      %p585 = pneg %p426
      %p586 = pneg %p455
      %p587 = pneg %p452
      %p588 = scmp.lt.s32.totalorder %s30, 1
      %s589 = scalar_select %p588, %s30, 1
      %s590 = smul.addr %s589, 2
      %s591 = scalar_lea.vmem %s19, %s590
      %p592 = scmp.lt.s32.totalorder %s30, 1
      %s593 = scalar_select %p592, %s30, 1
      %s594 = smul.addr %s593, 25
      %s595 = smul.addr %s594, 8
      %s596 = scalar_lea.vmem %s0, %s595
      %p597 = scmp.lt.s32.totalorder %s30, 1
      %s598 = scalar_select %p597, %s30, 1
      %s599 = smul.addr %s598, 2
      %s600 = scalar_lea.vmem %s19, %s599
      %v601 = vld [vmem:[%s596] sm:$0xff]
      %v602 = vld [vmem:[%s596 + $0x8] sm:$0xff]
      %v603 = vld [vmem:[%s596 + $0x10] sm:$0xff]
      %v604 = vld [vmem:[%s596 + $0x18] sm:$0xff]
      %v605 = vld [vmem:[%s596 + $0x20] sm:$0xff]
      %v606 = vld [vmem:[%s596 + $0x28] sm:$0xff]
      %v607 = vld [vmem:[%s596 + $0x30] sm:$0xff]
      %v608 = vld [vmem:[%s596 + $0x38] sm:$0xff]
      %v609 = vld [vmem:[%s596 + $0x40] sm:$0xff]
      %v610 = vld [vmem:[%s596 + $0x48] sm:$0xff]
      %v611 = vld [vmem:[%s596 + $0x50] sm:$0xff]
      %v612 = vld [vmem:[%s596 + $0x58] sm:$0xff]
      %v613 = vld [vmem:[%s596 + $0x60] sm:$0xff]
      %v614 = vld [vmem:[%s596 + $0x68] sm:$0xff]
      %v615 = vld [vmem:[%s596 + $0x70] sm:$0xff]
      %v616 = vld [vmem:[%s596 + $0x78] sm:$0xff]
      %v617 = vld [vmem:[%s596 + $0x80] sm:$0xff]
      %v618 = vld [vmem:[%s596 + $0x88] sm:$0xff]
      %v619 = vld [vmem:[%s596 + $0x90] sm:$0xff]
      %v620 = vld [vmem:[%s596 + $0x98] sm:$0xff]
      %v621 = vld [vmem:[%s596 + $0xa0] sm:$0xff]
      %v622 = vld [vmem:[%s596 + $0xa8] sm:$0xff]
      %v623 = vld [vmem:[%s596 + $0xb0] sm:$0xff]
      %v624 = vld [vmem:[%s596 + $0xb8] sm:$0xff]
      %v625 = vld [vmem:[%s596 + $0xc0] sm:$0xff]
      %v626 = vld [vmem:[%s1] sm:$0xff]
      %v627 = vld [vmem:[%s1 + $0x8] sm:$0xff]
      %v628 = vld [vmem:[%s1 + $0x10] sm:$0xff]
      %v629 = vld [vmem:[%s1 + $0x18] sm:$0xff]
      %v630 = vld [vmem:[%s1 + $0x20] sm:$0xff]
      %v631 = vld [vmem:[%s1 + $0x28] sm:$0xff]
      %v632 = vld [vmem:[%s1 + $0x30] sm:$0xff]
      %v633 = vld [vmem:[%s1 + $0x38] sm:$0xff]
      %v634 = vld [vmem:[%s1 + $0x40] sm:$0xff]
      %v635 = vld [vmem:[%s1 + $0x48] sm:$0xff]
      %v636 = vld [vmem:[%s1 + $0x50] sm:$0xff]
      %v637 = vld [vmem:[%s1 + $0x58] sm:$0xff]
      %v638 = vld [vmem:[%s1 + $0x60] sm:$0xff]
      %v639 = vld [vmem:[%s1 + $0x68] sm:$0xff]
      %v640 = vld [vmem:[%s1 + $0x70] sm:$0xff]
      %v641 = vld [vmem:[%s1 + $0x78] sm:$0xff]
      %v642 = vld [vmem:[%s1 + $0x80] sm:$0xff]
      %v643 = vld [vmem:[%s1 + $0x88] sm:$0xff]
      %v644 = vld [vmem:[%s1 + $0x90] sm:$0xff]
      %v645 = vld [vmem:[%s1 + $0x98] sm:$0xff]
      %v646 = vld [vmem:[%s1 + $0xa0] sm:$0xff]
      %v647 = vld [vmem:[%s1 + $0xa8] sm:$0xff]
      %v648 = vld [vmem:[%s1 + $0xb0] sm:$0xff]
      %v649 = vld [vmem:[%s1 + $0xb8] sm:$0xff]
      %v650 = vld [vmem:[%s1 + $0xc0] sm:$0xff]
      %v651 = vld [vmem:[%s1 + $0xc8] sm:$0xff]
      %v652 = vld [vmem:[%s1 + $0xd0] sm:$0xff]
      %v653 = vld [vmem:[%s1 + $0xd8] sm:$0xff]
      %v654 = vld [vmem:[%s1 + $0xe0] sm:$0xff]
      %v655 = vld [vmem:[%s1 + $0xe8] sm:$0xff]
      %v656 = vld [vmem:[%s1 + $0xf0] sm:$0xff]
      %v657 = vld [vmem:[%s1 + $0xf8] sm:$0xff]
      %v658 = vld [vmem:[%s1 + $0x100] sm:$0xff]
      %v659 = vld [vmem:[%s1 + $0x108] sm:$0xff]
      %v660 = vld [vmem:[%s1 + $0x110] sm:$0xff]
      %v661 = vld [vmem:[%s1 + $0x118] sm:$0xff]
      %v662 = vld [vmem:[%s1 + $0x120] sm:$0xff]
      %v663 = vld [vmem:[%s1 + $0x128] sm:$0xff]
      %v664 = vld [vmem:[%s1 + $0x130] sm:$0xff]
      %v665 = vld [vmem:[%s1 + $0x138] sm:$0xff]
      %v666 = vld [vmem:[%s1 + $0x140] sm:$0xff]
      %v667 = vld [vmem:[%s1 + $0x148] sm:$0xff]
      %v668 = vld [vmem:[%s1 + $0x150] sm:$0xff]
      %v669 = vld [vmem:[%s1 + $0x158] sm:$0xff]
      %v670 = vld [vmem:[%s1 + $0x160] sm:$0xff]
      %v671 = vld [vmem:[%s1 + $0x168] sm:$0xff]
      %v672 = vld [vmem:[%s1 + $0x170] sm:$0xff]
      %v673 = vld [vmem:[%s1 + $0x178] sm:$0xff]
      %v674 = vld [vmem:[%s1 + $0x180] sm:$0xf]
      %v675 = vld [vmem:[%s1 + $0x188] sm:$0xf]
      %v676 = vld [vmem:[%s1 + $0x190] sm:$0xf]
      %v677 = vld [vmem:[%s1 + $0x198] sm:$0xf]
      %s678 = scalar_lea.vmem %s1, 416
      %v679 = vld [vmem:[%s678] sm:$0xff]
      %v680 = vld [vmem:[%s678 + $0x8] sm:$0xff]
      %v681 = vld [vmem:[%s678 + $0x10] sm:$0xff]
      %v682 = vld [vmem:[%s678 + $0x18] sm:$0xff]
      %v683 = vld [vmem:[%s678 + $0x20] sm:$0xff]
      %v684 = vld [vmem:[%s678 + $0x28] sm:$0xff]
      %v685 = vld [vmem:[%s678 + $0x30] sm:$0xff]
      %v686 = vld [vmem:[%s678 + $0x38] sm:$0xff]
      %v687 = vld [vmem:[%s678 + $0x40] sm:$0xff]
      %v688 = vld [vmem:[%s678 + $0x48] sm:$0xff]
      %v689 = vld [vmem:[%s678 + $0x50] sm:$0xff]
      %v690 = vld [vmem:[%s678 + $0x58] sm:$0xff]
      %v691 = vld [vmem:[%s678 + $0x60] sm:$0xff]
      %v692 = vld [vmem:[%s678 + $0x68] sm:$0xff]
      %v693 = vld [vmem:[%s678 + $0x70] sm:$0xff]
      %v694 = vld [vmem:[%s678 + $0x78] sm:$0xff]
      %v695 = vld [vmem:[%s678 + $0x80] sm:$0xff]
      %v696 = vld [vmem:[%s678 + $0x88] sm:$0xff]
      %v697 = vld [vmem:[%s678 + $0x90] sm:$0xff]
      %v698 = vld [vmem:[%s678 + $0x98] sm:$0xff]
      %v699 = vld [vmem:[%s678 + $0xa0] sm:$0xff]
      %v700 = vld [vmem:[%s678 + $0xa8] sm:$0xff]
      %v701 = vld [vmem:[%s678 + $0xb0] sm:$0xff]
      %v702 = vld [vmem:[%s678 + $0xb8] sm:$0xff]
      %v703 = vld [vmem:[%s678 + $0xc0] sm:$0xff]
      %v704 = vld [vmem:[%s678 + $0xc8] sm:$0xff]
      %v705 = vld [vmem:[%s678 + $0xd0] sm:$0xff]
      %v706 = vld [vmem:[%s678 + $0xd8] sm:$0xff]
      %v707 = vld [vmem:[%s678 + $0xe0] sm:$0xff]
      %v708 = vld [vmem:[%s678 + $0xe8] sm:$0xff]
      %v709 = vld [vmem:[%s678 + $0xf0] sm:$0xff]
      %v710 = vld [vmem:[%s678 + $0xf8] sm:$0xff]
      %v711 = vld [vmem:[%s678 + $0x100] sm:$0xff]
      %v712 = vld [vmem:[%s678 + $0x108] sm:$0xff]
      %v713 = vld [vmem:[%s678 + $0x110] sm:$0xff]
      %v714 = vld [vmem:[%s678 + $0x118] sm:$0xff]
      %v715 = vld [vmem:[%s678 + $0x120] sm:$0xff]
      %v716 = vld [vmem:[%s678 + $0x128] sm:$0xff]
      %v717 = vld [vmem:[%s678 + $0x130] sm:$0xff]
      %v718 = vld [vmem:[%s678 + $0x138] sm:$0xff]
      %v719 = vld [vmem:[%s678 + $0x140] sm:$0xff]
      %v720 = vld [vmem:[%s678 + $0x148] sm:$0xff]
      %v721 = vld [vmem:[%s678 + $0x150] sm:$0xff]
      %v722 = vld [vmem:[%s678 + $0x158] sm:$0xff]
      %v723 = vld [vmem:[%s678 + $0x160] sm:$0xff]
      %v724 = vld [vmem:[%s678 + $0x168] sm:$0xff]
      %v725 = vld [vmem:[%s678 + $0x170] sm:$0xff]
      %v726 = vld [vmem:[%s678 + $0x178] sm:$0xff]
      %v727 = vld [vmem:[%s678 + $0x180] sm:$0xf]
      %v728 = vld [vmem:[%s678 + $0x188] sm:$0xf]
      %v729 = vld [vmem:[%s678 + $0x190] sm:$0xf]
      %v730 = vld [vmem:[%s678 + $0x198] sm:$0xf]
      %vm756 = vcmask 1046528
      %v757 = vrot.slane %v601, 1
      %v758 = vrot.slane %v602, 1
      %v759 = vsel %vm756, %v757, %v758
      %v760 = vrot.slane %v603, 1
      %v761 = vsel %vm756, %v758, %v760
      %v762 = vrot.slane %v604, 1
      %v763 = vsel %vm756, %v760, %v762
      %v764 = vrot.slane %v605, 1
      %v765 = vsel %vm756, %v762, %v764
      %v766 = vrot.slane %v606, 1
      %v767 = vsel %vm756, %v764, %v766
      %v768 = vrot.slane %v607, 1
      %v769 = vsel %vm756, %v766, %v768
      %v770 = vrot.slane %v608, 1
      %v771 = vsel %vm756, %v768, %v770
      %v772 = vrot.slane %v609, 1
      %v773 = vsel %vm756, %v770, %v772
      %v774 = vrot.slane %v610, 1
      %v775 = vsel %vm756, %v772, %v774
      %v776 = vrot.slane %v611, 1
      %v777 = vsel %vm756, %v774, %v776
      %v778 = vrot.slane %v612, 1
      %v779 = vsel %vm756, %v776, %v778
      %v780 = vrot.slane %v613, 1
      %v781 = vsel %vm756, %v778, %v780
      %v782 = vrot.slane %v614, 1
      %v783 = vsel %vm756, %v780, %v782
      %v784 = vrot.slane %v615, 1
      %v785 = vsel %vm756, %v782, %v784
      %v786 = vrot.slane %v616, 1
      %v787 = vsel %vm756, %v784, %v786
      %v788 = vrot.slane %v617, 1
      %v789 = vsel %vm756, %v786, %v788
      %v790 = vrot.slane %v618, 1
      %v791 = vsel %vm756, %v788, %v790
      %v792 = vrot.slane %v619, 1
      %v793 = vsel %vm756, %v790, %v792
      %v794 = vrot.slane %v620, 1
      %v795 = vsel %vm756, %v792, %v794
      %v796 = vrot.slane %v621, 1
      %v797 = vsel %vm756, %v794, %v796
      %v798 = vrot.slane %v622, 1
      %v799 = vsel %vm756, %v796, %v798
      %v800 = vrot.slane %v623, 1
      %v801 = vsel %vm756, %v798, %v800
      %v802 = vrot.slane %v624, 1
      %v803 = vsel %vm756, %v800, %v802
      %v804 = vrot.slane %v625, 1
      %v805 = vsel %vm756, %v802, %v804
      %vm806 = vcmask 818176
      %v807 = vsel %vm806, %v759, 0
      %v809 = vsel %vm806, %v761, 0
      %v811 = vsel %vm806, %v763, 0
      %v813 = vsel %vm806, %v765, 0
      %v815 = vsel %vm806, %v767, 0
      %v817 = vsel %vm806, %v769, 0
      %v819 = vsel %vm806, %v771, 0
      %v821 = vsel %vm806, %v773, 0
      %v823 = vsel %vm806, %v775, 0
      %v825 = vsel %vm806, %v777, 0
      %v827 = vsel %vm806, %v779, 0
      %v829 = vsel %vm806, %v781, 0
      %v831 = vsel %vm806, %v783, 0
      %v833 = vsel %vm806, %v785, 0
      %v835 = vsel %vm806, %v787, 0
      %v837 = vsel %vm806, %v789, 0
      %v839 = vsel %vm806, %v791, 0
      %v841 = vsel %vm806, %v793, 0
      %v843 = vsel %vm806, %v795, 0
      %v845 = vsel %vm806, %v797, 0
      %v847 = vsel %vm806, %v799, 0
      %v849 = vsel %vm806, %v801, 0
      %v851 = vsel %vm806, %v803, 0
      %v853 = vsel %vm806, %v805, 0
      %v855 = vsel %vm806, %v804, 0
      %vm857 = vcmask 1043456
      %v859 = vsel %vm857, %v727, 0
      %v862 = vsel %vm857, %v728, 0
      %v865 = vsel %vm857, %v729, 0
      %v868 = vsel %vm857, %v730, 0
      %870 = vmatprep.subr.mxu0 0.0
      %871 = vmatpush1.msra.mxu0 0.0
      %872 = vmatprep.subr.mxu0 0.0
      %873 = vmatpush1.msra.mxu0 0.0
      %874 = vmatprep.subr.mxu0 0.0
      %875 = vmatpush1.msra.mxu0 0.0
      %876 = vmatprep.subr.mxu0 %v862
      %877 = vmatpush1.msra.mxu0 %v859
      %878 = vmatprep.subr.mxu0 %v724
      %879 = vmatpush1.msra.mxu0 %v723
      %880 = vmatprep.subr.mxu0 %v720
      %881 = vmatpush1.msra.mxu0 %v719
      %882 = vmatprep.subr.mxu0 %v716
      %883 = vmatpush1.msra.mxu0 %v715
      %884 = vmatprep.subr.mxu0 %v712
      %885 = vmatpush1.msra.mxu0 %v711
      %886 = vmatprep.subr.mxu0 %v708
      %887 = vmatpush1.msra.mxu0 %v707
      %888 = vmatprep.subr.mxu0 %v704
      %889 = vmatpush1.msra.mxu0 %v703
      %890 = vmatprep.subr.mxu0 %v700
      %891 = vmatpush1.msra.mxu0 %v699
      %892 = vmatprep.subr.mxu0 %v696
      %893 = vmatpush1.msra.mxu0 %v695
      %894 = vmatprep.subr.mxu0 %v692
      %895 = vmatpush1.msra.mxu0 %v691
      %896 = vmatprep.subr.mxu0 %v688
      %897 = vmatpush1.msra.mxu0 %v687
      %898 = vmatprep.subr.mxu0 %v684
      %899 = vmatpush1.msra.mxu0 %v683
      %900 = vmatprep.subr.mxu0 %v680
      %901 = vmatpush1.msra.mxu0 %v679
      %902 = vmatprep.subr.mxu0 0.0
      %903 = vmatpush2.msra.mxu0 0.0
      %904 = vmatprep.subr.mxu0 0.0
      %905 = vmatpush2.msra.mxu0 0.0
      %906 = vmatprep.subr.mxu0 0.0
      %907 = vmatpush2.msra.mxu0 0.0
      %908 = vmatprep.subr.mxu0 0.0
      %909 = vmatpush2.msra.mxu0 0.0
      %910 = vmatprep.subr.mxu0 0.0
      %911 = vmatpush2.msra.mxu0 0.0
      %912 = vmatprep.subr.mxu0 0.0
      %913 = vmatpush2.msra.mxu0 0.0
      %914 = vmatprep.subr.mxu0 0.0
      %915 = vmatpush2.msra.mxu0 0.0
      %916 = vmatprep.subr.mxu0 0.0
      %917 = vmatpush2.msra.mxu0 0.0
      %918 = vmatprep.subr.mxu0 0.0
      %919 = vmatpush2.msra.mxu0 0.0
      %920 = vmatprep.subr.mxu0 0.0
      %921 = vmatpush2.msra.mxu0 0.0
      %922 = vmatprep.subr.mxu0 0.0
      %923 = vmatpush2.msra.mxu0 0.0
      %924 = vmatprep.subr.mxu0 0.0
      %925 = vmatpush2.msra.mxu0 0.0
      %926 = vmatprep.subr.mxu0 0.0
      %927 = vmatpush2.msra.mxu0 0.0
      %928 = vmatprep.subr.mxu0 0.0
      %929 = vmatpush2.msra.mxu0 0.0
      %930 = vmatprep.subr.mxu0 0.0
      %931 = vmatpush2.msra.mxu0 0.0
      %932 = vmatprep.subr.mxu0 0.0
      %933 = vmatpush2.msra.mxu0 0.0
      %934 = vmatprep.mubr.f32.mxu0 0.0
      %935 = vmatmul.mubr.f32.gmra.mxu0 %v807
      %v936 = vpop.f32.mrf.mxu0
      %v937 = vadd.f32 0.0, %v936
      %v938 = vpop.f32.mrf.mxu0
      %v939 = vadd.f32 0.0, %v938
      %940 = vmatprep.mubr.f32.mxu0 0.0
      %941 = vmatmul.mubr.f32.gmra.mxu0 %v809
      %v942 = vpop.f32.mrf.mxu0
      %v943 = vadd.f32 0.0, %v942
      %v944 = vpop.f32.mrf.mxu0
      %v945 = vadd.f32 0.0, %v944
      %946 = vmatprep.mubr.f32.mxu0 0.0
      %947 = vmatmul.mubr.f32.gmra.mxu0 %v811
      %v948 = vpop.f32.mrf.mxu0
      %v949 = vadd.f32 0.0, %v948
      %v950 = vpop.f32.mrf.mxu0
      %v951 = vadd.f32 0.0, %v950
      %952 = vmatprep.mubr.f32.mxu0 0.0
      %953 = vmatmul.mubr.f32.gmra.mxu0 %v813
      %v954 = vpop.f32.mrf.mxu0
      %v955 = vadd.f32 0.0, %v954
      %v956 = vpop.f32.mrf.mxu0
      %v957 = vadd.f32 0.0, %v956
      %958 = vmatprep.mubr.f32.mxu0 0.0
      %959 = vmatmul.mubr.f32.gmra.mxu0 %v815
      %v960 = vpop.f32.mrf.mxu0
      %v961 = vadd.f32 0.0, %v960
      %v962 = vpop.f32.mrf.mxu0
      %v963 = vadd.f32 0.0, %v962
      %964 = vmatprep.mubr.f32.mxu0 0.0
      %965 = vmatmul.mubr.f32.gmra.mxu0 %v817
      %v966 = vpop.f32.mrf.mxu0
      %v967 = vadd.f32 0.0, %v966
      %v968 = vpop.f32.mrf.mxu0
      %v969 = vadd.f32 0.0, %v968
      %970 = vmatprep.mubr.f32.mxu0 0.0
      %971 = vmatmul.mubr.f32.gmra.mxu0 %v819
      %v972 = vpop.f32.mrf.mxu0
      %v973 = vadd.f32 0.0, %v972
      %v974 = vpop.f32.mrf.mxu0
      %v975 = vadd.f32 0.0, %v974
      %976 = vmatprep.mubr.f32.mxu0 0.0
      %977 = vmatmul.mubr.f32.gmra.mxu0 %v821
      %v978 = vpop.f32.mrf.mxu0
      %v979 = vadd.f32 0.0, %v978
      %v980 = vpop.f32.mrf.mxu0
      %v981 = vadd.f32 0.0, %v980
      %982 = vmatprep.mubr.f32.mxu0 0.0
      %983 = vmatmul.mubr.f32.gmra.mxu0 %v823
      %v984 = vpop.f32.mrf.mxu0
      %v985 = vadd.f32 0.0, %v984
      %v986 = vpop.f32.mrf.mxu0
      %v987 = vadd.f32 0.0, %v986
      %988 = vmatprep.mubr.f32.mxu0 0.0
      %989 = vmatmul.mubr.f32.gmra.mxu0 %v825
      %v990 = vpop.f32.mrf.mxu0
      %v991 = vadd.f32 0.0, %v990
      %v992 = vpop.f32.mrf.mxu0
      %v993 = vadd.f32 0.0, %v992
      %994 = vmatprep.mubr.f32.mxu0 0.0
      %995 = vmatmul.mubr.f32.gmra.mxu0 %v827
      %v996 = vpop.f32.mrf.mxu0
      %v997 = vadd.f32 0.0, %v996
      %v998 = vpop.f32.mrf.mxu0
      %v999 = vadd.f32 0.0, %v998
      %1000 = vmatprep.mubr.f32.mxu0 0.0
      %1001 = vmatmul.mubr.f32.gmra.mxu0 %v829
      %v1002 = vpop.f32.mrf.mxu0
      %v1003 = vadd.f32 0.0, %v1002
      %v1004 = vpop.f32.mrf.mxu0
      %v1005 = vadd.f32 0.0, %v1004
      %1006 = vmatprep.mubr.f32.mxu0 0.0
      %1007 = vmatmul.mubr.f32.gmra.mxu0 %v831
      %v1008 = vpop.f32.mrf.mxu0
      %v1009 = vadd.f32 0.0, %v1008
      %v1010 = vpop.f32.mrf.mxu0
      %v1011 = vadd.f32 0.0, %v1010
      %1012 = vmatprep.mubr.f32.mxu0 0.0
      %1013 = vmatmul.mubr.f32.gmra.mxu0 %v833
      %v1014 = vpop.f32.mrf.mxu0
      %v1015 = vadd.f32 0.0, %v1014
      %v1016 = vpop.f32.mrf.mxu0
      %v1017 = vadd.f32 0.0, %v1016
      %1018 = vmatprep.mubr.f32.mxu0 0.0
      %1019 = vmatmul.mubr.f32.gmra.mxu0 %v835
      %v1020 = vpop.f32.mrf.mxu0
      %v1021 = vadd.f32 0.0, %v1020
      %v1022 = vpop.f32.mrf.mxu0
      %v1023 = vadd.f32 0.0, %v1022
      %1024 = vmatprep.mubr.f32.mxu0 0.0
      %1025 = vmatmul.mubr.f32.gmra.mxu0 %v837
      %v1026 = vpop.f32.mrf.mxu0
      %v1027 = vadd.f32 0.0, %v1026
      %v1028 = vpop.f32.mrf.mxu0
      %v1029 = vadd.f32 0.0, %v1028
      %1030 = vmatprep.mubr.f32.mxu0 0.0
      %1031 = vmatmul.mubr.f32.gmra.mxu0 %v839
      %v1032 = vpop.f32.mrf.mxu0
      %v1033 = vadd.f32 0.0, %v1032
      %v1034 = vpop.f32.mrf.mxu0
      %v1035 = vadd.f32 0.0, %v1034
      %1036 = vmatprep.mubr.f32.mxu0 0.0
      %1037 = vmatmul.mubr.f32.gmra.mxu0 %v841
      %v1038 = vpop.f32.mrf.mxu0
      %v1039 = vadd.f32 0.0, %v1038
      %v1040 = vpop.f32.mrf.mxu0
      %v1041 = vadd.f32 0.0, %v1040
      %1042 = vmatprep.mubr.f32.mxu0 0.0
      %1043 = vmatmul.mubr.f32.gmra.mxu0 %v843
      %v1044 = vpop.f32.mrf.mxu0
      %v1045 = vadd.f32 0.0, %v1044
      %v1046 = vpop.f32.mrf.mxu0
      %v1047 = vadd.f32 0.0, %v1046
      %1048 = vmatprep.mubr.f32.mxu0 0.0
      %1049 = vmatmul.mubr.f32.gmra.mxu0 %v845
      %v1050 = vpop.f32.mrf.mxu0
      %v1051 = vadd.f32 0.0, %v1050
      %v1052 = vpop.f32.mrf.mxu0
      %v1053 = vadd.f32 0.0, %v1052
      %1054 = vmatprep.mubr.f32.mxu0 0.0
      %1055 = vmatmul.mubr.f32.gmra.mxu0 %v847
      %v1056 = vpop.f32.mrf.mxu0
      %v1057 = vadd.f32 0.0, %v1056
      %v1058 = vpop.f32.mrf.mxu0
      %v1059 = vadd.f32 0.0, %v1058
      %1060 = vmatprep.mubr.f32.mxu0 0.0
      %1061 = vmatmul.mubr.f32.gmra.mxu0 %v849
      %v1062 = vpop.f32.mrf.mxu0
      %v1063 = vadd.f32 0.0, %v1062
      %v1064 = vpop.f32.mrf.mxu0
      %v1065 = vadd.f32 0.0, %v1064
      %1066 = vmatprep.mubr.f32.mxu0 0.0
      %1067 = vmatmul.mubr.f32.gmra.mxu0 %v851
      %v1068 = vpop.f32.mrf.mxu0
      %v1069 = vadd.f32 0.0, %v1068
      %v1070 = vpop.f32.mrf.mxu0
      %v1071 = vadd.f32 0.0, %v1070
      %1072 = vmatprep.mubr.f32.mxu0 0.0
      %1073 = vmatmul.mubr.f32.gmra.mxu0 %v853
      %v1074 = vpop.f32.mrf.mxu0
      %v1075 = vadd.f32 0.0, %v1074
      %v1076 = vpop.f32.mrf.mxu0
      %v1077 = vadd.f32 0.0, %v1076
      %1078 = vmatprep.mubr.f32.mxu0 0.0
      %1079 = vmatmul.mubr.f32.gmra.mxu0 %v855
      %v1080 = vpop.f32.mrf.mxu0
      %v1081 = vadd.f32 0.0, %v1080
      %v1082 = vpop.f32.mrf.mxu0
      %v1083 = vadd.f32 0.0, %v1082
      %1084 = vdwg.mxu0
      %1085 = vmatprep.subr.mxu0 0.0
      %1086 = vmatpush1.msra.mxu0 0.0
      %1087 = vmatprep.subr.mxu0 0.0
      %1088 = vmatpush1.msra.mxu0 0.0
      %1089 = vmatprep.subr.mxu0 0.0
      %1090 = vmatpush1.msra.mxu0 0.0
      %1091 = vmatprep.subr.mxu0 %v868
      %1092 = vmatpush1.msra.mxu0 %v865
      %1093 = vmatprep.subr.mxu0 %v726
      %1094 = vmatpush1.msra.mxu0 %v725
      %1095 = vmatprep.subr.mxu0 %v722
      %1096 = vmatpush1.msra.mxu0 %v721
      %1097 = vmatprep.subr.mxu0 %v718
      %1098 = vmatpush1.msra.mxu0 %v717
      %1099 = vmatprep.subr.mxu0 %v714
      %1100 = vmatpush1.msra.mxu0 %v713
      %1101 = vmatprep.subr.mxu0 %v710
      %1102 = vmatpush1.msra.mxu0 %v709
      %1103 = vmatprep.subr.mxu0 %v706
      %1104 = vmatpush1.msra.mxu0 %v705
      %1105 = vmatprep.subr.mxu0 %v702
      %1106 = vmatpush1.msra.mxu0 %v701
      %1107 = vmatprep.subr.mxu0 %v698
      %1108 = vmatpush1.msra.mxu0 %v697
      %1109 = vmatprep.subr.mxu0 %v694
      %1110 = vmatpush1.msra.mxu0 %v693
      %1111 = vmatprep.subr.mxu0 %v690
      %1112 = vmatpush1.msra.mxu0 %v689
      %1113 = vmatprep.subr.mxu0 %v686
      %1114 = vmatpush1.msra.mxu0 %v685
      %1115 = vmatprep.subr.mxu0 %v682
      %1116 = vmatpush1.msra.mxu0 %v681
      %1117 = vmatprep.subr.mxu0 0.0
      %1118 = vmatpush2.msra.mxu0 0.0
      %1119 = vmatprep.subr.mxu0 0.0
      %1120 = vmatpush2.msra.mxu0 0.0
      %1121 = vmatprep.subr.mxu0 0.0
      %1122 = vmatpush2.msra.mxu0 0.0
      %1123 = vmatprep.subr.mxu0 0.0
      %1124 = vmatpush2.msra.mxu0 0.0
      %1125 = vmatprep.subr.mxu0 0.0
      %1126 = vmatpush2.msra.mxu0 0.0
      %1127 = vmatprep.subr.mxu0 0.0
      %1128 = vmatpush2.msra.mxu0 0.0
      %1129 = vmatprep.subr.mxu0 0.0
      %1130 = vmatpush2.msra.mxu0 0.0
      %1131 = vmatprep.subr.mxu0 0.0
      %1132 = vmatpush2.msra.mxu0 0.0
      %1133 = vmatprep.subr.mxu0 0.0
      %1134 = vmatpush2.msra.mxu0 0.0
      %1135 = vmatprep.subr.mxu0 0.0
      %1136 = vmatpush2.msra.mxu0 0.0
      %1137 = vmatprep.subr.mxu0 0.0
      %1138 = vmatpush2.msra.mxu0 0.0
      %1139 = vmatprep.subr.mxu0 0.0
      %1140 = vmatpush2.msra.mxu0 0.0
      %1141 = vmatprep.subr.mxu0 0.0
      %1142 = vmatpush2.msra.mxu0 0.0
      %1143 = vmatprep.subr.mxu0 0.0
      %1144 = vmatpush2.msra.mxu0 0.0
      %1145 = vmatprep.subr.mxu0 0.0
      %1146 = vmatpush2.msra.mxu0 0.0
      %1147 = vmatprep.subr.mxu0 0.0
      %1148 = vmatpush2.msra.mxu0 0.0
      %1149 = vmatprep.mubr.f32.mxu0 0.0
      %1150 = vmatmul.mubr.f32.gmra.mxu0 %v807
      %v1151 = vpop.f32.mrf.mxu0
      %v1152 = vadd.f32 0.0, %v1151
      %v1153 = vpop.f32.mrf.mxu0
      %v1154 = vadd.f32 0.0, %v1153
      %1155 = vmatprep.mubr.f32.mxu0 0.0
      %1156 = vmatmul.mubr.f32.gmra.mxu0 %v809
      %v1157 = vpop.f32.mrf.mxu0
      %v1158 = vadd.f32 0.0, %v1157
      %v1159 = vpop.f32.mrf.mxu0
      %v1160 = vadd.f32 0.0, %v1159
      %1161 = vmatprep.mubr.f32.mxu0 0.0
      %1162 = vmatmul.mubr.f32.gmra.mxu0 %v811
      %v1163 = vpop.f32.mrf.mxu0
      %v1164 = vadd.f32 0.0, %v1163
      %v1165 = vpop.f32.mrf.mxu0
      %v1166 = vadd.f32 0.0, %v1165
      %1167 = vmatprep.mubr.f32.mxu0 0.0
      %1168 = vmatmul.mubr.f32.gmra.mxu0 %v813
      %v1169 = vpop.f32.mrf.mxu0
      %v1170 = vadd.f32 0.0, %v1169
      %v1171 = vpop.f32.mrf.mxu0
      %v1172 = vadd.f32 0.0, %v1171
      %1173 = vmatprep.mubr.f32.mxu0 0.0
      %1174 = vmatmul.mubr.f32.gmra.mxu0 %v815
      %v1175 = vpop.f32.mrf.mxu0
      %v1176 = vadd.f32 0.0, %v1175
      %v1177 = vpop.f32.mrf.mxu0
      %v1178 = vadd.f32 0.0, %v1177
      %1179 = vmatprep.mubr.f32.mxu0 0.0
      %1180 = vmatmul.mubr.f32.gmra.mxu0 %v817
      %v1181 = vpop.f32.mrf.mxu0
      %v1182 = vadd.f32 0.0, %v1181
      %v1183 = vpop.f32.mrf.mxu0
      %v1184 = vadd.f32 0.0, %v1183
      %1185 = vmatprep.mubr.f32.mxu0 0.0
      %1186 = vmatmul.mubr.f32.gmra.mxu0 %v819
      %v1187 = vpop.f32.mrf.mxu0
      %v1188 = vadd.f32 0.0, %v1187
      %v1189 = vpop.f32.mrf.mxu0
      %v1190 = vadd.f32 0.0, %v1189
      %1191 = vmatprep.mubr.f32.mxu0 0.0
      %1192 = vmatmul.mubr.f32.gmra.mxu0 %v821
      %v1193 = vpop.f32.mrf.mxu0
      %v1194 = vadd.f32 0.0, %v1193
      %v1195 = vpop.f32.mrf.mxu0
      %v1196 = vadd.f32 0.0, %v1195
      %1197 = vmatprep.mubr.f32.mxu0 0.0
      %1198 = vmatmul.mubr.f32.gmra.mxu0 %v823
      %v1199 = vpop.f32.mrf.mxu0
      %v1200 = vadd.f32 0.0, %v1199
      %v1201 = vpop.f32.mrf.mxu0
      %v1202 = vadd.f32 0.0, %v1201
      %1203 = vmatprep.mubr.f32.mxu0 0.0
      %1204 = vmatmul.mubr.f32.gmra.mxu0 %v825
      %v1205 = vpop.f32.mrf.mxu0
      %v1206 = vadd.f32 0.0, %v1205
      %v1207 = vpop.f32.mrf.mxu0
      %v1208 = vadd.f32 0.0, %v1207
      %1209 = vmatprep.mubr.f32.mxu0 0.0
      %1210 = vmatmul.mubr.f32.gmra.mxu0 %v827
      %v1211 = vpop.f32.mrf.mxu0
      %v1212 = vadd.f32 0.0, %v1211
      %v1213 = vpop.f32.mrf.mxu0
      %v1214 = vadd.f32 0.0, %v1213
      %1215 = vmatprep.mubr.f32.mxu0 0.0
      %1216 = vmatmul.mubr.f32.gmra.mxu0 %v829
      %v1217 = vpop.f32.mrf.mxu0
      %v1218 = vadd.f32 0.0, %v1217
      %v1219 = vpop.f32.mrf.mxu0
      %v1220 = vadd.f32 0.0, %v1219
      %1221 = vmatprep.mubr.f32.mxu0 0.0
      %1222 = vmatmul.mubr.f32.gmra.mxu0 %v831
      %v1223 = vpop.f32.mrf.mxu0
      %v1224 = vadd.f32 0.0, %v1223
      %v1225 = vpop.f32.mrf.mxu0
      %v1226 = vadd.f32 0.0, %v1225
      %1227 = vmatprep.mubr.f32.mxu0 0.0
      %1228 = vmatmul.mubr.f32.gmra.mxu0 %v833
      %v1229 = vpop.f32.mrf.mxu0
      %v1230 = vadd.f32 0.0, %v1229
      %v1231 = vpop.f32.mrf.mxu0
      %v1232 = vadd.f32 0.0, %v1231
      %1233 = vmatprep.mubr.f32.mxu0 0.0
      %1234 = vmatmul.mubr.f32.gmra.mxu0 %v835
      %v1235 = vpop.f32.mrf.mxu0
      %v1236 = vadd.f32 0.0, %v1235
      %v1237 = vpop.f32.mrf.mxu0
      %v1238 = vadd.f32 0.0, %v1237
      %1239 = vmatprep.mubr.f32.mxu0 0.0
      %1240 = vmatmul.mubr.f32.gmra.mxu0 %v837
      %v1241 = vpop.f32.mrf.mxu0
      %v1242 = vadd.f32 0.0, %v1241
      %v1243 = vpop.f32.mrf.mxu0
      %v1244 = vadd.f32 0.0, %v1243
      %1245 = vmatprep.mubr.f32.mxu0 0.0
      %1246 = vmatmul.mubr.f32.gmra.mxu0 %v839
      %v1247 = vpop.f32.mrf.mxu0
      %v1248 = vadd.f32 0.0, %v1247
      %v1249 = vpop.f32.mrf.mxu0
      %v1250 = vadd.f32 0.0, %v1249
      %1251 = vmatprep.mubr.f32.mxu0 0.0
      %1252 = vmatmul.mubr.f32.gmra.mxu0 %v841
      %v1253 = vpop.f32.mrf.mxu0
      %v1254 = vadd.f32 0.0, %v1253
      %v1255 = vpop.f32.mrf.mxu0
      %v1256 = vadd.f32 0.0, %v1255
      %1257 = vmatprep.mubr.f32.mxu0 0.0
      %1258 = vmatmul.mubr.f32.gmra.mxu0 %v843
      %v1259 = vpop.f32.mrf.mxu0
      %v1260 = vadd.f32 0.0, %v1259
      %v1261 = vpop.f32.mrf.mxu0
      %v1262 = vadd.f32 0.0, %v1261
      %1263 = vmatprep.mubr.f32.mxu0 0.0
      %1264 = vmatmul.mubr.f32.gmra.mxu0 %v845
      %v1265 = vpop.f32.mrf.mxu0
      %v1266 = vadd.f32 0.0, %v1265
      %v1267 = vpop.f32.mrf.mxu0
      %v1268 = vadd.f32 0.0, %v1267
      %1269 = vmatprep.mubr.f32.mxu0 0.0
      %1270 = vmatmul.mubr.f32.gmra.mxu0 %v847
      %v1271 = vpop.f32.mrf.mxu0
      %v1272 = vadd.f32 0.0, %v1271
      %v1273 = vpop.f32.mrf.mxu0
      %v1274 = vadd.f32 0.0, %v1273
      %1275 = vmatprep.mubr.f32.mxu0 0.0
      %1276 = vmatmul.mubr.f32.gmra.mxu0 %v849
      %v1277 = vpop.f32.mrf.mxu0
      %v1278 = vadd.f32 0.0, %v1277
      %v1279 = vpop.f32.mrf.mxu0
      %v1280 = vadd.f32 0.0, %v1279
      %1281 = vmatprep.mubr.f32.mxu0 0.0
      %1282 = vmatmul.mubr.f32.gmra.mxu0 %v851
      %v1283 = vpop.f32.mrf.mxu0
      %v1284 = vadd.f32 0.0, %v1283
      %v1285 = vpop.f32.mrf.mxu0
      %v1286 = vadd.f32 0.0, %v1285
      %1287 = vmatprep.mubr.f32.mxu0 0.0
      %1288 = vmatmul.mubr.f32.gmra.mxu0 %v853
      %v1289 = vpop.f32.mrf.mxu0
      %v1290 = vadd.f32 0.0, %v1289
      %v1291 = vpop.f32.mrf.mxu0
      %v1292 = vadd.f32 0.0, %v1291
      %1293 = vmatprep.mubr.f32.mxu0 0.0
      %1294 = vmatmul.mubr.f32.gmra.mxu0 %v855
      %v1295 = vpop.f32.mrf.mxu0
      %v1296 = vadd.f32 0.0, %v1295
      %v1297 = vpop.f32.mrf.mxu0
      %v1298 = vadd.f32 0.0, %v1297
      %1299 = vdwg.mxu0
      %v1300 = vsel %vm806, %v601, 0
      %v1302 = vsel %vm806, %v602, 0
      %v1304 = vsel %vm806, %v603, 0
      %v1306 = vsel %vm806, %v604, 0
      %v1308 = vsel %vm806, %v605, 0
      %v1310 = vsel %vm806, %v606, 0
      %v1312 = vsel %vm806, %v607, 0
      %v1314 = vsel %vm806, %v608, 0
      %v1316 = vsel %vm806, %v609, 0
      %v1318 = vsel %vm806, %v610, 0
      %v1320 = vsel %vm806, %v611, 0
      %v1322 = vsel %vm806, %v612, 0
      %v1324 = vsel %vm806, %v613, 0
      %v1326 = vsel %vm806, %v614, 0
      %v1328 = vsel %vm806, %v615, 0
      %v1330 = vsel %vm806, %v616, 0
      %v1332 = vsel %vm806, %v617, 0
      %v1334 = vsel %vm806, %v618, 0
      %v1336 = vsel %vm806, %v619, 0
      %v1338 = vsel %vm806, %v620, 0
      %v1340 = vsel %vm806, %v621, 0
      %v1342 = vsel %vm806, %v622, 0
      %v1344 = vsel %vm806, %v623, 0
      %v1346 = vsel %vm806, %v624, 0
      %v1348 = vsel %vm806, %v625, 0
      %v1351 = vsel %vm857, %v674, 0
      %v1354 = vsel %vm857, %v675, 0
      %v1357 = vsel %vm857, %v676, 0
      %v1360 = vsel %vm857, %v677, 0
      %1362 = vmatprep.subr.mxu0 0.0
      %1363 = vmatpush1.msra.mxu0 0.0
      %1364 = vmatprep.subr.mxu0 0.0
      %1365 = vmatpush1.msra.mxu0 0.0
      %1366 = vmatprep.subr.mxu0 0.0
      %1367 = vmatpush1.msra.mxu0 0.0
      %1368 = vmatprep.subr.mxu0 %v1354
      %1369 = vmatpush1.msra.mxu0 %v1351
      %1370 = vmatprep.subr.mxu0 %v671
      %1371 = vmatpush1.msra.mxu0 %v670
      %1372 = vmatprep.subr.mxu0 %v667
      %1373 = vmatpush1.msra.mxu0 %v666
      %1374 = vmatprep.subr.mxu0 %v663
      %1375 = vmatpush1.msra.mxu0 %v662
      %1376 = vmatprep.subr.mxu0 %v659
      %1377 = vmatpush1.msra.mxu0 %v658
      %1378 = vmatprep.subr.mxu0 %v655
      %1379 = vmatpush1.msra.mxu0 %v654
      %1380 = vmatprep.subr.mxu0 %v651
      %1381 = vmatpush1.msra.mxu0 %v650
      %1382 = vmatprep.subr.mxu0 %v647
      %1383 = vmatpush1.msra.mxu0 %v646
      %1384 = vmatprep.subr.mxu0 %v643
      %1385 = vmatpush1.msra.mxu0 %v642
      %1386 = vmatprep.subr.mxu0 %v639
      %1387 = vmatpush1.msra.mxu0 %v638
      %1388 = vmatprep.subr.mxu0 %v635
      %1389 = vmatpush1.msra.mxu0 %v634
      %1390 = vmatprep.subr.mxu0 %v631
      %1391 = vmatpush1.msra.mxu0 %v630
      %1392 = vmatprep.subr.mxu0 %v627
      %1393 = vmatpush1.msra.mxu0 %v626
      %1394 = vmatprep.subr.mxu0 0.0
      %1395 = vmatpush2.msra.mxu0 0.0
      %1396 = vmatprep.subr.mxu0 0.0
      %1397 = vmatpush2.msra.mxu0 0.0
      %1398 = vmatprep.subr.mxu0 0.0
      %1399 = vmatpush2.msra.mxu0 0.0
      %1400 = vmatprep.subr.mxu0 0.0
      %1401 = vmatpush2.msra.mxu0 0.0
      %1402 = vmatprep.subr.mxu0 0.0
      %1403 = vmatpush2.msra.mxu0 0.0
      %1404 = vmatprep.subr.mxu0 0.0
      %1405 = vmatpush2.msra.mxu0 0.0
      %1406 = vmatprep.subr.mxu0 0.0
      %1407 = vmatpush2.msra.mxu0 0.0
      %1408 = vmatprep.subr.mxu0 0.0
      %1409 = vmatpush2.msra.mxu0 0.0
      %1410 = vmatprep.subr.mxu0 0.0
      %1411 = vmatpush2.msra.mxu0 0.0
      %1412 = vmatprep.subr.mxu0 0.0
      %1413 = vmatpush2.msra.mxu0 0.0
      %1414 = vmatprep.subr.mxu0 0.0
      %1415 = vmatpush2.msra.mxu0 0.0
      %1416 = vmatprep.subr.mxu0 0.0
      %1417 = vmatpush2.msra.mxu0 0.0
      %1418 = vmatprep.subr.mxu0 0.0
      %1419 = vmatpush2.msra.mxu0 0.0
      %1420 = vmatprep.subr.mxu0 0.0
      %1421 = vmatpush2.msra.mxu0 0.0
      %1422 = vmatprep.subr.mxu0 0.0
      %1423 = vmatpush2.msra.mxu0 0.0
      %1424 = vmatprep.subr.mxu0 0.0
      %1425 = vmatpush2.msra.mxu0 0.0
      %1426 = vmatprep.mubr.f32.mxu0 0.0
      %1427 = vmatmul.mubr.f32.gmra.mxu0 %v1300
      %v1428 = vpop.f32.mrf.mxu0
      %v1429 = vadd.f32 %v937, %v1428
      %v1430 = vpop.f32.mrf.mxu0
      %v1431 = vadd.f32 %v939, %v1430
      %1432 = vmatprep.mubr.f32.mxu0 0.0
      %1433 = vmatmul.mubr.f32.gmra.mxu0 %v1302
      %v1434 = vpop.f32.mrf.mxu0
      %v1435 = vadd.f32 %v943, %v1434
      %v1436 = vpop.f32.mrf.mxu0
      %v1437 = vadd.f32 %v945, %v1436
      %1438 = vmatprep.mubr.f32.mxu0 0.0
      %1439 = vmatmul.mubr.f32.gmra.mxu0 %v1304
      %v1440 = vpop.f32.mrf.mxu0
      %v1441 = vadd.f32 %v949, %v1440
      %v1442 = vpop.f32.mrf.mxu0
      %v1443 = vadd.f32 %v951, %v1442
      %1444 = vmatprep.mubr.f32.mxu0 0.0
      %1445 = vmatmul.mubr.f32.gmra.mxu0 %v1306
      %v1446 = vpop.f32.mrf.mxu0
      %v1447 = vadd.f32 %v955, %v1446
      %v1448 = vpop.f32.mrf.mxu0
      %v1449 = vadd.f32 %v957, %v1448
      %1450 = vmatprep.mubr.f32.mxu0 0.0
      %1451 = vmatmul.mubr.f32.gmra.mxu0 %v1308
      %v1452 = vpop.f32.mrf.mxu0
      %v1453 = vadd.f32 %v961, %v1452
      %v1454 = vpop.f32.mrf.mxu0
      %v1455 = vadd.f32 %v963, %v1454
      %1456 = vmatprep.mubr.f32.mxu0 0.0
      %1457 = vmatmul.mubr.f32.gmra.mxu0 %v1310
      %v1458 = vpop.f32.mrf.mxu0
      %v1459 = vadd.f32 %v967, %v1458
      %v1460 = vpop.f32.mrf.mxu0
      %v1461 = vadd.f32 %v969, %v1460
      %1462 = vmatprep.mubr.f32.mxu0 0.0
      %1463 = vmatmul.mubr.f32.gmra.mxu0 %v1312
      %v1464 = vpop.f32.mrf.mxu0
      %v1465 = vadd.f32 %v973, %v1464
      %v1466 = vpop.f32.mrf.mxu0
      %v1467 = vadd.f32 %v975, %v1466
      %1468 = vmatprep.mubr.f32.mxu0 0.0
      %1469 = vmatmul.mubr.f32.gmra.mxu0 %v1314
      %v1470 = vpop.f32.mrf.mxu0
      %v1471 = vadd.f32 %v979, %v1470
      %v1472 = vpop.f32.mrf.mxu0
      %v1473 = vadd.f32 %v981, %v1472
      %1474 = vmatprep.mubr.f32.mxu0 0.0
      %1475 = vmatmul.mubr.f32.gmra.mxu0 %v1316
      %v1476 = vpop.f32.mrf.mxu0
      %v1477 = vadd.f32 %v985, %v1476
      %v1478 = vpop.f32.mrf.mxu0
      %v1479 = vadd.f32 %v987, %v1478
      %1480 = vmatprep.mubr.f32.mxu0 0.0
      %1481 = vmatmul.mubr.f32.gmra.mxu0 %v1318
      %v1482 = vpop.f32.mrf.mxu0
      %v1483 = vadd.f32 %v991, %v1482
      %v1484 = vpop.f32.mrf.mxu0
      %v1485 = vadd.f32 %v993, %v1484
      %1486 = vmatprep.mubr.f32.mxu0 0.0
      %1487 = vmatmul.mubr.f32.gmra.mxu0 %v1320
      %v1488 = vpop.f32.mrf.mxu0
      %v1489 = vadd.f32 %v997, %v1488
      %v1490 = vpop.f32.mrf.mxu0
      %v1491 = vadd.f32 %v999, %v1490
      %1492 = vmatprep.mubr.f32.mxu0 0.0
      %1493 = vmatmul.mubr.f32.gmra.mxu0 %v1322
      %v1494 = vpop.f32.mrf.mxu0
      %v1495 = vadd.f32 %v1003, %v1494
      %v1496 = vpop.f32.mrf.mxu0
      %v1497 = vadd.f32 %v1005, %v1496
      %1498 = vmatprep.mubr.f32.mxu0 0.0
      %1499 = vmatmul.mubr.f32.gmra.mxu0 %v1324
      %v1500 = vpop.f32.mrf.mxu0
      %v1501 = vadd.f32 %v1009, %v1500
      %v1502 = vpop.f32.mrf.mxu0
      %v1503 = vadd.f32 %v1011, %v1502
      %1504 = vmatprep.mubr.f32.mxu0 0.0
      %1505 = vmatmul.mubr.f32.gmra.mxu0 %v1326
      %v1506 = vpop.f32.mrf.mxu0
      %v1507 = vadd.f32 %v1015, %v1506
      %v1508 = vpop.f32.mrf.mxu0
      %v1509 = vadd.f32 %v1017, %v1508
      %1510 = vmatprep.mubr.f32.mxu0 0.0
      %1511 = vmatmul.mubr.f32.gmra.mxu0 %v1328
      %v1512 = vpop.f32.mrf.mxu0
      %v1513 = vadd.f32 %v1021, %v1512
      %v1514 = vpop.f32.mrf.mxu0
      %v1515 = vadd.f32 %v1023, %v1514
      %1516 = vmatprep.mubr.f32.mxu0 0.0
      %1517 = vmatmul.mubr.f32.gmra.mxu0 %v1330
      %v1518 = vpop.f32.mrf.mxu0
      %v1519 = vadd.f32 %v1027, %v1518
      %v1520 = vpop.f32.mrf.mxu0
      %v1521 = vadd.f32 %v1029, %v1520
      %1522 = vmatprep.mubr.f32.mxu0 0.0
      %1523 = vmatmul.mubr.f32.gmra.mxu0 %v1332
      %v1524 = vpop.f32.mrf.mxu0
      %v1525 = vadd.f32 %v1033, %v1524
      %v1526 = vpop.f32.mrf.mxu0
      %v1527 = vadd.f32 %v1035, %v1526
      %1528 = vmatprep.mubr.f32.mxu0 0.0
      %1529 = vmatmul.mubr.f32.gmra.mxu0 %v1334
      %v1530 = vpop.f32.mrf.mxu0
      %v1531 = vadd.f32 %v1039, %v1530
      %v1532 = vpop.f32.mrf.mxu0
      %v1533 = vadd.f32 %v1041, %v1532
      %1534 = vmatprep.mubr.f32.mxu0 0.0
      %1535 = vmatmul.mubr.f32.gmra.mxu0 %v1336
      %v1536 = vpop.f32.mrf.mxu0
      %v1537 = vadd.f32 %v1045, %v1536
      %v1538 = vpop.f32.mrf.mxu0
      %v1539 = vadd.f32 %v1047, %v1538
      %1540 = vmatprep.mubr.f32.mxu0 0.0
      %1541 = vmatmul.mubr.f32.gmra.mxu0 %v1338
      %v1542 = vpop.f32.mrf.mxu0
      %v1543 = vadd.f32 %v1051, %v1542
      %v1544 = vpop.f32.mrf.mxu0
      %v1545 = vadd.f32 %v1053, %v1544
      %1546 = vmatprep.mubr.f32.mxu0 0.0
      %1547 = vmatmul.mubr.f32.gmra.mxu0 %v1340
      %v1548 = vpop.f32.mrf.mxu0
      %v1549 = vadd.f32 %v1057, %v1548
      %v1550 = vpop.f32.mrf.mxu0
      %v1551 = vadd.f32 %v1059, %v1550
      %1552 = vmatprep.mubr.f32.mxu0 0.0
      %1553 = vmatmul.mubr.f32.gmra.mxu0 %v1342
      %v1554 = vpop.f32.mrf.mxu0
      %v1555 = vadd.f32 %v1063, %v1554
      %v1556 = vpop.f32.mrf.mxu0
      %v1557 = vadd.f32 %v1065, %v1556
      %1558 = vmatprep.mubr.f32.mxu0 0.0
      %1559 = vmatmul.mubr.f32.gmra.mxu0 %v1344
      %v1560 = vpop.f32.mrf.mxu0
      %v1561 = vadd.f32 %v1069, %v1560
      %v1562 = vpop.f32.mrf.mxu0
      %v1563 = vadd.f32 %v1071, %v1562
      %1564 = vmatprep.mubr.f32.mxu0 0.0
      %1565 = vmatmul.mubr.f32.gmra.mxu0 %v1346
      %v1566 = vpop.f32.mrf.mxu0
      %v1567 = vadd.f32 %v1075, %v1566
      %v1568 = vpop.f32.mrf.mxu0
      %v1569 = vadd.f32 %v1077, %v1568
      %1570 = vmatprep.mubr.f32.mxu0 0.0
      %1571 = vmatmul.mubr.f32.gmra.mxu0 %v1348
      %v1572 = vpop.f32.mrf.mxu0
      %v1573 = vadd.f32 %v1081, %v1572
      %v1574 = vpop.f32.mrf.mxu0
      %v1575 = vadd.f32 %v1083, %v1574
      %1576 = vdwg.mxu0
      %1577 = vmatprep.subr.mxu0 0.0
      %1578 = vmatpush1.msra.mxu0 0.0
      %1579 = vmatprep.subr.mxu0 0.0
      %1580 = vmatpush1.msra.mxu0 0.0
      %1581 = vmatprep.subr.mxu0 0.0
      %1582 = vmatpush1.msra.mxu0 0.0
      %1583 = vmatprep.subr.mxu0 %v1360
      %1584 = vmatpush1.msra.mxu0 %v1357
      %1585 = vmatprep.subr.mxu0 %v673
      %1586 = vmatpush1.msra.mxu0 %v672
      %1587 = vmatprep.subr.mxu0 %v669
      %1588 = vmatpush1.msra.mxu0 %v668
      %1589 = vmatprep.subr.mxu0 %v665
      %1590 = vmatpush1.msra.mxu0 %v664
      %1591 = vmatprep.subr.mxu0 %v661
      %1592 = vmatpush1.msra.mxu0 %v660
      %1593 = vmatprep.subr.mxu0 %v657
      %1594 = vmatpush1.msra.mxu0 %v656
      %1595 = vmatprep.subr.mxu0 %v653
      %1596 = vmatpush1.msra.mxu0 %v652
      %1597 = vmatprep.subr.mxu0 %v649
      %1598 = vmatpush1.msra.mxu0 %v648
      %1599 = vmatprep.subr.mxu0 %v645
      %1600 = vmatpush1.msra.mxu0 %v644
      %1601 = vmatprep.subr.mxu0 %v641
      %1602 = vmatpush1.msra.mxu0 %v640
      %1603 = vmatprep.subr.mxu0 %v637
      %1604 = vmatpush1.msra.mxu0 %v636
      %1605 = vmatprep.subr.mxu0 %v633
      %1606 = vmatpush1.msra.mxu0 %v632
      %1607 = vmatprep.subr.mxu0 %v629
      %1608 = vmatpush1.msra.mxu0 %v628
      %1609 = vmatprep.subr.mxu0 0.0
      %1610 = vmatpush2.msra.mxu0 0.0
      %1611 = vmatprep.subr.mxu0 0.0
      %1612 = vmatpush2.msra.mxu0 0.0
      %1613 = vmatprep.subr.mxu0 0.0
      %1614 = vmatpush2.msra.mxu0 0.0
      %1615 = vmatprep.subr.mxu0 0.0
      %1616 = vmatpush2.msra.mxu0 0.0
      %1617 = vmatprep.subr.mxu0 0.0
      %1618 = vmatpush2.msra.mxu0 0.0
      %1619 = vmatprep.subr.mxu0 0.0
      %1620 = vmatpush2.msra.mxu0 0.0
      %1621 = vmatprep.subr.mxu0 0.0
      %1622 = vmatpush2.msra.mxu0 0.0
      %1623 = vmatprep.subr.mxu0 0.0
      %1624 = vmatpush2.msra.mxu0 0.0
      %1625 = vmatprep.subr.mxu0 0.0
      %1626 = vmatpush2.msra.mxu0 0.0
      %1627 = vmatprep.subr.mxu0 0.0
      %1628 = vmatpush2.msra.mxu0 0.0
      %1629 = vmatprep.subr.mxu0 0.0
      %1630 = vmatpush2.msra.mxu0 0.0
      %1631 = vmatprep.subr.mxu0 0.0
      %1632 = vmatpush2.msra.mxu0 0.0
      %1633 = vmatprep.subr.mxu0 0.0
      %1634 = vmatpush2.msra.mxu0 0.0
      %1635 = vmatprep.subr.mxu0 0.0
      %1636 = vmatpush2.msra.mxu0 0.0
      %1637 = vmatprep.subr.mxu0 0.0
      %1638 = vmatpush2.msra.mxu0 0.0
      %1639 = vmatprep.subr.mxu0 0.0
      %1640 = vmatpush2.msra.mxu0 0.0
      %1641 = vmatprep.mubr.f32.mxu0 0.0
      %1642 = vmatmul.mubr.f32.gmra.mxu0 %v1300
      %v1643 = vpop.f32.mrf.mxu0
      %v1644 = vadd.f32 %v1152, %v1643
      %v1645 = vpop.f32.mrf.mxu0
      %v1646 = vadd.f32 %v1154, %v1645
      %1647 = vmatprep.mubr.f32.mxu0 0.0
      %1648 = vmatmul.mubr.f32.gmra.mxu0 %v1302
      %v1649 = vpop.f32.mrf.mxu0
      %v1650 = vadd.f32 %v1158, %v1649
      %v1651 = vpop.f32.mrf.mxu0
      %v1652 = vadd.f32 %v1160, %v1651
      %1653 = vmatprep.mubr.f32.mxu0 0.0
      %1654 = vmatmul.mubr.f32.gmra.mxu0 %v1304
      %v1655 = vpop.f32.mrf.mxu0
      %v1656 = vadd.f32 %v1164, %v1655
      %v1657 = vpop.f32.mrf.mxu0
      %v1658 = vadd.f32 %v1166, %v1657
      %1659 = vmatprep.mubr.f32.mxu0 0.0
      %1660 = vmatmul.mubr.f32.gmra.mxu0 %v1306
      %v1661 = vpop.f32.mrf.mxu0
      %v1662 = vadd.f32 %v1170, %v1661
      %v1663 = vpop.f32.mrf.mxu0
      %v1664 = vadd.f32 %v1172, %v1663
      %1665 = vmatprep.mubr.f32.mxu0 0.0
      %1666 = vmatmul.mubr.f32.gmra.mxu0 %v1308
      %v1667 = vpop.f32.mrf.mxu0
      %v1668 = vadd.f32 %v1176, %v1667
      %v1669 = vpop.f32.mrf.mxu0
      %v1670 = vadd.f32 %v1178, %v1669
      %1671 = vmatprep.mubr.f32.mxu0 0.0
      %1672 = vmatmul.mubr.f32.gmra.mxu0 %v1310
      %v1673 = vpop.f32.mrf.mxu0
      %v1674 = vadd.f32 %v1182, %v1673
      %v1675 = vpop.f32.mrf.mxu0
      %v1676 = vadd.f32 %v1184, %v1675
      %1677 = vmatprep.mubr.f32.mxu0 0.0
      %1678 = vmatmul.mubr.f32.gmra.mxu0 %v1312
      %v1679 = vpop.f32.mrf.mxu0
      %v1680 = vadd.f32 %v1188, %v1679
      %v1681 = vpop.f32.mrf.mxu0
      %v1682 = vadd.f32 %v1190, %v1681
      %1683 = vmatprep.mubr.f32.mxu0 0.0
      %1684 = vmatmul.mubr.f32.gmra.mxu0 %v1314
      %v1685 = vpop.f32.mrf.mxu0
      %v1686 = vadd.f32 %v1194, %v1685
      %v1687 = vpop.f32.mrf.mxu0
      %v1688 = vadd.f32 %v1196, %v1687
      %1689 = vmatprep.mubr.f32.mxu0 0.0
      %1690 = vmatmul.mubr.f32.gmra.mxu0 %v1316
      %v1691 = vpop.f32.mrf.mxu0
      %v1692 = vadd.f32 %v1200, %v1691
      %v1693 = vpop.f32.mrf.mxu0
      %v1694 = vadd.f32 %v1202, %v1693
      %1695 = vmatprep.mubr.f32.mxu0 0.0
      %1696 = vmatmul.mubr.f32.gmra.mxu0 %v1318
      %v1697 = vpop.f32.mrf.mxu0
      %v1698 = vadd.f32 %v1206, %v1697
      %v1699 = vpop.f32.mrf.mxu0
      %v1700 = vadd.f32 %v1208, %v1699
      %1701 = vmatprep.mubr.f32.mxu0 0.0
      %1702 = vmatmul.mubr.f32.gmra.mxu0 %v1320
      %v1703 = vpop.f32.mrf.mxu0
      %v1704 = vadd.f32 %v1212, %v1703
      %v1705 = vpop.f32.mrf.mxu0
      %v1706 = vadd.f32 %v1214, %v1705
      %1707 = vmatprep.mubr.f32.mxu0 0.0
      %1708 = vmatmul.mubr.f32.gmra.mxu0 %v1322
      %v1709 = vpop.f32.mrf.mxu0
      %v1710 = vadd.f32 %v1218, %v1709
      %v1711 = vpop.f32.mrf.mxu0
      %v1712 = vadd.f32 %v1220, %v1711
      %1713 = vmatprep.mubr.f32.mxu0 0.0
      %1714 = vmatmul.mubr.f32.gmra.mxu0 %v1324
      %v1715 = vpop.f32.mrf.mxu0
      %v1716 = vadd.f32 %v1224, %v1715
      %v1717 = vpop.f32.mrf.mxu0
      %v1718 = vadd.f32 %v1226, %v1717
      %1719 = vmatprep.mubr.f32.mxu0 0.0
      %1720 = vmatmul.mubr.f32.gmra.mxu0 %v1326
      %v1721 = vpop.f32.mrf.mxu0
      %v1722 = vadd.f32 %v1230, %v1721
      %v1723 = vpop.f32.mrf.mxu0
      %v1724 = vadd.f32 %v1232, %v1723
      %1725 = vmatprep.mubr.f32.mxu0 0.0
      %1726 = vmatmul.mubr.f32.gmra.mxu0 %v1328
      %v1727 = vpop.f32.mrf.mxu0
      %v1728 = vadd.f32 %v1236, %v1727
      %v1729 = vpop.f32.mrf.mxu0
      %v1730 = vadd.f32 %v1238, %v1729
      %1731 = vmatprep.mubr.f32.mxu0 0.0
      %1732 = vmatmul.mubr.f32.gmra.mxu0 %v1330
      %v1733 = vpop.f32.mrf.mxu0
      %v1734 = vadd.f32 %v1242, %v1733
      %v1735 = vpop.f32.mrf.mxu0
      %v1736 = vadd.f32 %v1244, %v1735
      %1737 = vmatprep.mubr.f32.mxu0 0.0
      %1738 = vmatmul.mubr.f32.gmra.mxu0 %v1332
      %v1739 = vpop.f32.mrf.mxu0
      %v1740 = vadd.f32 %v1248, %v1739
      %v1741 = vpop.f32.mrf.mxu0
      %v1742 = vadd.f32 %v1250, %v1741
      %1743 = vmatprep.mubr.f32.mxu0 0.0
      %1744 = vmatmul.mubr.f32.gmra.mxu0 %v1334
      %v1745 = vpop.f32.mrf.mxu0
      %v1746 = vadd.f32 %v1254, %v1745
      %v1747 = vpop.f32.mrf.mxu0
      %v1748 = vadd.f32 %v1256, %v1747
      %1749 = vmatprep.mubr.f32.mxu0 0.0
      %1750 = vmatmul.mubr.f32.gmra.mxu0 %v1336
      %v1751 = vpop.f32.mrf.mxu0
      %v1752 = vadd.f32 %v1260, %v1751
      %v1753 = vpop.f32.mrf.mxu0
      %v1754 = vadd.f32 %v1262, %v1753
      %1755 = vmatprep.mubr.f32.mxu0 0.0
      %1756 = vmatmul.mubr.f32.gmra.mxu0 %v1338
      %v1757 = vpop.f32.mrf.mxu0
      %v1758 = vadd.f32 %v1266, %v1757
      %v1759 = vpop.f32.mrf.mxu0
      %v1760 = vadd.f32 %v1268, %v1759
      %1761 = vmatprep.mubr.f32.mxu0 0.0
      %1762 = vmatmul.mubr.f32.gmra.mxu0 %v1340
      %v1763 = vpop.f32.mrf.mxu0
      %v1764 = vadd.f32 %v1272, %v1763
      %v1765 = vpop.f32.mrf.mxu0
      %v1766 = vadd.f32 %v1274, %v1765
      %1767 = vmatprep.mubr.f32.mxu0 0.0
      %1768 = vmatmul.mubr.f32.gmra.mxu0 %v1342
      %v1769 = vpop.f32.mrf.mxu0
      %v1770 = vadd.f32 %v1278, %v1769
      %v1771 = vpop.f32.mrf.mxu0
      %v1772 = vadd.f32 %v1280, %v1771
      %1773 = vmatprep.mubr.f32.mxu0 0.0
      %1774 = vmatmul.mubr.f32.gmra.mxu0 %v1344
      %v1775 = vpop.f32.mrf.mxu0
      %v1776 = vadd.f32 %v1284, %v1775
      %v1777 = vpop.f32.mrf.mxu0
      %v1778 = vadd.f32 %v1286, %v1777
      %1779 = vmatprep.mubr.f32.mxu0 0.0
      %1780 = vmatmul.mubr.f32.gmra.mxu0 %v1346
      %v1781 = vpop.f32.mrf.mxu0
      %v1782 = vadd.f32 %v1290, %v1781
      %v1783 = vpop.f32.mrf.mxu0
      %v1784 = vadd.f32 %v1292, %v1783
      %1785 = vmatprep.mubr.f32.mxu0 0.0
      %1786 = vmatmul.mubr.f32.gmra.mxu0 %v1348
      %v1787 = vpop.f32.mrf.mxu0
      %v1788 = vadd.f32 %v1296, %v1787
      %v1789 = vpop.f32.mrf.mxu0
      %v1790 = vadd.f32 %v1298, %v1789
      %1791 = vdwg.mxu0
      %s1792 = scalar_lea.vmem %s1, 832
      %v1793 = vld [vmem:[%s1792] sm:$0xff]
      %v1794 = vld [vmem:[%s1792 + $0x8] sm:$0xff]
      %v1795 = vld [vmem:[%s1792 + $0x10] sm:$0xff]
      %v1796 = vld [vmem:[%s1792 + $0x18] sm:$0xff]
      %v1797 = vld [vmem:[%s1792 + $0x20] sm:$0xff]
      %v1798 = vld [vmem:[%s1792 + $0x28] sm:$0xff]
      %v1799 = vld [vmem:[%s1792 + $0x30] sm:$0xff]
      %v1800 = vld [vmem:[%s1792 + $0x38] sm:$0xff]
      %v1801 = vld [vmem:[%s1792 + $0x40] sm:$0xff]
      %v1802 = vld [vmem:[%s1792 + $0x48] sm:$0xff]
      %v1803 = vld [vmem:[%s1792 + $0x50] sm:$0xff]
      %v1804 = vld [vmem:[%s1792 + $0x58] sm:$0xff]
      %v1805 = vld [vmem:[%s1792 + $0x60] sm:$0xff]
      %v1806 = vld [vmem:[%s1792 + $0x68] sm:$0xff]
      %v1807 = vld [vmem:[%s1792 + $0x70] sm:$0xff]
      %v1808 = vld [vmem:[%s1792 + $0x78] sm:$0xff]
      %v1809 = vld [vmem:[%s1792 + $0x80] sm:$0xff]
      %v1810 = vld [vmem:[%s1792 + $0x88] sm:$0xff]
      %v1811 = vld [vmem:[%s1792 + $0x90] sm:$0xff]
      %v1812 = vld [vmem:[%s1792 + $0x98] sm:$0xff]
      %v1813 = vld [vmem:[%s1792 + $0xa0] sm:$0xff]
      %v1814 = vld [vmem:[%s1792 + $0xa8] sm:$0xff]
      %v1815 = vld [vmem:[%s1792 + $0xb0] sm:$0xff]
      %v1816 = vld [vmem:[%s1792 + $0xb8] sm:$0xff]
      %v1817 = vld [vmem:[%s1792 + $0xc0] sm:$0xff]
      %v1818 = vld [vmem:[%s1792 + $0xc8] sm:$0xff]
      %v1819 = vld [vmem:[%s1792 + $0xd0] sm:$0xff]
      %v1820 = vld [vmem:[%s1792 + $0xd8] sm:$0xff]
      %v1821 = vld [vmem:[%s1792 + $0xe0] sm:$0xff]
      %v1822 = vld [vmem:[%s1792 + $0xe8] sm:$0xff]
      %v1823 = vld [vmem:[%s1792 + $0xf0] sm:$0xff]
      %v1824 = vld [vmem:[%s1792 + $0xf8] sm:$0xff]
      %v1825 = vld [vmem:[%s1792 + $0x100] sm:$0xff]
      %v1826 = vld [vmem:[%s1792 + $0x108] sm:$0xff]
      %v1827 = vld [vmem:[%s1792 + $0x110] sm:$0xff]
      %v1828 = vld [vmem:[%s1792 + $0x118] sm:$0xff]
      %v1829 = vld [vmem:[%s1792 + $0x120] sm:$0xff]
      %v1830 = vld [vmem:[%s1792 + $0x128] sm:$0xff]
      %v1831 = vld [vmem:[%s1792 + $0x130] sm:$0xff]
      %v1832 = vld [vmem:[%s1792 + $0x138] sm:$0xff]
      %v1833 = vld [vmem:[%s1792 + $0x140] sm:$0xff]
      %v1834 = vld [vmem:[%s1792 + $0x148] sm:$0xff]
      %v1835 = vld [vmem:[%s1792 + $0x150] sm:$0xff]
      %v1836 = vld [vmem:[%s1792 + $0x158] sm:$0xff]
      %v1837 = vld [vmem:[%s1792 + $0x160] sm:$0xff]
      %v1838 = vld [vmem:[%s1792 + $0x168] sm:$0xff]
      %v1839 = vld [vmem:[%s1792 + $0x170] sm:$0xff]
      %v1840 = vld [vmem:[%s1792 + $0x178] sm:$0xff]
      %v1841 = vld [vmem:[%s1792 + $0x180] sm:$0xf]
      %v1842 = vld [vmem:[%s1792 + $0x188] sm:$0xf]
      %v1843 = vld [vmem:[%s1792 + $0x190] sm:$0xf]
      %v1844 = vld [vmem:[%s1792 + $0x198] sm:$0xf]
      %vm1845 = vcmask 1045504
      %v1846 = vrot.slane %v601, 2
      %v1847 = vrot.slane %v602, 2
      %v1848 = vsel %vm1845, %v1846, %v1847
      %v1849 = vrot.slane %v603, 2
      %v1850 = vsel %vm1845, %v1847, %v1849
      %v1851 = vrot.slane %v604, 2
      %v1852 = vsel %vm1845, %v1849, %v1851
      %v1853 = vrot.slane %v605, 2
      %v1854 = vsel %vm1845, %v1851, %v1853
      %v1855 = vrot.slane %v606, 2
      %v1856 = vsel %vm1845, %v1853, %v1855
      %v1857 = vrot.slane %v607, 2
      %v1858 = vsel %vm1845, %v1855, %v1857
      %v1859 = vrot.slane %v608, 2
      %v1860 = vsel %vm1845, %v1857, %v1859
      %v1861 = vrot.slane %v609, 2
      %v1862 = vsel %vm1845, %v1859, %v1861
      %v1863 = vrot.slane %v610, 2
      %v1864 = vsel %vm1845, %v1861, %v1863
      %v1865 = vrot.slane %v611, 2
      %v1866 = vsel %vm1845, %v1863, %v1865
      %v1867 = vrot.slane %v612, 2
      %v1868 = vsel %vm1845, %v1865, %v1867
      %v1869 = vrot.slane %v613, 2
      %v1870 = vsel %vm1845, %v1867, %v1869
      %v1871 = vrot.slane %v614, 2
      %v1872 = vsel %vm1845, %v1869, %v1871
      %v1873 = vrot.slane %v615, 2
      %v1874 = vsel %vm1845, %v1871, %v1873
      %v1875 = vrot.slane %v616, 2
      %v1876 = vsel %vm1845, %v1873, %v1875
      %v1877 = vrot.slane %v617, 2
      %v1878 = vsel %vm1845, %v1875, %v1877
      %v1879 = vrot.slane %v618, 2
      %v1880 = vsel %vm1845, %v1877, %v1879
      %v1881 = vrot.slane %v619, 2
      %v1882 = vsel %vm1845, %v1879, %v1881
      %v1883 = vrot.slane %v620, 2
      %v1884 = vsel %vm1845, %v1881, %v1883
      %v1885 = vrot.slane %v621, 2
      %v1886 = vsel %vm1845, %v1883, %v1885
      %v1887 = vrot.slane %v622, 2
      %v1888 = vsel %vm1845, %v1885, %v1887
      %v1889 = vrot.slane %v623, 2
      %v1890 = vsel %vm1845, %v1887, %v1889
      %v1891 = vrot.slane %v624, 2
      %v1892 = vsel %vm1845, %v1889, %v1891
      %v1893 = vrot.slane %v625, 2
      %v1894 = vsel %vm1845, %v1891, %v1893
      %v1895 = vsel %vm806, %v1848, 0
      %v1897 = vsel %vm806, %v1850, 0
      %v1899 = vsel %vm806, %v1852, 0
      %v1901 = vsel %vm806, %v1854, 0
      %v1903 = vsel %vm806, %v1856, 0
      %v1905 = vsel %vm806, %v1858, 0
      %v1907 = vsel %vm806, %v1860, 0
      %v1909 = vsel %vm806, %v1862, 0
      %v1911 = vsel %vm806, %v1864, 0
      %v1913 = vsel %vm806, %v1866, 0
      %v1915 = vsel %vm806, %v1868, 0
      %v1917 = vsel %vm806, %v1870, 0
      %v1919 = vsel %vm806, %v1872, 0
      %v1921 = vsel %vm806, %v1874, 0
      %v1923 = vsel %vm806, %v1876, 0
      %v1925 = vsel %vm806, %v1878, 0
      %v1927 = vsel %vm806, %v1880, 0
      %v1929 = vsel %vm806, %v1882, 0
      %v1931 = vsel %vm806, %v1884, 0
      %v1933 = vsel %vm806, %v1886, 0
      %v1935 = vsel %vm806, %v1888, 0
      %v1937 = vsel %vm806, %v1890, 0
      %v1939 = vsel %vm806, %v1892, 0
      %v1941 = vsel %vm806, %v1894, 0
      %v1943 = vsel %vm806, %v1893, 0
      %v1946 = vsel %vm857, %v1841, 0
      %v1949 = vsel %vm857, %v1842, 0
      %v1952 = vsel %vm857, %v1843, 0
      %v1955 = vsel %vm857, %v1844, 0
      %1957 = vmatprep.subr.mxu0 0.0
      %1958 = vmatpush1.msra.mxu0 0.0
      %1959 = vmatprep.subr.mxu0 0.0
      %1960 = vmatpush1.msra.mxu0 0.0
      %1961 = vmatprep.subr.mxu0 0.0
      %1962 = vmatpush1.msra.mxu0 0.0
      %1963 = vmatprep.subr.mxu0 %v1949
      %1964 = vmatpush1.msra.mxu0 %v1946
      %1965 = vmatprep.subr.mxu0 %v1838
      %1966 = vmatpush1.msra.mxu0 %v1837
      %1967 = vmatprep.subr.mxu0 %v1834
      %1968 = vmatpush1.msra.mxu0 %v1833
      %1969 = vmatprep.subr.mxu0 %v1830
      %1970 = vmatpush1.msra.mxu0 %v1829
      %1971 = vmatprep.subr.mxu0 %v1826
      %1972 = vmatpush1.msra.mxu0 %v1825
      %1973 = vmatprep.subr.mxu0 %v1822
      %1974 = vmatpush1.msra.mxu0 %v1821
      %1975 = vmatprep.subr.mxu0 %v1818
      %1976 = vmatpush1.msra.mxu0 %v1817
      %1977 = vmatprep.subr.mxu0 %v1814
      %1978 = vmatpush1.msra.mxu0 %v1813
      %1979 = vmatprep.subr.mxu0 %v1810
      %1980 = vmatpush1.msra.mxu0 %v1809
      %1981 = vmatprep.subr.mxu0 %v1806
      %1982 = vmatpush1.msra.mxu0 %v1805
      %1983 = vmatprep.subr.mxu0 %v1802
      %1984 = vmatpush1.msra.mxu0 %v1801
      %1985 = vmatprep.subr.mxu0 %v1798
      %1986 = vmatpush1.msra.mxu0 %v1797
      %1987 = vmatprep.subr.mxu0 %v1794
      %1988 = vmatpush1.msra.mxu0 %v1793
      %1989 = vmatprep.subr.mxu0 0.0
      %1990 = vmatpush2.msra.mxu0 0.0
      %1991 = vmatprep.subr.mxu0 0.0
      %1992 = vmatpush2.msra.mxu0 0.0
      %1993 = vmatprep.subr.mxu0 0.0
      %1994 = vmatpush2.msra.mxu0 0.0
      %1995 = vmatprep.subr.mxu0 0.0
      %1996 = vmatpush2.msra.mxu0 0.0
      %1997 = vmatprep.subr.mxu0 0.0
      %1998 = vmatpush2.msra.mxu0 0.0
      %1999 = vmatprep.subr.mxu0 0.0
      %2000 = vmatpush2.msra.mxu0 0.0
      %2001 = vmatprep.subr.mxu0 0.0
      %2002 = vmatpush2.msra.mxu0 0.0
      %2003 = vmatprep.subr.mxu0 0.0
      %2004 = vmatpush2.msra.mxu0 0.0
      %2005 = vmatprep.subr.mxu0 0.0
      %2006 = vmatpush2.msra.mxu0 0.0
      %2007 = vmatprep.subr.mxu0 0.0
      %2008 = vmatpush2.msra.mxu0 0.0
      %2009 = vmatprep.subr.mxu0 0.0
      %2010 = vmatpush2.msra.mxu0 0.0
      %2011 = vmatprep.subr.mxu0 0.0
      %2012 = vmatpush2.msra.mxu0 0.0
      %2013 = vmatprep.subr.mxu0 0.0
      %2014 = vmatpush2.msra.mxu0 0.0
      %2015 = vmatprep.subr.mxu0 0.0
      %2016 = vmatpush2.msra.mxu0 0.0
      %2017 = vmatprep.subr.mxu0 0.0
      %2018 = vmatpush2.msra.mxu0 0.0
      %2019 = vmatprep.subr.mxu0 0.0
      %2020 = vmatpush2.msra.mxu0 0.0
      %2021 = vmatprep.mubr.f32.mxu0 0.0
      %2022 = vmatmul.mubr.f32.gmra.mxu0 %v1895
      %v2023 = vpop.f32.mrf.mxu0
      %v2024 = vadd.f32 0.0, %v2023
      %v2025 = vpop.f32.mrf.mxu0
      %v2026 = vadd.f32 0.0, %v2025
      %2027 = vmatprep.mubr.f32.mxu0 0.0
      %2028 = vmatmul.mubr.f32.gmra.mxu0 %v1897
      %v2029 = vpop.f32.mrf.mxu0
      %v2030 = vadd.f32 0.0, %v2029
      %v2031 = vpop.f32.mrf.mxu0
      %v2032 = vadd.f32 0.0, %v2031
      %2033 = vmatprep.mubr.f32.mxu0 0.0
      %2034 = vmatmul.mubr.f32.gmra.mxu0 %v1899
      %v2035 = vpop.f32.mrf.mxu0
      %v2036 = vadd.f32 0.0, %v2035
      %v2037 = vpop.f32.mrf.mxu0
      %v2038 = vadd.f32 0.0, %v2037
      %2039 = vmatprep.mubr.f32.mxu0 0.0
      %2040 = vmatmul.mubr.f32.gmra.mxu0 %v1901
      %v2041 = vpop.f32.mrf.mxu0
      %v2042 = vadd.f32 0.0, %v2041
      %v2043 = vpop.f32.mrf.mxu0
      %v2044 = vadd.f32 0.0, %v2043
      %2045 = vmatprep.mubr.f32.mxu0 0.0
      %2046 = vmatmul.mubr.f32.gmra.mxu0 %v1903
      %v2047 = vpop.f32.mrf.mxu0
      %v2048 = vadd.f32 0.0, %v2047
      %v2049 = vpop.f32.mrf.mxu0
      %v2050 = vadd.f32 0.0, %v2049
      %2051 = vmatprep.mubr.f32.mxu0 0.0
      %2052 = vmatmul.mubr.f32.gmra.mxu0 %v1905
      %v2053 = vpop.f32.mrf.mxu0
      %v2054 = vadd.f32 0.0, %v2053
      %v2055 = vpop.f32.mrf.mxu0
      %v2056 = vadd.f32 0.0, %v2055
      %2057 = vmatprep.mubr.f32.mxu0 0.0
      %2058 = vmatmul.mubr.f32.gmra.mxu0 %v1907
      %v2059 = vpop.f32.mrf.mxu0
      %v2060 = vadd.f32 0.0, %v2059
      %v2061 = vpop.f32.mrf.mxu0
      %v2062 = vadd.f32 0.0, %v2061
      %2063 = vmatprep.mubr.f32.mxu0 0.0
      %2064 = vmatmul.mubr.f32.gmra.mxu0 %v1909
      %v2065 = vpop.f32.mrf.mxu0
      %v2066 = vadd.f32 0.0, %v2065
      %v2067 = vpop.f32.mrf.mxu0
      %v2068 = vadd.f32 0.0, %v2067
      %2069 = vmatprep.mubr.f32.mxu0 0.0
      %2070 = vmatmul.mubr.f32.gmra.mxu0 %v1911
      %v2071 = vpop.f32.mrf.mxu0
      %v2072 = vadd.f32 0.0, %v2071
      %v2073 = vpop.f32.mrf.mxu0
      %v2074 = vadd.f32 0.0, %v2073
      %2075 = vmatprep.mubr.f32.mxu0 0.0
      %2076 = vmatmul.mubr.f32.gmra.mxu0 %v1913
      %v2077 = vpop.f32.mrf.mxu0
      %v2078 = vadd.f32 0.0, %v2077
      %v2079 = vpop.f32.mrf.mxu0
      %v2080 = vadd.f32 0.0, %v2079
      %2081 = vmatprep.mubr.f32.mxu0 0.0
      %2082 = vmatmul.mubr.f32.gmra.mxu0 %v1915
      %v2083 = vpop.f32.mrf.mxu0
      %v2084 = vadd.f32 0.0, %v2083
      %v2085 = vpop.f32.mrf.mxu0
      %v2086 = vadd.f32 0.0, %v2085
      %2087 = vmatprep.mubr.f32.mxu0 0.0
      %2088 = vmatmul.mubr.f32.gmra.mxu0 %v1917
      %v2089 = vpop.f32.mrf.mxu0
      %v2090 = vadd.f32 0.0, %v2089
      %v2091 = vpop.f32.mrf.mxu0
      %v2092 = vadd.f32 0.0, %v2091
      %2093 = vmatprep.mubr.f32.mxu0 0.0
      %2094 = vmatmul.mubr.f32.gmra.mxu0 %v1919
      %v2095 = vpop.f32.mrf.mxu0
      %v2096 = vadd.f32 0.0, %v2095
      %v2097 = vpop.f32.mrf.mxu0
      %v2098 = vadd.f32 0.0, %v2097
      %2099 = vmatprep.mubr.f32.mxu0 0.0
      %2100 = vmatmul.mubr.f32.gmra.mxu0 %v1921
      %v2101 = vpop.f32.mrf.mxu0
      %v2102 = vadd.f32 0.0, %v2101
      %v2103 = vpop.f32.mrf.mxu0
      %v2104 = vadd.f32 0.0, %v2103
      %2105 = vmatprep.mubr.f32.mxu0 0.0
      %2106 = vmatmul.mubr.f32.gmra.mxu0 %v1923
      %v2107 = vpop.f32.mrf.mxu0
      %v2108 = vadd.f32 0.0, %v2107
      %v2109 = vpop.f32.mrf.mxu0
      %v2110 = vadd.f32 0.0, %v2109
      %2111 = vmatprep.mubr.f32.mxu0 0.0
      %2112 = vmatmul.mubr.f32.gmra.mxu0 %v1925
      %v2113 = vpop.f32.mrf.mxu0
      %v2114 = vadd.f32 0.0, %v2113
      %v2115 = vpop.f32.mrf.mxu0
      %v2116 = vadd.f32 0.0, %v2115
      %2117 = vmatprep.mubr.f32.mxu0 0.0
      %2118 = vmatmul.mubr.f32.gmra.mxu0 %v1927
      %v2119 = vpop.f32.mrf.mxu0
      %v2120 = vadd.f32 0.0, %v2119
      %v2121 = vpop.f32.mrf.mxu0
      %v2122 = vadd.f32 0.0, %v2121
      %2123 = vmatprep.mubr.f32.mxu0 0.0
      %2124 = vmatmul.mubr.f32.gmra.mxu0 %v1929
      %v2125 = vpop.f32.mrf.mxu0
      %v2126 = vadd.f32 0.0, %v2125
      %v2127 = vpop.f32.mrf.mxu0
      %v2128 = vadd.f32 0.0, %v2127
      %2129 = vmatprep.mubr.f32.mxu0 0.0
      %2130 = vmatmul.mubr.f32.gmra.mxu0 %v1931
      %v2131 = vpop.f32.mrf.mxu0
      %v2132 = vadd.f32 0.0, %v2131
      %v2133 = vpop.f32.mrf.mxu0
      %v2134 = vadd.f32 0.0, %v2133
      %2135 = vmatprep.mubr.f32.mxu0 0.0
      %2136 = vmatmul.mubr.f32.gmra.mxu0 %v1933
      %v2137 = vpop.f32.mrf.mxu0
      %v2138 = vadd.f32 0.0, %v2137
      %v2139 = vpop.f32.mrf.mxu0
      %v2140 = vadd.f32 0.0, %v2139
      %2141 = vmatprep.mubr.f32.mxu0 0.0
      %2142 = vmatmul.mubr.f32.gmra.mxu0 %v1935
      %v2143 = vpop.f32.mrf.mxu0
      %v2144 = vadd.f32 0.0, %v2143
      %v2145 = vpop.f32.mrf.mxu0
      %v2146 = vadd.f32 0.0, %v2145
      %2147 = vmatprep.mubr.f32.mxu0 0.0
      %2148 = vmatmul.mubr.f32.gmra.mxu0 %v1937
      %v2149 = vpop.f32.mrf.mxu0
      %v2150 = vadd.f32 0.0, %v2149
      %v2151 = vpop.f32.mrf.mxu0
      %v2152 = vadd.f32 0.0, %v2151
      %2153 = vmatprep.mubr.f32.mxu0 0.0
      %2154 = vmatmul.mubr.f32.gmra.mxu0 %v1939
      %v2155 = vpop.f32.mrf.mxu0
      %v2156 = vadd.f32 0.0, %v2155
      %v2157 = vpop.f32.mrf.mxu0
      %v2158 = vadd.f32 0.0, %v2157
      %2159 = vmatprep.mubr.f32.mxu0 0.0
      %2160 = vmatmul.mubr.f32.gmra.mxu0 %v1941
      %v2161 = vpop.f32.mrf.mxu0
      %v2162 = vadd.f32 0.0, %v2161
      %v2163 = vpop.f32.mrf.mxu0
      %v2164 = vadd.f32 0.0, %v2163
      %2165 = vmatprep.mubr.f32.mxu0 0.0
      %2166 = vmatmul.mubr.f32.gmra.mxu0 %v1943
      %v2167 = vpop.f32.mrf.mxu0
      %v2168 = vadd.f32 0.0, %v2167
      %v2169 = vpop.f32.mrf.mxu0
      %v2170 = vadd.f32 0.0, %v2169
      %2171 = vdwg.mxu0
      %2172 = vmatprep.subr.mxu0 0.0
      %2173 = vmatpush1.msra.mxu0 0.0
      %2174 = vmatprep.subr.mxu0 0.0
      %2175 = vmatpush1.msra.mxu0 0.0
      %2176 = vmatprep.subr.mxu0 0.0
      %2177 = vmatpush1.msra.mxu0 0.0
      %2178 = vmatprep.subr.mxu0 %v1955
      %2179 = vmatpush1.msra.mxu0 %v1952
      %2180 = vmatprep.subr.mxu0 %v1840
      %2181 = vmatpush1.msra.mxu0 %v1839
      %2182 = vmatprep.subr.mxu0 %v1836
      %2183 = vmatpush1.msra.mxu0 %v1835
      %2184 = vmatprep.subr.mxu0 %v1832
      %2185 = vmatpush1.msra.mxu0 %v1831
      %2186 = vmatprep.subr.mxu0 %v1828
      %2187 = vmatpush1.msra.mxu0 %v1827
      %2188 = vmatprep.subr.mxu0 %v1824
      %2189 = vmatpush1.msra.mxu0 %v1823
      %2190 = vmatprep.subr.mxu0 %v1820
      %2191 = vmatpush1.msra.mxu0 %v1819
      %2192 = vmatprep.subr.mxu0 %v1816
      %2193 = vmatpush1.msra.mxu0 %v1815
      %2194 = vmatprep.subr.mxu0 %v1812
      %2195 = vmatpush1.msra.mxu0 %v1811
      %2196 = vmatprep.subr.mxu0 %v1808
      %2197 = vmatpush1.msra.mxu0 %v1807
      %2198 = vmatprep.subr.mxu0 %v1804
      %2199 = vmatpush1.msra.mxu0 %v1803
      %2200 = vmatprep.subr.mxu0 %v1800
      %2201 = vmatpush1.msra.mxu0 %v1799
      %2202 = vmatprep.subr.mxu0 %v1796
      %2203 = vmatpush1.msra.mxu0 %v1795
      %2204 = vmatprep.subr.mxu0 0.0
      %2205 = vmatpush2.msra.mxu0 0.0
      %2206 = vmatprep.subr.mxu0 0.0
      %2207 = vmatpush2.msra.mxu0 0.0
      %2208 = vmatprep.subr.mxu0 0.0
      %2209 = vmatpush2.msra.mxu0 0.0
      %2210 = vmatprep.subr.mxu0 0.0
      %2211 = vmatpush2.msra.mxu0 0.0
      %2212 = vmatprep.subr.mxu0 0.0
      %2213 = vmatpush2.msra.mxu0 0.0
      %2214 = vmatprep.subr.mxu0 0.0
      %2215 = vmatpush2.msra.mxu0 0.0
      %2216 = vmatprep.subr.mxu0 0.0
      %2217 = vmatpush2.msra.mxu0 0.0
      %2218 = vmatprep.subr.mxu0 0.0
      %2219 = vmatpush2.msra.mxu0 0.0
      %2220 = vmatprep.subr.mxu0 0.0
      %2221 = vmatpush2.msra.mxu0 0.0
      %2222 = vmatprep.subr.mxu0 0.0
      %2223 = vmatpush2.msra.mxu0 0.0
      %2224 = vmatprep.subr.mxu0 0.0
      %2225 = vmatpush2.msra.mxu0 0.0
      %2226 = vmatprep.subr.mxu0 0.0
      %2227 = vmatpush2.msra.mxu0 0.0
      %2228 = vmatprep.subr.mxu0 0.0
      %2229 = vmatpush2.msra.mxu0 0.0
      %2230 = vmatprep.subr.mxu0 0.0
      %2231 = vmatpush2.msra.mxu0 0.0
      %2232 = vmatprep.subr.mxu0 0.0
      %2233 = vmatpush2.msra.mxu0 0.0
      %2234 = vmatprep.subr.mxu0 0.0
      %2235 = vmatpush2.msra.mxu0 0.0
      %2236 = vmatprep.mubr.f32.mxu0 0.0
      %2237 = vmatmul.mubr.f32.gmra.mxu0 %v1895
      %v2238 = vpop.f32.mrf.mxu0
      %v2239 = vadd.f32 0.0, %v2238
      %v2240 = vpop.f32.mrf.mxu0
      %v2241 = vadd.f32 0.0, %v2240
      %2242 = vmatprep.mubr.f32.mxu0 0.0
      %2243 = vmatmul.mubr.f32.gmra.mxu0 %v1897
      %v2244 = vpop.f32.mrf.mxu0
      %v2245 = vadd.f32 0.0, %v2244
      %v2246 = vpop.f32.mrf.mxu0
      %v2247 = vadd.f32 0.0, %v2246
      %2248 = vmatprep.mubr.f32.mxu0 0.0
      %2249 = vmatmul.mubr.f32.gmra.mxu0 %v1899
      %v2250 = vpop.f32.mrf.mxu0
      %v2251 = vadd.f32 0.0, %v2250
      %v2252 = vpop.f32.mrf.mxu0
      %v2253 = vadd.f32 0.0, %v2252
      %2254 = vmatprep.mubr.f32.mxu0 0.0
      %2255 = vmatmul.mubr.f32.gmra.mxu0 %v1901
      %v2256 = vpop.f32.mrf.mxu0
      %v2257 = vadd.f32 0.0, %v2256
      %v2258 = vpop.f32.mrf.mxu0
      %v2259 = vadd.f32 0.0, %v2258
      %2260 = vmatprep.mubr.f32.mxu0 0.0
      %2261 = vmatmul.mubr.f32.gmra.mxu0 %v1903
      %v2262 = vpop.f32.mrf.mxu0
      %v2263 = vadd.f32 0.0, %v2262
      %v2264 = vpop.f32.mrf.mxu0
      %v2265 = vadd.f32 0.0, %v2264
      %2266 = vmatprep.mubr.f32.mxu0 0.0
      %2267 = vmatmul.mubr.f32.gmra.mxu0 %v1905
      %v2268 = vpop.f32.mrf.mxu0
      %v2269 = vadd.f32 0.0, %v2268
      %v2270 = vpop.f32.mrf.mxu0
      %v2271 = vadd.f32 0.0, %v2270
      %2272 = vmatprep.mubr.f32.mxu0 0.0
      %2273 = vmatmul.mubr.f32.gmra.mxu0 %v1907
      %v2274 = vpop.f32.mrf.mxu0
      %v2275 = vadd.f32 0.0, %v2274
      %v2276 = vpop.f32.mrf.mxu0
      %v2277 = vadd.f32 0.0, %v2276
      %2278 = vmatprep.mubr.f32.mxu0 0.0
      %2279 = vmatmul.mubr.f32.gmra.mxu0 %v1909
      %v2280 = vpop.f32.mrf.mxu0
      %v2281 = vadd.f32 0.0, %v2280
      %v2282 = vpop.f32.mrf.mxu0
      %v2283 = vadd.f32 0.0, %v2282
      %2284 = vmatprep.mubr.f32.mxu0 0.0
      %2285 = vmatmul.mubr.f32.gmra.mxu0 %v1911
      %v2286 = vpop.f32.mrf.mxu0
      %v2287 = vadd.f32 0.0, %v2286
      %v2288 = vpop.f32.mrf.mxu0
      %v2289 = vadd.f32 0.0, %v2288
      %2290 = vmatprep.mubr.f32.mxu0 0.0
      %2291 = vmatmul.mubr.f32.gmra.mxu0 %v1913
      %v2292 = vpop.f32.mrf.mxu0
      %v2293 = vadd.f32 0.0, %v2292
      %v2294 = vpop.f32.mrf.mxu0
      %v2295 = vadd.f32 0.0, %v2294
      %2296 = vmatprep.mubr.f32.mxu0 0.0
      %2297 = vmatmul.mubr.f32.gmra.mxu0 %v1915
      %v2298 = vpop.f32.mrf.mxu0
      %v2299 = vadd.f32 0.0, %v2298
      %v2300 = vpop.f32.mrf.mxu0
      %v2301 = vadd.f32 0.0, %v2300
      %2302 = vmatprep.mubr.f32.mxu0 0.0
      %2303 = vmatmul.mubr.f32.gmra.mxu0 %v1917
      %v2304 = vpop.f32.mrf.mxu0
      %v2305 = vadd.f32 0.0, %v2304
      %v2306 = vpop.f32.mrf.mxu0
      %v2307 = vadd.f32 0.0, %v2306
      %2308 = vmatprep.mubr.f32.mxu0 0.0
      %2309 = vmatmul.mubr.f32.gmra.mxu0 %v1919
      %v2310 = vpop.f32.mrf.mxu0
      %v2311 = vadd.f32 0.0, %v2310
      %v2312 = vpop.f32.mrf.mxu0
      %v2313 = vadd.f32 0.0, %v2312
      %2314 = vmatprep.mubr.f32.mxu0 0.0
      %2315 = vmatmul.mubr.f32.gmra.mxu0 %v1921
      %v2316 = vpop.f32.mrf.mxu0
      %v2317 = vadd.f32 0.0, %v2316
      %v2318 = vpop.f32.mrf.mxu0
      %v2319 = vadd.f32 0.0, %v2318
      %2320 = vmatprep.mubr.f32.mxu0 0.0
      %2321 = vmatmul.mubr.f32.gmra.mxu0 %v1923
      %v2322 = vpop.f32.mrf.mxu0
      %v2323 = vadd.f32 0.0, %v2322
      %v2324 = vpop.f32.mrf.mxu0
      %v2325 = vadd.f32 0.0, %v2324
      %2326 = vmatprep.mubr.f32.mxu0 0.0
      %2327 = vmatmul.mubr.f32.gmra.mxu0 %v1925
      %v2328 = vpop.f32.mrf.mxu0
      %v2329 = vadd.f32 0.0, %v2328
      %v2330 = vpop.f32.mrf.mxu0
      %v2331 = vadd.f32 0.0, %v2330
      %2332 = vmatprep.mubr.f32.mxu0 0.0
      %2333 = vmatmul.mubr.f32.gmra.mxu0 %v1927
      %v2334 = vpop.f32.mrf.mxu0
      %v2335 = vadd.f32 0.0, %v2334
      %v2336 = vpop.f32.mrf.mxu0
      %v2337 = vadd.f32 0.0, %v2336
      %2338 = vmatprep.mubr.f32.mxu0 0.0
      %2339 = vmatmul.mubr.f32.gmra.mxu0 %v1929
      %v2340 = vpop.f32.mrf.mxu0
      %v2341 = vadd.f32 0.0, %v2340
      %v2342 = vpop.f32.mrf.mxu0
      %v2343 = vadd.f32 0.0, %v2342
      %2344 = vmatprep.mubr.f32.mxu0 0.0
      %2345 = vmatmul.mubr.f32.gmra.mxu0 %v1931
      %v2346 = vpop.f32.mrf.mxu0
      %v2347 = vadd.f32 0.0, %v2346
      %v2348 = vpop.f32.mrf.mxu0
      %v2349 = vadd.f32 0.0, %v2348
      %2350 = vmatprep.mubr.f32.mxu0 0.0
      %2351 = vmatmul.mubr.f32.gmra.mxu0 %v1933
      %v2352 = vpop.f32.mrf.mxu0
      %v2353 = vadd.f32 0.0, %v2352
      %v2354 = vpop.f32.mrf.mxu0
      %v2355 = vadd.f32 0.0, %v2354
      %2356 = vmatprep.mubr.f32.mxu0 0.0
      %2357 = vmatmul.mubr.f32.gmra.mxu0 %v1935
      %v2358 = vpop.f32.mrf.mxu0
      %v2359 = vadd.f32 0.0, %v2358
      %v2360 = vpop.f32.mrf.mxu0
      %v2361 = vadd.f32 0.0, %v2360
      %2362 = vmatprep.mubr.f32.mxu0 0.0
      %2363 = vmatmul.mubr.f32.gmra.mxu0 %v1937
      %v2364 = vpop.f32.mrf.mxu0
      %v2365 = vadd.f32 0.0, %v2364
      %v2366 = vpop.f32.mrf.mxu0
      %v2367 = vadd.f32 0.0, %v2366
      %2368 = vmatprep.mubr.f32.mxu0 0.0
      %2369 = vmatmul.mubr.f32.gmra.mxu0 %v1939
      %v2370 = vpop.f32.mrf.mxu0
      %v2371 = vadd.f32 0.0, %v2370
      %v2372 = vpop.f32.mrf.mxu0
      %v2373 = vadd.f32 0.0, %v2372
      %2374 = vmatprep.mubr.f32.mxu0 0.0
      %2375 = vmatmul.mubr.f32.gmra.mxu0 %v1941
      %v2376 = vpop.f32.mrf.mxu0
      %v2377 = vadd.f32 0.0, %v2376
      %v2378 = vpop.f32.mrf.mxu0
      %v2379 = vadd.f32 0.0, %v2378
      %2380 = vmatprep.mubr.f32.mxu0 0.0
      %2381 = vmatmul.mubr.f32.gmra.mxu0 %v1943
      %v2382 = vpop.f32.mrf.mxu0
      %v2383 = vadd.f32 0.0, %v2382
      %v2384 = vpop.f32.mrf.mxu0
      %v2385 = vadd.f32 0.0, %v2384
      %2386 = vdwg.mxu0
      %v2387 = vadd.f32 %v1429, %v2024
      %v2388 = vadd.f32 %v1431, %v2026
      %v2389 = vadd.f32 %v1644, %v2239
      %v2390 = vadd.f32 %v1646, %v2241
      %v2391 = vadd.f32 %v1435, %v2030
      %v2392 = vadd.f32 %v1437, %v2032
      %v2393 = vadd.f32 %v1650, %v2245
      %v2394 = vadd.f32 %v1652, %v2247
      %v2395 = vadd.f32 %v1441, %v2036
      %v2396 = vadd.f32 %v1443, %v2038
      %v2397 = vadd.f32 %v1656, %v2251
      %v2398 = vadd.f32 %v1658, %v2253
      %v2399 = vadd.f32 %v1447, %v2042
      %v2400 = vadd.f32 %v1449, %v2044
      %v2401 = vadd.f32 %v1662, %v2257
      %v2402 = vadd.f32 %v1664, %v2259
      %v2403 = vadd.f32 %v1453, %v2048
      %v2404 = vadd.f32 %v1455, %v2050
      %v2405 = vadd.f32 %v1668, %v2263
      %v2406 = vadd.f32 %v1670, %v2265
      %v2407 = vadd.f32 %v1459, %v2054
      %v2408 = vadd.f32 %v1461, %v2056
      %v2409 = vadd.f32 %v1674, %v2269
      %v2410 = vadd.f32 %v1676, %v2271
      %v2411 = vadd.f32 %v1465, %v2060
      %v2412 = vadd.f32 %v1467, %v2062
      %v2413 = vadd.f32 %v1680, %v2275
      %v2414 = vadd.f32 %v1682, %v2277
      %v2415 = vadd.f32 %v1471, %v2066
      %v2416 = vadd.f32 %v1473, %v2068
      %v2417 = vadd.f32 %v1686, %v2281
      %v2418 = vadd.f32 %v1688, %v2283
      %v2419 = vadd.f32 %v1477, %v2072
      %v2420 = vadd.f32 %v1479, %v2074
      %v2421 = vadd.f32 %v1692, %v2287
      %v2422 = vadd.f32 %v1694, %v2289
      %v2423 = vadd.f32 %v1483, %v2078
      %v2424 = vadd.f32 %v1485, %v2080
      %v2425 = vadd.f32 %v1698, %v2293
      %v2426 = vadd.f32 %v1700, %v2295
      %v2427 = vadd.f32 %v1489, %v2084
      %v2428 = vadd.f32 %v1491, %v2086
      %v2429 = vadd.f32 %v1704, %v2299
      %v2430 = vadd.f32 %v1706, %v2301
      %v2431 = vadd.f32 %v1495, %v2090
      %v2432 = vadd.f32 %v1497, %v2092
      %v2433 = vadd.f32 %v1710, %v2305
      %v2434 = vadd.f32 %v1712, %v2307
      %v2435 = vadd.f32 %v1501, %v2096
      %v2436 = vadd.f32 %v1503, %v2098
      %v2437 = vadd.f32 %v1716, %v2311
      %v2438 = vadd.f32 %v1718, %v2313
      %v2439 = vadd.f32 %v1507, %v2102
      %v2440 = vadd.f32 %v1509, %v2104
      %v2441 = vadd.f32 %v1722, %v2317
      %v2442 = vadd.f32 %v1724, %v2319
      %v2443 = vadd.f32 %v1513, %v2108
      %v2444 = vadd.f32 %v1515, %v2110
      %v2445 = vadd.f32 %v1728, %v2323
      %v2446 = vadd.f32 %v1730, %v2325
      %v2447 = vadd.f32 %v1519, %v2114
      %v2448 = vadd.f32 %v1521, %v2116
      %v2449 = vadd.f32 %v1734, %v2329
      %v2450 = vadd.f32 %v1736, %v2331
      %v2451 = vadd.f32 %v1525, %v2120
      %v2452 = vadd.f32 %v1527, %v2122
      %v2453 = vadd.f32 %v1740, %v2335
      %v2454 = vadd.f32 %v1742, %v2337
      %v2455 = vadd.f32 %v1531, %v2126
      %v2456 = vadd.f32 %v1533, %v2128
      %v2457 = vadd.f32 %v1746, %v2341
      %v2458 = vadd.f32 %v1748, %v2343
      %v2459 = vadd.f32 %v1537, %v2132
      %v2460 = vadd.f32 %v1539, %v2134
      %v2461 = vadd.f32 %v1752, %v2347
      %v2462 = vadd.f32 %v1754, %v2349
      %v2463 = vadd.f32 %v1543, %v2138
      %v2464 = vadd.f32 %v1545, %v2140
      %v2465 = vadd.f32 %v1758, %v2353
      %v2466 = vadd.f32 %v1760, %v2355
      %v2467 = vadd.f32 %v1549, %v2144
      %v2468 = vadd.f32 %v1551, %v2146
      %v2469 = vadd.f32 %v1764, %v2359
      %v2470 = vadd.f32 %v1766, %v2361
      %v2471 = vadd.f32 %v1555, %v2150
      %v2472 = vadd.f32 %v1557, %v2152
      %v2473 = vadd.f32 %v1770, %v2365
      %v2474 = vadd.f32 %v1772, %v2367
      %v2475 = vadd.f32 %v1561, %v2156
      %v2476 = vadd.f32 %v1563, %v2158
      %v2477 = vadd.f32 %v1776, %v2371
      %v2478 = vadd.f32 %v1778, %v2373
      %v2479 = vadd.f32 %v1567, %v2162
      %v2480 = vadd.f32 %v1569, %v2164
      %v2481 = vadd.f32 %v1782, %v2377
      %v2482 = vadd.f32 %v1784, %v2379
      %v2483 = vadd.f32 %v1573, %v2168
      %v2484 = vadd.f32 %v1575, %v2170
      %v2485 = vadd.f32 %v1788, %v2383
      %v2486 = vadd.f32 %v1790, %v2385
      %v2587 = vrot.slane %v2387, 1
      %v2588 = vrot.slane %v2391, 1
      %v2589 = vsel %vm756, %v2587, %v2588
      %v2590 = vrot.slane %v2388, 1
      %v2591 = vrot.slane %v2392, 1
      %v2592 = vsel %vm756, %v2590, %v2591
      %v2593 = vrot.slane %v2389, 1
      %v2594 = vrot.slane %v2393, 1
      %v2595 = vsel %vm756, %v2593, %v2594
      %v2596 = vrot.slane %v2390, 1
      %v2597 = vrot.slane %v2394, 1
      %v2598 = vsel %vm756, %v2596, %v2597
      %v2599 = vrot.slane %v2395, 1
      %v2600 = vsel %vm756, %v2588, %v2599
      %v2601 = vrot.slane %v2396, 1
      %v2602 = vsel %vm756, %v2591, %v2601
      %v2603 = vrot.slane %v2397, 1
      %v2604 = vsel %vm756, %v2594, %v2603
      %v2605 = vrot.slane %v2398, 1
      %v2606 = vsel %vm756, %v2597, %v2605
      %v2607 = vrot.slane %v2399, 1
      %v2608 = vsel %vm756, %v2599, %v2607
      %v2609 = vrot.slane %v2400, 1
      %v2610 = vsel %vm756, %v2601, %v2609
      %v2611 = vrot.slane %v2401, 1
      %v2612 = vsel %vm756, %v2603, %v2611
      %v2613 = vrot.slane %v2402, 1
      %v2614 = vsel %vm756, %v2605, %v2613
      %v2615 = vrot.slane %v2403, 1
      %v2616 = vsel %vm756, %v2607, %v2615
      %v2617 = vrot.slane %v2404, 1
      %v2618 = vsel %vm756, %v2609, %v2617
      %v2619 = vrot.slane %v2405, 1
      %v2620 = vsel %vm756, %v2611, %v2619
      %v2621 = vrot.slane %v2406, 1
      %v2622 = vsel %vm756, %v2613, %v2621
      %v2623 = vrot.slane %v2407, 1
      %v2624 = vsel %vm756, %v2615, %v2623
      %v2625 = vrot.slane %v2408, 1
      %v2626 = vsel %vm756, %v2617, %v2625
      %v2627 = vrot.slane %v2409, 1
      %v2628 = vsel %vm756, %v2619, %v2627
      %v2629 = vrot.slane %v2410, 1
      %v2630 = vsel %vm756, %v2621, %v2629
      %v2631 = vrot.slane %v2411, 1
      %v2632 = vsel %vm756, %v2623, %v2631
      %v2633 = vrot.slane %v2412, 1
      %v2634 = vsel %vm756, %v2625, %v2633
      %v2635 = vrot.slane %v2413, 1
      %v2636 = vsel %vm756, %v2627, %v2635
      %v2637 = vrot.slane %v2414, 1
      %v2638 = vsel %vm756, %v2629, %v2637
      %v2639 = vrot.slane %v2415, 1
      %v2640 = vsel %vm756, %v2631, %v2639
      %v2641 = vrot.slane %v2416, 1
      %v2642 = vsel %vm756, %v2633, %v2641
      %v2643 = vrot.slane %v2417, 1
      %v2644 = vsel %vm756, %v2635, %v2643
      %v2645 = vrot.slane %v2418, 1
      %v2646 = vsel %vm756, %v2637, %v2645
      %v2647 = vrot.slane %v2419, 1
      %v2648 = vsel %vm756, %v2639, %v2647
      %v2649 = vrot.slane %v2420, 1
      %v2650 = vsel %vm756, %v2641, %v2649
      %v2651 = vrot.slane %v2421, 1
      %v2652 = vsel %vm756, %v2643, %v2651
      %v2653 = vrot.slane %v2422, 1
      %v2654 = vsel %vm756, %v2645, %v2653
      %v2655 = vrot.slane %v2423, 1
      %v2656 = vsel %vm756, %v2647, %v2655
      %v2657 = vrot.slane %v2424, 1
      %v2658 = vsel %vm756, %v2649, %v2657
      %v2659 = vrot.slane %v2425, 1
      %v2660 = vsel %vm756, %v2651, %v2659
      %v2661 = vrot.slane %v2426, 1
      %v2662 = vsel %vm756, %v2653, %v2661
      %v2663 = vrot.slane %v2427, 1
      %v2664 = vsel %vm756, %v2655, %v2663
      %v2665 = vrot.slane %v2428, 1
      %v2666 = vsel %vm756, %v2657, %v2665
      %v2667 = vrot.slane %v2429, 1
      %v2668 = vsel %vm756, %v2659, %v2667
      %v2669 = vrot.slane %v2430, 1
      %v2670 = vsel %vm756, %v2661, %v2669
      %v2671 = vrot.slane %v2431, 1
      %v2672 = vsel %vm756, %v2663, %v2671
      %v2673 = vrot.slane %v2432, 1
      %v2674 = vsel %vm756, %v2665, %v2673
      %v2675 = vrot.slane %v2433, 1
      %v2676 = vsel %vm756, %v2667, %v2675
      %v2677 = vrot.slane %v2434, 1
      %v2678 = vsel %vm756, %v2669, %v2677
      %v2679 = vrot.slane %v2435, 1
      %v2680 = vsel %vm756, %v2671, %v2679
      %v2681 = vrot.slane %v2436, 1
      %v2682 = vsel %vm756, %v2673, %v2681
      %v2683 = vrot.slane %v2437, 1
      %v2684 = vsel %vm756, %v2675, %v2683
      %v2685 = vrot.slane %v2438, 1
      %v2686 = vsel %vm756, %v2677, %v2685
      %v2687 = vrot.slane %v2439, 1
      %v2688 = vsel %vm756, %v2679, %v2687
      %v2689 = vrot.slane %v2440, 1
      %v2690 = vsel %vm756, %v2681, %v2689
      %v2691 = vrot.slane %v2441, 1
      %v2692 = vsel %vm756, %v2683, %v2691
      %v2693 = vrot.slane %v2442, 1
      %v2694 = vsel %vm756, %v2685, %v2693
      %v2695 = vrot.slane %v2443, 1
      %v2696 = vsel %vm756, %v2687, %v2695
      %v2697 = vrot.slane %v2444, 1
      %v2698 = vsel %vm756, %v2689, %v2697
      %v2699 = vrot.slane %v2445, 1
      %v2700 = vsel %vm756, %v2691, %v2699
      %v2701 = vrot.slane %v2446, 1
      %v2702 = vsel %vm756, %v2693, %v2701
      %v2703 = vrot.slane %v2447, 1
      %v2704 = vsel %vm756, %v2695, %v2703
      %v2705 = vrot.slane %v2448, 1
      %v2706 = vsel %vm756, %v2697, %v2705
      %v2707 = vrot.slane %v2449, 1
      %v2708 = vsel %vm756, %v2699, %v2707
      %v2709 = vrot.slane %v2450, 1
      %v2710 = vsel %vm756, %v2701, %v2709
      %v2711 = vrot.slane %v2451, 1
      %v2712 = vsel %vm756, %v2703, %v2711
      %v2713 = vrot.slane %v2452, 1
      %v2714 = vsel %vm756, %v2705, %v2713
      %v2715 = vrot.slane %v2453, 1
      %v2716 = vsel %vm756, %v2707, %v2715
      %v2717 = vrot.slane %v2454, 1
      %v2718 = vsel %vm756, %v2709, %v2717
      %v2719 = vrot.slane %v2455, 1
      %v2720 = vsel %vm756, %v2711, %v2719
      %v2721 = vrot.slane %v2456, 1
      %v2722 = vsel %vm756, %v2713, %v2721
      %v2723 = vrot.slane %v2457, 1
      %v2724 = vsel %vm756, %v2715, %v2723
      %v2725 = vrot.slane %v2458, 1
      %v2726 = vsel %vm756, %v2717, %v2725
      %v2727 = vrot.slane %v2459, 1
      %v2728 = vsel %vm756, %v2719, %v2727
      %v2729 = vrot.slane %v2460, 1
      %v2730 = vsel %vm756, %v2721, %v2729
      %v2731 = vrot.slane %v2461, 1
      %v2732 = vsel %vm756, %v2723, %v2731
      %v2733 = vrot.slane %v2462, 1
      %v2734 = vsel %vm756, %v2725, %v2733
      %v2735 = vrot.slane %v2463, 1
      %v2736 = vsel %vm756, %v2727, %v2735
      %v2737 = vrot.slane %v2464, 1
      %v2738 = vsel %vm756, %v2729, %v2737
      %v2739 = vrot.slane %v2465, 1
      %v2740 = vsel %vm756, %v2731, %v2739
      %v2741 = vrot.slane %v2466, 1
      %v2742 = vsel %vm756, %v2733, %v2741
      %v2743 = vrot.slane %v2467, 1
      %v2744 = vsel %vm756, %v2735, %v2743
      %v2745 = vrot.slane %v2468, 1
      %v2746 = vsel %vm756, %v2737, %v2745
      %v2747 = vrot.slane %v2469, 1
      %v2748 = vsel %vm756, %v2739, %v2747
      %v2749 = vrot.slane %v2470, 1
      %v2750 = vsel %vm756, %v2741, %v2749
      %v2751 = vrot.slane %v2471, 1
      %v2752 = vsel %vm756, %v2743, %v2751
      %v2753 = vrot.slane %v2472, 1
      %v2754 = vsel %vm756, %v2745, %v2753
      %v2755 = vrot.slane %v2473, 1
      %v2756 = vsel %vm756, %v2747, %v2755
      %v2757 = vrot.slane %v2474, 1
      %v2758 = vsel %vm756, %v2749, %v2757
      %v2759 = vrot.slane %v2475, 1
      %v2760 = vsel %vm756, %v2751, %v2759
      %v2761 = vrot.slane %v2476, 1
      %v2762 = vsel %vm756, %v2753, %v2761
      %v2763 = vrot.slane %v2477, 1
      %v2764 = vsel %vm756, %v2755, %v2763
      %v2765 = vrot.slane %v2478, 1
      %v2766 = vsel %vm756, %v2757, %v2765
      %v2767 = vrot.slane %v2479, 1
      %v2768 = vsel %vm756, %v2759, %v2767
      %v2769 = vrot.slane %v2480, 1
      %v2770 = vsel %vm756, %v2761, %v2769
      %v2771 = vrot.slane %v2481, 1
      %v2772 = vsel %vm756, %v2763, %v2771
      %v2773 = vrot.slane %v2482, 1
      %v2774 = vsel %vm756, %v2765, %v2773
      %v2775 = vrot.slane %v2483, 1
      %v2776 = vsel %vm756, %v2767, %v2775
      %v2777 = vrot.slane %v2484, 1
      %v2778 = vsel %vm756, %v2769, %v2777
      %v2779 = vrot.slane %v2485, 1
      %v2780 = vsel %vm756, %v2771, %v2779
      %v2781 = vrot.slane %v2486, 1
      %v2782 = vsel %vm756, %v2773, %v2781
      %v2883 = vmax.f32 %v2387, %v2589
      %v2884 = vmax.f32 %v2388, %v2592
      %v2885 = vmax.f32 %v2389, %v2595
      %v2886 = vmax.f32 %v2390, %v2598
      %v2887 = vmax.f32 %v2391, %v2600
      %v2888 = vmax.f32 %v2392, %v2602
      %v2889 = vmax.f32 %v2393, %v2604
      %v2890 = vmax.f32 %v2394, %v2606
      %v2891 = vmax.f32 %v2395, %v2608
      %v2892 = vmax.f32 %v2396, %v2610
      %v2893 = vmax.f32 %v2397, %v2612
      %v2894 = vmax.f32 %v2398, %v2614
      %v2895 = vmax.f32 %v2399, %v2616
      %v2896 = vmax.f32 %v2400, %v2618
      %v2897 = vmax.f32 %v2401, %v2620
      %v2898 = vmax.f32 %v2402, %v2622
      %v2899 = vmax.f32 %v2403, %v2624
      %v2900 = vmax.f32 %v2404, %v2626
      %v2901 = vmax.f32 %v2405, %v2628
      %v2902 = vmax.f32 %v2406, %v2630
      %v2903 = vmax.f32 %v2407, %v2632
      %v2904 = vmax.f32 %v2408, %v2634
      %v2905 = vmax.f32 %v2409, %v2636
      %v2906 = vmax.f32 %v2410, %v2638
      %v2907 = vmax.f32 %v2411, %v2640
      %v2908 = vmax.f32 %v2412, %v2642
      %v2909 = vmax.f32 %v2413, %v2644
      %v2910 = vmax.f32 %v2414, %v2646
      %v2911 = vmax.f32 %v2415, %v2648
      %v2912 = vmax.f32 %v2416, %v2650
      %v2913 = vmax.f32 %v2417, %v2652
      %v2914 = vmax.f32 %v2418, %v2654
      %v2915 = vmax.f32 %v2419, %v2656
      %v2916 = vmax.f32 %v2420, %v2658
      %v2917 = vmax.f32 %v2421, %v2660
      %v2918 = vmax.f32 %v2422, %v2662
      %v2919 = vmax.f32 %v2423, %v2664
      %v2920 = vmax.f32 %v2424, %v2666
      %v2921 = vmax.f32 %v2425, %v2668
      %v2922 = vmax.f32 %v2426, %v2670
      %v2923 = vmax.f32 %v2427, %v2672
      %v2924 = vmax.f32 %v2428, %v2674
      %v2925 = vmax.f32 %v2429, %v2676
      %v2926 = vmax.f32 %v2430, %v2678
      %v2927 = vmax.f32 %v2431, %v2680
      %v2928 = vmax.f32 %v2432, %v2682
      %v2929 = vmax.f32 %v2433, %v2684
      %v2930 = vmax.f32 %v2434, %v2686
      %v2931 = vmax.f32 %v2435, %v2688
      %v2932 = vmax.f32 %v2436, %v2690
      %v2933 = vmax.f32 %v2437, %v2692
      %v2934 = vmax.f32 %v2438, %v2694
      %v2935 = vmax.f32 %v2439, %v2696
      %v2936 = vmax.f32 %v2440, %v2698
      %v2937 = vmax.f32 %v2441, %v2700
      %v2938 = vmax.f32 %v2442, %v2702
      %v2939 = vmax.f32 %v2443, %v2704
      %v2940 = vmax.f32 %v2444, %v2706
      %v2941 = vmax.f32 %v2445, %v2708
      %v2942 = vmax.f32 %v2446, %v2710
      %v2943 = vmax.f32 %v2447, %v2712
      %v2944 = vmax.f32 %v2448, %v2714
      %v2945 = vmax.f32 %v2449, %v2716
      %v2946 = vmax.f32 %v2450, %v2718
      %v2947 = vmax.f32 %v2451, %v2720
      %v2948 = vmax.f32 %v2452, %v2722
      %v2949 = vmax.f32 %v2453, %v2724
      %v2950 = vmax.f32 %v2454, %v2726
      %v2951 = vmax.f32 %v2455, %v2728
      %v2952 = vmax.f32 %v2456, %v2730
      %v2953 = vmax.f32 %v2457, %v2732
      %v2954 = vmax.f32 %v2458, %v2734
      %v2955 = vmax.f32 %v2459, %v2736
      %v2956 = vmax.f32 %v2460, %v2738
      %v2957 = vmax.f32 %v2461, %v2740
      %v2958 = vmax.f32 %v2462, %v2742
      %v2959 = vmax.f32 %v2463, %v2744
      %v2960 = vmax.f32 %v2464, %v2746
      %v2961 = vmax.f32 %v2465, %v2748
      %v2962 = vmax.f32 %v2466, %v2750
      %v2963 = vmax.f32 %v2467, %v2752
      %v2964 = vmax.f32 %v2468, %v2754
      %v2965 = vmax.f32 %v2469, %v2756
      %v2966 = vmax.f32 %v2470, %v2758
      %v2967 = vmax.f32 %v2471, %v2760
      %v2968 = vmax.f32 %v2472, %v2762
      %v2969 = vmax.f32 %v2473, %v2764
      %v2970 = vmax.f32 %v2474, %v2766
      %v2971 = vmax.f32 %v2475, %v2768
      %v2972 = vmax.f32 %v2476, %v2770
      %v2973 = vmax.f32 %v2477, %v2772
      %v2974 = vmax.f32 %v2478, %v2774
      %v2975 = vmax.f32 %v2479, %v2776
      %v2976 = vmax.f32 %v2480, %v2778
      %v2977 = vmax.f32 %v2481, %v2780
      %v2978 = vmax.f32 %v2482, %v2782
      %v2979 = vmax.f32 %v2483, %v2775
      %v2980 = vmax.f32 %v2484, %v2777
      %v2981 = vmax.f32 %v2485, %v2779
      %v2982 = vmax.f32 %v2486, %v2781
      %v2983 = vld [vmem:[%s2] sm:$0xff]
      %v2984 = vld [vmem:[%s2 + $0x8] sm:$0xff]
      %v2985 = vld [vmem:[%s2 + $0x10] sm:$0xff]
      %v2986 = vld [vmem:[%s2 + $0x18] sm:$0xff]
      %v2987 = vld [vmem:[%s2 + $0x20] sm:$0xff]
      %v2988 = vld [vmem:[%s2 + $0x28] sm:$0xff]
      %v2989 = vld [vmem:[%s2 + $0x30] sm:$0xff]
      %v2990 = vld [vmem:[%s2 + $0x38] sm:$0xff]
      %v2991 = vld [vmem:[%s2 + $0x40] sm:$0xff]
      %v2992 = vld [vmem:[%s2 + $0x48] sm:$0xff]
      %v2993 = vld [vmem:[%s2 + $0x50] sm:$0xff]
      %v2994 = vld [vmem:[%s2 + $0x58] sm:$0xff]
      %v2995 = vld [vmem:[%s2 + $0x60] sm:$0xff]
      %v2996 = vld [vmem:[%s2 + $0x68] sm:$0xff]
      %v2997 = vld [vmem:[%s2 + $0x70] sm:$0xff]
      %v2998 = vld [vmem:[%s2 + $0x78] sm:$0xff]
      %v2999 = vld [vmem:[%s2 + $0x80] sm:$0xff]
      %v3000 = vld [vmem:[%s2 + $0x88] sm:$0xff]
      %v3001 = vld [vmem:[%s2 + $0x90] sm:$0xff]
      %v3002 = vld [vmem:[%s2 + $0x98] sm:$0xff]
      %v3003 = vld [vmem:[%s2 + $0xa0] sm:$0xff]
      %v3004 = vld [vmem:[%s2 + $0xa8] sm:$0xff]
      %v3005 = vld [vmem:[%s2 + $0xb0] sm:$0xff]
      %v3006 = vld [vmem:[%s2 + $0xb8] sm:$0xff]
      %v3007 = vld [vmem:[%s2 + $0xc0] sm:$0xff]
      %v3008 = vld [vmem:[%s2 + $0xc8] sm:$0xff]
      %v3009 = vld [vmem:[%s2 + $0xd0] sm:$0xff]
      %v3010 = vld [vmem:[%s2 + $0xd8] sm:$0xff]
      %v3011 = vld [vmem:[%s2 + $0xe0] sm:$0xff]
      %v3012 = vld [vmem:[%s2 + $0xe8] sm:$0xff]
      %v3013 = vld [vmem:[%s2 + $0xf0] sm:$0xff]
      %v3014 = vld [vmem:[%s2 + $0xf8] sm:$0xff]
      %v3015 = vld [vmem:[%s2 + $0x100] sm:$0xff]
      %v3016 = vld [vmem:[%s2 + $0x108] sm:$0xff]
      %v3017 = vld [vmem:[%s2 + $0x110] sm:$0xff]
      %v3018 = vld [vmem:[%s2 + $0x118] sm:$0xff]
      %v3019 = vld [vmem:[%s2 + $0x120] sm:$0xff]
      %v3020 = vld [vmem:[%s2 + $0x128] sm:$0xff]
      %v3021 = vld [vmem:[%s2 + $0x130] sm:$0xff]
      %v3022 = vld [vmem:[%s2 + $0x138] sm:$0xff]
      %v3023 = vld [vmem:[%s2 + $0x140] sm:$0xff]
      %v3024 = vld [vmem:[%s2 + $0x148] sm:$0xff]
      %v3025 = vld [vmem:[%s2 + $0x150] sm:$0xff]
      %v3026 = vld [vmem:[%s2 + $0x158] sm:$0xff]
      %v3027 = vld [vmem:[%s2 + $0x160] sm:$0xff]
      %v3028 = vld [vmem:[%s2 + $0x168] sm:$0xff]
      %v3029 = vld [vmem:[%s2 + $0x170] sm:$0xff]
      %v3030 = vld [vmem:[%s2 + $0x178] sm:$0xff]
      %v3031 = vld [vmem:[%s2 + $0x180] sm:$0xff]
      %v3032 = vld [vmem:[%s2 + $0x188] sm:$0xff]
      %v3033 = vld [vmem:[%s2 + $0x190] sm:$0xff]
      %v3034 = vld [vmem:[%s2 + $0x198] sm:$0xff]
      %v3035 = vld [vmem:[%s2 + $0x1a0] sm:$0xff]
      %v3036 = vld [vmem:[%s2 + $0x1a8] sm:$0xff]
      %v3037 = vld [vmem:[%s2 + $0x1b0] sm:$0xff]
      %v3038 = vld [vmem:[%s2 + $0x1b8] sm:$0xff]
      %v3039 = vld [vmem:[%s2 + $0x1c0] sm:$0xff]
      %v3040 = vld [vmem:[%s2 + $0x1c8] sm:$0xff]
      %v3041 = vld [vmem:[%s2 + $0x1d0] sm:$0xff]
      %v3042 = vld [vmem:[%s2 + $0x1d8] sm:$0xff]
      %v3043 = vld [vmem:[%s2 + $0x1e0] sm:$0xff]
      %v3044 = vld [vmem:[%s2 + $0x1e8] sm:$0xff]
      %v3045 = vld [vmem:[%s2 + $0x1f0] sm:$0xff]
      %v3046 = vld [vmem:[%s2 + $0x1f8] sm:$0xff]
      %v3047 = vld [vmem:[%s2 + $0x200] sm:$0xff]
      %v3048 = vld [vmem:[%s2 + $0x208] sm:$0xff]
      %v3049 = vld [vmem:[%s2 + $0x210] sm:$0xff]
      %v3050 = vld [vmem:[%s2 + $0x218] sm:$0xff]
      %v3051 = vld [vmem:[%s2 + $0x220] sm:$0xff]
      %v3052 = vld [vmem:[%s2 + $0x228] sm:$0xff]
      %v3053 = vld [vmem:[%s2 + $0x230] sm:$0xff]
      %v3054 = vld [vmem:[%s2 + $0x238] sm:$0xff]
      %v3055 = vld [vmem:[%s2 + $0x240] sm:$0xff]
      %v3056 = vld [vmem:[%s2 + $0x248] sm:$0xff]
      %v3057 = vld [vmem:[%s2 + $0x250] sm:$0xff]
      %v3058 = vld [vmem:[%s2 + $0x258] sm:$0xff]
      %v3059 = vld [vmem:[%s2 + $0x260] sm:$0xff]
      %v3060 = vld [vmem:[%s2 + $0x268] sm:$0xff]
      %v3061 = vld [vmem:[%s2 + $0x270] sm:$0xff]
      %v3062 = vld [vmem:[%s2 + $0x278] sm:$0xff]
      %v3063 = vld [vmem:[%s2 + $0x280] sm:$0xff]
      %v3064 = vld [vmem:[%s2 + $0x288] sm:$0xff]
      %v3065 = vld [vmem:[%s2 + $0x290] sm:$0xff]
      %v3066 = vld [vmem:[%s2 + $0x298] sm:$0xff]
      %v3067 = vld [vmem:[%s2 + $0x2a0] sm:$0xff]
      %v3068 = vld [vmem:[%s2 + $0x2a8] sm:$0xff]
      %v3069 = vld [vmem:[%s2 + $0x2b0] sm:$0xff]
      %v3070 = vld [vmem:[%s2 + $0x2b8] sm:$0xff]
      %v3071 = vld [vmem:[%s2 + $0x2c0] sm:$0xff]
      %v3072 = vld [vmem:[%s2 + $0x2c8] sm:$0xff]
      %v3073 = vld [vmem:[%s2 + $0x2d0] sm:$0xff]
      %v3074 = vld [vmem:[%s2 + $0x2d8] sm:$0xff]
      %v3075 = vld [vmem:[%s2 + $0x2e0] sm:$0xff]
      %v3076 = vld [vmem:[%s2 + $0x2e8] sm:$0xff]
      %v3077 = vld [vmem:[%s2 + $0x2f0] sm:$0xff]
      %v3078 = vld [vmem:[%s2 + $0x2f8] sm:$0xff]
      %v3079 = vld [vmem:[%s2 + $0x300] sm:$0x7f]
      %v3080 = vld [vmem:[%s2 + $0x308] sm:$0x7f]
      %vm3081 = vcmask 56320
      %v3083 = vsel %vm3081, %v2886, 0
      %v3086 = vsel %vm3081, %v2890, 0
      %v3089 = vsel %vm3081, %v2894, 0
      %v3092 = vsel %vm3081, %v2898, 0
      %v3095 = vsel %vm3081, %v2902, 0
      %v3098 = vsel %vm3081, %v2906, 0
      %v3101 = vsel %vm3081, %v2910, 0
      %v3104 = vsel %vm3081, %v2914, 0
      %v3107 = vsel %vm3081, %v2918, 0
      %v3110 = vsel %vm3081, %v2922, 0
      %v3113 = vsel %vm3081, %v2926, 0
      %v3116 = vsel %vm3081, %v2930, 0
      %v3119 = vsel %vm3081, %v2934, 0
      %v3122 = vsel %vm3081, %v2938, 0
      %v3125 = vsel %vm3081, %v2942, 0
      %v3128 = vsel %vm3081, %v2946, 0
      %v3131 = vsel %vm3081, %v2950, 0
      %v3134 = vsel %vm3081, %v2954, 0
      %v3137 = vsel %vm3081, %v2958, 0
      %v3140 = vsel %vm3081, %v2962, 0
      %v3143 = vsel %vm3081, %v2966, 0
      %v3146 = vsel %vm3081, %v2970, 0
      %v3149 = vsel %vm3081, %v2974, 0
      %v3152 = vsel %vm3081, %v2978, 0
      %v3155 = vsel %vm3081, %v2982, 0
      %v3158 = vsel %vm756, %v3079, 0
      %v3161 = vsel %vm756, %v3080, 0
      %3163 = vmatprep.subr.mxu0 %v3014
      %3164 = vmatpush1.msra.mxu0 %v3013
      %3165 = vmatprep.subr.mxu0 %v3012
      %3166 = vmatpush1.msra.mxu0 %v3011
      %3167 = vmatprep.subr.mxu0 %v3010
      %3168 = vmatpush1.msra.mxu0 %v3009
      %3169 = vmatprep.subr.mxu0 %v3008
      %3170 = vmatpush1.msra.mxu0 %v3007
      %3171 = vmatprep.subr.mxu0 %v3006
      %3172 = vmatpush1.msra.mxu0 %v3005
      %3173 = vmatprep.subr.mxu0 %v3004
      %3174 = vmatpush1.msra.mxu0 %v3003
      %3175 = vmatprep.subr.mxu0 %v3002
      %3176 = vmatpush1.msra.mxu0 %v3001
      %3177 = vmatprep.subr.mxu0 %v3000
      %3178 = vmatpush1.msra.mxu0 %v2999
      %3179 = vmatprep.subr.mxu0 %v2998
      %3180 = vmatpush1.msra.mxu0 %v2997
      %3181 = vmatprep.subr.mxu0 %v2996
      %3182 = vmatpush1.msra.mxu0 %v2995
      %3183 = vmatprep.subr.mxu0 %v2994
      %3184 = vmatpush1.msra.mxu0 %v2993
      %3185 = vmatprep.subr.mxu0 %v2992
      %3186 = vmatpush1.msra.mxu0 %v2991
      %3187 = vmatprep.subr.mxu0 %v2990
      %3188 = vmatpush1.msra.mxu0 %v2989
      %3189 = vmatprep.subr.mxu0 %v2988
      %3190 = vmatpush1.msra.mxu0 %v2987
      %3191 = vmatprep.subr.mxu0 %v2986
      %3192 = vmatpush1.msra.mxu0 %v2985
      %3193 = vmatprep.subr.mxu0 %v2984
      %3194 = vmatpush1.msra.mxu0 %v2983
      %3195 = vmatprep.subr.mxu0 %v3046
      %3196 = vmatpush2.msra.mxu0 %v3045
      %3197 = vmatprep.subr.mxu0 %v3044
      %3198 = vmatpush2.msra.mxu0 %v3043
      %3199 = vmatprep.subr.mxu0 %v3042
      %3200 = vmatpush2.msra.mxu0 %v3041
      %3201 = vmatprep.subr.mxu0 %v3040
      %3202 = vmatpush2.msra.mxu0 %v3039
      %3203 = vmatprep.subr.mxu0 %v3038
      %3204 = vmatpush2.msra.mxu0 %v3037
      %3205 = vmatprep.subr.mxu0 %v3036
      %3206 = vmatpush2.msra.mxu0 %v3035
      %3207 = vmatprep.subr.mxu0 %v3034
      %3208 = vmatpush2.msra.mxu0 %v3033
      %3209 = vmatprep.subr.mxu0 %v3032
      %3210 = vmatpush2.msra.mxu0 %v3031
      %3211 = vmatprep.subr.mxu0 %v3030
      %3212 = vmatpush2.msra.mxu0 %v3029
      %3213 = vmatprep.subr.mxu0 %v3028
      %3214 = vmatpush2.msra.mxu0 %v3027
      %3215 = vmatprep.subr.mxu0 %v3026
      %3216 = vmatpush2.msra.mxu0 %v3025
      %3217 = vmatprep.subr.mxu0 %v3024
      %3218 = vmatpush2.msra.mxu0 %v3023
      %3219 = vmatprep.subr.mxu0 %v3022
      %3220 = vmatpush2.msra.mxu0 %v3021
      %3221 = vmatprep.subr.mxu0 %v3020
      %3222 = vmatpush2.msra.mxu0 %v3019
      %3223 = vmatprep.subr.mxu0 %v3018
      %3224 = vmatpush2.msra.mxu0 %v3017
      %3225 = vmatprep.subr.mxu0 %v3016
      %3226 = vmatpush2.msra.mxu0 %v3015
      %3227 = vmatprep.mubr.f32.mxu0 %v2884
      %3228 = vmatmul.mubr.f32.gmra.mxu0 %v2883
      %v3229 = vpop.f32.mrf.mxu0
      %v3230 = vadd.f32 0.0, %v3229
      %v3231 = vpop.f32.mrf.mxu0
      %v3232 = vadd.f32 0.0, %v3231
      %3233 = vmatprep.mubr.f32.mxu0 %v2888
      %3234 = vmatmul.mubr.f32.gmra.mxu0 %v2887
      %v3235 = vpop.f32.mrf.mxu0
      %v3236 = vadd.f32 0.0, %v3235
      %v3237 = vpop.f32.mrf.mxu0
      %v3238 = vadd.f32 0.0, %v3237
      %3239 = vmatprep.mubr.f32.mxu0 %v2892
      %3240 = vmatmul.mubr.f32.gmra.mxu0 %v2891
      %v3241 = vpop.f32.mrf.mxu0
      %v3242 = vadd.f32 0.0, %v3241
      %v3243 = vpop.f32.mrf.mxu0
      %v3244 = vadd.f32 0.0, %v3243
      %3245 = vmatprep.mubr.f32.mxu0 %v2896
      %3246 = vmatmul.mubr.f32.gmra.mxu0 %v2895
      %v3247 = vpop.f32.mrf.mxu0
      %v3248 = vadd.f32 0.0, %v3247
      %v3249 = vpop.f32.mrf.mxu0
      %v3250 = vadd.f32 0.0, %v3249
      %3251 = vmatprep.mubr.f32.mxu0 %v2900
      %3252 = vmatmul.mubr.f32.gmra.mxu0 %v2899
      %v3253 = vpop.f32.mrf.mxu0
      %v3254 = vadd.f32 0.0, %v3253
      %v3255 = vpop.f32.mrf.mxu0
      %v3256 = vadd.f32 0.0, %v3255
      %3257 = vmatprep.mubr.f32.mxu0 %v2904
      %3258 = vmatmul.mubr.f32.gmra.mxu0 %v2903
      %v3259 = vpop.f32.mrf.mxu0
      %v3260 = vadd.f32 0.0, %v3259
      %v3261 = vpop.f32.mrf.mxu0
      %v3262 = vadd.f32 0.0, %v3261
      %3263 = vmatprep.mubr.f32.mxu0 %v2908
      %3264 = vmatmul.mubr.f32.gmra.mxu0 %v2907
      %v3265 = vpop.f32.mrf.mxu0
      %v3266 = vadd.f32 0.0, %v3265
      %v3267 = vpop.f32.mrf.mxu0
      %v3268 = vadd.f32 0.0, %v3267
      %3269 = vmatprep.mubr.f32.mxu0 %v2912
      %3270 = vmatmul.mubr.f32.gmra.mxu0 %v2911
      %v3271 = vpop.f32.mrf.mxu0
      %v3272 = vadd.f32 0.0, %v3271
      %v3273 = vpop.f32.mrf.mxu0
      %v3274 = vadd.f32 0.0, %v3273
      %3275 = vmatprep.mubr.f32.mxu0 %v2916
      %3276 = vmatmul.mubr.f32.gmra.mxu0 %v2915
      %v3277 = vpop.f32.mrf.mxu0
      %v3278 = vadd.f32 0.0, %v3277
      %v3279 = vpop.f32.mrf.mxu0
      %v3280 = vadd.f32 0.0, %v3279
      %3281 = vmatprep.mubr.f32.mxu0 %v2920
      %3282 = vmatmul.mubr.f32.gmra.mxu0 %v2919
      %v3283 = vpop.f32.mrf.mxu0
      %v3284 = vadd.f32 0.0, %v3283
      %v3285 = vpop.f32.mrf.mxu0
      %v3286 = vadd.f32 0.0, %v3285
      %3287 = vmatprep.mubr.f32.mxu0 %v2924
      %3288 = vmatmul.mubr.f32.gmra.mxu0 %v2923
      %v3289 = vpop.f32.mrf.mxu0
      %v3290 = vadd.f32 0.0, %v3289
      %v3291 = vpop.f32.mrf.mxu0
      %v3292 = vadd.f32 0.0, %v3291
      %3293 = vmatprep.mubr.f32.mxu0 %v2928
      %3294 = vmatmul.mubr.f32.gmra.mxu0 %v2927
      %v3295 = vpop.f32.mrf.mxu0
      %v3296 = vadd.f32 0.0, %v3295
      %v3297 = vpop.f32.mrf.mxu0
      %v3298 = vadd.f32 0.0, %v3297
      %3299 = vmatprep.mubr.f32.mxu0 %v2932
      %3300 = vmatmul.mubr.f32.gmra.mxu0 %v2931
      %v3301 = vpop.f32.mrf.mxu0
      %v3302 = vadd.f32 0.0, %v3301
      %v3303 = vpop.f32.mrf.mxu0
      %v3304 = vadd.f32 0.0, %v3303
      %3305 = vmatprep.mubr.f32.mxu0 %v2936
      %3306 = vmatmul.mubr.f32.gmra.mxu0 %v2935
      %v3307 = vpop.f32.mrf.mxu0
      %v3308 = vadd.f32 0.0, %v3307
      %v3309 = vpop.f32.mrf.mxu0
      %v3310 = vadd.f32 0.0, %v3309
      %3311 = vmatprep.mubr.f32.mxu0 %v2940
      %3312 = vmatmul.mubr.f32.gmra.mxu0 %v2939
      %v3313 = vpop.f32.mrf.mxu0
      %v3314 = vadd.f32 0.0, %v3313
      %v3315 = vpop.f32.mrf.mxu0
      %v3316 = vadd.f32 0.0, %v3315
      %3317 = vmatprep.mubr.f32.mxu0 %v2944
      %3318 = vmatmul.mubr.f32.gmra.mxu0 %v2943
      %v3319 = vpop.f32.mrf.mxu0
      %v3320 = vadd.f32 0.0, %v3319
      %v3321 = vpop.f32.mrf.mxu0
      %v3322 = vadd.f32 0.0, %v3321
      %3323 = vmatprep.mubr.f32.mxu0 %v2948
      %3324 = vmatmul.mubr.f32.gmra.mxu0 %v2947
      %v3325 = vpop.f32.mrf.mxu0
      %v3326 = vadd.f32 0.0, %v3325
      %v3327 = vpop.f32.mrf.mxu0
      %v3328 = vadd.f32 0.0, %v3327
      %3329 = vmatprep.mubr.f32.mxu0 %v2952
      %3330 = vmatmul.mubr.f32.gmra.mxu0 %v2951
      %v3331 = vpop.f32.mrf.mxu0
      %v3332 = vadd.f32 0.0, %v3331
      %v3333 = vpop.f32.mrf.mxu0
      %v3334 = vadd.f32 0.0, %v3333
      %3335 = vmatprep.mubr.f32.mxu0 %v2956
      %3336 = vmatmul.mubr.f32.gmra.mxu0 %v2955
      %v3337 = vpop.f32.mrf.mxu0
      %v3338 = vadd.f32 0.0, %v3337
      %v3339 = vpop.f32.mrf.mxu0
      %v3340 = vadd.f32 0.0, %v3339
      %3341 = vmatprep.mubr.f32.mxu0 %v2960
      %3342 = vmatmul.mubr.f32.gmra.mxu0 %v2959
      %v3343 = vpop.f32.mrf.mxu0
      %v3344 = vadd.f32 0.0, %v3343
      %v3345 = vpop.f32.mrf.mxu0
      %v3346 = vadd.f32 0.0, %v3345
      %3347 = vmatprep.mubr.f32.mxu0 %v2964
      %3348 = vmatmul.mubr.f32.gmra.mxu0 %v2963
      %v3349 = vpop.f32.mrf.mxu0
      %v3350 = vadd.f32 0.0, %v3349
      %v3351 = vpop.f32.mrf.mxu0
      %v3352 = vadd.f32 0.0, %v3351
      %3353 = vmatprep.mubr.f32.mxu0 %v2968
      %3354 = vmatmul.mubr.f32.gmra.mxu0 %v2967
      %v3355 = vpop.f32.mrf.mxu0
      %v3356 = vadd.f32 0.0, %v3355
      %v3357 = vpop.f32.mrf.mxu0
      %v3358 = vadd.f32 0.0, %v3357
      %3359 = vmatprep.mubr.f32.mxu0 %v2972
      %3360 = vmatmul.mubr.f32.gmra.mxu0 %v2971
      %v3361 = vpop.f32.mrf.mxu0
      %v3362 = vadd.f32 0.0, %v3361
      %v3363 = vpop.f32.mrf.mxu0
      %v3364 = vadd.f32 0.0, %v3363
      %3365 = vmatprep.mubr.f32.mxu0 %v2976
      %3366 = vmatmul.mubr.f32.gmra.mxu0 %v2975
      %v3367 = vpop.f32.mrf.mxu0
      %v3368 = vadd.f32 0.0, %v3367
      %v3369 = vpop.f32.mrf.mxu0
      %v3370 = vadd.f32 0.0, %v3369
      %3371 = vmatprep.mubr.f32.mxu0 %v2980
      %3372 = vmatmul.mubr.f32.gmra.mxu0 %v2979
      %v3373 = vpop.f32.mrf.mxu0
      %v3374 = vadd.f32 0.0, %v3373
      %v3375 = vpop.f32.mrf.mxu0
      %v3376 = vadd.f32 0.0, %v3375
      %3377 = vdwg.mxu0
      %3378 = vmatprep.subr.mxu0 %v3078
      %3379 = vmatpush1.msra.mxu0 %v3077
      %3380 = vmatprep.subr.mxu0 %v3076
      %3381 = vmatpush1.msra.mxu0 %v3075
      %3382 = vmatprep.subr.mxu0 %v3074
      %3383 = vmatpush1.msra.mxu0 %v3073
      %3384 = vmatprep.subr.mxu0 %v3072
      %3385 = vmatpush1.msra.mxu0 %v3071
      %3386 = vmatprep.subr.mxu0 %v3070
      %3387 = vmatpush1.msra.mxu0 %v3069
      %3388 = vmatprep.subr.mxu0 %v3068
      %3389 = vmatpush1.msra.mxu0 %v3067
      %3390 = vmatprep.subr.mxu0 %v3066
      %3391 = vmatpush1.msra.mxu0 %v3065
      %3392 = vmatprep.subr.mxu0 %v3064
      %3393 = vmatpush1.msra.mxu0 %v3063
      %3394 = vmatprep.subr.mxu0 %v3062
      %3395 = vmatpush1.msra.mxu0 %v3061
      %3396 = vmatprep.subr.mxu0 %v3060
      %3397 = vmatpush1.msra.mxu0 %v3059
      %3398 = vmatprep.subr.mxu0 %v3058
      %3399 = vmatpush1.msra.mxu0 %v3057
      %3400 = vmatprep.subr.mxu0 %v3056
      %3401 = vmatpush1.msra.mxu0 %v3055
      %3402 = vmatprep.subr.mxu0 %v3054
      %3403 = vmatpush1.msra.mxu0 %v3053
      %3404 = vmatprep.subr.mxu0 %v3052
      %3405 = vmatpush1.msra.mxu0 %v3051
      %3406 = vmatprep.subr.mxu0 %v3050
      %3407 = vmatpush1.msra.mxu0 %v3049
      %3408 = vmatprep.subr.mxu0 %v3048
      %3409 = vmatpush1.msra.mxu0 %v3047
      %3410 = vmatprep.subr.mxu0 0.0
      %3411 = vmatpush2.msra.mxu0 0.0
      %3412 = vmatprep.subr.mxu0 0.0
      %3413 = vmatpush2.msra.mxu0 0.0
      %3414 = vmatprep.subr.mxu0 0.0
      %3415 = vmatpush2.msra.mxu0 0.0
      %3416 = vmatprep.subr.mxu0 0.0
      %3417 = vmatpush2.msra.mxu0 0.0
      %3418 = vmatprep.subr.mxu0 0.0
      %3419 = vmatpush2.msra.mxu0 0.0
      %3420 = vmatprep.subr.mxu0 0.0
      %3421 = vmatpush2.msra.mxu0 0.0
      %3422 = vmatprep.subr.mxu0 0.0
      %3423 = vmatpush2.msra.mxu0 0.0
      %3424 = vmatprep.subr.mxu0 0.0
      %3425 = vmatpush2.msra.mxu0 0.0
      %3426 = vmatprep.subr.mxu0 0.0
      %3427 = vmatpush2.msra.mxu0 0.0
      %3428 = vmatprep.subr.mxu0 0.0
      %3429 = vmatpush2.msra.mxu0 0.0
      %3430 = vmatprep.subr.mxu0 0.0
      %3431 = vmatpush2.msra.mxu0 0.0
      %3432 = vmatprep.subr.mxu0 0.0
      %3433 = vmatpush2.msra.mxu0 0.0
      %3434 = vmatprep.subr.mxu0 0.0
      %3435 = vmatpush2.msra.mxu0 0.0
      %3436 = vmatprep.subr.mxu0 0.0
      %3437 = vmatpush2.msra.mxu0 0.0
      %3438 = vmatprep.subr.mxu0 0.0
      %3439 = vmatpush2.msra.mxu0 0.0
      %3440 = vmatprep.subr.mxu0 %v3161
      %3441 = vmatpush2.msra.mxu0 %v3158
      %3442 = vmatprep.mubr.f32.mxu0 %v3083
      %3443 = vmatmul.mubr.f32.gmra.mxu0 %v2885
      %v3444 = vpop.f32.mrf.mxu0
      %v3445 = vadd.f32 %v3230, %v3444
      %v3446 = vpop.f32.mrf.mxu0
      %v3447 = vadd.f32 %v3232, %v3446
      %3448 = vmatprep.mubr.f32.mxu0 %v3086
      %3449 = vmatmul.mubr.f32.gmra.mxu0 %v2889
      %v3450 = vpop.f32.mrf.mxu0
      %v3451 = vadd.f32 %v3236, %v3450
      %v3452 = vpop.f32.mrf.mxu0
      %v3453 = vadd.f32 %v3238, %v3452
      %3454 = vmatprep.mubr.f32.mxu0 %v3089
      %3455 = vmatmul.mubr.f32.gmra.mxu0 %v2893
      %v3456 = vpop.f32.mrf.mxu0
      %v3457 = vadd.f32 %v3242, %v3456
      %v3458 = vpop.f32.mrf.mxu0
      %v3459 = vadd.f32 %v3244, %v3458
      %3460 = vmatprep.mubr.f32.mxu0 %v3092
      %3461 = vmatmul.mubr.f32.gmra.mxu0 %v2897
      %v3462 = vpop.f32.mrf.mxu0
      %v3463 = vadd.f32 %v3248, %v3462
      %v3464 = vpop.f32.mrf.mxu0
      %v3465 = vadd.f32 %v3250, %v3464
      %3466 = vmatprep.mubr.f32.mxu0 %v3095
      %3467 = vmatmul.mubr.f32.gmra.mxu0 %v2901
      %v3468 = vpop.f32.mrf.mxu0
      %v3469 = vadd.f32 %v3254, %v3468
      %v3470 = vpop.f32.mrf.mxu0
      %v3471 = vadd.f32 %v3256, %v3470
      %3472 = vmatprep.mubr.f32.mxu0 %v3098
      %3473 = vmatmul.mubr.f32.gmra.mxu0 %v2905
      %v3474 = vpop.f32.mrf.mxu0
      %v3475 = vadd.f32 %v3260, %v3474
      %v3476 = vpop.f32.mrf.mxu0
      %v3477 = vadd.f32 %v3262, %v3476
      %3478 = vmatprep.mubr.f32.mxu0 %v3101
      %3479 = vmatmul.mubr.f32.gmra.mxu0 %v2909
      %v3480 = vpop.f32.mrf.mxu0
      %v3481 = vadd.f32 %v3266, %v3480
      %v3482 = vpop.f32.mrf.mxu0
      %v3483 = vadd.f32 %v3268, %v3482
      %3484 = vmatprep.mubr.f32.mxu0 %v3104
      %3485 = vmatmul.mubr.f32.gmra.mxu0 %v2913
      %v3486 = vpop.f32.mrf.mxu0
      %v3487 = vadd.f32 %v3272, %v3486
      %v3488 = vpop.f32.mrf.mxu0
      %v3489 = vadd.f32 %v3274, %v3488
      %3490 = vmatprep.mubr.f32.mxu0 %v3107
      %3491 = vmatmul.mubr.f32.gmra.mxu0 %v2917
      %v3492 = vpop.f32.mrf.mxu0
      %v3493 = vadd.f32 %v3278, %v3492
      %v3494 = vpop.f32.mrf.mxu0
      %v3495 = vadd.f32 %v3280, %v3494
      %3496 = vmatprep.mubr.f32.mxu0 %v3110
      %3497 = vmatmul.mubr.f32.gmra.mxu0 %v2921
      %v3498 = vpop.f32.mrf.mxu0
      %v3499 = vadd.f32 %v3284, %v3498
      %v3500 = vpop.f32.mrf.mxu0
      %v3501 = vadd.f32 %v3286, %v3500
      %3502 = vmatprep.mubr.f32.mxu0 %v3113
      %3503 = vmatmul.mubr.f32.gmra.mxu0 %v2925
      %v3504 = vpop.f32.mrf.mxu0
      %v3505 = vadd.f32 %v3290, %v3504
      %v3506 = vpop.f32.mrf.mxu0
      %v3507 = vadd.f32 %v3292, %v3506
      %3508 = vmatprep.mubr.f32.mxu0 %v3116
      %3509 = vmatmul.mubr.f32.gmra.mxu0 %v2929
      %v3510 = vpop.f32.mrf.mxu0
      %v3511 = vadd.f32 %v3296, %v3510
      %v3512 = vpop.f32.mrf.mxu0
      %v3513 = vadd.f32 %v3298, %v3512
      %3514 = vmatprep.mubr.f32.mxu0 %v3119
      %3515 = vmatmul.mubr.f32.gmra.mxu0 %v2933
      %v3516 = vpop.f32.mrf.mxu0
      %v3517 = vadd.f32 %v3302, %v3516
      %v3518 = vpop.f32.mrf.mxu0
      %v3519 = vadd.f32 %v3304, %v3518
      %3520 = vmatprep.mubr.f32.mxu0 %v3122
      %3521 = vmatmul.mubr.f32.gmra.mxu0 %v2937
      %v3522 = vpop.f32.mrf.mxu0
      %v3523 = vadd.f32 %v3308, %v3522
      %v3524 = vpop.f32.mrf.mxu0
      %v3525 = vadd.f32 %v3310, %v3524
      %3526 = vmatprep.mubr.f32.mxu0 %v3125
      %3527 = vmatmul.mubr.f32.gmra.mxu0 %v2941
      %v3528 = vpop.f32.mrf.mxu0
      %v3529 = vadd.f32 %v3314, %v3528
      %v3530 = vpop.f32.mrf.mxu0
      %v3531 = vadd.f32 %v3316, %v3530
      %3532 = vmatprep.mubr.f32.mxu0 %v3128
      %3533 = vmatmul.mubr.f32.gmra.mxu0 %v2945
      %v3534 = vpop.f32.mrf.mxu0
      %v3535 = vadd.f32 %v3320, %v3534
      %v3536 = vpop.f32.mrf.mxu0
      %v3537 = vadd.f32 %v3322, %v3536
      %3538 = vmatprep.mubr.f32.mxu0 %v3131
      %3539 = vmatmul.mubr.f32.gmra.mxu0 %v2949
      %v3540 = vpop.f32.mrf.mxu0
      %v3541 = vadd.f32 %v3326, %v3540
      %v3542 = vpop.f32.mrf.mxu0
      %v3543 = vadd.f32 %v3328, %v3542
      %3544 = vmatprep.mubr.f32.mxu0 %v3134
      %3545 = vmatmul.mubr.f32.gmra.mxu0 %v2953
      %v3546 = vpop.f32.mrf.mxu0
      %v3547 = vadd.f32 %v3332, %v3546
      %v3548 = vpop.f32.mrf.mxu0
      %v3549 = vadd.f32 %v3334, %v3548
      %3550 = vmatprep.mubr.f32.mxu0 %v3137
      %3551 = vmatmul.mubr.f32.gmra.mxu0 %v2957
      %v3552 = vpop.f32.mrf.mxu0
      %v3553 = vadd.f32 %v3338, %v3552
      %v3554 = vpop.f32.mrf.mxu0
      %v3555 = vadd.f32 %v3340, %v3554
      %3556 = vmatprep.mubr.f32.mxu0 %v3140
      %3557 = vmatmul.mubr.f32.gmra.mxu0 %v2961
      %v3558 = vpop.f32.mrf.mxu0
      %v3559 = vadd.f32 %v3344, %v3558
      %v3560 = vpop.f32.mrf.mxu0
      %v3561 = vadd.f32 %v3346, %v3560
      %3562 = vmatprep.mubr.f32.mxu0 %v3143
      %3563 = vmatmul.mubr.f32.gmra.mxu0 %v2965
      %v3564 = vpop.f32.mrf.mxu0
      %v3565 = vadd.f32 %v3350, %v3564
      %v3566 = vpop.f32.mrf.mxu0
      %v3567 = vadd.f32 %v3352, %v3566
      %3568 = vmatprep.mubr.f32.mxu0 %v3146
      %3569 = vmatmul.mubr.f32.gmra.mxu0 %v2969
      %v3570 = vpop.f32.mrf.mxu0
      %v3571 = vadd.f32 %v3356, %v3570
      %v3572 = vpop.f32.mrf.mxu0
      %v3573 = vadd.f32 %v3358, %v3572
      %3574 = vmatprep.mubr.f32.mxu0 %v3149
      %3575 = vmatmul.mubr.f32.gmra.mxu0 %v2973
      %v3576 = vpop.f32.mrf.mxu0
      %v3577 = vadd.f32 %v3362, %v3576
      %v3578 = vpop.f32.mrf.mxu0
      %v3579 = vadd.f32 %v3364, %v3578
      %3580 = vmatprep.mubr.f32.mxu0 %v3152
      %3581 = vmatmul.mubr.f32.gmra.mxu0 %v2977
      %v3582 = vpop.f32.mrf.mxu0
      %v3583 = vadd.f32 %v3368, %v3582
      %v3584 = vpop.f32.mrf.mxu0
      %v3585 = vadd.f32 %v3370, %v3584
      %3586 = vmatprep.mubr.f32.mxu0 %v3155
      %3587 = vmatmul.mubr.f32.gmra.mxu0 %v2981
      %v3588 = vpop.f32.mrf.mxu0
      %v3589 = vadd.f32 %v3374, %v3588
      %v3590 = vpop.f32.mrf.mxu0
      %v3591 = vadd.f32 %v3376, %v3590
      %3592 = vdwg.mxu0
      %3668 = vrot.lane.b32.xlu0 %v2883, 127
      %v3669 = vpop.permute.xlu0 %3668
      %3670 = vrot.lane.b32.xlu0 %v2884, 127
      %v3671 = vpop.permute.xlu0 %3670
      %3672 = vrot.lane.b32.xlu0 %v2885, 127
      %v3673 = vpop.permute.xlu0 %3672
      %3674 = vrot.lane.b32.xlu0 %v2886, 127
      %v3675 = vpop.permute.xlu0 %3674
      %3676 = vrot.lane.b32.xlu0 %v2887, 127
      %v3677 = vpop.permute.xlu0 %3676
      %3678 = vrot.lane.b32.xlu0 %v2888, 127
      %v3679 = vpop.permute.xlu0 %3678
      %3680 = vrot.lane.b32.xlu0 %v2889, 127
      %v3681 = vpop.permute.xlu0 %3680
      %3682 = vrot.lane.b32.xlu0 %v2890, 127
      %v3683 = vpop.permute.xlu0 %3682
      %3684 = vrot.lane.b32.xlu0 %v2891, 127
      %v3685 = vpop.permute.xlu0 %3684
      %3686 = vrot.lane.b32.xlu0 %v2892, 127
      %v3687 = vpop.permute.xlu0 %3686
      %3688 = vrot.lane.b32.xlu0 %v2893, 127
      %v3689 = vpop.permute.xlu0 %3688
      %3690 = vrot.lane.b32.xlu0 %v2894, 127
      %v3691 = vpop.permute.xlu0 %3690
      %3692 = vrot.lane.b32.xlu0 %v2895, 127
      %v3693 = vpop.permute.xlu0 %3692
      %3694 = vrot.lane.b32.xlu0 %v2896, 127
      %v3695 = vpop.permute.xlu0 %3694
      %3696 = vrot.lane.b32.xlu0 %v2897, 127
      %v3697 = vpop.permute.xlu0 %3696
      %3698 = vrot.lane.b32.xlu0 %v2898, 127
      %v3699 = vpop.permute.xlu0 %3698
      %3700 = vrot.lane.b32.xlu0 %v2899, 127
      %v3701 = vpop.permute.xlu0 %3700
      %3702 = vrot.lane.b32.xlu0 %v2900, 127
      %v3703 = vpop.permute.xlu0 %3702
      %3704 = vrot.lane.b32.xlu0 %v2901, 127
      %v3705 = vpop.permute.xlu0 %3704
      %3706 = vrot.lane.b32.xlu0 %v2902, 127
      %v3707 = vpop.permute.xlu0 %3706
      %3708 = vrot.lane.b32.xlu0 %v2903, 127
      %v3709 = vpop.permute.xlu0 %3708
      %3710 = vrot.lane.b32.xlu0 %v2904, 127
      %v3711 = vpop.permute.xlu0 %3710
      %3712 = vrot.lane.b32.xlu0 %v2905, 127
      %v3713 = vpop.permute.xlu0 %3712
      %3714 = vrot.lane.b32.xlu0 %v2906, 127
      %v3715 = vpop.permute.xlu0 %3714
      %3716 = vrot.lane.b32.xlu0 %v2907, 127
      %v3717 = vpop.permute.xlu0 %3716
      %3718 = vrot.lane.b32.xlu0 %v2908, 127
      %v3719 = vpop.permute.xlu0 %3718
      %3720 = vrot.lane.b32.xlu0 %v2909, 127
      %v3721 = vpop.permute.xlu0 %3720
      %3722 = vrot.lane.b32.xlu0 %v2910, 127
      %v3723 = vpop.permute.xlu0 %3722
      %3724 = vrot.lane.b32.xlu0 %v2911, 127
      %v3725 = vpop.permute.xlu0 %3724
      %3726 = vrot.lane.b32.xlu0 %v2912, 127
      %v3727 = vpop.permute.xlu0 %3726
      %3728 = vrot.lane.b32.xlu0 %v2913, 127
      %v3729 = vpop.permute.xlu0 %3728
      %3730 = vrot.lane.b32.xlu0 %v2914, 127
      %v3731 = vpop.permute.xlu0 %3730
      %3732 = vrot.lane.b32.xlu0 %v2915, 127
      %v3733 = vpop.permute.xlu0 %3732
      %3734 = vrot.lane.b32.xlu0 %v2916, 127
      %v3735 = vpop.permute.xlu0 %3734
      %3736 = vrot.lane.b32.xlu0 %v2917, 127
      %v3737 = vpop.permute.xlu0 %3736
      %3738 = vrot.lane.b32.xlu0 %v2918, 127
      %v3739 = vpop.permute.xlu0 %3738
      %3740 = vrot.lane.b32.xlu0 %v2919, 127
      %v3741 = vpop.permute.xlu0 %3740
      %3742 = vrot.lane.b32.xlu0 %v2920, 127
      %v3743 = vpop.permute.xlu0 %3742
      %3744 = vrot.lane.b32.xlu0 %v2921, 127
      %v3745 = vpop.permute.xlu0 %3744
      %3746 = vrot.lane.b32.xlu0 %v2922, 127
      %v3747 = vpop.permute.xlu0 %3746
      %3748 = vrot.lane.b32.xlu0 %v2923, 127
      %v3749 = vpop.permute.xlu0 %3748
      %3750 = vrot.lane.b32.xlu0 %v2924, 127
      %v3751 = vpop.permute.xlu0 %3750
      %3752 = vrot.lane.b32.xlu0 %v2925, 127
      %v3753 = vpop.permute.xlu0 %3752
      %3754 = vrot.lane.b32.xlu0 %v2926, 127
      %v3755 = vpop.permute.xlu0 %3754
      %3756 = vrot.lane.b32.xlu0 %v2927, 127
      %v3757 = vpop.permute.xlu0 %3756
      %3758 = vrot.lane.b32.xlu0 %v2928, 127
      %v3759 = vpop.permute.xlu0 %3758
      %3760 = vrot.lane.b32.xlu0 %v2929, 127
      %v3761 = vpop.permute.xlu0 %3760
      %3762 = vrot.lane.b32.xlu0 %v2930, 127
      %v3763 = vpop.permute.xlu0 %3762
      %3764 = vrot.lane.b32.xlu0 %v2931, 127
      %v3765 = vpop.permute.xlu0 %3764
      %3766 = vrot.lane.b32.xlu0 %v2932, 127
      %v3767 = vpop.permute.xlu0 %3766
      %3768 = vrot.lane.b32.xlu0 %v2933, 127
      %v3769 = vpop.permute.xlu0 %3768
      %3770 = vrot.lane.b32.xlu0 %v2934, 127
      %v3771 = vpop.permute.xlu0 %3770
      %3772 = vrot.lane.b32.xlu0 %v2935, 127
      %v3773 = vpop.permute.xlu0 %3772
      %3774 = vrot.lane.b32.xlu0 %v2936, 127
      %v3775 = vpop.permute.xlu0 %3774
      %3776 = vrot.lane.b32.xlu0 %v2937, 127
      %v3777 = vpop.permute.xlu0 %3776
      %3778 = vrot.lane.b32.xlu0 %v2938, 127
      %v3779 = vpop.permute.xlu0 %3778
      %3780 = vrot.lane.b32.xlu0 %v2939, 127
      %v3781 = vpop.permute.xlu0 %3780
      %3782 = vrot.lane.b32.xlu0 %v2940, 127
      %v3783 = vpop.permute.xlu0 %3782
      %3784 = vrot.lane.b32.xlu0 %v2941, 127
      %v3785 = vpop.permute.xlu0 %3784
      %3786 = vrot.lane.b32.xlu0 %v2942, 127
      %v3787 = vpop.permute.xlu0 %3786
      %3788 = vrot.lane.b32.xlu0 %v2943, 127
      %v3789 = vpop.permute.xlu0 %3788
      %3790 = vrot.lane.b32.xlu0 %v2944, 127
      %v3791 = vpop.permute.xlu0 %3790
      %3792 = vrot.lane.b32.xlu0 %v2945, 127
      %v3793 = vpop.permute.xlu0 %3792
      %3794 = vrot.lane.b32.xlu0 %v2946, 127
      %v3795 = vpop.permute.xlu0 %3794
      %3796 = vrot.lane.b32.xlu0 %v2947, 127
      %v3797 = vpop.permute.xlu0 %3796
      %3798 = vrot.lane.b32.xlu0 %v2948, 127
      %v3799 = vpop.permute.xlu0 %3798
      %3800 = vrot.lane.b32.xlu0 %v2949, 127
      %v3801 = vpop.permute.xlu0 %3800
      %3802 = vrot.lane.b32.xlu0 %v2950, 127
      %v3803 = vpop.permute.xlu0 %3802
      %3804 = vrot.lane.b32.xlu0 %v2951, 127
      %v3805 = vpop.permute.xlu0 %3804
      %3806 = vrot.lane.b32.xlu0 %v2952, 127
      %v3807 = vpop.permute.xlu0 %3806
      %3808 = vrot.lane.b32.xlu0 %v2953, 127
      %v3809 = vpop.permute.xlu0 %3808
      %3810 = vrot.lane.b32.xlu0 %v2954, 127
      %v3811 = vpop.permute.xlu0 %3810
      %3812 = vrot.lane.b32.xlu0 %v2955, 127
      %v3813 = vpop.permute.xlu0 %3812
      %3814 = vrot.lane.b32.xlu0 %v2956, 127
      %v3815 = vpop.permute.xlu0 %3814
      %3816 = vrot.lane.b32.xlu0 %v2957, 127
      %v3817 = vpop.permute.xlu0 %3816
      %3818 = vrot.lane.b32.xlu0 %v2958, 127
      %v3819 = vpop.permute.xlu0 %3818
      %3820 = vrot.lane.b32.xlu0 %v2959, 127
      %v3821 = vpop.permute.xlu0 %3820
      %3822 = vrot.lane.b32.xlu0 %v2960, 127
      %v3823 = vpop.permute.xlu0 %3822
      %3824 = vrot.lane.b32.xlu0 %v2961, 127
      %v3825 = vpop.permute.xlu0 %3824
      %3826 = vrot.lane.b32.xlu0 %v2962, 127
      %v3827 = vpop.permute.xlu0 %3826
      %3828 = vrot.lane.b32.xlu0 %v2963, 127
      %v3829 = vpop.permute.xlu0 %3828
      %3830 = vrot.lane.b32.xlu0 %v2964, 127
      %v3831 = vpop.permute.xlu0 %3830
      %3832 = vrot.lane.b32.xlu0 %v2965, 127
      %v3833 = vpop.permute.xlu0 %3832
      %3834 = vrot.lane.b32.xlu0 %v2966, 127
      %v3835 = vpop.permute.xlu0 %3834
      %3836 = vrot.lane.b32.xlu0 %v2967, 127
      %v3837 = vpop.permute.xlu0 %3836
      %3838 = vrot.lane.b32.xlu0 %v2968, 127
      %v3839 = vpop.permute.xlu0 %3838
      %3840 = vrot.lane.b32.xlu0 %v2969, 127
      %v3841 = vpop.permute.xlu0 %3840
      %3842 = vrot.lane.b32.xlu0 %v2970, 127
      %v3843 = vpop.permute.xlu0 %3842
      %3844 = vrot.lane.b32.xlu0 %v2971, 127
      %v3845 = vpop.permute.xlu0 %3844
      %3846 = vrot.lane.b32.xlu0 %v2972, 127
      %v3847 = vpop.permute.xlu0 %3846
      %3848 = vrot.lane.b32.xlu0 %v2973, 127
      %v3849 = vpop.permute.xlu0 %3848
      %3850 = vrot.lane.b32.xlu0 %v2974, 127
      %v3851 = vpop.permute.xlu0 %3850
      %3852 = vrot.lane.b32.xlu0 %v2975, 127
      %v3853 = vpop.permute.xlu0 %3852
      %3854 = vrot.lane.b32.xlu0 %v2976, 127
      %v3855 = vpop.permute.xlu0 %3854
      %3856 = vrot.lane.b32.xlu0 %v2977, 127
      %v3857 = vpop.permute.xlu0 %3856
      %3858 = vrot.lane.b32.xlu0 %v2978, 127
      %v3859 = vpop.permute.xlu0 %3858
      %3860 = vrot.lane.b32.xlu0 %v2979, 127
      %v3861 = vpop.permute.xlu0 %3860
      %3862 = vrot.lane.b32.xlu0 %v2980, 127
      %v3863 = vpop.permute.xlu0 %3862
      %3864 = vrot.lane.b32.xlu0 %v2981, 127
      %v3865 = vpop.permute.xlu0 %3864
      %3866 = vrot.lane.b32.xlu0 %v2982, 127
      %v3867 = vpop.permute.xlu0 %3866
      %vm3868 = vcmask 1039360
      %v3869 = vsel %vm3868, %v3669, %v3671
      %v3870 = vsel %vm3868, %v3671, %v3673
      %v3871 = vsel %vm3868, %v3673, %v3675
      %v3872 = vsel %vm3868, %v3677, %v3679
      %v3873 = vsel %vm3868, %v3679, %v3681
      %v3874 = vsel %vm3868, %v3681, %v3683
      %v3875 = vsel %vm3868, %v3685, %v3687
      %v3876 = vsel %vm3868, %v3687, %v3689
      %v3877 = vsel %vm3868, %v3689, %v3691
      %v3878 = vsel %vm3868, %v3693, %v3695
      %v3879 = vsel %vm3868, %v3695, %v3697
      %v3880 = vsel %vm3868, %v3697, %v3699
      %v3881 = vsel %vm3868, %v3701, %v3703
      %v3882 = vsel %vm3868, %v3703, %v3705
      %v3883 = vsel %vm3868, %v3705, %v3707
      %v3884 = vsel %vm3868, %v3709, %v3711
      %v3885 = vsel %vm3868, %v3711, %v3713
      %v3886 = vsel %vm3868, %v3713, %v3715
      %v3887 = vsel %vm3868, %v3717, %v3719
      %v3888 = vsel %vm3868, %v3719, %v3721
      %v3889 = vsel %vm3868, %v3721, %v3723
      %v3890 = vsel %vm3868, %v3725, %v3727
      %v3891 = vsel %vm3868, %v3727, %v3729
      %v3892 = vsel %vm3868, %v3729, %v3731
      %v3893 = vsel %vm3868, %v3733, %v3735
      %v3894 = vsel %vm3868, %v3735, %v3737
      %v3895 = vsel %vm3868, %v3737, %v3739
      %v3896 = vsel %vm3868, %v3741, %v3743
      %v3897 = vsel %vm3868, %v3743, %v3745
      %v3898 = vsel %vm3868, %v3745, %v3747
      %v3899 = vsel %vm3868, %v3749, %v3751
      %v3900 = vsel %vm3868, %v3751, %v3753
      %v3901 = vsel %vm3868, %v3753, %v3755
      %v3902 = vsel %vm3868, %v3757, %v3759
      %v3903 = vsel %vm3868, %v3759, %v3761
      %v3904 = vsel %vm3868, %v3761, %v3763
      %v3905 = vsel %vm3868, %v3765, %v3767
      %v3906 = vsel %vm3868, %v3767, %v3769
      %v3907 = vsel %vm3868, %v3769, %v3771
      %v3908 = vsel %vm3868, %v3773, %v3775
      %v3909 = vsel %vm3868, %v3775, %v3777
      %v3910 = vsel %vm3868, %v3777, %v3779
      %v3911 = vsel %vm3868, %v3781, %v3783
      %v3912 = vsel %vm3868, %v3783, %v3785
      %v3913 = vsel %vm3868, %v3785, %v3787
      %v3914 = vsel %vm3868, %v3789, %v3791
      %v3915 = vsel %vm3868, %v3791, %v3793
      %v3916 = vsel %vm3868, %v3793, %v3795
      %v3917 = vsel %vm3868, %v3797, %v3799
      %v3918 = vsel %vm3868, %v3799, %v3801
      %v3919 = vsel %vm3868, %v3801, %v3803
      %v3920 = vsel %vm3868, %v3805, %v3807
      %v3921 = vsel %vm3868, %v3807, %v3809
      %v3922 = vsel %vm3868, %v3809, %v3811
      %v3923 = vsel %vm3868, %v3813, %v3815
      %v3924 = vsel %vm3868, %v3815, %v3817
      %v3925 = vsel %vm3868, %v3817, %v3819
      %v3926 = vsel %vm3868, %v3821, %v3823
      %v3927 = vsel %vm3868, %v3823, %v3825
      %v3928 = vsel %vm3868, %v3825, %v3827
      %v3929 = vsel %vm3868, %v3829, %v3831
      %v3930 = vsel %vm3868, %v3831, %v3833
      %v3931 = vsel %vm3868, %v3833, %v3835
      %v3932 = vsel %vm3868, %v3837, %v3839
      %v3933 = vsel %vm3868, %v3839, %v3841
      %v3934 = vsel %vm3868, %v3841, %v3843
      %v3935 = vsel %vm3868, %v3845, %v3847
      %v3936 = vsel %vm3868, %v3847, %v3849
      %v3937 = vsel %vm3868, %v3849, %v3851
      %v3938 = vsel %vm3868, %v3853, %v3855
      %v3939 = vsel %vm3868, %v3855, %v3857
      %v3940 = vsel %vm3868, %v3857, %v3859
      %v3941 = vsel %vm3868, %v3861, %v3863
      %v3942 = vsel %vm3868, %v3863, %v3865
      %v3943 = vsel %vm3868, %v3865, %v3867
      %v4019 = vsel %vm3081, %v3675, 0
      %v4021 = vsel %vm3081, %v3683, 0
      %v4023 = vsel %vm3081, %v3691, 0
      %v4025 = vsel %vm3081, %v3699, 0
      %v4027 = vsel %vm3081, %v3707, 0
      %v4029 = vsel %vm3081, %v3715, 0
      %v4031 = vsel %vm3081, %v3723, 0
      %v4033 = vsel %vm3081, %v3731, 0
      %v4035 = vsel %vm3081, %v3739, 0
      %v4037 = vsel %vm3081, %v3747, 0
      %v4039 = vsel %vm3081, %v3755, 0
      %v4041 = vsel %vm3081, %v3763, 0
      %v4043 = vsel %vm3081, %v3771, 0
      %v4045 = vsel %vm3081, %v3779, 0
      %v4047 = vsel %vm3081, %v3787, 0
      %v4049 = vsel %vm3081, %v3795, 0
      %v4051 = vsel %vm3081, %v3803, 0
      %v4053 = vsel %vm3081, %v3811, 0
      %v4055 = vsel %vm3081, %v3819, 0
      %v4057 = vsel %vm3081, %v3827, 0
      %v4059 = vsel %vm3081, %v3835, 0
      %v4061 = vsel %vm3081, %v3843, 0
      %v4063 = vsel %vm3081, %v3851, 0
      %v4065 = vsel %vm3081, %v3859, 0
      %v4067 = vsel %vm3081, %v3867, 0
      %4069 = vmatprep.subr.mxu0 %v3014
      %4070 = vmatpush1.msra.mxu0 %v3013
      %4071 = vmatprep.subr.mxu0 %v3012
      %4072 = vmatpush1.msra.mxu0 %v3011
      %4073 = vmatprep.subr.mxu0 %v3010
      %4074 = vmatpush1.msra.mxu0 %v3009
      %4075 = vmatprep.subr.mxu0 %v3008
      %4076 = vmatpush1.msra.mxu0 %v3007
      %4077 = vmatprep.subr.mxu0 %v3006
      %4078 = vmatpush1.msra.mxu0 %v3005
      %4079 = vmatprep.subr.mxu0 %v3004
      %4080 = vmatpush1.msra.mxu0 %v3003
      %4081 = vmatprep.subr.mxu0 %v3002
      %4082 = vmatpush1.msra.mxu0 %v3001
      %4083 = vmatprep.subr.mxu0 %v3000
      %4084 = vmatpush1.msra.mxu0 %v2999
      %4085 = vmatprep.subr.mxu0 %v2998
      %4086 = vmatpush1.msra.mxu0 %v2997
      %4087 = vmatprep.subr.mxu0 %v2996
      %4088 = vmatpush1.msra.mxu0 %v2995
      %4089 = vmatprep.subr.mxu0 %v2994
      %4090 = vmatpush1.msra.mxu0 %v2993
      %4091 = vmatprep.subr.mxu0 %v2992
      %4092 = vmatpush1.msra.mxu0 %v2991
      %4093 = vmatprep.subr.mxu0 %v2990
      %4094 = vmatpush1.msra.mxu0 %v2989
      %4095 = vmatprep.subr.mxu0 %v2988
      %4096 = vmatpush1.msra.mxu0 %v2987
      %4097 = vmatprep.subr.mxu0 %v2986
      %4098 = vmatpush1.msra.mxu0 %v2985
      %4099 = vmatprep.subr.mxu0 %v2984
      %4100 = vmatpush1.msra.mxu0 %v2983
      %4101 = vmatprep.subr.mxu0 %v3046
      %4102 = vmatpush2.msra.mxu0 %v3045
      %4103 = vmatprep.subr.mxu0 %v3044
      %4104 = vmatpush2.msra.mxu0 %v3043
      %4105 = vmatprep.subr.mxu0 %v3042
      %4106 = vmatpush2.msra.mxu0 %v3041
      %4107 = vmatprep.subr.mxu0 %v3040
      %4108 = vmatpush2.msra.mxu0 %v3039
      %4109 = vmatprep.subr.mxu0 %v3038
      %4110 = vmatpush2.msra.mxu0 %v3037
      %4111 = vmatprep.subr.mxu0 %v3036
      %4112 = vmatpush2.msra.mxu0 %v3035
      %4113 = vmatprep.subr.mxu0 %v3034
      %4114 = vmatpush2.msra.mxu0 %v3033
      %4115 = vmatprep.subr.mxu0 %v3032
      %4116 = vmatpush2.msra.mxu0 %v3031
      %4117 = vmatprep.subr.mxu0 %v3030
      %4118 = vmatpush2.msra.mxu0 %v3029
      %4119 = vmatprep.subr.mxu0 %v3028
      %4120 = vmatpush2.msra.mxu0 %v3027
      %4121 = vmatprep.subr.mxu0 %v3026
      %4122 = vmatpush2.msra.mxu0 %v3025
      %4123 = vmatprep.subr.mxu0 %v3024
      %4124 = vmatpush2.msra.mxu0 %v3023
      %4125 = vmatprep.subr.mxu0 %v3022
      %4126 = vmatpush2.msra.mxu0 %v3021
      %4127 = vmatprep.subr.mxu0 %v3020
      %4128 = vmatpush2.msra.mxu0 %v3019
      %4129 = vmatprep.subr.mxu0 %v3018
      %4130 = vmatpush2.msra.mxu0 %v3017
      %4131 = vmatprep.subr.mxu0 %v3016
      %4132 = vmatpush2.msra.mxu0 %v3015
      %4133 = vmatprep.mubr.f32.mxu0 %v3870
      %4134 = vmatmul.mubr.f32.gmra.mxu0 %v3869
      %v4135 = vpop.f32.mrf.mxu0
      %v4136 = vadd.f32 0.0, %v4135
      %v4137 = vpop.f32.mrf.mxu0
      %v4138 = vadd.f32 0.0, %v4137
      %4139 = vmatprep.mubr.f32.mxu0 %v3873
      %4140 = vmatmul.mubr.f32.gmra.mxu0 %v3872
      %v4141 = vpop.f32.mrf.mxu0
      %v4142 = vadd.f32 0.0, %v4141
      %v4143 = vpop.f32.mrf.mxu0
      %v4144 = vadd.f32 0.0, %v4143
      %4145 = vmatprep.mubr.f32.mxu0 %v3876
      %4146 = vmatmul.mubr.f32.gmra.mxu0 %v3875
      %v4147 = vpop.f32.mrf.mxu0
      %v4148 = vadd.f32 0.0, %v4147
      %v4149 = vpop.f32.mrf.mxu0
      %v4150 = vadd.f32 0.0, %v4149
      %4151 = vmatprep.mubr.f32.mxu0 %v3879
      %4152 = vmatmul.mubr.f32.gmra.mxu0 %v3878
      %v4153 = vpop.f32.mrf.mxu0
      %v4154 = vadd.f32 0.0, %v4153
      %v4155 = vpop.f32.mrf.mxu0
      %v4156 = vadd.f32 0.0, %v4155
      %4157 = vmatprep.mubr.f32.mxu0 %v3882
      %4158 = vmatmul.mubr.f32.gmra.mxu0 %v3881
      %v4159 = vpop.f32.mrf.mxu0
      %v4160 = vadd.f32 0.0, %v4159
      %v4161 = vpop.f32.mrf.mxu0
      %v4162 = vadd.f32 0.0, %v4161
      %4163 = vmatprep.mubr.f32.mxu0 %v3885
      %4164 = vmatmul.mubr.f32.gmra.mxu0 %v3884
      %v4165 = vpop.f32.mrf.mxu0
      %v4166 = vadd.f32 0.0, %v4165
      %v4167 = vpop.f32.mrf.mxu0
      %v4168 = vadd.f32 0.0, %v4167
      %4169 = vmatprep.mubr.f32.mxu0 %v3888
      %4170 = vmatmul.mubr.f32.gmra.mxu0 %v3887
      %v4171 = vpop.f32.mrf.mxu0
      %v4172 = vadd.f32 0.0, %v4171
      %v4173 = vpop.f32.mrf.mxu0
      %v4174 = vadd.f32 0.0, %v4173
      %4175 = vmatprep.mubr.f32.mxu0 %v3891
      %4176 = vmatmul.mubr.f32.gmra.mxu0 %v3890
      %v4177 = vpop.f32.mrf.mxu0
      %v4178 = vadd.f32 0.0, %v4177
      %v4179 = vpop.f32.mrf.mxu0
      %v4180 = vadd.f32 0.0, %v4179
      %4181 = vmatprep.mubr.f32.mxu0 %v3894
      %4182 = vmatmul.mubr.f32.gmra.mxu0 %v3893
      %v4183 = vpop.f32.mrf.mxu0
      %v4184 = vadd.f32 0.0, %v4183
      %v4185 = vpop.f32.mrf.mxu0
      %v4186 = vadd.f32 0.0, %v4185
      %4187 = vmatprep.mubr.f32.mxu0 %v3897
      %4188 = vmatmul.mubr.f32.gmra.mxu0 %v3896
      %v4189 = vpop.f32.mrf.mxu0
      %v4190 = vadd.f32 0.0, %v4189
      %v4191 = vpop.f32.mrf.mxu0
      %v4192 = vadd.f32 0.0, %v4191
      %4193 = vmatprep.mubr.f32.mxu0 %v3900
      %4194 = vmatmul.mubr.f32.gmra.mxu0 %v3899
      %v4195 = vpop.f32.mrf.mxu0
      %v4196 = vadd.f32 0.0, %v4195
      %v4197 = vpop.f32.mrf.mxu0
      %v4198 = vadd.f32 0.0, %v4197
      %4199 = vmatprep.mubr.f32.mxu0 %v3903
      %4200 = vmatmul.mubr.f32.gmra.mxu0 %v3902
      %v4201 = vpop.f32.mrf.mxu0
      %v4202 = vadd.f32 0.0, %v4201
      %v4203 = vpop.f32.mrf.mxu0
      %v4204 = vadd.f32 0.0, %v4203
      %4205 = vmatprep.mubr.f32.mxu0 %v3906
      %4206 = vmatmul.mubr.f32.gmra.mxu0 %v3905
      %v4207 = vpop.f32.mrf.mxu0
      %v4208 = vadd.f32 0.0, %v4207
      %v4209 = vpop.f32.mrf.mxu0
      %v4210 = vadd.f32 0.0, %v4209
      %4211 = vmatprep.mubr.f32.mxu0 %v3909
      %4212 = vmatmul.mubr.f32.gmra.mxu0 %v3908
      %v4213 = vpop.f32.mrf.mxu0
      %v4214 = vadd.f32 0.0, %v4213
      %v4215 = vpop.f32.mrf.mxu0
      %v4216 = vadd.f32 0.0, %v4215
      %4217 = vmatprep.mubr.f32.mxu0 %v3912
      %4218 = vmatmul.mubr.f32.gmra.mxu0 %v3911
      %v4219 = vpop.f32.mrf.mxu0
      %v4220 = vadd.f32 0.0, %v4219
      %v4221 = vpop.f32.mrf.mxu0
      %v4222 = vadd.f32 0.0, %v4221
      %4223 = vmatprep.mubr.f32.mxu0 %v3915
      %4224 = vmatmul.mubr.f32.gmra.mxu0 %v3914
      %v4225 = vpop.f32.mrf.mxu0
      %v4226 = vadd.f32 0.0, %v4225
      %v4227 = vpop.f32.mrf.mxu0
      %v4228 = vadd.f32 0.0, %v4227
      %4229 = vmatprep.mubr.f32.mxu0 %v3918
      %4230 = vmatmul.mubr.f32.gmra.mxu0 %v3917
      %v4231 = vpop.f32.mrf.mxu0
      %v4232 = vadd.f32 0.0, %v4231
      %v4233 = vpop.f32.mrf.mxu0
      %v4234 = vadd.f32 0.0, %v4233
      %4235 = vmatprep.mubr.f32.mxu0 %v3921
      %4236 = vmatmul.mubr.f32.gmra.mxu0 %v3920
      %v4237 = vpop.f32.mrf.mxu0
      %v4238 = vadd.f32 0.0, %v4237
      %v4239 = vpop.f32.mrf.mxu0
      %v4240 = vadd.f32 0.0, %v4239
      %4241 = vmatprep.mubr.f32.mxu0 %v3924
      %4242 = vmatmul.mubr.f32.gmra.mxu0 %v3923
      %v4243 = vpop.f32.mrf.mxu0
      %v4244 = vadd.f32 0.0, %v4243
      %v4245 = vpop.f32.mrf.mxu0
      %v4246 = vadd.f32 0.0, %v4245
      %4247 = vmatprep.mubr.f32.mxu0 %v3927
      %4248 = vmatmul.mubr.f32.gmra.mxu0 %v3926
      %v4249 = vpop.f32.mrf.mxu0
      %v4250 = vadd.f32 0.0, %v4249
      %v4251 = vpop.f32.mrf.mxu0
      %v4252 = vadd.f32 0.0, %v4251
      %4253 = vmatprep.mubr.f32.mxu0 %v3930
      %4254 = vmatmul.mubr.f32.gmra.mxu0 %v3929
      %v4255 = vpop.f32.mrf.mxu0
      %v4256 = vadd.f32 0.0, %v4255
      %v4257 = vpop.f32.mrf.mxu0
      %v4258 = vadd.f32 0.0, %v4257
      %4259 = vmatprep.mubr.f32.mxu0 %v3933
      %4260 = vmatmul.mubr.f32.gmra.mxu0 %v3932
      %v4261 = vpop.f32.mrf.mxu0
      %v4262 = vadd.f32 0.0, %v4261
      %v4263 = vpop.f32.mrf.mxu0
      %v4264 = vadd.f32 0.0, %v4263
      %4265 = vmatprep.mubr.f32.mxu0 %v3936
      %4266 = vmatmul.mubr.f32.gmra.mxu0 %v3935
      %v4267 = vpop.f32.mrf.mxu0
      %v4268 = vadd.f32 0.0, %v4267
      %v4269 = vpop.f32.mrf.mxu0
      %v4270 = vadd.f32 0.0, %v4269
      %4271 = vmatprep.mubr.f32.mxu0 %v3939
      %4272 = vmatmul.mubr.f32.gmra.mxu0 %v3938
      %v4273 = vpop.f32.mrf.mxu0
      %v4274 = vadd.f32 0.0, %v4273
      %v4275 = vpop.f32.mrf.mxu0
      %v4276 = vadd.f32 0.0, %v4275
      %4277 = vmatprep.mubr.f32.mxu0 %v3942
      %4278 = vmatmul.mubr.f32.gmra.mxu0 %v3941
      %v4279 = vpop.f32.mrf.mxu0
      %v4280 = vadd.f32 0.0, %v4279
      %v4281 = vpop.f32.mrf.mxu0
      %v4282 = vadd.f32 0.0, %v4281
      %4283 = vdwg.mxu0
      %4284 = vmatprep.subr.mxu0 %v3078
      %4285 = vmatpush1.msra.mxu0 %v3077
      %4286 = vmatprep.subr.mxu0 %v3076
      %4287 = vmatpush1.msra.mxu0 %v3075
      %4288 = vmatprep.subr.mxu0 %v3074
      %4289 = vmatpush1.msra.mxu0 %v3073
      %4290 = vmatprep.subr.mxu0 %v3072
      %4291 = vmatpush1.msra.mxu0 %v3071
      %4292 = vmatprep.subr.mxu0 %v3070
      %4293 = vmatpush1.msra.mxu0 %v3069
      %4294 = vmatprep.subr.mxu0 %v3068
      %4295 = vmatpush1.msra.mxu0 %v3067
      %4296 = vmatprep.subr.mxu0 %v3066
      %4297 = vmatpush1.msra.mxu0 %v3065
      %4298 = vmatprep.subr.mxu0 %v3064
      %4299 = vmatpush1.msra.mxu0 %v3063
      %4300 = vmatprep.subr.mxu0 %v3062
      %4301 = vmatpush1.msra.mxu0 %v3061
      %4302 = vmatprep.subr.mxu0 %v3060
      %4303 = vmatpush1.msra.mxu0 %v3059
      %4304 = vmatprep.subr.mxu0 %v3058
      %4305 = vmatpush1.msra.mxu0 %v3057
      %4306 = vmatprep.subr.mxu0 %v3056
      %4307 = vmatpush1.msra.mxu0 %v3055
      %4308 = vmatprep.subr.mxu0 %v3054
      %4309 = vmatpush1.msra.mxu0 %v3053
      %4310 = vmatprep.subr.mxu0 %v3052
      %4311 = vmatpush1.msra.mxu0 %v3051
      %4312 = vmatprep.subr.mxu0 %v3050
      %4313 = vmatpush1.msra.mxu0 %v3049
      %4314 = vmatprep.subr.mxu0 %v3048
      %4315 = vmatpush1.msra.mxu0 %v3047
      %4316 = vmatprep.subr.mxu0 0.0
      %4317 = vmatpush2.msra.mxu0 0.0
      %4318 = vmatprep.subr.mxu0 0.0
      %4319 = vmatpush2.msra.mxu0 0.0
      %4320 = vmatprep.subr.mxu0 0.0
      %4321 = vmatpush2.msra.mxu0 0.0
      %4322 = vmatprep.subr.mxu0 0.0
      %4323 = vmatpush2.msra.mxu0 0.0
      %4324 = vmatprep.subr.mxu0 0.0
      %4325 = vmatpush2.msra.mxu0 0.0
      %4326 = vmatprep.subr.mxu0 0.0
      %4327 = vmatpush2.msra.mxu0 0.0
      %4328 = vmatprep.subr.mxu0 0.0
      %4329 = vmatpush2.msra.mxu0 0.0
      %4330 = vmatprep.subr.mxu0 0.0
      %4331 = vmatpush2.msra.mxu0 0.0
      %4332 = vmatprep.subr.mxu0 0.0
      %4333 = vmatpush2.msra.mxu0 0.0
      %4334 = vmatprep.subr.mxu0 0.0
      %4335 = vmatpush2.msra.mxu0 0.0
      %4336 = vmatprep.subr.mxu0 0.0
      %4337 = vmatpush2.msra.mxu0 0.0
      %4338 = vmatprep.subr.mxu0 0.0
      %4339 = vmatpush2.msra.mxu0 0.0
      %4340 = vmatprep.subr.mxu0 0.0
      %4341 = vmatpush2.msra.mxu0 0.0
      %4342 = vmatprep.subr.mxu0 0.0
      %4343 = vmatpush2.msra.mxu0 0.0
      %4344 = vmatprep.subr.mxu0 0.0
      %4345 = vmatpush2.msra.mxu0 0.0
      %4346 = vmatprep.subr.mxu0 %v3161
      %4347 = vmatpush2.msra.mxu0 %v3158
      %4348 = vmatprep.mubr.f32.mxu0 %v4019
      %4349 = vmatmul.mubr.f32.gmra.mxu0 %v3871
      %v4350 = vpop.f32.mrf.mxu0
      %v4351 = vadd.f32 %v4136, %v4350
      %v4352 = vpop.f32.mrf.mxu0
      %v4353 = vadd.f32 %v4138, %v4352
      %4354 = vmatprep.mubr.f32.mxu0 %v4021
      %4355 = vmatmul.mubr.f32.gmra.mxu0 %v3874
      %v4356 = vpop.f32.mrf.mxu0
      %v4357 = vadd.f32 %v4142, %v4356
      %v4358 = vpop.f32.mrf.mxu0
      %v4359 = vadd.f32 %v4144, %v4358
      %4360 = vmatprep.mubr.f32.mxu0 %v4023
      %4361 = vmatmul.mubr.f32.gmra.mxu0 %v3877
      %v4362 = vpop.f32.mrf.mxu0
      %v4363 = vadd.f32 %v4148, %v4362
      %v4364 = vpop.f32.mrf.mxu0
      %v4365 = vadd.f32 %v4150, %v4364
      %4366 = vmatprep.mubr.f32.mxu0 %v4025
      %4367 = vmatmul.mubr.f32.gmra.mxu0 %v3880
      %v4368 = vpop.f32.mrf.mxu0
      %v4369 = vadd.f32 %v4154, %v4368
      %v4370 = vpop.f32.mrf.mxu0
      %v4371 = vadd.f32 %v4156, %v4370
      %4372 = vmatprep.mubr.f32.mxu0 %v4027
      %4373 = vmatmul.mubr.f32.gmra.mxu0 %v3883
      %v4374 = vpop.f32.mrf.mxu0
      %v4375 = vadd.f32 %v4160, %v4374
      %v4376 = vpop.f32.mrf.mxu0
      %v4377 = vadd.f32 %v4162, %v4376
      %4378 = vmatprep.mubr.f32.mxu0 %v4029
      %4379 = vmatmul.mubr.f32.gmra.mxu0 %v3886
      %v4380 = vpop.f32.mrf.mxu0
      %v4381 = vadd.f32 %v4166, %v4380
      %v4382 = vpop.f32.mrf.mxu0
      %v4383 = vadd.f32 %v4168, %v4382
      %4384 = vmatprep.mubr.f32.mxu0 %v4031
      %4385 = vmatmul.mubr.f32.gmra.mxu0 %v3889
      %v4386 = vpop.f32.mrf.mxu0
      %v4387 = vadd.f32 %v4172, %v4386
      %v4388 = vpop.f32.mrf.mxu0
      %v4389 = vadd.f32 %v4174, %v4388
      %4390 = vmatprep.mubr.f32.mxu0 %v4033
      %4391 = vmatmul.mubr.f32.gmra.mxu0 %v3892
      %v4392 = vpop.f32.mrf.mxu0
      %v4393 = vadd.f32 %v4178, %v4392
      %v4394 = vpop.f32.mrf.mxu0
      %v4395 = vadd.f32 %v4180, %v4394
      %4396 = vmatprep.mubr.f32.mxu0 %v4035
      %4397 = vmatmul.mubr.f32.gmra.mxu0 %v3895
      %v4398 = vpop.f32.mrf.mxu0
      %v4399 = vadd.f32 %v4184, %v4398
      %v4400 = vpop.f32.mrf.mxu0
      %v4401 = vadd.f32 %v4186, %v4400
      %4402 = vmatprep.mubr.f32.mxu0 %v4037
      %4403 = vmatmul.mubr.f32.gmra.mxu0 %v3898
      %v4404 = vpop.f32.mrf.mxu0
      %v4405 = vadd.f32 %v4190, %v4404
      %v4406 = vpop.f32.mrf.mxu0
      %v4407 = vadd.f32 %v4192, %v4406
      %4408 = vmatprep.mubr.f32.mxu0 %v4039
      %4409 = vmatmul.mubr.f32.gmra.mxu0 %v3901
      %v4410 = vpop.f32.mrf.mxu0
      %v4411 = vadd.f32 %v4196, %v4410
      %v4412 = vpop.f32.mrf.mxu0
      %v4413 = vadd.f32 %v4198, %v4412
      %4414 = vmatprep.mubr.f32.mxu0 %v4041
      %4415 = vmatmul.mubr.f32.gmra.mxu0 %v3904
      %v4416 = vpop.f32.mrf.mxu0
      %v4417 = vadd.f32 %v4202, %v4416
      %v4418 = vpop.f32.mrf.mxu0
      %v4419 = vadd.f32 %v4204, %v4418
      %4420 = vmatprep.mubr.f32.mxu0 %v4043
      %4421 = vmatmul.mubr.f32.gmra.mxu0 %v3907
      %v4422 = vpop.f32.mrf.mxu0
      %v4423 = vadd.f32 %v4208, %v4422
      %v4424 = vpop.f32.mrf.mxu0
      %v4425 = vadd.f32 %v4210, %v4424
      %4426 = vmatprep.mubr.f32.mxu0 %v4045
      %4427 = vmatmul.mubr.f32.gmra.mxu0 %v3910
      %v4428 = vpop.f32.mrf.mxu0
      %v4429 = vadd.f32 %v4214, %v4428
      %v4430 = vpop.f32.mrf.mxu0
      %v4431 = vadd.f32 %v4216, %v4430
      %4432 = vmatprep.mubr.f32.mxu0 %v4047
      %4433 = vmatmul.mubr.f32.gmra.mxu0 %v3913
      %v4434 = vpop.f32.mrf.mxu0
      %v4435 = vadd.f32 %v4220, %v4434
      %v4436 = vpop.f32.mrf.mxu0
      %v4437 = vadd.f32 %v4222, %v4436
      %4438 = vmatprep.mubr.f32.mxu0 %v4049
      %4439 = vmatmul.mubr.f32.gmra.mxu0 %v3916
      %v4440 = vpop.f32.mrf.mxu0
      %v4441 = vadd.f32 %v4226, %v4440
      %v4442 = vpop.f32.mrf.mxu0
      %v4443 = vadd.f32 %v4228, %v4442
      %4444 = vmatprep.mubr.f32.mxu0 %v4051
      %4445 = vmatmul.mubr.f32.gmra.mxu0 %v3919
      %v4446 = vpop.f32.mrf.mxu0
      %v4447 = vadd.f32 %v4232, %v4446
      %v4448 = vpop.f32.mrf.mxu0
      %v4449 = vadd.f32 %v4234, %v4448
      %4450 = vmatprep.mubr.f32.mxu0 %v4053
      %4451 = vmatmul.mubr.f32.gmra.mxu0 %v3922
      %v4452 = vpop.f32.mrf.mxu0
      %v4453 = vadd.f32 %v4238, %v4452
      %v4454 = vpop.f32.mrf.mxu0
      %v4455 = vadd.f32 %v4240, %v4454
      %4456 = vmatprep.mubr.f32.mxu0 %v4055
      %4457 = vmatmul.mubr.f32.gmra.mxu0 %v3925
      %v4458 = vpop.f32.mrf.mxu0
      %v4459 = vadd.f32 %v4244, %v4458
      %v4460 = vpop.f32.mrf.mxu0
      %v4461 = vadd.f32 %v4246, %v4460
      %4462 = vmatprep.mubr.f32.mxu0 %v4057
      %4463 = vmatmul.mubr.f32.gmra.mxu0 %v3928
      %v4464 = vpop.f32.mrf.mxu0
      %v4465 = vadd.f32 %v4250, %v4464
      %v4466 = vpop.f32.mrf.mxu0
      %v4467 = vadd.f32 %v4252, %v4466
      %4468 = vmatprep.mubr.f32.mxu0 %v4059
      %4469 = vmatmul.mubr.f32.gmra.mxu0 %v3931
      %v4470 = vpop.f32.mrf.mxu0
      %v4471 = vadd.f32 %v4256, %v4470
      %v4472 = vpop.f32.mrf.mxu0
      %v4473 = vadd.f32 %v4258, %v4472
      %4474 = vmatprep.mubr.f32.mxu0 %v4061
      %4475 = vmatmul.mubr.f32.gmra.mxu0 %v3934
      %v4476 = vpop.f32.mrf.mxu0
      %v4477 = vadd.f32 %v4262, %v4476
      %v4478 = vpop.f32.mrf.mxu0
      %v4479 = vadd.f32 %v4264, %v4478
      %4480 = vmatprep.mubr.f32.mxu0 %v4063
      %4481 = vmatmul.mubr.f32.gmra.mxu0 %v3937
      %v4482 = vpop.f32.mrf.mxu0
      %v4483 = vadd.f32 %v4268, %v4482
      %v4484 = vpop.f32.mrf.mxu0
      %v4485 = vadd.f32 %v4270, %v4484
      %4486 = vmatprep.mubr.f32.mxu0 %v4065
      %4487 = vmatmul.mubr.f32.gmra.mxu0 %v3940
      %v4488 = vpop.f32.mrf.mxu0
      %v4489 = vadd.f32 %v4274, %v4488
      %v4490 = vpop.f32.mrf.mxu0
      %v4491 = vadd.f32 %v4276, %v4490
      %4492 = vmatprep.mubr.f32.mxu0 %v4067
      %4493 = vmatmul.mubr.f32.gmra.mxu0 %v3943
      %v4494 = vpop.f32.mrf.mxu0
      %v4495 = vadd.f32 %v4280, %v4494
      %v4496 = vpop.f32.mrf.mxu0
      %v4497 = vadd.f32 %v4282, %v4496
      %4498 = vdwg.mxu0
      %v4499 = vmax.f32 %v3445, %v4351
      %v4500 = vmax.f32 %v3447, %v4353
      %v4501 = vmax.f32 %v3451, %v4357
      %v4502 = vmax.f32 %v3453, %v4359
      %v4503 = vmax.f32 %v3457, %v4363
      %v4504 = vmax.f32 %v3459, %v4365
      %v4505 = vmax.f32 %v3463, %v4369
      %v4506 = vmax.f32 %v3465, %v4371
      %v4507 = vmax.f32 %v3469, %v4375
      %v4508 = vmax.f32 %v3471, %v4377
      %v4509 = vmax.f32 %v3475, %v4381
      %v4510 = vmax.f32 %v3477, %v4383
      %v4511 = vmax.f32 %v3481, %v4387
      %v4512 = vmax.f32 %v3483, %v4389
      %v4513 = vmax.f32 %v3487, %v4393
      %v4514 = vmax.f32 %v3489, %v4395
      %v4515 = vmax.f32 %v3493, %v4399
      %v4516 = vmax.f32 %v3495, %v4401
      %v4517 = vmax.f32 %v3499, %v4405
      %v4518 = vmax.f32 %v3501, %v4407
      %v4519 = vmax.f32 %v3505, %v4411
      %v4520 = vmax.f32 %v3507, %v4413
      %v4521 = vmax.f32 %v3511, %v4417
      %v4522 = vmax.f32 %v3513, %v4419
      %v4523 = vmax.f32 %v3517, %v4423
      %v4524 = vmax.f32 %v3519, %v4425
      %v4525 = vmax.f32 %v3523, %v4429
      %v4526 = vmax.f32 %v3525, %v4431
      %v4527 = vmax.f32 %v3529, %v4435
      %v4528 = vmax.f32 %v3531, %v4437
      %v4529 = vmax.f32 %v3535, %v4441
      %v4530 = vmax.f32 %v3537, %v4443
      %v4531 = vmax.f32 %v3541, %v4447
      %v4532 = vmax.f32 %v3543, %v4449
      %v4533 = vmax.f32 %v3547, %v4453
      %v4534 = vmax.f32 %v3549, %v4455
      %v4535 = vmax.f32 %v3553, %v4459
      %v4536 = vmax.f32 %v3555, %v4461
      %v4537 = vmax.f32 %v3559, %v4465
      %v4538 = vmax.f32 %v3561, %v4467
      %v4539 = vmax.f32 %v3565, %v4471
      %v4540 = vmax.f32 %v3567, %v4473
      %v4541 = vmax.f32 %v3571, %v4477
      %v4542 = vmax.f32 %v3573, %v4479
      %v4543 = vmax.f32 %v3577, %v4483
      %v4544 = vmax.f32 %v3579, %v4485
      %v4545 = vmax.f32 %v3583, %v4489
      %v4546 = vmax.f32 %v3585, %v4491
      %v4547 = vmax.f32 %v3589, %v4495
      %v4548 = vmax.f32 %v3591, %v4497
      %v4549 = vld [vmem:[%s3] sm:$0xff]
      %v4550 = vld [vmem:[%s3 + $0x8] sm:$0xff]
      %v4551 = vld [vmem:[%s3 + $0x10] sm:$0xff]
      %v4552 = vld [vmem:[%s3 + $0x18] sm:$0xff]
      %v4553 = vld [vmem:[%s3 + $0x20] sm:$0xff]
      %v4554 = vld [vmem:[%s3 + $0x28] sm:$0xff]
      %v4555 = vld [vmem:[%s3 + $0x30] sm:$0xff]
      %v4556 = vld [vmem:[%s3 + $0x38] sm:$0xff]
      %v4557 = vld [vmem:[%s3 + $0x40] sm:$0xff]
      %v4558 = vld [vmem:[%s3 + $0x48] sm:$0xff]
      %v4559 = vld [vmem:[%s3 + $0x50] sm:$0xff]
      %v4560 = vld [vmem:[%s3 + $0x58] sm:$0xff]
      %v4561 = vld [vmem:[%s3 + $0x60] sm:$0xff]
      %v4562 = vld [vmem:[%s3 + $0x68] sm:$0xff]
      %v4563 = vld [vmem:[%s3 + $0x70] sm:$0xff]
      %v4564 = vld [vmem:[%s3 + $0x78] sm:$0xff]
      %v4565 = vld [vmem:[%s3 + $0x80] sm:$0xff]
      %v4566 = vld [vmem:[%s3 + $0x88] sm:$0xff]
      %v4567 = vld [vmem:[%s3 + $0x90] sm:$0xff]
      %v4568 = vld [vmem:[%s3 + $0x98] sm:$0xff]
      %v4569 = vld [vmem:[%s3 + $0xa0] sm:$0xff]
      %v4570 = vld [vmem:[%s3 + $0xa8] sm:$0xff]
      %v4571 = vld [vmem:[%s3 + $0xb0] sm:$0xff]
      %v4572 = vld [vmem:[%s3 + $0xb8] sm:$0xff]
      %v4573 = vld [vmem:[%s3 + $0xc0] sm:$0x3]
      %v4574 = vld [vmem:[%s3 + $0xc8] sm:$0x3]
      %v4575 = vld [vmem:[%s4] sm:$0x3]
      %v4577 = vlaneseq
      %v4578 = vshrl.u32 %v4577, 7
      %v4579 = vsub.s32 0, %v4578
      %v4580 = vrot.slane %v4575, %v4579
      %v4581 = vlaneseq
      %v4582 = vshrl.u32 %v4581, 7
      %v4583 = vsub.s32 1, %v4582
      %v4584 = vrot.slane %v4575, %v4583
      %vm4587 = vcmask 564224
      %v4589 = vsel %vm4587, %v4550, 0
      %v4592 = vsel %vm4587, %v4552, 0
      %v4595 = vsel %vm4587, %v4554, 0
      %v4598 = vsel %vm4587, %v4556, 0
      %v4601 = vsel %vm4587, %v4558, 0
      %v4604 = vsel %vm4587, %v4560, 0
      %v4607 = vsel %vm4587, %v4562, 0
      %v4610 = vsel %vm4587, %v4564, 0
      %v4613 = vsel %vm4587, %v4566, 0
      %v4616 = vsel %vm4587, %v4568, 0
      %v4619 = vsel %vm4587, %v4570, 0
      %v4622 = vsel %vm4587, %v4572, 0
      %v4625 = vsel %vm4587, %v4574, 0
      %vm4627 = vcmask 1044480
      %v4629 = vsel %vm4627, %v4547, 0
      %v4632 = vsel %vm4627, %v4548, 0
      %4634 = vmatprep.subr.mxu0 %v4530
      %4635 = vmatpush1.msra.mxu0 %v4529
      %4636 = vmatprep.subr.mxu0 %v4528
      %4637 = vmatpush1.msra.mxu0 %v4527
      %4638 = vmatprep.subr.mxu0 %v4526
      %4639 = vmatpush1.msra.mxu0 %v4525
      %4640 = vmatprep.subr.mxu0 %v4524
      %4641 = vmatpush1.msra.mxu0 %v4523
      %4642 = vmatprep.subr.mxu0 %v4522
      %4643 = vmatpush1.msra.mxu0 %v4521
      %4644 = vmatprep.subr.mxu0 %v4520
      %4645 = vmatpush1.msra.mxu0 %v4519
      %4646 = vmatprep.subr.mxu0 %v4518
      %4647 = vmatpush1.msra.mxu0 %v4517
      %4648 = vmatprep.subr.mxu0 %v4516
      %4649 = vmatpush1.msra.mxu0 %v4515
      %4650 = vmatprep.subr.mxu0 %v4514
      %4651 = vmatpush1.msra.mxu0 %v4513
      %4652 = vmatprep.subr.mxu0 %v4512
      %4653 = vmatpush1.msra.mxu0 %v4511
      %4654 = vmatprep.subr.mxu0 %v4510
      %4655 = vmatpush1.msra.mxu0 %v4509
      %4656 = vmatprep.subr.mxu0 %v4508
      %4657 = vmatpush1.msra.mxu0 %v4507
      %4658 = vmatprep.subr.mxu0 %v4506
      %4659 = vmatpush1.msra.mxu0 %v4505
      %4660 = vmatprep.subr.mxu0 %v4504
      %4661 = vmatpush1.msra.mxu0 %v4503
      %4662 = vmatprep.subr.mxu0 %v4502
      %4663 = vmatpush1.msra.mxu0 %v4501
      %4664 = vmatprep.subr.mxu0 %v4500
      %4665 = vmatpush1.msra.mxu0 %v4499
      %4666 = vmatprep.subr.mxu0 0.0
      %4667 = vmatpush2.msra.mxu0 0.0
      %4668 = vmatprep.subr.mxu0 0.0
      %4669 = vmatpush2.msra.mxu0 0.0
      %4670 = vmatprep.subr.mxu0 0.0
      %4671 = vmatpush2.msra.mxu0 0.0
      %4672 = vmatprep.subr.mxu0 0.0
      %4673 = vmatpush2.msra.mxu0 0.0
      %4674 = vmatprep.subr.mxu0 0.0
      %4675 = vmatpush2.msra.mxu0 0.0
      %4676 = vmatprep.subr.mxu0 0.0
      %4677 = vmatpush2.msra.mxu0 0.0
      %4678 = vmatprep.subr.mxu0 0.0
      %4679 = vmatpush2.msra.mxu0 0.0
      %4680 = vmatprep.subr.mxu0 %v4632
      %4681 = vmatpush2.msra.mxu0 %v4629
      %4682 = vmatprep.subr.mxu0 %v4546
      %4683 = vmatpush2.msra.mxu0 %v4545
      %4684 = vmatprep.subr.mxu0 %v4544
      %4685 = vmatpush2.msra.mxu0 %v4543
      %4686 = vmatprep.subr.mxu0 %v4542
      %4687 = vmatpush2.msra.mxu0 %v4541
      %4688 = vmatprep.subr.mxu0 %v4540
      %4689 = vmatpush2.msra.mxu0 %v4539
      %4690 = vmatprep.subr.mxu0 %v4538
      %4691 = vmatpush2.msra.mxu0 %v4537
      %4692 = vmatprep.subr.mxu0 %v4536
      %4693 = vmatpush2.msra.mxu0 %v4535
      %4694 = vmatprep.subr.mxu0 %v4534
      %4695 = vmatpush2.msra.mxu0 %v4533
      %4696 = vmatprep.subr.mxu0 %v4532
      %4697 = vmatpush2.msra.mxu0 %v4531
      %4698 = vmatprep.mubr.f32.mxu0 %v4589
      %4699 = vmatmul.mubr.f32.gmra.mxu0 %v4549
      %v4700 = vpop.f32.mrf.mxu0
      %v4701 = vadd.f32 %v4580, %v4700
      %v4702 = vpop.f32.mrf.mxu0
      %v4703 = vadd.f32 %v4584, %v4702
      %4704 = vmatprep.mubr.f32.mxu0 %v4592
      %4705 = vmatmul.mubr.f32.gmra.mxu0 %v4551
      %v4706 = vpop.f32.mrf.mxu0
      %v4707 = vadd.f32 %v4580, %v4706
      %v4708 = vpop.f32.mrf.mxu0
      %v4709 = vadd.f32 %v4584, %v4708
      %4710 = vmatprep.mubr.f32.mxu0 %v4595
      %4711 = vmatmul.mubr.f32.gmra.mxu0 %v4553
      %v4712 = vpop.f32.mrf.mxu0
      %v4713 = vadd.f32 %v4580, %v4712
      %v4714 = vpop.f32.mrf.mxu0
      %v4715 = vadd.f32 %v4584, %v4714
      %4716 = vmatprep.mubr.f32.mxu0 %v4598
      %4717 = vmatmul.mubr.f32.gmra.mxu0 %v4555
      %v4718 = vpop.f32.mrf.mxu0
      %v4719 = vadd.f32 %v4580, %v4718
      %v4720 = vpop.f32.mrf.mxu0
      %v4721 = vadd.f32 %v4584, %v4720
      %4722 = vmatprep.mubr.f32.mxu0 %v4601
      %4723 = vmatmul.mubr.f32.gmra.mxu0 %v4557
      %v4724 = vpop.f32.mrf.mxu0
      %v4725 = vadd.f32 %v4580, %v4724
      %v4726 = vpop.f32.mrf.mxu0
      %v4727 = vadd.f32 %v4584, %v4726
      %4728 = vmatprep.mubr.f32.mxu0 %v4604
      %4729 = vmatmul.mubr.f32.gmra.mxu0 %v4559
      %v4730 = vpop.f32.mrf.mxu0
      %v4731 = vadd.f32 %v4580, %v4730
      %v4732 = vpop.f32.mrf.mxu0
      %v4733 = vadd.f32 %v4584, %v4732
      %4734 = vmatprep.mubr.f32.mxu0 %v4607
      %4735 = vmatmul.mubr.f32.gmra.mxu0 %v4561
      %v4736 = vpop.f32.mrf.mxu0
      %v4737 = vadd.f32 %v4580, %v4736
      %v4738 = vpop.f32.mrf.mxu0
      %v4739 = vadd.f32 %v4584, %v4738
      %4740 = vmatprep.mubr.f32.mxu0 %v4610
      %4741 = vmatmul.mubr.f32.gmra.mxu0 %v4563
      %v4742 = vpop.f32.mrf.mxu0
      %v4743 = vadd.f32 %v4580, %v4742
      %v4744 = vpop.f32.mrf.mxu0
      %v4745 = vadd.f32 %v4584, %v4744
      %4746 = vmatprep.mubr.f32.mxu0 %v4613
      %4747 = vmatmul.mubr.f32.gmra.mxu0 %v4565
      %v4748 = vpop.f32.mrf.mxu0
      %v4749 = vadd.f32 %v4580, %v4748
      %v4750 = vpop.f32.mrf.mxu0
      %v4751 = vadd.f32 %v4584, %v4750
      %4752 = vmatprep.mubr.f32.mxu0 %v4616
      %4753 = vmatmul.mubr.f32.gmra.mxu0 %v4567
      %v4754 = vpop.f32.mrf.mxu0
      %v4755 = vadd.f32 %v4580, %v4754
      %v4756 = vpop.f32.mrf.mxu0
      %v4757 = vadd.f32 %v4584, %v4756
      %4758 = vmatprep.mubr.f32.mxu0 %v4619
      %4759 = vmatmul.mubr.f32.gmra.mxu0 %v4569
      %v4760 = vpop.f32.mrf.mxu0
      %v4761 = vadd.f32 %v4580, %v4760
      %v4762 = vpop.f32.mrf.mxu0
      %v4763 = vadd.f32 %v4584, %v4762
      %4764 = vmatprep.mubr.f32.mxu0 %v4622
      %4765 = vmatmul.mubr.f32.gmra.mxu0 %v4571
      %v4766 = vpop.f32.mrf.mxu0
      %v4767 = vadd.f32 %v4580, %v4766
      %v4768 = vpop.f32.mrf.mxu0
      %v4769 = vadd.f32 %v4584, %v4768
      %4770 = vmatprep.mubr.f32.mxu0 %v4625
      %4771 = vmatmul.mubr.f32.gmra.mxu0 %v4573
      %v4772 = vpop.f32.mrf.mxu0
      %v4773 = vadd.f32 %v4580, %v4772
      %v4774 = vpop.f32.mrf.mxu0
      %v4775 = vadd.f32 %v4584, %v4774
      %4776 = vdwg.mxu0
      %v4777 = vmax.f32 %v4701, 0.0
      %v4778 = vmax.f32 %v4703, 0.0
      %v4779 = vmax.f32 %v4707, 0.0
      %v4780 = vmax.f32 %v4709, 0.0
      %v4781 = vmax.f32 %v4713, 0.0
      %v4782 = vmax.f32 %v4715, 0.0
      %v4783 = vmax.f32 %v4719, 0.0
      %v4784 = vmax.f32 %v4721, 0.0
      %v4785 = vmax.f32 %v4725, 0.0
      %v4786 = vmax.f32 %v4727, 0.0
      %v4787 = vmax.f32 %v4731, 0.0
      %v4788 = vmax.f32 %v4733, 0.0
      %v4789 = vmax.f32 %v4737, 0.0
      %v4790 = vmax.f32 %v4739, 0.0
      %v4791 = vmax.f32 %v4743, 0.0
      %v4792 = vmax.f32 %v4745, 0.0
      %v4793 = vmax.f32 %v4749, 0.0
      %v4794 = vmax.f32 %v4751, 0.0
      %v4795 = vmax.f32 %v4755, 0.0
      %v4796 = vmax.f32 %v4757, 0.0
      %v4797 = vmax.f32 %v4761, 0.0
      %v4798 = vmax.f32 %v4763, 0.0
      %v4799 = vmax.f32 %v4767, 0.0
      %v4800 = vmax.f32 %v4769, 0.0
      %v4801 = vmax.f32 %v4773, 0.0
      %v4802 = vmax.f32 %v4775, 0.0
      %v4803 = vld [vmem:[%s5] sm:$0xff]
      %v4804 = vld [vmem:[%s5 + $0x8] sm:$0xff]
      %v4805 = vld [vmem:[%s5 + $0x10] sm:$0xff]
      %v4806 = vld [vmem:[%s5 + $0x18] sm:$0xff]
      %v4807 = vld [vmem:[%s5 + $0x20] sm:$0xff]
      %v4808 = vld [vmem:[%s5 + $0x28] sm:$0xff]
      %v4809 = vld [vmem:[%s5 + $0x30] sm:$0xff]
      %v4810 = vld [vmem:[%s5 + $0x38] sm:$0xff]
      %v4811 = vld [vmem:[%s5 + $0x40] sm:$0xff]
      %v4812 = vld [vmem:[%s5 + $0x48] sm:$0xff]
      %v4813 = vld [vmem:[%s5 + $0x50] sm:$0xff]
      %v4814 = vld [vmem:[%s5 + $0x58] sm:$0xff]
      %v4815 = vld [vmem:[%s5 + $0x60] sm:$0xff]
      %v4816 = vld [vmem:[%s5 + $0x68] sm:$0xff]
      %v4817 = vld [vmem:[%s5 + $0x70] sm:$0xff]
      %v4818 = vld [vmem:[%s5 + $0x78] sm:$0xff]
      %v4819 = vld [vmem:[%s5 + $0x80] sm:$0xff]
      %v4820 = vld [vmem:[%s5 + $0x88] sm:$0xff]
      %v4821 = vld [vmem:[%s5 + $0x90] sm:$0xff]
      %v4822 = vld [vmem:[%s5 + $0x98] sm:$0xff]
      %v4823 = vld [vmem:[%s5 + $0xa0] sm:$0xff]
      %v4824 = vld [vmem:[%s5 + $0xa8] sm:$0xff]
      %v4825 = vld [vmem:[%s5 + $0xb0] sm:$0xff]
      %v4826 = vld [vmem:[%s5 + $0xb8] sm:$0xff]
      %v4827 = vld [vmem:[%s5 + $0xc0] sm:$0xff]
      %v4828 = vld [vmem:[%s5 + $0xc8] sm:$0xff]
      %v4829 = vld [vmem:[%s5 + $0xd0] sm:$0xff]
      %v4830 = vld [vmem:[%s5 + $0xd8] sm:$0xff]
      %v4831 = vld [vmem:[%s5 + $0xe0] sm:$0xff]
      %v4832 = vld [vmem:[%s5 + $0xe8] sm:$0xff]
      %v4833 = vld [vmem:[%s5 + $0xf0] sm:$0xff]
      %v4834 = vld [vmem:[%s5 + $0xf8] sm:$0xff]
      %v4835 = vld [vmem:[%s5 + $0x100] sm:$0xff]
      %v4836 = vld [vmem:[%s5 + $0x108] sm:$0xff]
      %v4837 = vld [vmem:[%s5 + $0x110] sm:$0xff]
      %v4838 = vld [vmem:[%s5 + $0x118] sm:$0xff]
      %v4839 = vld [vmem:[%s5 + $0x120] sm:$0xff]
      %v4840 = vld [vmem:[%s5 + $0x128] sm:$0xff]
      %v4841 = vld [vmem:[%s5 + $0x130] sm:$0xff]
      %v4842 = vld [vmem:[%s5 + $0x138] sm:$0xff]
      %v4843 = vld [vmem:[%s5 + $0x140] sm:$0xff]
      %v4844 = vld [vmem:[%s5 + $0x148] sm:$0xff]
      %v4845 = vld [vmem:[%s5 + $0x150] sm:$0xff]
      %v4846 = vld [vmem:[%s5 + $0x158] sm:$0xff]
      %v4847 = vld [vmem:[%s5 + $0x160] sm:$0xff]
      %v4848 = vld [vmem:[%s5 + $0x168] sm:$0xff]
      %v4849 = vld [vmem:[%s5 + $0x170] sm:$0xff]
      %v4850 = vld [vmem:[%s5 + $0x178] sm:$0xff]
      %v4851 = vld [vmem:[%s5 + $0x180] sm:$0xff]
      %v4852 = vld [vmem:[%s5 + $0x188] sm:$0xff]
      %v4853 = vld [vmem:[%s5 + $0x190] sm:$0xff]
      %v4854 = vld [vmem:[%s5 + $0x198] sm:$0xff]
      %v4855 = vld [vmem:[%s5 + $0x1a0] sm:$0xff]
      %v4856 = vld [vmem:[%s5 + $0x1a8] sm:$0xff]
      %v4857 = vld [vmem:[%s5 + $0x1b0] sm:$0xff]
      %v4858 = vld [vmem:[%s5 + $0x1b8] sm:$0xff]
      %v4859 = vld [vmem:[%s5 + $0x1c0] sm:$0xff]
      %v4860 = vld [vmem:[%s5 + $0x1c8] sm:$0xff]
      %v4861 = vld [vmem:[%s5 + $0x1d0] sm:$0xff]
      %v4862 = vld [vmem:[%s5 + $0x1d8] sm:$0xff]
      %v4863 = vld [vmem:[%s5 + $0x1e0] sm:$0xff]
      %v4864 = vld [vmem:[%s5 + $0x1e8] sm:$0xff]
      %v4865 = vld [vmem:[%s5 + $0x1f0] sm:$0xff]
      %v4866 = vld [vmem:[%s5 + $0x1f8] sm:$0xff]
      %v4867 = vld [vmem:[%s5 + $0x200] sm:$0xff]
      %v4868 = vld [vmem:[%s5 + $0x208] sm:$0xff]
      %v4869 = vld [vmem:[%s5 + $0x210] sm:$0xff]
      %v4870 = vld [vmem:[%s5 + $0x218] sm:$0xff]
      %v4871 = vld [vmem:[%s5 + $0x220] sm:$0xff]
      %v4872 = vld [vmem:[%s5 + $0x228] sm:$0xff]
      %v4873 = vld [vmem:[%s5 + $0x230] sm:$0xff]
      %v4874 = vld [vmem:[%s5 + $0x238] sm:$0xff]
      %v4875 = vld [vmem:[%s5 + $0x240] sm:$0xf]
      %v4876 = vld [vmem:[%s5 + $0x248] sm:$0xf]
      %v4877 = vld [vmem:[%s5 + $0x250] sm:$0xf]
      %s4878 = scalar_lea.vmem %s5, 600
      %v4879 = vld [vmem:[%s4878] sm:$0xff]
      %v4880 = vld [vmem:[%s4878 + $0x8] sm:$0xff]
      %v4881 = vld [vmem:[%s4878 + $0x10] sm:$0xff]
      %v4882 = vld [vmem:[%s4878 + $0x18] sm:$0xff]
      %v4883 = vld [vmem:[%s4878 + $0x20] sm:$0xff]
      %v4884 = vld [vmem:[%s4878 + $0x28] sm:$0xff]
      %v4885 = vld [vmem:[%s4878 + $0x30] sm:$0xff]
      %v4886 = vld [vmem:[%s4878 + $0x38] sm:$0xff]
      %v4887 = vld [vmem:[%s4878 + $0x40] sm:$0xff]
      %v4888 = vld [vmem:[%s4878 + $0x48] sm:$0xff]
      %v4889 = vld [vmem:[%s4878 + $0x50] sm:$0xff]
      %v4890 = vld [vmem:[%s4878 + $0x58] sm:$0xff]
      %v4891 = vld [vmem:[%s4878 + $0x60] sm:$0xff]
      %v4892 = vld [vmem:[%s4878 + $0x68] sm:$0xff]
      %v4893 = vld [vmem:[%s4878 + $0x70] sm:$0xff]
      %v4894 = vld [vmem:[%s4878 + $0x78] sm:$0xff]
      %v4895 = vld [vmem:[%s4878 + $0x80] sm:$0xff]
      %v4896 = vld [vmem:[%s4878 + $0x88] sm:$0xff]
      %v4897 = vld [vmem:[%s4878 + $0x90] sm:$0xff]
      %v4898 = vld [vmem:[%s4878 + $0x98] sm:$0xff]
      %v4899 = vld [vmem:[%s4878 + $0xa0] sm:$0xff]
      %v4900 = vld [vmem:[%s4878 + $0xa8] sm:$0xff]
      %v4901 = vld [vmem:[%s4878 + $0xb0] sm:$0xff]
      %v4902 = vld [vmem:[%s4878 + $0xb8] sm:$0xff]
      %v4903 = vld [vmem:[%s4878 + $0xc0] sm:$0xff]
      %v4904 = vld [vmem:[%s4878 + $0xc8] sm:$0xff]
      %v4905 = vld [vmem:[%s4878 + $0xd0] sm:$0xff]
      %v4906 = vld [vmem:[%s4878 + $0xd8] sm:$0xff]
      %v4907 = vld [vmem:[%s4878 + $0xe0] sm:$0xff]
      %v4908 = vld [vmem:[%s4878 + $0xe8] sm:$0xff]
      %v4909 = vld [vmem:[%s4878 + $0xf0] sm:$0xff]
      %v4910 = vld [vmem:[%s4878 + $0xf8] sm:$0xff]
      %v4911 = vld [vmem:[%s4878 + $0x100] sm:$0xff]
      %v4912 = vld [vmem:[%s4878 + $0x108] sm:$0xff]
      %v4913 = vld [vmem:[%s4878 + $0x110] sm:$0xff]
      %v4914 = vld [vmem:[%s4878 + $0x118] sm:$0xff]
      %v4915 = vld [vmem:[%s4878 + $0x120] sm:$0xff]
      %v4916 = vld [vmem:[%s4878 + $0x128] sm:$0xff]
      %v4917 = vld [vmem:[%s4878 + $0x130] sm:$0xff]
      %v4918 = vld [vmem:[%s4878 + $0x138] sm:$0xff]
      %v4919 = vld [vmem:[%s4878 + $0x140] sm:$0xff]
      %v4920 = vld [vmem:[%s4878 + $0x148] sm:$0xff]
      %v4921 = vld [vmem:[%s4878 + $0x150] sm:$0xff]
      %v4922 = vld [vmem:[%s4878 + $0x158] sm:$0xff]
      %v4923 = vld [vmem:[%s4878 + $0x160] sm:$0xff]
      %v4924 = vld [vmem:[%s4878 + $0x168] sm:$0xff]
      %v4925 = vld [vmem:[%s4878 + $0x170] sm:$0xff]
      %v4926 = vld [vmem:[%s4878 + $0x178] sm:$0xff]
      %v4927 = vld [vmem:[%s4878 + $0x180] sm:$0xff]
      %v4928 = vld [vmem:[%s4878 + $0x188] sm:$0xff]
      %v4929 = vld [vmem:[%s4878 + $0x190] sm:$0xff]
      %v4930 = vld [vmem:[%s4878 + $0x198] sm:$0xff]
      %v4931 = vld [vmem:[%s4878 + $0x1a0] sm:$0xff]
      %v4932 = vld [vmem:[%s4878 + $0x1a8] sm:$0xff]
      %v4933 = vld [vmem:[%s4878 + $0x1b0] sm:$0xff]
      %v4934 = vld [vmem:[%s4878 + $0x1b8] sm:$0xff]
      %v4935 = vld [vmem:[%s4878 + $0x1c0] sm:$0xff]
      %v4936 = vld [vmem:[%s4878 + $0x1c8] sm:$0xff]
      %v4937 = vld [vmem:[%s4878 + $0x1d0] sm:$0xff]
      %v4938 = vld [vmem:[%s4878 + $0x1d8] sm:$0xff]
      %v4939 = vld [vmem:[%s4878 + $0x1e0] sm:$0xff]
      %v4940 = vld [vmem:[%s4878 + $0x1e8] sm:$0xff]
      %v4941 = vld [vmem:[%s4878 + $0x1f0] sm:$0xff]
      %v4942 = vld [vmem:[%s4878 + $0x1f8] sm:$0xff]
      %v4943 = vld [vmem:[%s4878 + $0x200] sm:$0xff]
      %v4944 = vld [vmem:[%s4878 + $0x208] sm:$0xff]
      %v4945 = vld [vmem:[%s4878 + $0x210] sm:$0xff]
      %v4946 = vld [vmem:[%s4878 + $0x218] sm:$0xff]
      %v4947 = vld [vmem:[%s4878 + $0x220] sm:$0xff]
      %v4948 = vld [vmem:[%s4878 + $0x228] sm:$0xff]
      %v4949 = vld [vmem:[%s4878 + $0x230] sm:$0xff]
      %v4950 = vld [vmem:[%s4878 + $0x238] sm:$0xff]
      %v4951 = vld [vmem:[%s4878 + $0x240] sm:$0xf]
      %v4952 = vld [vmem:[%s4878 + $0x248] sm:$0xf]
      %v4953 = vld [vmem:[%s4878 + $0x250] sm:$0xf]
      %v4980 = vrot.slane %v4777, 1
      %v4981 = vrot.slane %v4779, 1
      %v4982 = vsel %vm756, %v4980, %v4981
      %v4983 = vrot.slane %v4778, 1
      %v4984 = vrot.slane %v4780, 1
      %v4985 = vsel %vm756, %v4983, %v4984
      %v4986 = vrot.slane %v4781, 1
      %v4987 = vsel %vm756, %v4981, %v4986
      %v4988 = vrot.slane %v4782, 1
      %v4989 = vsel %vm756, %v4984, %v4988
      %v4990 = vrot.slane %v4783, 1
      %v4991 = vsel %vm756, %v4986, %v4990
      %v4992 = vrot.slane %v4784, 1
      %v4993 = vsel %vm756, %v4988, %v4992
      %v4994 = vrot.slane %v4785, 1
      %v4995 = vsel %vm756, %v4990, %v4994
      %v4996 = vrot.slane %v4786, 1
      %v4997 = vsel %vm756, %v4992, %v4996
      %v4998 = vrot.slane %v4787, 1
      %v4999 = vsel %vm756, %v4994, %v4998
      %v5000 = vrot.slane %v4788, 1
      %v5001 = vsel %vm756, %v4996, %v5000
      %v5002 = vrot.slane %v4789, 1
      %v5003 = vsel %vm756, %v4998, %v5002
      %v5004 = vrot.slane %v4790, 1
      %v5005 = vsel %vm756, %v5000, %v5004
      %v5006 = vrot.slane %v4791, 1
      %v5007 = vsel %vm756, %v5002, %v5006
      %v5008 = vrot.slane %v4792, 1
      %v5009 = vsel %vm756, %v5004, %v5008
      %v5010 = vrot.slane %v4793, 1
      %v5011 = vsel %vm756, %v5006, %v5010
      %v5012 = vrot.slane %v4794, 1
      %v5013 = vsel %vm756, %v5008, %v5012
      %v5014 = vrot.slane %v4795, 1
      %v5015 = vsel %vm756, %v5010, %v5014
      %v5016 = vrot.slane %v4796, 1
      %v5017 = vsel %vm756, %v5012, %v5016
      %v5018 = vrot.slane %v4797, 1
      %v5019 = vsel %vm756, %v5014, %v5018
      %v5020 = vrot.slane %v4798, 1
      %v5021 = vsel %vm756, %v5016, %v5020
      %v5022 = vrot.slane %v4799, 1
      %v5023 = vsel %vm756, %v5018, %v5022
      %v5024 = vrot.slane %v4800, 1
      %v5025 = vsel %vm756, %v5020, %v5024
      %v5026 = vrot.slane %v4801, 1
      %v5027 = vsel %vm756, %v5022, %v5026
      %v5028 = vrot.slane %v4802, 1
      %v5029 = vsel %vm756, %v5024, %v5028
      %vm5042 = vcmask 556032
      %v5043 = vsel %vm5042, %v4985, 0
      %v5045 = vsel %vm5042, %v4989, 0
      %v5047 = vsel %vm5042, %v4993, 0
      %v5049 = vsel %vm5042, %v4997, 0
      %v5051 = vsel %vm5042, %v5001, 0
      %v5053 = vsel %vm5042, %v5005, 0
      %v5055 = vsel %vm5042, %v5009, 0
      %v5057 = vsel %vm5042, %v5013, 0
      %v5059 = vsel %vm5042, %v5017, 0
      %v5061 = vsel %vm5042, %v5021, 0
      %v5063 = vsel %vm5042, %v5025, 0
      %v5065 = vsel %vm5042, %v5029, 0
      %v5068 = vsel %vm857, %v4951, 0
      %v5071 = vsel %vm857, %v4952, 0
      %v5074 = vsel %vm857, %v4953, 0
      %5076 = vmatprep.subr.mxu0 %v4925
      %5077 = vmatpush1.msra.mxu0 %v4924
      %5078 = vmatprep.subr.mxu0 %v4922
      %5079 = vmatpush1.msra.mxu0 %v4921
      %5080 = vmatprep.subr.mxu0 %v4919
      %5081 = vmatpush1.msra.mxu0 %v4918
      %5082 = vmatprep.subr.mxu0 %v4916
      %5083 = vmatpush1.msra.mxu0 %v4915
      %5084 = vmatprep.subr.mxu0 %v4913
      %5085 = vmatpush1.msra.mxu0 %v4912
      %5086 = vmatprep.subr.mxu0 %v4910
      %5087 = vmatpush1.msra.mxu0 %v4909
      %5088 = vmatprep.subr.mxu0 %v4907
      %5089 = vmatpush1.msra.mxu0 %v4906
      %5090 = vmatprep.subr.mxu0 %v4904
      %5091 = vmatpush1.msra.mxu0 %v4903
      %5092 = vmatprep.subr.mxu0 %v4901
      %5093 = vmatpush1.msra.mxu0 %v4900
      %5094 = vmatprep.subr.mxu0 %v4898
      %5095 = vmatpush1.msra.mxu0 %v4897
      %5096 = vmatprep.subr.mxu0 %v4895
      %5097 = vmatpush1.msra.mxu0 %v4894
      %5098 = vmatprep.subr.mxu0 %v4892
      %5099 = vmatpush1.msra.mxu0 %v4891
      %5100 = vmatprep.subr.mxu0 %v4889
      %5101 = vmatpush1.msra.mxu0 %v4888
      %5102 = vmatprep.subr.mxu0 %v4886
      %5103 = vmatpush1.msra.mxu0 %v4885
      %5104 = vmatprep.subr.mxu0 %v4883
      %5105 = vmatpush1.msra.mxu0 %v4882
      %5106 = vmatprep.subr.mxu0 %v4880
      %5107 = vmatpush1.msra.mxu0 %v4879
      %5108 = vmatprep.subr.mxu0 0.0
      %5109 = vmatpush2.msra.mxu0 0.0
      %5110 = vmatprep.subr.mxu0 0.0
      %5111 = vmatpush2.msra.mxu0 0.0
      %5112 = vmatprep.subr.mxu0 0.0
      %5113 = vmatpush2.msra.mxu0 0.0
      %5114 = vmatprep.subr.mxu0 0.0
      %5115 = vmatpush2.msra.mxu0 0.0
      %5116 = vmatprep.subr.mxu0 0.0
      %5117 = vmatpush2.msra.mxu0 0.0
      %5118 = vmatprep.subr.mxu0 0.0
      %5119 = vmatpush2.msra.mxu0 0.0
      %5120 = vmatprep.subr.mxu0 0.0
      %5121 = vmatpush2.msra.mxu0 0.0
      %5122 = vmatprep.subr.mxu0 %v5071
      %5123 = vmatpush2.msra.mxu0 %v5068
      %5124 = vmatprep.subr.mxu0 %v4949
      %5125 = vmatpush2.msra.mxu0 %v4948
      %5126 = vmatprep.subr.mxu0 %v4946
      %5127 = vmatpush2.msra.mxu0 %v4945
      %5128 = vmatprep.subr.mxu0 %v4943
      %5129 = vmatpush2.msra.mxu0 %v4942
      %5130 = vmatprep.subr.mxu0 %v4940
      %5131 = vmatpush2.msra.mxu0 %v4939
      %5132 = vmatprep.subr.mxu0 %v4937
      %5133 = vmatpush2.msra.mxu0 %v4936
      %5134 = vmatprep.subr.mxu0 %v4934
      %5135 = vmatpush2.msra.mxu0 %v4933
      %5136 = vmatprep.subr.mxu0 %v4931
      %5137 = vmatpush2.msra.mxu0 %v4930
      %5138 = vmatprep.subr.mxu0 %v4928
      %5139 = vmatpush2.msra.mxu0 %v4927
      %5140 = vmatprep.mubr.f32.mxu0 %v5043
      %5141 = vmatmul.mubr.f32.gmra.mxu0 %v4982
      %v5142 = vpop.f32.mrf.mxu0
      %v5143 = vadd.f32 0.0, %v5142
      %v5144 = vpop.f32.mrf.mxu0
      %v5145 = vadd.f32 0.0, %v5144
      %5146 = vmatprep.mubr.f32.mxu0 %v5045
      %5147 = vmatmul.mubr.f32.gmra.mxu0 %v4987
      %v5148 = vpop.f32.mrf.mxu0
      %v5149 = vadd.f32 0.0, %v5148
      %v5150 = vpop.f32.mrf.mxu0
      %v5151 = vadd.f32 0.0, %v5150
      %5152 = vmatprep.mubr.f32.mxu0 %v5047
      %5153 = vmatmul.mubr.f32.gmra.mxu0 %v4991
      %v5154 = vpop.f32.mrf.mxu0
      %v5155 = vadd.f32 0.0, %v5154
      %v5156 = vpop.f32.mrf.mxu0
      %v5157 = vadd.f32 0.0, %v5156
      %5158 = vmatprep.mubr.f32.mxu0 %v5049
      %5159 = vmatmul.mubr.f32.gmra.mxu0 %v4995
      %v5160 = vpop.f32.mrf.mxu0
      %v5161 = vadd.f32 0.0, %v5160
      %v5162 = vpop.f32.mrf.mxu0
      %v5163 = vadd.f32 0.0, %v5162
      %5164 = vmatprep.mubr.f32.mxu0 %v5051
      %5165 = vmatmul.mubr.f32.gmra.mxu0 %v4999
      %v5166 = vpop.f32.mrf.mxu0
      %v5167 = vadd.f32 0.0, %v5166
      %v5168 = vpop.f32.mrf.mxu0
      %v5169 = vadd.f32 0.0, %v5168
      %5170 = vmatprep.mubr.f32.mxu0 %v5053
      %5171 = vmatmul.mubr.f32.gmra.mxu0 %v5003
      %v5172 = vpop.f32.mrf.mxu0
      %v5173 = vadd.f32 0.0, %v5172
      %v5174 = vpop.f32.mrf.mxu0
      %v5175 = vadd.f32 0.0, %v5174
      %5176 = vmatprep.mubr.f32.mxu0 %v5055
      %5177 = vmatmul.mubr.f32.gmra.mxu0 %v5007
      %v5178 = vpop.f32.mrf.mxu0
      %v5179 = vadd.f32 0.0, %v5178
      %v5180 = vpop.f32.mrf.mxu0
      %v5181 = vadd.f32 0.0, %v5180
      %5182 = vmatprep.mubr.f32.mxu0 %v5057
      %5183 = vmatmul.mubr.f32.gmra.mxu0 %v5011
      %v5184 = vpop.f32.mrf.mxu0
      %v5185 = vadd.f32 0.0, %v5184
      %v5186 = vpop.f32.mrf.mxu0
      %v5187 = vadd.f32 0.0, %v5186
      %5188 = vmatprep.mubr.f32.mxu0 %v5059
      %5189 = vmatmul.mubr.f32.gmra.mxu0 %v5015
      %v5190 = vpop.f32.mrf.mxu0
      %v5191 = vadd.f32 0.0, %v5190
      %v5192 = vpop.f32.mrf.mxu0
      %v5193 = vadd.f32 0.0, %v5192
      %5194 = vmatprep.mubr.f32.mxu0 %v5061
      %5195 = vmatmul.mubr.f32.gmra.mxu0 %v5019
      %v5196 = vpop.f32.mrf.mxu0
      %v5197 = vadd.f32 0.0, %v5196
      %v5198 = vpop.f32.mrf.mxu0
      %v5199 = vadd.f32 0.0, %v5198
      %5200 = vmatprep.mubr.f32.mxu0 %v5063
      %5201 = vmatmul.mubr.f32.gmra.mxu0 %v5023
      %v5202 = vpop.f32.mrf.mxu0
      %v5203 = vadd.f32 0.0, %v5202
      %v5204 = vpop.f32.mrf.mxu0
      %v5205 = vadd.f32 0.0, %v5204
      %5206 = vmatprep.mubr.f32.mxu0 %v5065
      %5207 = vmatmul.mubr.f32.gmra.mxu0 %v5027
      %v5208 = vpop.f32.mrf.mxu0
      %v5209 = vadd.f32 0.0, %v5208
      %v5210 = vpop.f32.mrf.mxu0
      %v5211 = vadd.f32 0.0, %v5210
      %5212 = vdwg.mxu0
      %5213 = vmatprep.subr.mxu0 0.0
      %5214 = vmatpush1.msra.mxu0 %v4926
      %5215 = vmatprep.subr.mxu0 0.0
      %5216 = vmatpush1.msra.mxu0 %v4923
      %5217 = vmatprep.subr.mxu0 0.0
      %5218 = vmatpush1.msra.mxu0 %v4920
      %5219 = vmatprep.subr.mxu0 0.0
      %5220 = vmatpush1.msra.mxu0 %v4917
      %5221 = vmatprep.subr.mxu0 0.0
      %5222 = vmatpush1.msra.mxu0 %v4914
      %5223 = vmatprep.subr.mxu0 0.0
      %5224 = vmatpush1.msra.mxu0 %v4911
      %5225 = vmatprep.subr.mxu0 0.0
      %5226 = vmatpush1.msra.mxu0 %v4908
      %5227 = vmatprep.subr.mxu0 0.0
      %5228 = vmatpush1.msra.mxu0 %v4905
      %5229 = vmatprep.subr.mxu0 0.0
      %5230 = vmatpush1.msra.mxu0 %v4902
      %5231 = vmatprep.subr.mxu0 0.0
      %5232 = vmatpush1.msra.mxu0 %v4899
      %5233 = vmatprep.subr.mxu0 0.0
      %5234 = vmatpush1.msra.mxu0 %v4896
      %5235 = vmatprep.subr.mxu0 0.0
      %5236 = vmatpush1.msra.mxu0 %v4893
      %5237 = vmatprep.subr.mxu0 0.0
      %5238 = vmatpush1.msra.mxu0 %v4890
      %5239 = vmatprep.subr.mxu0 0.0
      %5240 = vmatpush1.msra.mxu0 %v4887
      %5241 = vmatprep.subr.mxu0 0.0
      %5242 = vmatpush1.msra.mxu0 %v4884
      %5243 = vmatprep.subr.mxu0 0.0
      %5244 = vmatpush1.msra.mxu0 %v4881
      %5245 = vmatprep.subr.mxu0 0.0
      %5246 = vmatpush2.msra.mxu0 0.0
      %5247 = vmatprep.subr.mxu0 0.0
      %5248 = vmatpush2.msra.mxu0 0.0
      %5249 = vmatprep.subr.mxu0 0.0
      %5250 = vmatpush2.msra.mxu0 0.0
      %5251 = vmatprep.subr.mxu0 0.0
      %5252 = vmatpush2.msra.mxu0 0.0
      %5253 = vmatprep.subr.mxu0 0.0
      %5254 = vmatpush2.msra.mxu0 0.0
      %5255 = vmatprep.subr.mxu0 0.0
      %5256 = vmatpush2.msra.mxu0 0.0
      %5257 = vmatprep.subr.mxu0 0.0
      %5258 = vmatpush2.msra.mxu0 0.0
      %5259 = vmatprep.subr.mxu0 0.0
      %5260 = vmatpush2.msra.mxu0 %v5074
      %5261 = vmatprep.subr.mxu0 0.0
      %5262 = vmatpush2.msra.mxu0 %v4950
      %5263 = vmatprep.subr.mxu0 0.0
      %5264 = vmatpush2.msra.mxu0 %v4947
      %5265 = vmatprep.subr.mxu0 0.0
      %5266 = vmatpush2.msra.mxu0 %v4944
      %5267 = vmatprep.subr.mxu0 0.0
      %5268 = vmatpush2.msra.mxu0 %v4941
      %5269 = vmatprep.subr.mxu0 0.0
      %5270 = vmatpush2.msra.mxu0 %v4938
      %5271 = vmatprep.subr.mxu0 0.0
      %5272 = vmatpush2.msra.mxu0 %v4935
      %5273 = vmatprep.subr.mxu0 0.0
      %5274 = vmatpush2.msra.mxu0 %v4932
      %5275 = vmatprep.subr.mxu0 0.0
      %5276 = vmatpush2.msra.mxu0 %v4929
      %5277 = vmatprep.mubr.f32.mxu0 %v5043
      %5278 = vmatmul.mubr.f32.gmra.mxu0 %v4982
      %v5279 = vpop.f32.mrf.mxu0
      %v5280 = vadd.f32 0.0, %v5279
      %v5281 = vpop.f32.mrf.mxu0
      %5282 = vmatprep.mubr.f32.mxu0 %v5045
      %5283 = vmatmul.mubr.f32.gmra.mxu0 %v4987
      %v5284 = vpop.f32.mrf.mxu0
      %v5285 = vadd.f32 0.0, %v5284
      %v5286 = vpop.f32.mrf.mxu0
      %5287 = vmatprep.mubr.f32.mxu0 %v5047
      %5288 = vmatmul.mubr.f32.gmra.mxu0 %v4991
      %v5289 = vpop.f32.mrf.mxu0
      %v5290 = vadd.f32 0.0, %v5289
      %v5291 = vpop.f32.mrf.mxu0
      %5292 = vmatprep.mubr.f32.mxu0 %v5049
      %5293 = vmatmul.mubr.f32.gmra.mxu0 %v4995
      %v5294 = vpop.f32.mrf.mxu0
      %v5295 = vadd.f32 0.0, %v5294
      %v5296 = vpop.f32.mrf.mxu0
      %5297 = vmatprep.mubr.f32.mxu0 %v5051
      %5298 = vmatmul.mubr.f32.gmra.mxu0 %v4999
      %v5299 = vpop.f32.mrf.mxu0
      %v5300 = vadd.f32 0.0, %v5299
      %v5301 = vpop.f32.mrf.mxu0
      %5302 = vmatprep.mubr.f32.mxu0 %v5053
      %5303 = vmatmul.mubr.f32.gmra.mxu0 %v5003
      %v5304 = vpop.f32.mrf.mxu0
      %v5305 = vadd.f32 0.0, %v5304
      %v5306 = vpop.f32.mrf.mxu0
      %5307 = vmatprep.mubr.f32.mxu0 %v5055
      %5308 = vmatmul.mubr.f32.gmra.mxu0 %v5007
      %v5309 = vpop.f32.mrf.mxu0
      %v5310 = vadd.f32 0.0, %v5309
      %v5311 = vpop.f32.mrf.mxu0
      %5312 = vmatprep.mubr.f32.mxu0 %v5057
      %5313 = vmatmul.mubr.f32.gmra.mxu0 %v5011
      %v5314 = vpop.f32.mrf.mxu0
      %v5315 = vadd.f32 0.0, %v5314
      %v5316 = vpop.f32.mrf.mxu0
      %5317 = vmatprep.mubr.f32.mxu0 %v5059
      %5318 = vmatmul.mubr.f32.gmra.mxu0 %v5015
      %v5319 = vpop.f32.mrf.mxu0
      %v5320 = vadd.f32 0.0, %v5319
      %v5321 = vpop.f32.mrf.mxu0
      %5322 = vmatprep.mubr.f32.mxu0 %v5061
      %5323 = vmatmul.mubr.f32.gmra.mxu0 %v5019
      %v5324 = vpop.f32.mrf.mxu0
      %v5325 = vadd.f32 0.0, %v5324
      %v5326 = vpop.f32.mrf.mxu0
      %5327 = vmatprep.mubr.f32.mxu0 %v5063
      %5328 = vmatmul.mubr.f32.gmra.mxu0 %v5023
      %v5329 = vpop.f32.mrf.mxu0
      %v5330 = vadd.f32 0.0, %v5329
      %v5331 = vpop.f32.mrf.mxu0
      %5332 = vmatprep.mubr.f32.mxu0 %v5065
      %5333 = vmatmul.mubr.f32.gmra.mxu0 %v5027
      %v5334 = vpop.f32.mrf.mxu0
      %v5335 = vadd.f32 0.0, %v5334
      %v5336 = vpop.f32.mrf.mxu0
      %5337 = vdwg.mxu0
      %v5338 = vsel %vm5042, %v4778, 0
      %v5340 = vsel %vm5042, %v4780, 0
      %v5342 = vsel %vm5042, %v4782, 0
      %v5344 = vsel %vm5042, %v4784, 0
      %v5346 = vsel %vm5042, %v4786, 0
      %v5348 = vsel %vm5042, %v4788, 0
      %v5350 = vsel %vm5042, %v4790, 0
      %v5352 = vsel %vm5042, %v4792, 0
      %v5354 = vsel %vm5042, %v4794, 0
      %v5356 = vsel %vm5042, %v4796, 0
      %v5358 = vsel %vm5042, %v4798, 0
      %v5360 = vsel %vm5042, %v4800, 0
      %v5363 = vsel %vm857, %v4875, 0
      %v5366 = vsel %vm857, %v4876, 0
      %v5369 = vsel %vm857, %v4877, 0
      %5371 = vmatprep.subr.mxu0 %v4849
      %5372 = vmatpush1.msra.mxu0 %v4848
      %5373 = vmatprep.subr.mxu0 %v4846
      %5374 = vmatpush1.msra.mxu0 %v4845
      %5375 = vmatprep.subr.mxu0 %v4843
      %5376 = vmatpush1.msra.mxu0 %v4842
      %5377 = vmatprep.subr.mxu0 %v4840
      %5378 = vmatpush1.msra.mxu0 %v4839
      %5379 = vmatprep.subr.mxu0 %v4837
      %5380 = vmatpush1.msra.mxu0 %v4836
      %5381 = vmatprep.subr.mxu0 %v4834
      %5382 = vmatpush1.msra.mxu0 %v4833
      %5383 = vmatprep.subr.mxu0 %v4831
      %5384 = vmatpush1.msra.mxu0 %v4830
      %5385 = vmatprep.subr.mxu0 %v4828
      %5386 = vmatpush1.msra.mxu0 %v4827
      %5387 = vmatprep.subr.mxu0 %v4825
      %5388 = vmatpush1.msra.mxu0 %v4824
      %5389 = vmatprep.subr.mxu0 %v4822
      %5390 = vmatpush1.msra.mxu0 %v4821
      %5391 = vmatprep.subr.mxu0 %v4819
      %5392 = vmatpush1.msra.mxu0 %v4818
      %5393 = vmatprep.subr.mxu0 %v4816
      %5394 = vmatpush1.msra.mxu0 %v4815
      %5395 = vmatprep.subr.mxu0 %v4813
      %5396 = vmatpush1.msra.mxu0 %v4812
      %5397 = vmatprep.subr.mxu0 %v4810
      %5398 = vmatpush1.msra.mxu0 %v4809
      %5399 = vmatprep.subr.mxu0 %v4807
      %5400 = vmatpush1.msra.mxu0 %v4806
      %5401 = vmatprep.subr.mxu0 %v4804
      %5402 = vmatpush1.msra.mxu0 %v4803
      %5403 = vmatprep.subr.mxu0 0.0
      %5404 = vmatpush2.msra.mxu0 0.0
      %5405 = vmatprep.subr.mxu0 0.0
      %5406 = vmatpush2.msra.mxu0 0.0
      %5407 = vmatprep.subr.mxu0 0.0
      %5408 = vmatpush2.msra.mxu0 0.0
      %5409 = vmatprep.subr.mxu0 0.0
      %5410 = vmatpush2.msra.mxu0 0.0
      %5411 = vmatprep.subr.mxu0 0.0
      %5412 = vmatpush2.msra.mxu0 0.0
      %5413 = vmatprep.subr.mxu0 0.0
      %5414 = vmatpush2.msra.mxu0 0.0
      %5415 = vmatprep.subr.mxu0 0.0
      %5416 = vmatpush2.msra.mxu0 0.0
      %5417 = vmatprep.subr.mxu0 %v5366
      %5418 = vmatpush2.msra.mxu0 %v5363
      %5419 = vmatprep.subr.mxu0 %v4873
      %5420 = vmatpush2.msra.mxu0 %v4872
      %5421 = vmatprep.subr.mxu0 %v4870
      %5422 = vmatpush2.msra.mxu0 %v4869
      %5423 = vmatprep.subr.mxu0 %v4867
      %5424 = vmatpush2.msra.mxu0 %v4866
      %5425 = vmatprep.subr.mxu0 %v4864
      %5426 = vmatpush2.msra.mxu0 %v4863
      %5427 = vmatprep.subr.mxu0 %v4861
      %5428 = vmatpush2.msra.mxu0 %v4860
      %5429 = vmatprep.subr.mxu0 %v4858
      %5430 = vmatpush2.msra.mxu0 %v4857
      %5431 = vmatprep.subr.mxu0 %v4855
      %5432 = vmatpush2.msra.mxu0 %v4854
      %5433 = vmatprep.subr.mxu0 %v4852
      %5434 = vmatpush2.msra.mxu0 %v4851
      %5435 = vmatprep.mubr.f32.mxu0 %v5338
      %5436 = vmatmul.mubr.f32.gmra.mxu0 %v4777
      %v5437 = vpop.f32.mrf.mxu0
      %v5438 = vadd.f32 %v5143, %v5437
      %v5439 = vpop.f32.mrf.mxu0
      %v5440 = vadd.f32 %v5145, %v5439
      %5441 = vmatprep.mubr.f32.mxu0 %v5340
      %5442 = vmatmul.mubr.f32.gmra.mxu0 %v4779
      %v5443 = vpop.f32.mrf.mxu0
      %v5444 = vadd.f32 %v5149, %v5443
      %v5445 = vpop.f32.mrf.mxu0
      %v5446 = vadd.f32 %v5151, %v5445
      %5447 = vmatprep.mubr.f32.mxu0 %v5342
      %5448 = vmatmul.mubr.f32.gmra.mxu0 %v4781
      %v5449 = vpop.f32.mrf.mxu0
      %v5450 = vadd.f32 %v5155, %v5449
      %v5451 = vpop.f32.mrf.mxu0
      %v5452 = vadd.f32 %v5157, %v5451
      %5453 = vmatprep.mubr.f32.mxu0 %v5344
      %5454 = vmatmul.mubr.f32.gmra.mxu0 %v4783
      %v5455 = vpop.f32.mrf.mxu0
      %v5456 = vadd.f32 %v5161, %v5455
      %v5457 = vpop.f32.mrf.mxu0
      %v5458 = vadd.f32 %v5163, %v5457
      %5459 = vmatprep.mubr.f32.mxu0 %v5346
      %5460 = vmatmul.mubr.f32.gmra.mxu0 %v4785
      %v5461 = vpop.f32.mrf.mxu0
      %v5462 = vadd.f32 %v5167, %v5461
      %v5463 = vpop.f32.mrf.mxu0
      %v5464 = vadd.f32 %v5169, %v5463
      %5465 = vmatprep.mubr.f32.mxu0 %v5348
      %5466 = vmatmul.mubr.f32.gmra.mxu0 %v4787
      %v5467 = vpop.f32.mrf.mxu0
      %v5468 = vadd.f32 %v5173, %v5467
      %v5469 = vpop.f32.mrf.mxu0
      %v5470 = vadd.f32 %v5175, %v5469
      %5471 = vmatprep.mubr.f32.mxu0 %v5350
      %5472 = vmatmul.mubr.f32.gmra.mxu0 %v4789
      %v5473 = vpop.f32.mrf.mxu0
      %v5474 = vadd.f32 %v5179, %v5473
      %v5475 = vpop.f32.mrf.mxu0
      %v5476 = vadd.f32 %v5181, %v5475
      %5477 = vmatprep.mubr.f32.mxu0 %v5352
      %5478 = vmatmul.mubr.f32.gmra.mxu0 %v4791
      %v5479 = vpop.f32.mrf.mxu0
      %v5480 = vadd.f32 %v5185, %v5479
      %v5481 = vpop.f32.mrf.mxu0
      %v5482 = vadd.f32 %v5187, %v5481
      %5483 = vmatprep.mubr.f32.mxu0 %v5354
      %5484 = vmatmul.mubr.f32.gmra.mxu0 %v4793
      %v5485 = vpop.f32.mrf.mxu0
      %v5486 = vadd.f32 %v5191, %v5485
      %v5487 = vpop.f32.mrf.mxu0
      %v5488 = vadd.f32 %v5193, %v5487
      %5489 = vmatprep.mubr.f32.mxu0 %v5356
      %5490 = vmatmul.mubr.f32.gmra.mxu0 %v4795
      %v5491 = vpop.f32.mrf.mxu0
      %v5492 = vadd.f32 %v5197, %v5491
      %v5493 = vpop.f32.mrf.mxu0
      %v5494 = vadd.f32 %v5199, %v5493
      %5495 = vmatprep.mubr.f32.mxu0 %v5358
      %5496 = vmatmul.mubr.f32.gmra.mxu0 %v4797
      %v5497 = vpop.f32.mrf.mxu0
      %v5498 = vadd.f32 %v5203, %v5497
      %v5499 = vpop.f32.mrf.mxu0
      %v5500 = vadd.f32 %v5205, %v5499
      %5501 = vmatprep.mubr.f32.mxu0 %v5360
      %5502 = vmatmul.mubr.f32.gmra.mxu0 %v4799
      %v5503 = vpop.f32.mrf.mxu0
      %v5504 = vadd.f32 %v5209, %v5503
      %v5505 = vpop.f32.mrf.mxu0
      %v5506 = vadd.f32 %v5211, %v5505
      %5507 = vdwg.mxu0
      %5508 = vmatprep.subr.mxu0 0.0
      %5509 = vmatpush1.msra.mxu0 %v4850
      %5510 = vmatprep.subr.mxu0 0.0
      %5511 = vmatpush1.msra.mxu0 %v4847
      %5512 = vmatprep.subr.mxu0 0.0
      %5513 = vmatpush1.msra.mxu0 %v4844
      %5514 = vmatprep.subr.mxu0 0.0
      %5515 = vmatpush1.msra.mxu0 %v4841
      %5516 = vmatprep.subr.mxu0 0.0
      %5517 = vmatpush1.msra.mxu0 %v4838
      %5518 = vmatprep.subr.mxu0 0.0
      %5519 = vmatpush1.msra.mxu0 %v4835
      %5520 = vmatprep.subr.mxu0 0.0
      %5521 = vmatpush1.msra.mxu0 %v4832
      %5522 = vmatprep.subr.mxu0 0.0
      %5523 = vmatpush1.msra.mxu0 %v4829
      %5524 = vmatprep.subr.mxu0 0.0
      %5525 = vmatpush1.msra.mxu0 %v4826
      %5526 = vmatprep.subr.mxu0 0.0
      %5527 = vmatpush1.msra.mxu0 %v4823
      %5528 = vmatprep.subr.mxu0 0.0
      %5529 = vmatpush1.msra.mxu0 %v4820
      %5530 = vmatprep.subr.mxu0 0.0
      %5531 = vmatpush1.msra.mxu0 %v4817
      %5532 = vmatprep.subr.mxu0 0.0
      %5533 = vmatpush1.msra.mxu0 %v4814
      %5534 = vmatprep.subr.mxu0 0.0
      %5535 = vmatpush1.msra.mxu0 %v4811
      %5536 = vmatprep.subr.mxu0 0.0
      %5537 = vmatpush1.msra.mxu0 %v4808
      %5538 = vmatprep.subr.mxu0 0.0
      %5539 = vmatpush1.msra.mxu0 %v4805
      %5540 = vmatprep.subr.mxu0 0.0
      %5541 = vmatpush2.msra.mxu0 0.0
      %5542 = vmatprep.subr.mxu0 0.0
      %5543 = vmatpush2.msra.mxu0 0.0
      %5544 = vmatprep.subr.mxu0 0.0
      %5545 = vmatpush2.msra.mxu0 0.0
      %5546 = vmatprep.subr.mxu0 0.0
      %5547 = vmatpush2.msra.mxu0 0.0
      %5548 = vmatprep.subr.mxu0 0.0
      %5549 = vmatpush2.msra.mxu0 0.0
      %5550 = vmatprep.subr.mxu0 0.0
      %5551 = vmatpush2.msra.mxu0 0.0
      %5552 = vmatprep.subr.mxu0 0.0
      %5553 = vmatpush2.msra.mxu0 0.0
      %5554 = vmatprep.subr.mxu0 0.0
      %5555 = vmatpush2.msra.mxu0 %v5369
      %5556 = vmatprep.subr.mxu0 0.0
      %5557 = vmatpush2.msra.mxu0 %v4874
      %5558 = vmatprep.subr.mxu0 0.0
      %5559 = vmatpush2.msra.mxu0 %v4871
      %5560 = vmatprep.subr.mxu0 0.0
      %5561 = vmatpush2.msra.mxu0 %v4868
      %5562 = vmatprep.subr.mxu0 0.0
      %5563 = vmatpush2.msra.mxu0 %v4865
      %5564 = vmatprep.subr.mxu0 0.0
      %5565 = vmatpush2.msra.mxu0 %v4862
      %5566 = vmatprep.subr.mxu0 0.0
      %5567 = vmatpush2.msra.mxu0 %v4859
      %5568 = vmatprep.subr.mxu0 0.0
      %5569 = vmatpush2.msra.mxu0 %v4856
      %5570 = vmatprep.subr.mxu0 0.0
      %5571 = vmatpush2.msra.mxu0 %v4853
      %5572 = vmatprep.mubr.f32.mxu0 %v5338
      %5573 = vmatmul.mubr.f32.gmra.mxu0 %v4777
      %v5574 = vpop.f32.mrf.mxu0
      %v5575 = vadd.f32 %v5280, %v5574
      %v5576 = vpop.f32.mrf.mxu0
      %5577 = vmatprep.mubr.f32.mxu0 %v5340
      %5578 = vmatmul.mubr.f32.gmra.mxu0 %v4779
      %v5579 = vpop.f32.mrf.mxu0
      %v5580 = vadd.f32 %v5285, %v5579
      %v5581 = vpop.f32.mrf.mxu0
      %5582 = vmatprep.mubr.f32.mxu0 %v5342
      %5583 = vmatmul.mubr.f32.gmra.mxu0 %v4781
      %v5584 = vpop.f32.mrf.mxu0
      %v5585 = vadd.f32 %v5290, %v5584
      %v5586 = vpop.f32.mrf.mxu0
      %5587 = vmatprep.mubr.f32.mxu0 %v5344
      %5588 = vmatmul.mubr.f32.gmra.mxu0 %v4783
      %v5589 = vpop.f32.mrf.mxu0
      %v5590 = vadd.f32 %v5295, %v5589
      %v5591 = vpop.f32.mrf.mxu0
      %5592 = vmatprep.mubr.f32.mxu0 %v5346
      %5593 = vmatmul.mubr.f32.gmra.mxu0 %v4785
      %v5594 = vpop.f32.mrf.mxu0
      %v5595 = vadd.f32 %v5300, %v5594
      %v5596 = vpop.f32.mrf.mxu0
      %5597 = vmatprep.mubr.f32.mxu0 %v5348
      %5598 = vmatmul.mubr.f32.gmra.mxu0 %v4787
      %v5599 = vpop.f32.mrf.mxu0
      %v5600 = vadd.f32 %v5305, %v5599
      %v5601 = vpop.f32.mrf.mxu0
      %5602 = vmatprep.mubr.f32.mxu0 %v5350
      %5603 = vmatmul.mubr.f32.gmra.mxu0 %v4789
      %v5604 = vpop.f32.mrf.mxu0
      %v5605 = vadd.f32 %v5310, %v5604
      %v5606 = vpop.f32.mrf.mxu0
      %5607 = vmatprep.mubr.f32.mxu0 %v5352
      %5608 = vmatmul.mubr.f32.gmra.mxu0 %v4791
      %v5609 = vpop.f32.mrf.mxu0
      %v5610 = vadd.f32 %v5315, %v5609
      %v5611 = vpop.f32.mrf.mxu0
      %5612 = vmatprep.mubr.f32.mxu0 %v5354
      %5613 = vmatmul.mubr.f32.gmra.mxu0 %v4793
      %v5614 = vpop.f32.mrf.mxu0
      %v5615 = vadd.f32 %v5320, %v5614
      %v5616 = vpop.f32.mrf.mxu0
      %5617 = vmatprep.mubr.f32.mxu0 %v5356
      %5618 = vmatmul.mubr.f32.gmra.mxu0 %v4795
      %v5619 = vpop.f32.mrf.mxu0
      %v5620 = vadd.f32 %v5325, %v5619
      %v5621 = vpop.f32.mrf.mxu0
      %5622 = vmatprep.mubr.f32.mxu0 %v5358
      %5623 = vmatmul.mubr.f32.gmra.mxu0 %v4797
      %v5624 = vpop.f32.mrf.mxu0
      %v5625 = vadd.f32 %v5330, %v5624
      %v5626 = vpop.f32.mrf.mxu0
      %5627 = vmatprep.mubr.f32.mxu0 %v5360
      %5628 = vmatmul.mubr.f32.gmra.mxu0 %v4799
      %v5629 = vpop.f32.mrf.mxu0
      %v5630 = vadd.f32 %v5335, %v5629
      %v5631 = vpop.f32.mrf.mxu0
      %5632 = vdwg.mxu0
      %s5633 = scalar_lea.vmem %s5, 1200
      %v5634 = vld [vmem:[%s5633] sm:$0xff]
      %v5635 = vld [vmem:[%s5633 + $0x8] sm:$0xff]
      %v5636 = vld [vmem:[%s5633 + $0x10] sm:$0xff]
      %v5637 = vld [vmem:[%s5633 + $0x18] sm:$0xff]
      %v5638 = vld [vmem:[%s5633 + $0x20] sm:$0xff]
      %v5639 = vld [vmem:[%s5633 + $0x28] sm:$0xff]
      %v5640 = vld [vmem:[%s5633 + $0x30] sm:$0xff]
      %v5641 = vld [vmem:[%s5633 + $0x38] sm:$0xff]
      %v5642 = vld [vmem:[%s5633 + $0x40] sm:$0xff]
      %v5643 = vld [vmem:[%s5633 + $0x48] sm:$0xff]
      %v5644 = vld [vmem:[%s5633 + $0x50] sm:$0xff]
      %v5645 = vld [vmem:[%s5633 + $0x58] sm:$0xff]
      %v5646 = vld [vmem:[%s5633 + $0x60] sm:$0xff]
      %v5647 = vld [vmem:[%s5633 + $0x68] sm:$0xff]
      %v5648 = vld [vmem:[%s5633 + $0x70] sm:$0xff]
      %v5649 = vld [vmem:[%s5633 + $0x78] sm:$0xff]
      %v5650 = vld [vmem:[%s5633 + $0x80] sm:$0xff]
      %v5651 = vld [vmem:[%s5633 + $0x88] sm:$0xff]
      %v5652 = vld [vmem:[%s5633 + $0x90] sm:$0xff]
      %v5653 = vld [vmem:[%s5633 + $0x98] sm:$0xff]
      %v5654 = vld [vmem:[%s5633 + $0xa0] sm:$0xff]
      %v5655 = vld [vmem:[%s5633 + $0xa8] sm:$0xff]
      %v5656 = vld [vmem:[%s5633 + $0xb0] sm:$0xff]
      %v5657 = vld [vmem:[%s5633 + $0xb8] sm:$0xff]
      %v5658 = vld [vmem:[%s5633 + $0xc0] sm:$0xff]
      %v5659 = vld [vmem:[%s5633 + $0xc8] sm:$0xff]
      %v5660 = vld [vmem:[%s5633 + $0xd0] sm:$0xff]
      %v5661 = vld [vmem:[%s5633 + $0xd8] sm:$0xff]
      %v5662 = vld [vmem:[%s5633 + $0xe0] sm:$0xff]
      %v5663 = vld [vmem:[%s5633 + $0xe8] sm:$0xff]
      %v5664 = vld [vmem:[%s5633 + $0xf0] sm:$0xff]
      %v5665 = vld [vmem:[%s5633 + $0xf8] sm:$0xff]
      %v5666 = vld [vmem:[%s5633 + $0x100] sm:$0xff]
      %v5667 = vld [vmem:[%s5633 + $0x108] sm:$0xff]
      %v5668 = vld [vmem:[%s5633 + $0x110] sm:$0xff]
      %v5669 = vld [vmem:[%s5633 + $0x118] sm:$0xff]
      %v5670 = vld [vmem:[%s5633 + $0x120] sm:$0xff]
      %v5671 = vld [vmem:[%s5633 + $0x128] sm:$0xff]
      %v5672 = vld [vmem:[%s5633 + $0x130] sm:$0xff]
      %v5673 = vld [vmem:[%s5633 + $0x138] sm:$0xff]
      %v5674 = vld [vmem:[%s5633 + $0x140] sm:$0xff]
      %v5675 = vld [vmem:[%s5633 + $0x148] sm:$0xff]
      %v5676 = vld [vmem:[%s5633 + $0x150] sm:$0xff]
      %v5677 = vld [vmem:[%s5633 + $0x158] sm:$0xff]
      %v5678 = vld [vmem:[%s5633 + $0x160] sm:$0xff]
      %v5679 = vld [vmem:[%s5633 + $0x168] sm:$0xff]
      %v5680 = vld [vmem:[%s5633 + $0x170] sm:$0xff]
      %v5681 = vld [vmem:[%s5633 + $0x178] sm:$0xff]
      %v5682 = vld [vmem:[%s5633 + $0x180] sm:$0xff]
      %v5683 = vld [vmem:[%s5633 + $0x188] sm:$0xff]
      %v5684 = vld [vmem:[%s5633 + $0x190] sm:$0xff]
      %v5685 = vld [vmem:[%s5633 + $0x198] sm:$0xff]
      %v5686 = vld [vmem:[%s5633 + $0x1a0] sm:$0xff]
      %v5687 = vld [vmem:[%s5633 + $0x1a8] sm:$0xff]
      %v5688 = vld [vmem:[%s5633 + $0x1b0] sm:$0xff]
      %v5689 = vld [vmem:[%s5633 + $0x1b8] sm:$0xff]
      %v5690 = vld [vmem:[%s5633 + $0x1c0] sm:$0xff]
      %v5691 = vld [vmem:[%s5633 + $0x1c8] sm:$0xff]
      %v5692 = vld [vmem:[%s5633 + $0x1d0] sm:$0xff]
      %v5693 = vld [vmem:[%s5633 + $0x1d8] sm:$0xff]
      %v5694 = vld [vmem:[%s5633 + $0x1e0] sm:$0xff]
      %v5695 = vld [vmem:[%s5633 + $0x1e8] sm:$0xff]
      %v5696 = vld [vmem:[%s5633 + $0x1f0] sm:$0xff]
      %v5697 = vld [vmem:[%s5633 + $0x1f8] sm:$0xff]
      %v5698 = vld [vmem:[%s5633 + $0x200] sm:$0xff]
      %v5699 = vld [vmem:[%s5633 + $0x208] sm:$0xff]
      %v5700 = vld [vmem:[%s5633 + $0x210] sm:$0xff]
      %v5701 = vld [vmem:[%s5633 + $0x218] sm:$0xff]
      %v5702 = vld [vmem:[%s5633 + $0x220] sm:$0xff]
      %v5703 = vld [vmem:[%s5633 + $0x228] sm:$0xff]
      %v5704 = vld [vmem:[%s5633 + $0x230] sm:$0xff]
      %v5705 = vld [vmem:[%s5633 + $0x238] sm:$0xff]
      %v5706 = vld [vmem:[%s5633 + $0x240] sm:$0xf]
      %v5707 = vld [vmem:[%s5633 + $0x248] sm:$0xf]
      %v5708 = vld [vmem:[%s5633 + $0x250] sm:$0xf]
      %v5709 = vrot.slane %v4777, 2
      %v5710 = vrot.slane %v4779, 2
      %v5711 = vsel %vm1845, %v5709, %v5710
      %v5712 = vrot.slane %v4778, 2
      %v5713 = vrot.slane %v4780, 2
      %v5714 = vsel %vm1845, %v5712, %v5713
      %v5715 = vrot.slane %v4781, 2
      %v5716 = vsel %vm1845, %v5710, %v5715
      %v5717 = vrot.slane %v4782, 2
      %v5718 = vsel %vm1845, %v5713, %v5717
      %v5719 = vrot.slane %v4783, 2
      %v5720 = vsel %vm1845, %v5715, %v5719
      %v5721 = vrot.slane %v4784, 2
      %v5722 = vsel %vm1845, %v5717, %v5721
      %v5723 = vrot.slane %v4785, 2
      %v5724 = vsel %vm1845, %v5719, %v5723
      %v5725 = vrot.slane %v4786, 2
      %v5726 = vsel %vm1845, %v5721, %v5725
      %v5727 = vrot.slane %v4787, 2
      %v5728 = vsel %vm1845, %v5723, %v5727
      %v5729 = vrot.slane %v4788, 2
      %v5730 = vsel %vm1845, %v5725, %v5729
      %v5731 = vrot.slane %v4789, 2
      %v5732 = vsel %vm1845, %v5727, %v5731
      %v5733 = vrot.slane %v4790, 2
      %v5734 = vsel %vm1845, %v5729, %v5733
      %v5735 = vrot.slane %v4791, 2
      %v5736 = vsel %vm1845, %v5731, %v5735
      %v5737 = vrot.slane %v4792, 2
      %v5738 = vsel %vm1845, %v5733, %v5737
      %v5739 = vrot.slane %v4793, 2
      %v5740 = vsel %vm1845, %v5735, %v5739
      %v5741 = vrot.slane %v4794, 2
      %v5742 = vsel %vm1845, %v5737, %v5741
      %v5743 = vrot.slane %v4795, 2
      %v5744 = vsel %vm1845, %v5739, %v5743
      %v5745 = vrot.slane %v4796, 2
      %v5746 = vsel %vm1845, %v5741, %v5745
      %v5747 = vrot.slane %v4797, 2
      %v5748 = vsel %vm1845, %v5743, %v5747
      %v5749 = vrot.slane %v4798, 2
      %v5750 = vsel %vm1845, %v5745, %v5749
      %v5751 = vrot.slane %v4799, 2
      %v5752 = vsel %vm1845, %v5747, %v5751
      %v5753 = vrot.slane %v4800, 2
      %v5754 = vsel %vm1845, %v5749, %v5753
      %v5755 = vrot.slane %v4801, 2
      %v5756 = vsel %vm1845, %v5751, %v5755
      %v5757 = vrot.slane %v4802, 2
      %v5758 = vsel %vm1845, %v5753, %v5757
      %v5771 = vsel %vm5042, %v5714, 0
      %v5773 = vsel %vm5042, %v5718, 0
      %v5775 = vsel %vm5042, %v5722, 0
      %v5777 = vsel %vm5042, %v5726, 0
      %v5779 = vsel %vm5042, %v5730, 0
      %v5781 = vsel %vm5042, %v5734, 0
      %v5783 = vsel %vm5042, %v5738, 0
      %v5785 = vsel %vm5042, %v5742, 0
      %v5787 = vsel %vm5042, %v5746, 0
      %v5789 = vsel %vm5042, %v5750, 0
      %v5791 = vsel %vm5042, %v5754, 0
      %v5793 = vsel %vm5042, %v5758, 0
      %v5796 = vsel %vm857, %v5706, 0
      %v5799 = vsel %vm857, %v5707, 0
      %v5802 = vsel %vm857, %v5708, 0
      %5804 = vmatprep.subr.mxu0 %v5680
      %5805 = vmatpush1.msra.mxu0 %v5679
      %5806 = vmatprep.subr.mxu0 %v5677
      %5807 = vmatpush1.msra.mxu0 %v5676
      %5808 = vmatprep.subr.mxu0 %v5674
      %5809 = vmatpush1.msra.mxu0 %v5673
      %5810 = vmatprep.subr.mxu0 %v5671
      %5811 = vmatpush1.msra.mxu0 %v5670
      %5812 = vmatprep.subr.mxu0 %v5668
      %5813 = vmatpush1.msra.mxu0 %v5667
      %5814 = vmatprep.subr.mxu0 %v5665
      %5815 = vmatpush1.msra.mxu0 %v5664
      %5816 = vmatprep.subr.mxu0 %v5662
      %5817 = vmatpush1.msra.mxu0 %v5661
      %5818 = vmatprep.subr.mxu0 %v5659
      %5819 = vmatpush1.msra.mxu0 %v5658
      %5820 = vmatprep.subr.mxu0 %v5656
      %5821 = vmatpush1.msra.mxu0 %v5655
      %5822 = vmatprep.subr.mxu0 %v5653
      %5823 = vmatpush1.msra.mxu0 %v5652
      %5824 = vmatprep.subr.mxu0 %v5650
      %5825 = vmatpush1.msra.mxu0 %v5649
      %5826 = vmatprep.subr.mxu0 %v5647
      %5827 = vmatpush1.msra.mxu0 %v5646
      %5828 = vmatprep.subr.mxu0 %v5644
      %5829 = vmatpush1.msra.mxu0 %v5643
      %5830 = vmatprep.subr.mxu0 %v5641
      %5831 = vmatpush1.msra.mxu0 %v5640
      %5832 = vmatprep.subr.mxu0 %v5638
      %5833 = vmatpush1.msra.mxu0 %v5637
      %5834 = vmatprep.subr.mxu0 %v5635
      %5835 = vmatpush1.msra.mxu0 %v5634
      %5836 = vmatprep.subr.mxu0 0.0
      %5837 = vmatpush2.msra.mxu0 0.0
      %5838 = vmatprep.subr.mxu0 0.0
      %5839 = vmatpush2.msra.mxu0 0.0
      %5840 = vmatprep.subr.mxu0 0.0
      %5841 = vmatpush2.msra.mxu0 0.0
      %5842 = vmatprep.subr.mxu0 0.0
      %5843 = vmatpush2.msra.mxu0 0.0
      %5844 = vmatprep.subr.mxu0 0.0
      %5845 = vmatpush2.msra.mxu0 0.0
      %5846 = vmatprep.subr.mxu0 0.0
      %5847 = vmatpush2.msra.mxu0 0.0
      %5848 = vmatprep.subr.mxu0 0.0
      %5849 = vmatpush2.msra.mxu0 0.0
      %5850 = vmatprep.subr.mxu0 %v5799
      %5851 = vmatpush2.msra.mxu0 %v5796
      %5852 = vmatprep.subr.mxu0 %v5704
      %5853 = vmatpush2.msra.mxu0 %v5703
      %5854 = vmatprep.subr.mxu0 %v5701
      %5855 = vmatpush2.msra.mxu0 %v5700
      %5856 = vmatprep.subr.mxu0 %v5698
      %5857 = vmatpush2.msra.mxu0 %v5697
      %5858 = vmatprep.subr.mxu0 %v5695
      %5859 = vmatpush2.msra.mxu0 %v5694
      %5860 = vmatprep.subr.mxu0 %v5692
      %5861 = vmatpush2.msra.mxu0 %v5691
      %5862 = vmatprep.subr.mxu0 %v5689
      %5863 = vmatpush2.msra.mxu0 %v5688
      %5864 = vmatprep.subr.mxu0 %v5686
      %5865 = vmatpush2.msra.mxu0 %v5685
      %5866 = vmatprep.subr.mxu0 %v5683
      %5867 = vmatpush2.msra.mxu0 %v5682
      %5868 = vmatprep.mubr.f32.mxu0 %v5771
      %5869 = vmatmul.mubr.f32.gmra.mxu0 %v5711
      %v5870 = vpop.f32.mrf.mxu0
      %v5871 = vadd.f32 0.0, %v5870
      %v5872 = vpop.f32.mrf.mxu0
      %v5873 = vadd.f32 0.0, %v5872
      %5874 = vmatprep.mubr.f32.mxu0 %v5773
      %5875 = vmatmul.mubr.f32.gmra.mxu0 %v5716
      %v5876 = vpop.f32.mrf.mxu0
      %v5877 = vadd.f32 0.0, %v5876
      %v5878 = vpop.f32.mrf.mxu0
      %v5879 = vadd.f32 0.0, %v5878
      %5880 = vmatprep.mubr.f32.mxu0 %v5775
      %5881 = vmatmul.mubr.f32.gmra.mxu0 %v5720
      %v5882 = vpop.f32.mrf.mxu0
      %v5883 = vadd.f32 0.0, %v5882
      %v5884 = vpop.f32.mrf.mxu0
      %v5885 = vadd.f32 0.0, %v5884
      %5886 = vmatprep.mubr.f32.mxu0 %v5777
      %5887 = vmatmul.mubr.f32.gmra.mxu0 %v5724
      %v5888 = vpop.f32.mrf.mxu0
      %v5889 = vadd.f32 0.0, %v5888
      %v5890 = vpop.f32.mrf.mxu0
      %v5891 = vadd.f32 0.0, %v5890
      %5892 = vmatprep.mubr.f32.mxu0 %v5779
      %5893 = vmatmul.mubr.f32.gmra.mxu0 %v5728
      %v5894 = vpop.f32.mrf.mxu0
      %v5895 = vadd.f32 0.0, %v5894
      %v5896 = vpop.f32.mrf.mxu0
      %v5897 = vadd.f32 0.0, %v5896
      %5898 = vmatprep.mubr.f32.mxu0 %v5781
      %5899 = vmatmul.mubr.f32.gmra.mxu0 %v5732
      %v5900 = vpop.f32.mrf.mxu0
      %v5901 = vadd.f32 0.0, %v5900
      %v5902 = vpop.f32.mrf.mxu0
      %v5903 = vadd.f32 0.0, %v5902
      %5904 = vmatprep.mubr.f32.mxu0 %v5783
      %5905 = vmatmul.mubr.f32.gmra.mxu0 %v5736
      %v5906 = vpop.f32.mrf.mxu0
      %v5907 = vadd.f32 0.0, %v5906
      %v5908 = vpop.f32.mrf.mxu0
      %v5909 = vadd.f32 0.0, %v5908
      %5910 = vmatprep.mubr.f32.mxu0 %v5785
      %5911 = vmatmul.mubr.f32.gmra.mxu0 %v5740
      %v5912 = vpop.f32.mrf.mxu0
      %v5913 = vadd.f32 0.0, %v5912
      %v5914 = vpop.f32.mrf.mxu0
      %v5915 = vadd.f32 0.0, %v5914
      %5916 = vmatprep.mubr.f32.mxu0 %v5787
      %5917 = vmatmul.mubr.f32.gmra.mxu0 %v5744
      %v5918 = vpop.f32.mrf.mxu0
      %v5919 = vadd.f32 0.0, %v5918
      %v5920 = vpop.f32.mrf.mxu0
      %v5921 = vadd.f32 0.0, %v5920
      %5922 = vmatprep.mubr.f32.mxu0 %v5789
      %5923 = vmatmul.mubr.f32.gmra.mxu0 %v5748
      %v5924 = vpop.f32.mrf.mxu0
      %v5925 = vadd.f32 0.0, %v5924
      %v5926 = vpop.f32.mrf.mxu0
      %v5927 = vadd.f32 0.0, %v5926
      %5928 = vmatprep.mubr.f32.mxu0 %v5791
      %5929 = vmatmul.mubr.f32.gmra.mxu0 %v5752
      %v5930 = vpop.f32.mrf.mxu0
      %v5931 = vadd.f32 0.0, %v5930
      %v5932 = vpop.f32.mrf.mxu0
      %v5933 = vadd.f32 0.0, %v5932
      %5934 = vmatprep.mubr.f32.mxu0 %v5793
      %5935 = vmatmul.mubr.f32.gmra.mxu0 %v5756
      %v5936 = vpop.f32.mrf.mxu0
      %v5937 = vadd.f32 0.0, %v5936
      %v5938 = vpop.f32.mrf.mxu0
      %v5939 = vadd.f32 0.0, %v5938
      %5940 = vdwg.mxu0
      %5941 = vmatprep.subr.mxu0 0.0
      %5942 = vmatpush1.msra.mxu0 %v5681
      %5943 = vmatprep.subr.mxu0 0.0
      %5944 = vmatpush1.msra.mxu0 %v5678
      %5945 = vmatprep.subr.mxu0 0.0
      %5946 = vmatpush1.msra.mxu0 %v5675
      %5947 = vmatprep.subr.mxu0 0.0
      %5948 = vmatpush1.msra.mxu0 %v5672
      %5949 = vmatprep.subr.mxu0 0.0
      %5950 = vmatpush1.msra.mxu0 %v5669
      %5951 = vmatprep.subr.mxu0 0.0
      %5952 = vmatpush1.msra.mxu0 %v5666
      %5953 = vmatprep.subr.mxu0 0.0
      %5954 = vmatpush1.msra.mxu0 %v5663
      %5955 = vmatprep.subr.mxu0 0.0
      %5956 = vmatpush1.msra.mxu0 %v5660
      %5957 = vmatprep.subr.mxu0 0.0
      %5958 = vmatpush1.msra.mxu0 %v5657
      %5959 = vmatprep.subr.mxu0 0.0
      %5960 = vmatpush1.msra.mxu0 %v5654
      %5961 = vmatprep.subr.mxu0 0.0
      %5962 = vmatpush1.msra.mxu0 %v5651
      %5963 = vmatprep.subr.mxu0 0.0
      %5964 = vmatpush1.msra.mxu0 %v5648
      %5965 = vmatprep.subr.mxu0 0.0
      %5966 = vmatpush1.msra.mxu0 %v5645
      %5967 = vmatprep.subr.mxu0 0.0
      %5968 = vmatpush1.msra.mxu0 %v5642
      %5969 = vmatprep.subr.mxu0 0.0
      %5970 = vmatpush1.msra.mxu0 %v5639
      %5971 = vmatprep.subr.mxu0 0.0
      %5972 = vmatpush1.msra.mxu0 %v5636
      %5973 = vmatprep.subr.mxu0 0.0
      %5974 = vmatpush2.msra.mxu0 0.0
      %5975 = vmatprep.subr.mxu0 0.0
      %5976 = vmatpush2.msra.mxu0 0.0
      %5977 = vmatprep.subr.mxu0 0.0
      %5978 = vmatpush2.msra.mxu0 0.0
      %5979 = vmatprep.subr.mxu0 0.0
      %5980 = vmatpush2.msra.mxu0 0.0
      %5981 = vmatprep.subr.mxu0 0.0
      %5982 = vmatpush2.msra.mxu0 0.0
      %5983 = vmatprep.subr.mxu0 0.0
      %5984 = vmatpush2.msra.mxu0 0.0
      %5985 = vmatprep.subr.mxu0 0.0
      %5986 = vmatpush2.msra.mxu0 0.0
      %5987 = vmatprep.subr.mxu0 0.0
      %5988 = vmatpush2.msra.mxu0 %v5802
      %5989 = vmatprep.subr.mxu0 0.0
      %5990 = vmatpush2.msra.mxu0 %v5705
      %5991 = vmatprep.subr.mxu0 0.0
      %5992 = vmatpush2.msra.mxu0 %v5702
      %5993 = vmatprep.subr.mxu0 0.0
      %5994 = vmatpush2.msra.mxu0 %v5699
      %5995 = vmatprep.subr.mxu0 0.0
      %5996 = vmatpush2.msra.mxu0 %v5696
      %5997 = vmatprep.subr.mxu0 0.0
      %5998 = vmatpush2.msra.mxu0 %v5693
      %5999 = vmatprep.subr.mxu0 0.0
      %6000 = vmatpush2.msra.mxu0 %v5690
      %6001 = vmatprep.subr.mxu0 0.0
      %6002 = vmatpush2.msra.mxu0 %v5687
      %6003 = vmatprep.subr.mxu0 0.0
      %6004 = vmatpush2.msra.mxu0 %v5684
      %6005 = vmatprep.mubr.f32.mxu0 %v5771
      %6006 = vmatmul.mubr.f32.gmra.mxu0 %v5711
      %v6007 = vpop.f32.mrf.mxu0
      %v6008 = vadd.f32 0.0, %v6007
      %v6009 = vpop.f32.mrf.mxu0
      %6010 = vmatprep.mubr.f32.mxu0 %v5773
      %6011 = vmatmul.mubr.f32.gmra.mxu0 %v5716
      %v6012 = vpop.f32.mrf.mxu0
      %v6013 = vadd.f32 0.0, %v6012
      %v6014 = vpop.f32.mrf.mxu0
      %6015 = vmatprep.mubr.f32.mxu0 %v5775
      %6016 = vmatmul.mubr.f32.gmra.mxu0 %v5720
      %v6017 = vpop.f32.mrf.mxu0
      %v6018 = vadd.f32 0.0, %v6017
      %v6019 = vpop.f32.mrf.mxu0
      %6020 = vmatprep.mubr.f32.mxu0 %v5777
      %6021 = vmatmul.mubr.f32.gmra.mxu0 %v5724
      %v6022 = vpop.f32.mrf.mxu0
      %v6023 = vadd.f32 0.0, %v6022
      %v6024 = vpop.f32.mrf.mxu0
      %6025 = vmatprep.mubr.f32.mxu0 %v5779
      %6026 = vmatmul.mubr.f32.gmra.mxu0 %v5728
      %v6027 = vpop.f32.mrf.mxu0
      %v6028 = vadd.f32 0.0, %v6027
      %v6029 = vpop.f32.mrf.mxu0
      %6030 = vmatprep.mubr.f32.mxu0 %v5781
      %6031 = vmatmul.mubr.f32.gmra.mxu0 %v5732
      %v6032 = vpop.f32.mrf.mxu0
      %v6033 = vadd.f32 0.0, %v6032
      %v6034 = vpop.f32.mrf.mxu0
      %6035 = vmatprep.mubr.f32.mxu0 %v5783
      %6036 = vmatmul.mubr.f32.gmra.mxu0 %v5736
      %v6037 = vpop.f32.mrf.mxu0
      %v6038 = vadd.f32 0.0, %v6037
      %v6039 = vpop.f32.mrf.mxu0
      %6040 = vmatprep.mubr.f32.mxu0 %v5785
      %6041 = vmatmul.mubr.f32.gmra.mxu0 %v5740
      %v6042 = vpop.f32.mrf.mxu0
      %v6043 = vadd.f32 0.0, %v6042
      %v6044 = vpop.f32.mrf.mxu0
      %6045 = vmatprep.mubr.f32.mxu0 %v5787
      %6046 = vmatmul.mubr.f32.gmra.mxu0 %v5744
      %v6047 = vpop.f32.mrf.mxu0
      %v6048 = vadd.f32 0.0, %v6047
      %v6049 = vpop.f32.mrf.mxu0
      %6050 = vmatprep.mubr.f32.mxu0 %v5789
      %6051 = vmatmul.mubr.f32.gmra.mxu0 %v5748
      %v6052 = vpop.f32.mrf.mxu0
      %v6053 = vadd.f32 0.0, %v6052
      %v6054 = vpop.f32.mrf.mxu0
      %6055 = vmatprep.mubr.f32.mxu0 %v5791
      %6056 = vmatmul.mubr.f32.gmra.mxu0 %v5752
      %v6057 = vpop.f32.mrf.mxu0
      %v6058 = vadd.f32 0.0, %v6057
      %v6059 = vpop.f32.mrf.mxu0
      %6060 = vmatprep.mubr.f32.mxu0 %v5793
      %6061 = vmatmul.mubr.f32.gmra.mxu0 %v5756
      %v6062 = vpop.f32.mrf.mxu0
      %v6063 = vadd.f32 0.0, %v6062
      %v6064 = vpop.f32.mrf.mxu0
      %6065 = vdwg.mxu0
      %v6066 = vadd.f32 %v5438, %v5871
      %v6067 = vadd.f32 %v5440, %v5873
      %v6068 = vadd.f32 %v5575, %v6008
      %v6069 = vadd.f32 %v5444, %v5877
      %v6070 = vadd.f32 %v5446, %v5879
      %v6071 = vadd.f32 %v5580, %v6013
      %v6072 = vadd.f32 %v5450, %v5883
      %v6073 = vadd.f32 %v5452, %v5885
      %v6074 = vadd.f32 %v5585, %v6018
      %v6075 = vadd.f32 %v5456, %v5889
      %v6076 = vadd.f32 %v5458, %v5891
      %v6077 = vadd.f32 %v5590, %v6023
      %v6078 = vadd.f32 %v5462, %v5895
      %v6079 = vadd.f32 %v5464, %v5897
      %v6080 = vadd.f32 %v5595, %v6028
      %v6081 = vadd.f32 %v5468, %v5901
      %v6082 = vadd.f32 %v5470, %v5903
      %v6083 = vadd.f32 %v5600, %v6033
      %v6084 = vadd.f32 %v5474, %v5907
      %v6085 = vadd.f32 %v5476, %v5909
      %v6086 = vadd.f32 %v5605, %v6038
      %v6087 = vadd.f32 %v5480, %v5913
      %v6088 = vadd.f32 %v5482, %v5915
      %v6089 = vadd.f32 %v5610, %v6043
      %v6090 = vadd.f32 %v5486, %v5919
      %v6091 = vadd.f32 %v5488, %v5921
      %v6092 = vadd.f32 %v5615, %v6048
      %v6093 = vadd.f32 %v5492, %v5925
      %v6094 = vadd.f32 %v5494, %v5927
      %v6095 = vadd.f32 %v5620, %v6053
      %v6096 = vadd.f32 %v5498, %v5931
      %v6097 = vadd.f32 %v5500, %v5933
      %v6098 = vadd.f32 %v5625, %v6058
      %v6099 = vadd.f32 %v5504, %v5937
      %v6100 = vadd.f32 %v5506, %v5939
      %v6101 = vadd.f32 %v5630, %v6063
      %v6138 = vrot.slane %v6066, 1
      %v6139 = vrot.slane %v6069, 1
      %v6140 = vsel %vm756, %v6138, %v6139
      %v6141 = vrot.slane %v6067, 1
      %v6142 = vrot.slane %v6070, 1
      %v6143 = vsel %vm756, %v6141, %v6142
      %v6144 = vrot.slane %v6068, 1
      %v6145 = vrot.slane %v6071, 1
      %v6146 = vsel %vm756, %v6144, %v6145
      %v6147 = vrot.slane %v6072, 1
      %v6148 = vsel %vm756, %v6139, %v6147
      %v6149 = vrot.slane %v6073, 1
      %v6150 = vsel %vm756, %v6142, %v6149
      %v6151 = vrot.slane %v6074, 1
      %v6152 = vsel %vm756, %v6145, %v6151
      %v6153 = vrot.slane %v6075, 1
      %v6154 = vsel %vm756, %v6147, %v6153
      %v6155 = vrot.slane %v6076, 1
      %v6156 = vsel %vm756, %v6149, %v6155
      %v6157 = vrot.slane %v6077, 1
      %v6158 = vsel %vm756, %v6151, %v6157
      %v6159 = vrot.slane %v6078, 1
      %v6160 = vsel %vm756, %v6153, %v6159
      %v6161 = vrot.slane %v6079, 1
      %v6162 = vsel %vm756, %v6155, %v6161
      %v6163 = vrot.slane %v6080, 1
      %v6164 = vsel %vm756, %v6157, %v6163
      %v6165 = vrot.slane %v6081, 1
      %v6166 = vsel %vm756, %v6159, %v6165
      %v6167 = vrot.slane %v6082, 1
      %v6168 = vsel %vm756, %v6161, %v6167
      %v6169 = vrot.slane %v6083, 1
      %v6170 = vsel %vm756, %v6163, %v6169
      %v6171 = vrot.slane %v6084, 1
      %v6172 = vsel %vm756, %v6165, %v6171
      %v6173 = vrot.slane %v6085, 1
      %v6174 = vsel %vm756, %v6167, %v6173
      %v6175 = vrot.slane %v6086, 1
      %v6176 = vsel %vm756, %v6169, %v6175
      %v6177 = vrot.slane %v6087, 1
      %v6178 = vsel %vm756, %v6171, %v6177
      %v6179 = vrot.slane %v6088, 1
      %v6180 = vsel %vm756, %v6173, %v6179
      %v6181 = vrot.slane %v6089, 1
      %v6182 = vsel %vm756, %v6175, %v6181
      %v6183 = vrot.slane %v6090, 1
      %v6184 = vsel %vm756, %v6177, %v6183
      %v6185 = vrot.slane %v6091, 1
      %v6186 = vsel %vm756, %v6179, %v6185
      %v6187 = vrot.slane %v6092, 1
      %v6188 = vsel %vm756, %v6181, %v6187
      %v6189 = vrot.slane %v6093, 1
      %v6190 = vsel %vm756, %v6183, %v6189
      %v6191 = vrot.slane %v6094, 1
      %v6192 = vsel %vm756, %v6185, %v6191
      %v6193 = vrot.slane %v6095, 1
      %v6194 = vsel %vm756, %v6187, %v6193
      %v6195 = vrot.slane %v6096, 1
      %v6196 = vsel %vm756, %v6189, %v6195
      %v6197 = vrot.slane %v6097, 1
      %v6198 = vsel %vm756, %v6191, %v6197
      %v6199 = vrot.slane %v6098, 1
      %v6200 = vsel %vm756, %v6193, %v6199
      %v6201 = vrot.slane %v6099, 1
      %v6202 = vsel %vm756, %v6195, %v6201
      %v6203 = vrot.slane %v6100, 1
      %v6204 = vsel %vm756, %v6197, %v6203
      %v6205 = vrot.slane %v6101, 1
      %v6206 = vsel %vm756, %v6199, %v6205
      %v6243 = vmax.f32 %v6066, %v6140
      %v6244 = vmax.f32 %v6067, %v6143
      %v6245 = vmax.f32 %v6068, %v6146
      %v6246 = vmax.f32 %v6069, %v6148
      %v6247 = vmax.f32 %v6070, %v6150
      %v6248 = vmax.f32 %v6071, %v6152
      %v6249 = vmax.f32 %v6072, %v6154
      %v6250 = vmax.f32 %v6073, %v6156
      %v6251 = vmax.f32 %v6074, %v6158
      %v6252 = vmax.f32 %v6075, %v6160
      %v6253 = vmax.f32 %v6076, %v6162
      %v6254 = vmax.f32 %v6077, %v6164
      %v6255 = vmax.f32 %v6078, %v6166
      %v6256 = vmax.f32 %v6079, %v6168
      %v6257 = vmax.f32 %v6080, %v6170
      %v6258 = vmax.f32 %v6081, %v6172
      %v6259 = vmax.f32 %v6082, %v6174
      %v6260 = vmax.f32 %v6083, %v6176
      %v6261 = vmax.f32 %v6084, %v6178
      %v6262 = vmax.f32 %v6085, %v6180
      %v6263 = vmax.f32 %v6086, %v6182
      %v6264 = vmax.f32 %v6087, %v6184
      %v6265 = vmax.f32 %v6088, %v6186
      %v6266 = vmax.f32 %v6089, %v6188
      %v6267 = vmax.f32 %v6090, %v6190
      %v6268 = vmax.f32 %v6091, %v6192
      %v6269 = vmax.f32 %v6092, %v6194
      %v6270 = vmax.f32 %v6093, %v6196
      %v6271 = vmax.f32 %v6094, %v6198
      %v6272 = vmax.f32 %v6095, %v6200
      %v6273 = vmax.f32 %v6096, %v6202
      %v6274 = vmax.f32 %v6097, %v6204
      %v6275 = vmax.f32 %v6098, %v6206
      %v6276 = vmax.f32 %v6099, %v6201
      %v6277 = vmax.f32 %v6100, %v6203
      %v6278 = vmax.f32 %v6101, %v6205
      %v6279 = vld [vmem:[%s6] sm:$0xff]
      %v6280 = vld [vmem:[%s6 + $0x8] sm:$0xff]
      %v6281 = vld [vmem:[%s6 + $0x10] sm:$0xff]
      %v6282 = vld [vmem:[%s6 + $0x18] sm:$0xff]
      %v6283 = vld [vmem:[%s6 + $0x20] sm:$0xff]
      %v6284 = vld [vmem:[%s6 + $0x28] sm:$0xff]
      %v6285 = vld [vmem:[%s6 + $0x30] sm:$0xff]
      %v6286 = vld [vmem:[%s6 + $0x38] sm:$0xff]
      %v6287 = vld [vmem:[%s6 + $0x40] sm:$0xff]
      %v6288 = vld [vmem:[%s6 + $0x48] sm:$0xff]
      %v6289 = vld [vmem:[%s6 + $0x50] sm:$0xff]
      %v6290 = vld [vmem:[%s6 + $0x58] sm:$0xff]
      %v6291 = vld [vmem:[%s6 + $0x60] sm:$0xff]
      %v6292 = vld [vmem:[%s6 + $0x68] sm:$0xff]
      %v6293 = vld [vmem:[%s6 + $0x70] sm:$0xff]
      %v6294 = vld [vmem:[%s6 + $0x78] sm:$0xff]
      %v6295 = vld [vmem:[%s6 + $0x80] sm:$0xff]
      %v6296 = vld [vmem:[%s6 + $0x88] sm:$0xff]
      %v6297 = vld [vmem:[%s6 + $0x90] sm:$0xff]
      %v6298 = vld [vmem:[%s6 + $0x98] sm:$0xff]
      %v6299 = vld [vmem:[%s6 + $0xa0] sm:$0xff]
      %v6300 = vld [vmem:[%s6 + $0xa8] sm:$0xff]
      %v6301 = vld [vmem:[%s6 + $0xb0] sm:$0xff]
      %v6302 = vld [vmem:[%s6 + $0xb8] sm:$0xff]
      %v6303 = vld [vmem:[%s6 + $0xc0] sm:$0xff]
      %v6304 = vld [vmem:[%s6 + $0xc8] sm:$0xff]
      %v6305 = vld [vmem:[%s6 + $0xd0] sm:$0xff]
      %v6306 = vld [vmem:[%s6 + $0xd8] sm:$0xff]
      %v6307 = vld [vmem:[%s6 + $0xe0] sm:$0xff]
      %v6308 = vld [vmem:[%s6 + $0xe8] sm:$0xff]
      %v6309 = vld [vmem:[%s6 + $0xf0] sm:$0xff]
      %v6310 = vld [vmem:[%s6 + $0xf8] sm:$0xff]
      %v6311 = vld [vmem:[%s6 + $0x100] sm:$0xff]
      %v6312 = vld [vmem:[%s6 + $0x108] sm:$0xff]
      %v6313 = vld [vmem:[%s6 + $0x110] sm:$0xff]
      %v6314 = vld [vmem:[%s6 + $0x118] sm:$0xff]
      %v6315 = vld [vmem:[%s6 + $0x120] sm:$0xff]
      %v6316 = vld [vmem:[%s6 + $0x128] sm:$0xff]
      %v6317 = vld [vmem:[%s6 + $0x130] sm:$0xff]
      %v6318 = vld [vmem:[%s6 + $0x138] sm:$0xff]
      %v6319 = vld [vmem:[%s6 + $0x140] sm:$0xff]
      %v6320 = vld [vmem:[%s6 + $0x148] sm:$0xff]
      %v6321 = vld [vmem:[%s6 + $0x150] sm:$0xff]
      %v6322 = vld [vmem:[%s6 + $0x158] sm:$0xff]
      %v6323 = vld [vmem:[%s6 + $0x160] sm:$0xff]
      %v6324 = vld [vmem:[%s6 + $0x168] sm:$0xff]
      %v6325 = vld [vmem:[%s6 + $0x170] sm:$0xff]
      %v6326 = vld [vmem:[%s6 + $0x178] sm:$0xff]
      %v6327 = vld [vmem:[%s6 + $0x180] sm:$0xff]
      %v6328 = vld [vmem:[%s6 + $0x188] sm:$0xff]
      %v6329 = vld [vmem:[%s6 + $0x190] sm:$0xff]
      %v6330 = vld [vmem:[%s6 + $0x198] sm:$0xff]
      %v6331 = vld [vmem:[%s6 + $0x1a0] sm:$0xff]
      %v6332 = vld [vmem:[%s6 + $0x1a8] sm:$0xff]
      %v6333 = vld [vmem:[%s6 + $0x1b0] sm:$0xff]
      %v6334 = vld [vmem:[%s6 + $0x1b8] sm:$0xff]
      %v6335 = vld [vmem:[%s6 + $0x1c0] sm:$0xff]
      %v6336 = vld [vmem:[%s6 + $0x1c8] sm:$0xff]
      %v6337 = vld [vmem:[%s6 + $0x1d0] sm:$0xff]
      %v6338 = vld [vmem:[%s6 + $0x1d8] sm:$0xff]
      %v6339 = vld [vmem:[%s6 + $0x1e0] sm:$0xff]
      %v6340 = vld [vmem:[%s6 + $0x1e8] sm:$0xff]
      %v6341 = vld [vmem:[%s6 + $0x1f0] sm:$0xff]
      %v6342 = vld [vmem:[%s6 + $0x1f8] sm:$0xff]
      %v6343 = vld [vmem:[%s6 + $0x200] sm:$0xff]
      %v6344 = vld [vmem:[%s6 + $0x208] sm:$0xff]
      %v6345 = vld [vmem:[%s6 + $0x210] sm:$0xff]
      %v6346 = vld [vmem:[%s6 + $0x218] sm:$0xff]
      %v6347 = vld [vmem:[%s6 + $0x220] sm:$0xff]
      %v6348 = vld [vmem:[%s6 + $0x228] sm:$0xff]
      %v6349 = vld [vmem:[%s6 + $0x230] sm:$0xff]
      %v6350 = vld [vmem:[%s6 + $0x238] sm:$0xff]
      %v6351 = vld [vmem:[%s6 + $0x240] sm:$0xff]
      %v6352 = vld [vmem:[%s6 + $0x248] sm:$0xff]
      %v6353 = vld [vmem:[%s6 + $0x250] sm:$0xff]
      %v6354 = vld [vmem:[%s6 + $0x258] sm:$0xff]
      %v6355 = vld [vmem:[%s6 + $0x260] sm:$0xff]
      %v6356 = vld [vmem:[%s6 + $0x268] sm:$0xff]
      %v6357 = vld [vmem:[%s6 + $0x270] sm:$0xff]
      %v6358 = vld [vmem:[%s6 + $0x278] sm:$0xff]
      %v6359 = vld [vmem:[%s6 + $0x280] sm:$0xff]
      %v6360 = vld [vmem:[%s6 + $0x288] sm:$0xff]
      %v6361 = vld [vmem:[%s6 + $0x290] sm:$0xff]
      %v6362 = vld [vmem:[%s6 + $0x298] sm:$0xff]
      %v6363 = vld [vmem:[%s6 + $0x2a0] sm:$0xff]
      %v6364 = vld [vmem:[%s6 + $0x2a8] sm:$0xff]
      %v6365 = vld [vmem:[%s6 + $0x2b0] sm:$0xff]
      %v6366 = vld [vmem:[%s6 + $0x2b8] sm:$0xff]
      %v6367 = vld [vmem:[%s6 + $0x2c0] sm:$0xff]
      %v6368 = vld [vmem:[%s6 + $0x2c8] sm:$0xff]
      %v6369 = vld [vmem:[%s6 + $0x2d0] sm:$0xff]
      %v6370 = vld [vmem:[%s6 + $0x2d8] sm:$0xff]
      %v6371 = vld [vmem:[%s6 + $0x2e0] sm:$0x7f]
      %v6372 = vld [vmem:[%s6 + $0x2e8] sm:$0x7f]
      %vm6373 = vcmask 973824
      %v6375 = vsel %vm6373, %v6245, 0
      %v6378 = vsel %vm6373, %v6248, 0
      %v6381 = vsel %vm6373, %v6251, 0
      %v6384 = vsel %vm6373, %v6254, 0
      %v6387 = vsel %vm6373, %v6257, 0
      %v6390 = vsel %vm6373, %v6260, 0
      %v6393 = vsel %vm6373, %v6263, 0
      %v6396 = vsel %vm6373, %v6266, 0
      %v6399 = vsel %vm6373, %v6269, 0
      %v6402 = vsel %vm6373, %v6272, 0
      %v6405 = vsel %vm6373, %v6275, 0
      %v6408 = vsel %vm6373, %v6278, 0
      %v6411 = vsel %vm756, %v6371, 0
      %v6414 = vsel %vm756, %v6372, 0
      %6416 = vmatprep.subr.mxu0 %v6310
      %6417 = vmatpush1.msra.mxu0 %v6309
      %6418 = vmatprep.subr.mxu0 %v6308
      %6419 = vmatpush1.msra.mxu0 %v6307
      %6420 = vmatprep.subr.mxu0 %v6306
      %6421 = vmatpush1.msra.mxu0 %v6305
      %6422 = vmatprep.subr.mxu0 %v6304
      %6423 = vmatpush1.msra.mxu0 %v6303
      %6424 = vmatprep.subr.mxu0 %v6302
      %6425 = vmatpush1.msra.mxu0 %v6301
      %6426 = vmatprep.subr.mxu0 %v6300
      %6427 = vmatpush1.msra.mxu0 %v6299
      %6428 = vmatprep.subr.mxu0 %v6298
      %6429 = vmatpush1.msra.mxu0 %v6297
      %6430 = vmatprep.subr.mxu0 %v6296
      %6431 = vmatpush1.msra.mxu0 %v6295
      %6432 = vmatprep.subr.mxu0 %v6294
      %6433 = vmatpush1.msra.mxu0 %v6293
      %6434 = vmatprep.subr.mxu0 %v6292
      %6435 = vmatpush1.msra.mxu0 %v6291
      %6436 = vmatprep.subr.mxu0 %v6290
      %6437 = vmatpush1.msra.mxu0 %v6289
      %6438 = vmatprep.subr.mxu0 %v6288
      %6439 = vmatpush1.msra.mxu0 %v6287
      %6440 = vmatprep.subr.mxu0 %v6286
      %6441 = vmatpush1.msra.mxu0 %v6285
      %6442 = vmatprep.subr.mxu0 %v6284
      %6443 = vmatpush1.msra.mxu0 %v6283
      %6444 = vmatprep.subr.mxu0 %v6282
      %6445 = vmatpush1.msra.mxu0 %v6281
      %6446 = vmatprep.subr.mxu0 %v6280
      %6447 = vmatpush1.msra.mxu0 %v6279
      %6448 = vmatprep.subr.mxu0 %v6342
      %6449 = vmatpush2.msra.mxu0 %v6341
      %6450 = vmatprep.subr.mxu0 %v6340
      %6451 = vmatpush2.msra.mxu0 %v6339
      %6452 = vmatprep.subr.mxu0 %v6338
      %6453 = vmatpush2.msra.mxu0 %v6337
      %6454 = vmatprep.subr.mxu0 %v6336
      %6455 = vmatpush2.msra.mxu0 %v6335
      %6456 = vmatprep.subr.mxu0 %v6334
      %6457 = vmatpush2.msra.mxu0 %v6333
      %6458 = vmatprep.subr.mxu0 %v6332
      %6459 = vmatpush2.msra.mxu0 %v6331
      %6460 = vmatprep.subr.mxu0 %v6330
      %6461 = vmatpush2.msra.mxu0 %v6329
      %6462 = vmatprep.subr.mxu0 %v6328
      %6463 = vmatpush2.msra.mxu0 %v6327
      %6464 = vmatprep.subr.mxu0 %v6326
      %6465 = vmatpush2.msra.mxu0 %v6325
      %6466 = vmatprep.subr.mxu0 %v6324
      %6467 = vmatpush2.msra.mxu0 %v6323
      %6468 = vmatprep.subr.mxu0 %v6322
      %6469 = vmatpush2.msra.mxu0 %v6321
      %6470 = vmatprep.subr.mxu0 %v6320
      %6471 = vmatpush2.msra.mxu0 %v6319
      %6472 = vmatprep.subr.mxu0 %v6318
      %6473 = vmatpush2.msra.mxu0 %v6317
      %6474 = vmatprep.subr.mxu0 %v6316
      %6475 = vmatpush2.msra.mxu0 %v6315
      %6476 = vmatprep.subr.mxu0 %v6314
      %6477 = vmatpush2.msra.mxu0 %v6313
      %6478 = vmatprep.subr.mxu0 %v6312
      %6479 = vmatpush2.msra.mxu0 %v6311
      %6480 = vmatprep.mubr.f32.mxu0 %v6244
      %6481 = vmatmul.mubr.f32.gmra.mxu0 %v6243
      %v6482 = vpop.f32.mrf.mxu0
      %v6483 = vadd.f32 0.0, %v6482
      %v6484 = vpop.f32.mrf.mxu0
      %v6485 = vadd.f32 0.0, %v6484
      %6486 = vmatprep.mubr.f32.mxu0 %v6247
      %6487 = vmatmul.mubr.f32.gmra.mxu0 %v6246
      %v6488 = vpop.f32.mrf.mxu0
      %v6489 = vadd.f32 0.0, %v6488
      %v6490 = vpop.f32.mrf.mxu0
      %v6491 = vadd.f32 0.0, %v6490
      %6492 = vmatprep.mubr.f32.mxu0 %v6250
      %6493 = vmatmul.mubr.f32.gmra.mxu0 %v6249
      %v6494 = vpop.f32.mrf.mxu0
      %v6495 = vadd.f32 0.0, %v6494
      %v6496 = vpop.f32.mrf.mxu0
      %v6497 = vadd.f32 0.0, %v6496
      %6498 = vmatprep.mubr.f32.mxu0 %v6253
      %6499 = vmatmul.mubr.f32.gmra.mxu0 %v6252
      %v6500 = vpop.f32.mrf.mxu0
      %v6501 = vadd.f32 0.0, %v6500
      %v6502 = vpop.f32.mrf.mxu0
      %v6503 = vadd.f32 0.0, %v6502
      %6504 = vmatprep.mubr.f32.mxu0 %v6256
      %6505 = vmatmul.mubr.f32.gmra.mxu0 %v6255
      %v6506 = vpop.f32.mrf.mxu0
      %v6507 = vadd.f32 0.0, %v6506
      %v6508 = vpop.f32.mrf.mxu0
      %v6509 = vadd.f32 0.0, %v6508
      %6510 = vmatprep.mubr.f32.mxu0 %v6259
      %6511 = vmatmul.mubr.f32.gmra.mxu0 %v6258
      %v6512 = vpop.f32.mrf.mxu0
      %v6513 = vadd.f32 0.0, %v6512
      %v6514 = vpop.f32.mrf.mxu0
      %v6515 = vadd.f32 0.0, %v6514
      %6516 = vmatprep.mubr.f32.mxu0 %v6262
      %6517 = vmatmul.mubr.f32.gmra.mxu0 %v6261
      %v6518 = vpop.f32.mrf.mxu0
      %v6519 = vadd.f32 0.0, %v6518
      %v6520 = vpop.f32.mrf.mxu0
      %v6521 = vadd.f32 0.0, %v6520
      %6522 = vmatprep.mubr.f32.mxu0 %v6265
      %6523 = vmatmul.mubr.f32.gmra.mxu0 %v6264
      %v6524 = vpop.f32.mrf.mxu0
      %v6525 = vadd.f32 0.0, %v6524
      %v6526 = vpop.f32.mrf.mxu0
      %v6527 = vadd.f32 0.0, %v6526
      %6528 = vmatprep.mubr.f32.mxu0 %v6268
      %6529 = vmatmul.mubr.f32.gmra.mxu0 %v6267
      %v6530 = vpop.f32.mrf.mxu0
      %v6531 = vadd.f32 0.0, %v6530
      %v6532 = vpop.f32.mrf.mxu0
      %v6533 = vadd.f32 0.0, %v6532
      %6534 = vmatprep.mubr.f32.mxu0 %v6271
      %6535 = vmatmul.mubr.f32.gmra.mxu0 %v6270
      %v6536 = vpop.f32.mrf.mxu0
      %v6537 = vadd.f32 0.0, %v6536
      %v6538 = vpop.f32.mrf.mxu0
      %v6539 = vadd.f32 0.0, %v6538
      %6540 = vmatprep.mubr.f32.mxu0 %v6274
      %6541 = vmatmul.mubr.f32.gmra.mxu0 %v6273
      %v6542 = vpop.f32.mrf.mxu0
      %v6543 = vadd.f32 0.0, %v6542
      %v6544 = vpop.f32.mrf.mxu0
      %v6545 = vadd.f32 0.0, %v6544
      %6546 = vmatprep.mubr.f32.mxu0 %v6277
      %6547 = vmatmul.mubr.f32.gmra.mxu0 %v6276
      %v6548 = vpop.f32.mrf.mxu0
      %v6549 = vadd.f32 0.0, %v6548
      %v6550 = vpop.f32.mrf.mxu0
      %v6551 = vadd.f32 0.0, %v6550
      %6552 = vdwg.mxu0
      %6553 = vmatprep.subr.mxu0 0.0
      %6554 = vmatpush1.msra.mxu0 0.0
      %6555 = vmatprep.subr.mxu0 %v6414
      %6556 = vmatpush1.msra.mxu0 %v6411
      %6557 = vmatprep.subr.mxu0 %v6370
      %6558 = vmatpush1.msra.mxu0 %v6369
      %6559 = vmatprep.subr.mxu0 %v6368
      %6560 = vmatpush1.msra.mxu0 %v6367
      %6561 = vmatprep.subr.mxu0 %v6366
      %6562 = vmatpush1.msra.mxu0 %v6365
      %6563 = vmatprep.subr.mxu0 %v6364
      %6564 = vmatpush1.msra.mxu0 %v6363
      %6565 = vmatprep.subr.mxu0 %v6362
      %6566 = vmatpush1.msra.mxu0 %v6361
      %6567 = vmatprep.subr.mxu0 %v6360
      %6568 = vmatpush1.msra.mxu0 %v6359
      %6569 = vmatprep.subr.mxu0 %v6358
      %6570 = vmatpush1.msra.mxu0 %v6357
      %6571 = vmatprep.subr.mxu0 %v6356
      %6572 = vmatpush1.msra.mxu0 %v6355
      %6573 = vmatprep.subr.mxu0 %v6354
      %6574 = vmatpush1.msra.mxu0 %v6353
      %6575 = vmatprep.subr.mxu0 %v6352
      %6576 = vmatpush1.msra.mxu0 %v6351
      %6577 = vmatprep.subr.mxu0 %v6350
      %6578 = vmatpush1.msra.mxu0 %v6349
      %6579 = vmatprep.subr.mxu0 %v6348
      %6580 = vmatpush1.msra.mxu0 %v6347
      %6581 = vmatprep.subr.mxu0 %v6346
      %6582 = vmatpush1.msra.mxu0 %v6345
      %6583 = vmatprep.subr.mxu0 %v6344
      %6584 = vmatpush1.msra.mxu0 %v6343
      %6585 = vmatprep.subr.mxu0 0.0
      %6586 = vmatpush2.msra.mxu0 0.0
      %6587 = vmatprep.subr.mxu0 0.0
      %6588 = vmatpush2.msra.mxu0 0.0
      %6589 = vmatprep.subr.mxu0 0.0
      %6590 = vmatpush2.msra.mxu0 0.0
      %6591 = vmatprep.subr.mxu0 0.0
      %6592 = vmatpush2.msra.mxu0 0.0
      %6593 = vmatprep.subr.mxu0 0.0
      %6594 = vmatpush2.msra.mxu0 0.0
      %6595 = vmatprep.subr.mxu0 0.0
      %6596 = vmatpush2.msra.mxu0 0.0
      %6597 = vmatprep.subr.mxu0 0.0
      %6598 = vmatpush2.msra.mxu0 0.0
      %6599 = vmatprep.subr.mxu0 0.0
      %6600 = vmatpush2.msra.mxu0 0.0
      %6601 = vmatprep.subr.mxu0 0.0
      %6602 = vmatpush2.msra.mxu0 0.0
      %6603 = vmatprep.subr.mxu0 0.0
      %6604 = vmatpush2.msra.mxu0 0.0
      %6605 = vmatprep.subr.mxu0 0.0
      %6606 = vmatpush2.msra.mxu0 0.0
      %6607 = vmatprep.subr.mxu0 0.0
      %6608 = vmatpush2.msra.mxu0 0.0
      %6609 = vmatprep.subr.mxu0 0.0
      %6610 = vmatpush2.msra.mxu0 0.0
      %6611 = vmatprep.subr.mxu0 0.0
      %6612 = vmatpush2.msra.mxu0 0.0
      %6613 = vmatprep.subr.mxu0 0.0
      %6614 = vmatpush2.msra.mxu0 0.0
      %6615 = vmatprep.subr.mxu0 0.0
      %6616 = vmatpush2.msra.mxu0 0.0
      %6617 = vmatprep.mubr.f32.mxu0 0.0
      %6618 = vmatmul.mubr.f32.gmra.mxu0 %v6375
      %v6619 = vpop.f32.mrf.mxu0
      %v6620 = vadd.f32 %v6483, %v6619
      %v6621 = vpop.f32.mrf.mxu0
      %v6622 = vadd.f32 %v6485, %v6621
      %6623 = vmatprep.mubr.f32.mxu0 0.0
      %6624 = vmatmul.mubr.f32.gmra.mxu0 %v6378
      %v6625 = vpop.f32.mrf.mxu0
      %v6626 = vadd.f32 %v6489, %v6625
      %v6627 = vpop.f32.mrf.mxu0
      %v6628 = vadd.f32 %v6491, %v6627
      %6629 = vmatprep.mubr.f32.mxu0 0.0
      %6630 = vmatmul.mubr.f32.gmra.mxu0 %v6381
      %v6631 = vpop.f32.mrf.mxu0
      %v6632 = vadd.f32 %v6495, %v6631
      %v6633 = vpop.f32.mrf.mxu0
      %v6634 = vadd.f32 %v6497, %v6633
      %6635 = vmatprep.mubr.f32.mxu0 0.0
      %6636 = vmatmul.mubr.f32.gmra.mxu0 %v6384
      %v6637 = vpop.f32.mrf.mxu0
      %v6638 = vadd.f32 %v6501, %v6637
      %v6639 = vpop.f32.mrf.mxu0
      %v6640 = vadd.f32 %v6503, %v6639
      %6641 = vmatprep.mubr.f32.mxu0 0.0
      %6642 = vmatmul.mubr.f32.gmra.mxu0 %v6387
      %v6643 = vpop.f32.mrf.mxu0
      %v6644 = vadd.f32 %v6507, %v6643
      %v6645 = vpop.f32.mrf.mxu0
      %v6646 = vadd.f32 %v6509, %v6645
      %6647 = vmatprep.mubr.f32.mxu0 0.0
      %6648 = vmatmul.mubr.f32.gmra.mxu0 %v6390
      %v6649 = vpop.f32.mrf.mxu0
      %v6650 = vadd.f32 %v6513, %v6649
      %v6651 = vpop.f32.mrf.mxu0
      %v6652 = vadd.f32 %v6515, %v6651
      %6653 = vmatprep.mubr.f32.mxu0 0.0
      %6654 = vmatmul.mubr.f32.gmra.mxu0 %v6393
      %v6655 = vpop.f32.mrf.mxu0
      %v6656 = vadd.f32 %v6519, %v6655
      %v6657 = vpop.f32.mrf.mxu0
      %v6658 = vadd.f32 %v6521, %v6657
      %6659 = vmatprep.mubr.f32.mxu0 0.0
      %6660 = vmatmul.mubr.f32.gmra.mxu0 %v6396
      %v6661 = vpop.f32.mrf.mxu0
      %v6662 = vadd.f32 %v6525, %v6661
      %v6663 = vpop.f32.mrf.mxu0
      %v6664 = vadd.f32 %v6527, %v6663
      %6665 = vmatprep.mubr.f32.mxu0 0.0
      %6666 = vmatmul.mubr.f32.gmra.mxu0 %v6399
      %v6667 = vpop.f32.mrf.mxu0
      %v6668 = vadd.f32 %v6531, %v6667
      %v6669 = vpop.f32.mrf.mxu0
      %v6670 = vadd.f32 %v6533, %v6669
      %6671 = vmatprep.mubr.f32.mxu0 0.0
      %6672 = vmatmul.mubr.f32.gmra.mxu0 %v6402
      %v6673 = vpop.f32.mrf.mxu0
      %v6674 = vadd.f32 %v6537, %v6673
      %v6675 = vpop.f32.mrf.mxu0
      %v6676 = vadd.f32 %v6539, %v6675
      %6677 = vmatprep.mubr.f32.mxu0 0.0
      %6678 = vmatmul.mubr.f32.gmra.mxu0 %v6405
      %v6679 = vpop.f32.mrf.mxu0
      %v6680 = vadd.f32 %v6543, %v6679
      %v6681 = vpop.f32.mrf.mxu0
      %v6682 = vadd.f32 %v6545, %v6681
      %6683 = vmatprep.mubr.f32.mxu0 0.0
      %6684 = vmatmul.mubr.f32.gmra.mxu0 %v6408
      %v6685 = vpop.f32.mrf.mxu0
      %v6686 = vadd.f32 %v6549, %v6685
      %v6687 = vpop.f32.mrf.mxu0
      %v6688 = vadd.f32 %v6551, %v6687
      %6689 = vdwg.mxu0
      %6714 = vrot.lane.b32.xlu0 %v6243, 127
      %v6715 = vpop.permute.xlu0 %6714
      %6716 = vrot.lane.b32.xlu0 %v6244, 127
      %v6717 = vpop.permute.xlu0 %6716
      %6718 = vrot.lane.b32.xlu0 %v6245, 127
      %v6719 = vpop.permute.xlu0 %6718
      %6720 = vrot.lane.b32.xlu0 %v6246, 127
      %v6721 = vpop.permute.xlu0 %6720
      %6722 = vrot.lane.b32.xlu0 %v6247, 127
      %v6723 = vpop.permute.xlu0 %6722
      %6724 = vrot.lane.b32.xlu0 %v6248, 127
      %v6725 = vpop.permute.xlu0 %6724
      %6726 = vrot.lane.b32.xlu0 %v6249, 127
      %v6727 = vpop.permute.xlu0 %6726
      %6728 = vrot.lane.b32.xlu0 %v6250, 127
      %v6729 = vpop.permute.xlu0 %6728
      %6730 = vrot.lane.b32.xlu0 %v6251, 127
      %v6731 = vpop.permute.xlu0 %6730
      %6732 = vrot.lane.b32.xlu0 %v6252, 127
      %v6733 = vpop.permute.xlu0 %6732
      %6734 = vrot.lane.b32.xlu0 %v6253, 127
      %v6735 = vpop.permute.xlu0 %6734
      %6736 = vrot.lane.b32.xlu0 %v6254, 127
      %v6737 = vpop.permute.xlu0 %6736
      %6738 = vrot.lane.b32.xlu0 %v6255, 127
      %v6739 = vpop.permute.xlu0 %6738
      %6740 = vrot.lane.b32.xlu0 %v6256, 127
      %v6741 = vpop.permute.xlu0 %6740
      %6742 = vrot.lane.b32.xlu0 %v6257, 127
      %v6743 = vpop.permute.xlu0 %6742
      %6744 = vrot.lane.b32.xlu0 %v6258, 127
      %v6745 = vpop.permute.xlu0 %6744
      %6746 = vrot.lane.b32.xlu0 %v6259, 127
      %v6747 = vpop.permute.xlu0 %6746
      %6748 = vrot.lane.b32.xlu0 %v6260, 127
      %v6749 = vpop.permute.xlu0 %6748
      %6750 = vrot.lane.b32.xlu0 %v6261, 127
      %v6751 = vpop.permute.xlu0 %6750
      %6752 = vrot.lane.b32.xlu0 %v6262, 127
      %v6753 = vpop.permute.xlu0 %6752
      %6754 = vrot.lane.b32.xlu0 %v6263, 127
      %v6755 = vpop.permute.xlu0 %6754
      %6756 = vrot.lane.b32.xlu0 %v6264, 127
      %v6757 = vpop.permute.xlu0 %6756
      %6758 = vrot.lane.b32.xlu0 %v6265, 127
      %v6759 = vpop.permute.xlu0 %6758
      %6760 = vrot.lane.b32.xlu0 %v6266, 127
      %v6761 = vpop.permute.xlu0 %6760
      %6762 = vrot.lane.b32.xlu0 %v6267, 127
      %v6763 = vpop.permute.xlu0 %6762
      %6764 = vrot.lane.b32.xlu0 %v6268, 127
      %v6765 = vpop.permute.xlu0 %6764
      %6766 = vrot.lane.b32.xlu0 %v6269, 127
      %v6767 = vpop.permute.xlu0 %6766
      %6768 = vrot.lane.b32.xlu0 %v6270, 127
      %v6769 = vpop.permute.xlu0 %6768
      %6770 = vrot.lane.b32.xlu0 %v6271, 127
      %v6771 = vpop.permute.xlu0 %6770
      %6772 = vrot.lane.b32.xlu0 %v6272, 127
      %v6773 = vpop.permute.xlu0 %6772
      %6774 = vrot.lane.b32.xlu0 %v6273, 127
      %v6775 = vpop.permute.xlu0 %6774
      %6776 = vrot.lane.b32.xlu0 %v6274, 127
      %v6777 = vpop.permute.xlu0 %6776
      %6778 = vrot.lane.b32.xlu0 %v6275, 127
      %v6779 = vpop.permute.xlu0 %6778
      %6780 = vrot.lane.b32.xlu0 %v6276, 127
      %v6781 = vpop.permute.xlu0 %6780
      %6782 = vrot.lane.b32.xlu0 %v6277, 127
      %v6783 = vpop.permute.xlu0 %6782
      %6784 = vrot.lane.b32.xlu0 %v6278, 127
      %v6785 = vpop.permute.xlu0 %6784
      %v6786 = vsel %vm3868, %v6715, %v6717
      %v6787 = vsel %vm3868, %v6717, %v6719
      %v6788 = vsel %vm3868, %v6721, %v6723
      %v6789 = vsel %vm3868, %v6723, %v6725
      %v6790 = vsel %vm3868, %v6727, %v6729
      %v6791 = vsel %vm3868, %v6729, %v6731
      %v6792 = vsel %vm3868, %v6733, %v6735
      %v6793 = vsel %vm3868, %v6735, %v6737
      %v6794 = vsel %vm3868, %v6739, %v6741
      %v6795 = vsel %vm3868, %v6741, %v6743
      %v6796 = vsel %vm3868, %v6745, %v6747
      %v6797 = vsel %vm3868, %v6747, %v6749
      %v6798 = vsel %vm3868, %v6751, %v6753
      %v6799 = vsel %vm3868, %v6753, %v6755
      %v6800 = vsel %vm3868, %v6757, %v6759
      %v6801 = vsel %vm3868, %v6759, %v6761
      %v6802 = vsel %vm3868, %v6763, %v6765
      %v6803 = vsel %vm3868, %v6765, %v6767
      %v6804 = vsel %vm3868, %v6769, %v6771
      %v6805 = vsel %vm3868, %v6771, %v6773
      %v6806 = vsel %vm3868, %v6775, %v6777
      %v6807 = vsel %vm3868, %v6777, %v6779
      %v6808 = vsel %vm3868, %v6781, %v6783
      %v6809 = vsel %vm3868, %v6783, %v6785
      %v6834 = vsel %vm6373, %v6719, 0
      %v6836 = vsel %vm6373, %v6725, 0
      %v6838 = vsel %vm6373, %v6731, 0
      %v6840 = vsel %vm6373, %v6737, 0
      %v6842 = vsel %vm6373, %v6743, 0
      %v6844 = vsel %vm6373, %v6749, 0
      %v6846 = vsel %vm6373, %v6755, 0
      %v6848 = vsel %vm6373, %v6761, 0
      %v6850 = vsel %vm6373, %v6767, 0
      %v6852 = vsel %vm6373, %v6773, 0
      %v6854 = vsel %vm6373, %v6779, 0
      %v6856 = vsel %vm6373, %v6785, 0
      %6858 = vmatprep.subr.mxu0 %v6310
      %6859 = vmatpush1.msra.mxu0 %v6309
      %6860 = vmatprep.subr.mxu0 %v6308
      %6861 = vmatpush1.msra.mxu0 %v6307
      %6862 = vmatprep.subr.mxu0 %v6306
      %6863 = vmatpush1.msra.mxu0 %v6305
      %6864 = vmatprep.subr.mxu0 %v6304
      %6865 = vmatpush1.msra.mxu0 %v6303
      %6866 = vmatprep.subr.mxu0 %v6302
      %6867 = vmatpush1.msra.mxu0 %v6301
      %6868 = vmatprep.subr.mxu0 %v6300
      %6869 = vmatpush1.msra.mxu0 %v6299
      %6870 = vmatprep.subr.mxu0 %v6298
      %6871 = vmatpush1.msra.mxu0 %v6297
      %6872 = vmatprep.subr.mxu0 %v6296
      %6873 = vmatpush1.msra.mxu0 %v6295
      %6874 = vmatprep.subr.mxu0 %v6294
      %6875 = vmatpush1.msra.mxu0 %v6293
      %6876 = vmatprep.subr.mxu0 %v6292
      %6877 = vmatpush1.msra.mxu0 %v6291
      %6878 = vmatprep.subr.mxu0 %v6290
      %6879 = vmatpush1.msra.mxu0 %v6289
      %6880 = vmatprep.subr.mxu0 %v6288
      %6881 = vmatpush1.msra.mxu0 %v6287
      %6882 = vmatprep.subr.mxu0 %v6286
      %6883 = vmatpush1.msra.mxu0 %v6285
      %6884 = vmatprep.subr.mxu0 %v6284
      %6885 = vmatpush1.msra.mxu0 %v6283
      %6886 = vmatprep.subr.mxu0 %v6282
      %6887 = vmatpush1.msra.mxu0 %v6281
      %6888 = vmatprep.subr.mxu0 %v6280
      %6889 = vmatpush1.msra.mxu0 %v6279
      %6890 = vmatprep.subr.mxu0 %v6342
      %6891 = vmatpush2.msra.mxu0 %v6341
      %6892 = vmatprep.subr.mxu0 %v6340
      %6893 = vmatpush2.msra.mxu0 %v6339
      %6894 = vmatprep.subr.mxu0 %v6338
      %6895 = vmatpush2.msra.mxu0 %v6337
      %6896 = vmatprep.subr.mxu0 %v6336
      %6897 = vmatpush2.msra.mxu0 %v6335
      %6898 = vmatprep.subr.mxu0 %v6334
      %6899 = vmatpush2.msra.mxu0 %v6333
      %6900 = vmatprep.subr.mxu0 %v6332
      %6901 = vmatpush2.msra.mxu0 %v6331
      %6902 = vmatprep.subr.mxu0 %v6330
      %6903 = vmatpush2.msra.mxu0 %v6329
      %6904 = vmatprep.subr.mxu0 %v6328
      %6905 = vmatpush2.msra.mxu0 %v6327
      %6906 = vmatprep.subr.mxu0 %v6326
      %6907 = vmatpush2.msra.mxu0 %v6325
      %6908 = vmatprep.subr.mxu0 %v6324
      %6909 = vmatpush2.msra.mxu0 %v6323
      %6910 = vmatprep.subr.mxu0 %v6322
      %6911 = vmatpush2.msra.mxu0 %v6321
      %6912 = vmatprep.subr.mxu0 %v6320
      %6913 = vmatpush2.msra.mxu0 %v6319
      %6914 = vmatprep.subr.mxu0 %v6318
      %6915 = vmatpush2.msra.mxu0 %v6317
      %6916 = vmatprep.subr.mxu0 %v6316
      %6917 = vmatpush2.msra.mxu0 %v6315
      %6918 = vmatprep.subr.mxu0 %v6314
      %6919 = vmatpush2.msra.mxu0 %v6313
      %6920 = vmatprep.subr.mxu0 %v6312
      %6921 = vmatpush2.msra.mxu0 %v6311
      %6922 = vmatprep.mubr.f32.mxu0 %v6787
      %6923 = vmatmul.mubr.f32.gmra.mxu0 %v6786
      %v6924 = vpop.f32.mrf.mxu0
      %v6925 = vadd.f32 0.0, %v6924
      %v6926 = vpop.f32.mrf.mxu0
      %v6927 = vadd.f32 0.0, %v6926
      %6928 = vmatprep.mubr.f32.mxu0 %v6789
      %6929 = vmatmul.mubr.f32.gmra.mxu0 %v6788
      %v6930 = vpop.f32.mrf.mxu0
      %v6931 = vadd.f32 0.0, %v6930
      %v6932 = vpop.f32.mrf.mxu0
      %v6933 = vadd.f32 0.0, %v6932
      %6934 = vmatprep.mubr.f32.mxu0 %v6791
      %6935 = vmatmul.mubr.f32.gmra.mxu0 %v6790
      %v6936 = vpop.f32.mrf.mxu0
      %v6937 = vadd.f32 0.0, %v6936
      %v6938 = vpop.f32.mrf.mxu0
      %v6939 = vadd.f32 0.0, %v6938
      %6940 = vmatprep.mubr.f32.mxu0 %v6793
      %6941 = vmatmul.mubr.f32.gmra.mxu0 %v6792
      %v6942 = vpop.f32.mrf.mxu0
      %v6943 = vadd.f32 0.0, %v6942
      %v6944 = vpop.f32.mrf.mxu0
      %v6945 = vadd.f32 0.0, %v6944
      %6946 = vmatprep.mubr.f32.mxu0 %v6795
      %6947 = vmatmul.mubr.f32.gmra.mxu0 %v6794
      %v6948 = vpop.f32.mrf.mxu0
      %v6949 = vadd.f32 0.0, %v6948
      %v6950 = vpop.f32.mrf.mxu0
      %v6951 = vadd.f32 0.0, %v6950
      %6952 = vmatprep.mubr.f32.mxu0 %v6797
      %6953 = vmatmul.mubr.f32.gmra.mxu0 %v6796
      %v6954 = vpop.f32.mrf.mxu0
      %v6955 = vadd.f32 0.0, %v6954
      %v6956 = vpop.f32.mrf.mxu0
      %v6957 = vadd.f32 0.0, %v6956
      %6958 = vmatprep.mubr.f32.mxu0 %v6799
      %6959 = vmatmul.mubr.f32.gmra.mxu0 %v6798
      %v6960 = vpop.f32.mrf.mxu0
      %v6961 = vadd.f32 0.0, %v6960
      %v6962 = vpop.f32.mrf.mxu0
      %v6963 = vadd.f32 0.0, %v6962
      %6964 = vmatprep.mubr.f32.mxu0 %v6801
      %6965 = vmatmul.mubr.f32.gmra.mxu0 %v6800
      %v6966 = vpop.f32.mrf.mxu0
      %v6967 = vadd.f32 0.0, %v6966
      %v6968 = vpop.f32.mrf.mxu0
      %v6969 = vadd.f32 0.0, %v6968
      %6970 = vmatprep.mubr.f32.mxu0 %v6803
      %6971 = vmatmul.mubr.f32.gmra.mxu0 %v6802
      %v6972 = vpop.f32.mrf.mxu0
      %v6973 = vadd.f32 0.0, %v6972
      %v6974 = vpop.f32.mrf.mxu0
      %v6975 = vadd.f32 0.0, %v6974
      %6976 = vmatprep.mubr.f32.mxu0 %v6805
      %6977 = vmatmul.mubr.f32.gmra.mxu0 %v6804
      %v6978 = vpop.f32.mrf.mxu0
      %v6979 = vadd.f32 0.0, %v6978
      %v6980 = vpop.f32.mrf.mxu0
      %v6981 = vadd.f32 0.0, %v6980
      %6982 = vmatprep.mubr.f32.mxu0 %v6807
      %6983 = vmatmul.mubr.f32.gmra.mxu0 %v6806
      %v6984 = vpop.f32.mrf.mxu0
      %v6985 = vadd.f32 0.0, %v6984
      %v6986 = vpop.f32.mrf.mxu0
      %v6987 = vadd.f32 0.0, %v6986
      %6988 = vmatprep.mubr.f32.mxu0 %v6809
      %6989 = vmatmul.mubr.f32.gmra.mxu0 %v6808
      %v6990 = vpop.f32.mrf.mxu0
      %v6991 = vadd.f32 0.0, %v6990
      %v6992 = vpop.f32.mrf.mxu0
      %v6993 = vadd.f32 0.0, %v6992
      %6994 = vdwg.mxu0
      %6995 = vmatprep.subr.mxu0 0.0
      %6996 = vmatpush1.msra.mxu0 0.0
      %6997 = vmatprep.subr.mxu0 %v6414
      %6998 = vmatpush1.msra.mxu0 %v6411
      %6999 = vmatprep.subr.mxu0 %v6370
      %7000 = vmatpush1.msra.mxu0 %v6369
      %7001 = vmatprep.subr.mxu0 %v6368
      %7002 = vmatpush1.msra.mxu0 %v6367
      %7003 = vmatprep.subr.mxu0 %v6366
      %7004 = vmatpush1.msra.mxu0 %v6365
      %7005 = vmatprep.subr.mxu0 %v6364
      %7006 = vmatpush1.msra.mxu0 %v6363
      %7007 = vmatprep.subr.mxu0 %v6362
      %7008 = vmatpush1.msra.mxu0 %v6361
      %7009 = vmatprep.subr.mxu0 %v6360
      %7010 = vmatpush1.msra.mxu0 %v6359
      %7011 = vmatprep.subr.mxu0 %v6358
      %7012 = vmatpush1.msra.mxu0 %v6357
      %7013 = vmatprep.subr.mxu0 %v6356
      %7014 = vmatpush1.msra.mxu0 %v6355
      %7015 = vmatprep.subr.mxu0 %v6354
      %7016 = vmatpush1.msra.mxu0 %v6353
      %7017 = vmatprep.subr.mxu0 %v6352
      %7018 = vmatpush1.msra.mxu0 %v6351
      %7019 = vmatprep.subr.mxu0 %v6350
      %7020 = vmatpush1.msra.mxu0 %v6349
      %7021 = vmatprep.subr.mxu0 %v6348
      %7022 = vmatpush1.msra.mxu0 %v6347
      %7023 = vmatprep.subr.mxu0 %v6346
      %7024 = vmatpush1.msra.mxu0 %v6345
      %7025 = vmatprep.subr.mxu0 %v6344
      %7026 = vmatpush1.msra.mxu0 %v6343
      %7027 = vmatprep.subr.mxu0 0.0
      %7028 = vmatpush2.msra.mxu0 0.0
      %7029 = vmatprep.subr.mxu0 0.0
      %7030 = vmatpush2.msra.mxu0 0.0
      %7031 = vmatprep.subr.mxu0 0.0
      %7032 = vmatpush2.msra.mxu0 0.0
      %7033 = vmatprep.subr.mxu0 0.0
      %7034 = vmatpush2.msra.mxu0 0.0
      %7035 = vmatprep.subr.mxu0 0.0
      %7036 = vmatpush2.msra.mxu0 0.0
      %7037 = vmatprep.subr.mxu0 0.0
      %7038 = vmatpush2.msra.mxu0 0.0
      %7039 = vmatprep.subr.mxu0 0.0
      %7040 = vmatpush2.msra.mxu0 0.0
      %7041 = vmatprep.subr.mxu0 0.0
      %7042 = vmatpush2.msra.mxu0 0.0
      %7043 = vmatprep.subr.mxu0 0.0
      %7044 = vmatpush2.msra.mxu0 0.0
      %7045 = vmatprep.subr.mxu0 0.0
      %7046 = vmatpush2.msra.mxu0 0.0
      %7047 = vmatprep.subr.mxu0 0.0
      %7048 = vmatpush2.msra.mxu0 0.0
      %7049 = vmatprep.subr.mxu0 0.0
      %7050 = vmatpush2.msra.mxu0 0.0
      %7051 = vmatprep.subr.mxu0 0.0
      %7052 = vmatpush2.msra.mxu0 0.0
      %7053 = vmatprep.subr.mxu0 0.0
      %7054 = vmatpush2.msra.mxu0 0.0
      %7055 = vmatprep.subr.mxu0 0.0
      %7056 = vmatpush2.msra.mxu0 0.0
      %7057 = vmatprep.subr.mxu0 0.0
      %7058 = vmatpush2.msra.mxu0 0.0
      %7059 = vmatprep.mubr.f32.mxu0 0.0
      %7060 = vmatmul.mubr.f32.gmra.mxu0 %v6834
      %v7061 = vpop.f32.mrf.mxu0
      %v7062 = vadd.f32 %v6925, %v7061
      %v7063 = vpop.f32.mrf.mxu0
      %v7064 = vadd.f32 %v6927, %v7063
      %7065 = vmatprep.mubr.f32.mxu0 0.0
      %7066 = vmatmul.mubr.f32.gmra.mxu0 %v6836
      %v7067 = vpop.f32.mrf.mxu0
      %v7068 = vadd.f32 %v6931, %v7067
      %v7069 = vpop.f32.mrf.mxu0
      %v7070 = vadd.f32 %v6933, %v7069
      %7071 = vmatprep.mubr.f32.mxu0 0.0
      %7072 = vmatmul.mubr.f32.gmra.mxu0 %v6838
      %v7073 = vpop.f32.mrf.mxu0
      %v7074 = vadd.f32 %v6937, %v7073
      %v7075 = vpop.f32.mrf.mxu0
      %v7076 = vadd.f32 %v6939, %v7075
      %7077 = vmatprep.mubr.f32.mxu0 0.0
      %7078 = vmatmul.mubr.f32.gmra.mxu0 %v6840
      %v7079 = vpop.f32.mrf.mxu0
      %v7080 = vadd.f32 %v6943, %v7079
      %v7081 = vpop.f32.mrf.mxu0
      %v7082 = vadd.f32 %v6945, %v7081
      %7083 = vmatprep.mubr.f32.mxu0 0.0
      %7084 = vmatmul.mubr.f32.gmra.mxu0 %v6842
      %v7085 = vpop.f32.mrf.mxu0
      %v7086 = vadd.f32 %v6949, %v7085
      %v7087 = vpop.f32.mrf.mxu0
      %v7088 = vadd.f32 %v6951, %v7087
      %7089 = vmatprep.mubr.f32.mxu0 0.0
      %7090 = vmatmul.mubr.f32.gmra.mxu0 %v6844
      %v7091 = vpop.f32.mrf.mxu0
      %v7092 = vadd.f32 %v6955, %v7091
      %v7093 = vpop.f32.mrf.mxu0
      %v7094 = vadd.f32 %v6957, %v7093
      %7095 = vmatprep.mubr.f32.mxu0 0.0
      %7096 = vmatmul.mubr.f32.gmra.mxu0 %v6846
      %v7097 = vpop.f32.mrf.mxu0
      %v7098 = vadd.f32 %v6961, %v7097
      %v7099 = vpop.f32.mrf.mxu0
      %v7100 = vadd.f32 %v6963, %v7099
      %7101 = vmatprep.mubr.f32.mxu0 0.0
      %7102 = vmatmul.mubr.f32.gmra.mxu0 %v6848
      %v7103 = vpop.f32.mrf.mxu0
      %v7104 = vadd.f32 %v6967, %v7103
      %v7105 = vpop.f32.mrf.mxu0
      %v7106 = vadd.f32 %v6969, %v7105
      %7107 = vmatprep.mubr.f32.mxu0 0.0
      %7108 = vmatmul.mubr.f32.gmra.mxu0 %v6850
      %v7109 = vpop.f32.mrf.mxu0
      %v7110 = vadd.f32 %v6973, %v7109
      %v7111 = vpop.f32.mrf.mxu0
      %v7112 = vadd.f32 %v6975, %v7111
      %7113 = vmatprep.mubr.f32.mxu0 0.0
      %7114 = vmatmul.mubr.f32.gmra.mxu0 %v6852
      %v7115 = vpop.f32.mrf.mxu0
      %v7116 = vadd.f32 %v6979, %v7115
      %v7117 = vpop.f32.mrf.mxu0
      %v7118 = vadd.f32 %v6981, %v7117
      %7119 = vmatprep.mubr.f32.mxu0 0.0
      %7120 = vmatmul.mubr.f32.gmra.mxu0 %v6854
      %v7121 = vpop.f32.mrf.mxu0
      %v7122 = vadd.f32 %v6985, %v7121
      %v7123 = vpop.f32.mrf.mxu0
      %v7124 = vadd.f32 %v6987, %v7123
      %7125 = vmatprep.mubr.f32.mxu0 0.0
      %7126 = vmatmul.mubr.f32.gmra.mxu0 %v6856
      %v7127 = vpop.f32.mrf.mxu0
      %v7128 = vadd.f32 %v6991, %v7127
      %v7129 = vpop.f32.mrf.mxu0
      %v7130 = vadd.f32 %v6993, %v7129
      %7131 = vdwg.mxu0
      %v7132 = vmax.f32 %v6620, %v7062
      %v7133 = vmax.f32 %v6622, %v7064
      %v7134 = vmax.f32 %v6626, %v7068
      %v7135 = vmax.f32 %v6628, %v7070
      %v7136 = vmax.f32 %v6632, %v7074
      %v7137 = vmax.f32 %v6634, %v7076
      %v7138 = vmax.f32 %v6638, %v7080
      %v7139 = vmax.f32 %v6640, %v7082
      %v7140 = vmax.f32 %v6644, %v7086
      %v7141 = vmax.f32 %v6646, %v7088
      %v7142 = vmax.f32 %v6650, %v7092
      %v7143 = vmax.f32 %v6652, %v7094
      %v7144 = vmax.f32 %v6656, %v7098
      %v7145 = vmax.f32 %v6658, %v7100
      %v7146 = vmax.f32 %v6662, %v7104
      %v7147 = vmax.f32 %v6664, %v7106
      %v7148 = vmax.f32 %v6668, %v7110
      %v7149 = vmax.f32 %v6670, %v7112
      %v7150 = vmax.f32 %v6674, %v7116
      %v7151 = vmax.f32 %v6676, %v7118
      %v7152 = vmax.f32 %v6680, %v7122
      %v7153 = vmax.f32 %v6682, %v7124
      %v7154 = vmax.f32 %v6686, %v7128
      %v7155 = vmax.f32 %v6688, %v7130
      %v7156 = vld [vmem:[%s7] sm:$0xff]
      %v7157 = vld [vmem:[%s7 + $0x8] sm:$0xff]
      %v7158 = vld [vmem:[%s7 + $0x10] sm:$0xff]
      %v7159 = vld [vmem:[%s7 + $0x18] sm:$0xff]
      %v7160 = vld [vmem:[%s7 + $0x20] sm:$0xff]
      %v7161 = vld [vmem:[%s7 + $0x28] sm:$0x3f]
      %v7162 = vld [vmem:[%s8] sm:$0x3]
      %v7164 = vlaneseq
      %v7165 = vshrl.u32 %v7164, 7
      %v7166 = vsub.s32 0, %v7165
      %v7167 = vrot.slane %v7162, %v7166
      %v7168 = vlaneseq
      %v7169 = vshrl.u32 %v7168, 7
      %v7170 = vsub.s32 1, %v7169
      %v7171 = vrot.slane %v7162, %v7170
      %vm7174 = vcmask 777216
      %v7176 = vsel %vm7174, %v7156, 0
      %v7179 = vsel %vm7174, %v7157, 0
      %v7182 = vsel %vm7174, %v7158, 0
      %v7185 = vsel %vm7174, %v7159, 0
      %v7188 = vsel %vm7174, %v7160, 0
      %v7191 = vsel %vm7174, %v7161, 0
      %v7194 = vsel %vm756, %v7154, 0
      %v7197 = vsel %vm756, %v7155, 0
      %7199 = vmatprep.subr.mxu0 0.0
      %7200 = vmatpush1.msra.mxu0 0.0
      %7201 = vmatprep.subr.mxu0 0.0
      %7202 = vmatpush1.msra.mxu0 0.0
      %7203 = vmatprep.subr.mxu0 0.0
      %7204 = vmatpush1.msra.mxu0 0.0
      %7205 = vmatprep.subr.mxu0 0.0
      %7206 = vmatpush1.msra.mxu0 0.0
      %7207 = vmatprep.subr.mxu0 %v7197
      %7208 = vmatpush1.msra.mxu0 %v7194
      %7209 = vmatprep.subr.mxu0 %v7153
      %7210 = vmatpush1.msra.mxu0 %v7152
      %7211 = vmatprep.subr.mxu0 %v7151
      %7212 = vmatpush1.msra.mxu0 %v7150
      %7213 = vmatprep.subr.mxu0 %v7149
      %7214 = vmatpush1.msra.mxu0 %v7148
      %7215 = vmatprep.subr.mxu0 %v7147
      %7216 = vmatpush1.msra.mxu0 %v7146
      %7217 = vmatprep.subr.mxu0 %v7145
      %7218 = vmatpush1.msra.mxu0 %v7144
      %7219 = vmatprep.subr.mxu0 %v7143
      %7220 = vmatpush1.msra.mxu0 %v7142
      %7221 = vmatprep.subr.mxu0 %v7141
      %7222 = vmatpush1.msra.mxu0 %v7140
      %7223 = vmatprep.subr.mxu0 %v7139
      %7224 = vmatpush1.msra.mxu0 %v7138
      %7225 = vmatprep.subr.mxu0 %v7137
      %7226 = vmatpush1.msra.mxu0 %v7136
      %7227 = vmatprep.subr.mxu0 %v7135
      %7228 = vmatpush1.msra.mxu0 %v7134
      %7229 = vmatprep.subr.mxu0 %v7133
      %7230 = vmatpush1.msra.mxu0 %v7132
      %7231 = vmatprep.subr.mxu0 0.0
      %7232 = vmatpush2.msra.mxu0 0.0
      %7233 = vmatprep.subr.mxu0 0.0
      %7234 = vmatpush2.msra.mxu0 0.0
      %7235 = vmatprep.subr.mxu0 0.0
      %7236 = vmatpush2.msra.mxu0 0.0
      %7237 = vmatprep.subr.mxu0 0.0
      %7238 = vmatpush2.msra.mxu0 0.0
      %7239 = vmatprep.subr.mxu0 0.0
      %7240 = vmatpush2.msra.mxu0 0.0
      %7241 = vmatprep.subr.mxu0 0.0
      %7242 = vmatpush2.msra.mxu0 0.0
      %7243 = vmatprep.subr.mxu0 0.0
      %7244 = vmatpush2.msra.mxu0 0.0
      %7245 = vmatprep.subr.mxu0 0.0
      %7246 = vmatpush2.msra.mxu0 0.0
      %7247 = vmatprep.subr.mxu0 0.0
      %7248 = vmatpush2.msra.mxu0 0.0
      %7249 = vmatprep.subr.mxu0 0.0
      %7250 = vmatpush2.msra.mxu0 0.0
      %7251 = vmatprep.subr.mxu0 0.0
      %7252 = vmatpush2.msra.mxu0 0.0
      %7253 = vmatprep.subr.mxu0 0.0
      %7254 = vmatpush2.msra.mxu0 0.0
      %7255 = vmatprep.subr.mxu0 0.0
      %7256 = vmatpush2.msra.mxu0 0.0
      %7257 = vmatprep.subr.mxu0 0.0
      %7258 = vmatpush2.msra.mxu0 0.0
      %7259 = vmatprep.subr.mxu0 0.0
      %7260 = vmatpush2.msra.mxu0 0.0
      %7261 = vmatprep.subr.mxu0 0.0
      %7262 = vmatpush2.msra.mxu0 0.0
      %7263 = vmatprep.mubr.f32.mxu0 0.0
      %7264 = vmatmul.mubr.f32.gmra.mxu0 %v7176
      %v7265 = vpop.f32.mrf.mxu0
      %v7266 = vadd.f32 %v7167, %v7265
      %v7267 = vpop.f32.mrf.mxu0
      %v7268 = vadd.f32 %v7171, %v7267
      %7269 = vmatprep.mubr.f32.mxu0 0.0
      %7270 = vmatmul.mubr.f32.gmra.mxu0 %v7179
      %v7271 = vpop.f32.mrf.mxu0
      %v7272 = vadd.f32 %v7167, %v7271
      %v7273 = vpop.f32.mrf.mxu0
      %v7274 = vadd.f32 %v7171, %v7273
      %7275 = vmatprep.mubr.f32.mxu0 0.0
      %7276 = vmatmul.mubr.f32.gmra.mxu0 %v7182
      %v7277 = vpop.f32.mrf.mxu0
      %v7278 = vadd.f32 %v7167, %v7277
      %v7279 = vpop.f32.mrf.mxu0
      %v7280 = vadd.f32 %v7171, %v7279
      %7281 = vmatprep.mubr.f32.mxu0 0.0
      %7282 = vmatmul.mubr.f32.gmra.mxu0 %v7185
      %v7283 = vpop.f32.mrf.mxu0
      %v7284 = vadd.f32 %v7167, %v7283
      %v7285 = vpop.f32.mrf.mxu0
      %v7286 = vadd.f32 %v7171, %v7285
      %7287 = vmatprep.mubr.f32.mxu0 0.0
      %7288 = vmatmul.mubr.f32.gmra.mxu0 %v7188
      %v7289 = vpop.f32.mrf.mxu0
      %v7290 = vadd.f32 %v7167, %v7289
      %v7291 = vpop.f32.mrf.mxu0
      %v7292 = vadd.f32 %v7171, %v7291
      %7293 = vmatprep.mubr.f32.mxu0 0.0
      %7294 = vmatmul.mubr.f32.gmra.mxu0 %v7191
      %v7295 = vpop.f32.mrf.mxu0
      %v7296 = vadd.f32 %v7167, %v7295
      %v7297 = vpop.f32.mrf.mxu0
      %v7298 = vadd.f32 %v7171, %v7297
      %7299 = vdwg.mxu0
      %v7300 = vmax.f32 %v7266, 0.0
      %v7301 = vmax.f32 %v7268, 0.0
      %v7302 = vmax.f32 %v7272, 0.0
      %v7303 = vmax.f32 %v7274, 0.0
      %v7304 = vmax.f32 %v7278, 0.0
      %v7305 = vmax.f32 %v7280, 0.0
      %v7306 = vmax.f32 %v7284, 0.0
      %v7307 = vmax.f32 %v7286, 0.0
      %v7308 = vmax.f32 %v7290, 0.0
      %v7309 = vmax.f32 %v7292, 0.0
      %v7310 = vmax.f32 %v7296, 0.0
      %v7311 = vmax.f32 %v7298, 0.0
      %v7312 = vld [vmem:[%s9] sm:$0xff]
      %v7313 = vld [vmem:[%s9 + $0x8] sm:$0xff]
      %v7314 = vld [vmem:[%s9 + $0x10] sm:$0xff]
      %v7315 = vld [vmem:[%s9 + $0x18] sm:$0xff]
      %v7316 = vld [vmem:[%s9 + $0x20] sm:$0xff]
      %v7317 = vld [vmem:[%s9 + $0x28] sm:$0xff]
      %v7318 = vld [vmem:[%s9 + $0x30] sm:$0xff]
      %v7319 = vld [vmem:[%s9 + $0x38] sm:$0xff]
      %v7320 = vld [vmem:[%s9 + $0x40] sm:$0xff]
      %v7321 = vld [vmem:[%s9 + $0x48] sm:$0xff]
      %v7322 = vld [vmem:[%s9 + $0x50] sm:$0xff]
      %v7323 = vld [vmem:[%s9 + $0x58] sm:$0xff]
      %v7324 = vld [vmem:[%s9 + $0x60] sm:$0xff]
      %v7325 = vld [vmem:[%s9 + $0x68] sm:$0xff]
      %v7326 = vld [vmem:[%s9 + $0x70] sm:$0xff]
      %v7327 = vld [vmem:[%s9 + $0x78] sm:$0xff]
      %v7328 = vld [vmem:[%s9 + $0x80] sm:$0xff]
      %v7329 = vld [vmem:[%s9 + $0x88] sm:$0xff]
      %v7330 = vld [vmem:[%s9 + $0x90] sm:$0xff]
      %v7331 = vld [vmem:[%s9 + $0x98] sm:$0xff]
      %v7332 = vld [vmem:[%s9 + $0xa0] sm:$0xff]
      %v7333 = vld [vmem:[%s9 + $0xa8] sm:$0xff]
      %v7334 = vld [vmem:[%s9 + $0xb0] sm:$0xff]
      %v7335 = vld [vmem:[%s9 + $0xb8] sm:$0xff]
      %v7336 = vld [vmem:[%s9 + $0xc0] sm:$0xff]
      %v7337 = vld [vmem:[%s9 + $0xc8] sm:$0xff]
      %v7338 = vld [vmem:[%s9 + $0xd0] sm:$0xff]
      %v7339 = vld [vmem:[%s9 + $0xd8] sm:$0xff]
      %v7340 = vld [vmem:[%s9 + $0xe0] sm:$0xff]
      %v7341 = vld [vmem:[%s9 + $0xe8] sm:$0xff]
      %v7342 = vld [vmem:[%s9 + $0xf0] sm:$0xff]
      %v7343 = vld [vmem:[%s9 + $0xf8] sm:$0xff]
      %v7344 = vld [vmem:[%s9 + $0x100] sm:$0xff]
      %v7345 = vld [vmem:[%s9 + $0x108] sm:$0xff]
      %v7346 = vld [vmem:[%s9 + $0x110] sm:$0xff]
      %v7347 = vld [vmem:[%s9 + $0x118] sm:$0xff]
      %v7348 = vld [vmem:[%s9 + $0x120] sm:$0xff]
      %v7349 = vld [vmem:[%s9 + $0x128] sm:$0xff]
      %v7350 = vld [vmem:[%s9 + $0x130] sm:$0xff]
      %v7351 = vld [vmem:[%s9 + $0x138] sm:$0xff]
      %v7352 = vld [vmem:[%s9 + $0x140] sm:$0xff]
      %v7353 = vld [vmem:[%s9 + $0x148] sm:$0xff]
      %v7354 = vld [vmem:[%s9 + $0x150] sm:$0xff]
      %v7355 = vld [vmem:[%s9 + $0x158] sm:$0xff]
      %v7356 = vld [vmem:[%s9 + $0x160] sm:$0xff]
      %v7357 = vld [vmem:[%s9 + $0x168] sm:$0xff]
      %s7358 = scalar_lea.vmem %s9, 368
      %v7359 = vld [vmem:[%s7358] sm:$0xff]
      %v7360 = vld [vmem:[%s7358 + $0x8] sm:$0xff]
      %v7361 = vld [vmem:[%s7358 + $0x10] sm:$0xff]
      %v7362 = vld [vmem:[%s7358 + $0x18] sm:$0xff]
      %v7363 = vld [vmem:[%s7358 + $0x20] sm:$0xff]
      %v7364 = vld [vmem:[%s7358 + $0x28] sm:$0xff]
      %v7365 = vld [vmem:[%s7358 + $0x30] sm:$0xff]
      %v7366 = vld [vmem:[%s7358 + $0x38] sm:$0xff]
      %v7367 = vld [vmem:[%s7358 + $0x40] sm:$0xff]
      %v7368 = vld [vmem:[%s7358 + $0x48] sm:$0xff]
      %v7369 = vld [vmem:[%s7358 + $0x50] sm:$0xff]
      %v7370 = vld [vmem:[%s7358 + $0x58] sm:$0xff]
      %v7371 = vld [vmem:[%s7358 + $0x60] sm:$0xff]
      %v7372 = vld [vmem:[%s7358 + $0x68] sm:$0xff]
      %v7373 = vld [vmem:[%s7358 + $0x70] sm:$0xff]
      %v7374 = vld [vmem:[%s7358 + $0x78] sm:$0xff]
      %v7375 = vld [vmem:[%s7358 + $0x80] sm:$0xff]
      %v7376 = vld [vmem:[%s7358 + $0x88] sm:$0xff]
      %v7377 = vld [vmem:[%s7358 + $0x90] sm:$0xff]
      %v7378 = vld [vmem:[%s7358 + $0x98] sm:$0xff]
      %v7379 = vld [vmem:[%s7358 + $0xa0] sm:$0xff]
      %v7380 = vld [vmem:[%s7358 + $0xa8] sm:$0xff]
      %v7381 = vld [vmem:[%s7358 + $0xb0] sm:$0xff]
      %v7382 = vld [vmem:[%s7358 + $0xb8] sm:$0xff]
      %v7383 = vld [vmem:[%s7358 + $0xc0] sm:$0xff]
      %v7384 = vld [vmem:[%s7358 + $0xc8] sm:$0xff]
      %v7385 = vld [vmem:[%s7358 + $0xd0] sm:$0xff]
      %v7386 = vld [vmem:[%s7358 + $0xd8] sm:$0xff]
      %v7387 = vld [vmem:[%s7358 + $0xe0] sm:$0xff]
      %v7388 = vld [vmem:[%s7358 + $0xe8] sm:$0xff]
      %v7389 = vld [vmem:[%s7358 + $0xf0] sm:$0xff]
      %v7390 = vld [vmem:[%s7358 + $0xf8] sm:$0xff]
      %v7391 = vld [vmem:[%s7358 + $0x100] sm:$0xff]
      %v7392 = vld [vmem:[%s7358 + $0x108] sm:$0xff]
      %v7393 = vld [vmem:[%s7358 + $0x110] sm:$0xff]
      %v7394 = vld [vmem:[%s7358 + $0x118] sm:$0xff]
      %v7395 = vld [vmem:[%s7358 + $0x120] sm:$0xff]
      %v7396 = vld [vmem:[%s7358 + $0x128] sm:$0xff]
      %v7397 = vld [vmem:[%s7358 + $0x130] sm:$0xff]
      %v7398 = vld [vmem:[%s7358 + $0x138] sm:$0xff]
      %v7399 = vld [vmem:[%s7358 + $0x140] sm:$0xff]
      %v7400 = vld [vmem:[%s7358 + $0x148] sm:$0xff]
      %v7401 = vld [vmem:[%s7358 + $0x150] sm:$0xff]
      %v7402 = vld [vmem:[%s7358 + $0x158] sm:$0xff]
      %v7403 = vld [vmem:[%s7358 + $0x160] sm:$0xff]
      %v7404 = vld [vmem:[%s7358 + $0x168] sm:$0xff]
      %v7417 = vrot.slane %v7300, 1
      %v7418 = vrot.slane %v7302, 1
      %v7419 = vsel %vm756, %v7417, %v7418
      %v7420 = vrot.slane %v7301, 1
      %v7421 = vrot.slane %v7303, 1
      %v7422 = vsel %vm756, %v7420, %v7421
      %v7423 = vrot.slane %v7304, 1
      %v7424 = vsel %vm756, %v7418, %v7423
      %v7425 = vrot.slane %v7305, 1
      %v7426 = vsel %vm756, %v7421, %v7425
      %v7427 = vrot.slane %v7306, 1
      %v7428 = vsel %vm756, %v7423, %v7427
      %v7429 = vrot.slane %v7307, 1
      %v7430 = vsel %vm756, %v7425, %v7429
      %v7431 = vrot.slane %v7308, 1
      %v7432 = vsel %vm756, %v7427, %v7431
      %v7433 = vrot.slane %v7309, 1
      %v7434 = vsel %vm756, %v7429, %v7433
      %v7435 = vrot.slane %v7310, 1
      %v7436 = vsel %vm756, %v7431, %v7435
      %v7437 = vrot.slane %v7311, 1
      %v7438 = vsel %vm756, %v7433, %v7437
      %vm7445 = vcmask 457728
      %v7446 = vsel %vm7445, %v7422, 0
      %v7448 = vsel %vm7445, %v7426, 0
      %v7450 = vsel %vm7445, %v7430, 0
      %v7452 = vsel %vm7445, %v7434, 0
      %v7454 = vsel %vm7445, %v7438, 0
      %v7456 = vsel %vm7445, %v7437, 0
      %7458 = vmatprep.subr.mxu0 %v7390
      %7459 = vmatpush1.msra.mxu0 %v7389
      %7460 = vmatprep.subr.mxu0 %v7388
      %7461 = vmatpush1.msra.mxu0 %v7387
      %7462 = vmatprep.subr.mxu0 %v7386
      %7463 = vmatpush1.msra.mxu0 %v7385
      %7464 = vmatprep.subr.mxu0 %v7384
      %7465 = vmatpush1.msra.mxu0 %v7383
      %7466 = vmatprep.subr.mxu0 %v7382
      %7467 = vmatpush1.msra.mxu0 %v7381
      %7468 = vmatprep.subr.mxu0 %v7380
      %7469 = vmatpush1.msra.mxu0 %v7379
      %7470 = vmatprep.subr.mxu0 %v7378
      %7471 = vmatpush1.msra.mxu0 %v7377
      %7472 = vmatprep.subr.mxu0 %v7376
      %7473 = vmatpush1.msra.mxu0 %v7375
      %7474 = vmatprep.subr.mxu0 %v7374
      %7475 = vmatpush1.msra.mxu0 %v7373
      %7476 = vmatprep.subr.mxu0 %v7372
      %7477 = vmatpush1.msra.mxu0 %v7371
      %7478 = vmatprep.subr.mxu0 %v7370
      %7479 = vmatpush1.msra.mxu0 %v7369
      %7480 = vmatprep.subr.mxu0 %v7368
      %7481 = vmatpush1.msra.mxu0 %v7367
      %7482 = vmatprep.subr.mxu0 %v7366
      %7483 = vmatpush1.msra.mxu0 %v7365
      %7484 = vmatprep.subr.mxu0 %v7364
      %7485 = vmatpush1.msra.mxu0 %v7363
      %7486 = vmatprep.subr.mxu0 %v7362
      %7487 = vmatpush1.msra.mxu0 %v7361
      %7488 = vmatprep.subr.mxu0 %v7360
      %7489 = vmatpush1.msra.mxu0 %v7359
      %7490 = vmatprep.subr.mxu0 0.0
      %7491 = vmatpush2.msra.mxu0 0.0
      %7492 = vmatprep.subr.mxu0 0.0
      %7493 = vmatpush2.msra.mxu0 0.0
      %7494 = vmatprep.subr.mxu0 0.0
      %7495 = vmatpush2.msra.mxu0 0.0
      %7496 = vmatprep.subr.mxu0 0.0
      %7497 = vmatpush2.msra.mxu0 0.0
      %7498 = vmatprep.subr.mxu0 0.0
      %7499 = vmatpush2.msra.mxu0 0.0
      %7500 = vmatprep.subr.mxu0 0.0
      %7501 = vmatpush2.msra.mxu0 0.0
      %7502 = vmatprep.subr.mxu0 0.0
      %7503 = vmatpush2.msra.mxu0 0.0
      %7504 = vmatprep.subr.mxu0 0.0
      %7505 = vmatpush2.msra.mxu0 0.0
      %7506 = vmatprep.subr.mxu0 0.0
      %7507 = vmatpush2.msra.mxu0 0.0
      %7508 = vmatprep.subr.mxu0 %v7404
      %7509 = vmatpush2.msra.mxu0 %v7403
      %7510 = vmatprep.subr.mxu0 %v7402
      %7511 = vmatpush2.msra.mxu0 %v7401
      %7512 = vmatprep.subr.mxu0 %v7400
      %7513 = vmatpush2.msra.mxu0 %v7399
      %7514 = vmatprep.subr.mxu0 %v7398
      %7515 = vmatpush2.msra.mxu0 %v7397
      %7516 = vmatprep.subr.mxu0 %v7396
      %7517 = vmatpush2.msra.mxu0 %v7395
      %7518 = vmatprep.subr.mxu0 %v7394
      %7519 = vmatpush2.msra.mxu0 %v7393
      %7520 = vmatprep.subr.mxu0 %v7392
      %7521 = vmatpush2.msra.mxu0 %v7391
      %7522 = vmatprep.mubr.f32.mxu0 %v7446
      %7523 = vmatmul.mubr.f32.gmra.mxu0 %v7419
      %v7524 = vpop.f32.mrf.mxu0
      %v7525 = vadd.f32 0.0, %v7524
      %v7526 = vpop.f32.mrf.mxu0
      %v7527 = vadd.f32 0.0, %v7526
      %7528 = vmatprep.mubr.f32.mxu0 %v7448
      %7529 = vmatmul.mubr.f32.gmra.mxu0 %v7424
      %v7530 = vpop.f32.mrf.mxu0
      %v7531 = vadd.f32 0.0, %v7530
      %v7532 = vpop.f32.mrf.mxu0
      %v7533 = vadd.f32 0.0, %v7532
      %7534 = vmatprep.mubr.f32.mxu0 %v7450
      %7535 = vmatmul.mubr.f32.gmra.mxu0 %v7428
      %v7536 = vpop.f32.mrf.mxu0
      %v7537 = vadd.f32 0.0, %v7536
      %v7538 = vpop.f32.mrf.mxu0
      %v7539 = vadd.f32 0.0, %v7538
      %7540 = vmatprep.mubr.f32.mxu0 %v7452
      %7541 = vmatmul.mubr.f32.gmra.mxu0 %v7432
      %v7542 = vpop.f32.mrf.mxu0
      %v7543 = vadd.f32 0.0, %v7542
      %v7544 = vpop.f32.mrf.mxu0
      %v7545 = vadd.f32 0.0, %v7544
      %7546 = vmatprep.mubr.f32.mxu0 %v7454
      %7547 = vmatmul.mubr.f32.gmra.mxu0 %v7436
      %v7548 = vpop.f32.mrf.mxu0
      %v7549 = vadd.f32 0.0, %v7548
      %v7550 = vpop.f32.mrf.mxu0
      %v7551 = vadd.f32 0.0, %v7550
      %7552 = vmatprep.mubr.f32.mxu0 %v7456
      %7553 = vmatmul.mubr.f32.gmra.mxu0 %v7435
      %v7554 = vpop.f32.mrf.mxu0
      %v7555 = vadd.f32 0.0, %v7554
      %v7556 = vpop.f32.mrf.mxu0
      %v7557 = vadd.f32 0.0, %v7556
      %7558 = vdwg.mxu0
      %v7559 = vsel %vm7445, %v7301, 0
      %v7561 = vsel %vm7445, %v7303, 0
      %v7563 = vsel %vm7445, %v7305, 0
      %v7565 = vsel %vm7445, %v7307, 0
      %v7567 = vsel %vm7445, %v7309, 0
      %v7569 = vsel %vm7445, %v7311, 0
      %7571 = vmatprep.subr.mxu0 %v7343
      %7572 = vmatpush1.msra.mxu0 %v7342
      %7573 = vmatprep.subr.mxu0 %v7341
      %7574 = vmatpush1.msra.mxu0 %v7340
      %7575 = vmatprep.subr.mxu0 %v7339
      %7576 = vmatpush1.msra.mxu0 %v7338
      %7577 = vmatprep.subr.mxu0 %v7337
      %7578 = vmatpush1.msra.mxu0 %v7336
      %7579 = vmatprep.subr.mxu0 %v7335
      %7580 = vmatpush1.msra.mxu0 %v7334
      %7581 = vmatprep.subr.mxu0 %v7333
      %7582 = vmatpush1.msra.mxu0 %v7332
      %7583 = vmatprep.subr.mxu0 %v7331
      %7584 = vmatpush1.msra.mxu0 %v7330
      %7585 = vmatprep.subr.mxu0 %v7329
      %7586 = vmatpush1.msra.mxu0 %v7328
      %7587 = vmatprep.subr.mxu0 %v7327
      %7588 = vmatpush1.msra.mxu0 %v7326
      %7589 = vmatprep.subr.mxu0 %v7325
      %7590 = vmatpush1.msra.mxu0 %v7324
      %7591 = vmatprep.subr.mxu0 %v7323
      %7592 = vmatpush1.msra.mxu0 %v7322
      %7593 = vmatprep.subr.mxu0 %v7321
      %7594 = vmatpush1.msra.mxu0 %v7320
      %7595 = vmatprep.subr.mxu0 %v7319
      %7596 = vmatpush1.msra.mxu0 %v7318
      %7597 = vmatprep.subr.mxu0 %v7317
      %7598 = vmatpush1.msra.mxu0 %v7316
      %7599 = vmatprep.subr.mxu0 %v7315
      %7600 = vmatpush1.msra.mxu0 %v7314
      %7601 = vmatprep.subr.mxu0 %v7313
      %7602 = vmatpush1.msra.mxu0 %v7312
      %7603 = vmatprep.subr.mxu0 0.0
      %7604 = vmatpush2.msra.mxu0 0.0
      %7605 = vmatprep.subr.mxu0 0.0
      %7606 = vmatpush2.msra.mxu0 0.0
      %7607 = vmatprep.subr.mxu0 0.0
      %7608 = vmatpush2.msra.mxu0 0.0
      %7609 = vmatprep.subr.mxu0 0.0
      %7610 = vmatpush2.msra.mxu0 0.0
      %7611 = vmatprep.subr.mxu0 0.0
      %7612 = vmatpush2.msra.mxu0 0.0
      %7613 = vmatprep.subr.mxu0 0.0
      %7614 = vmatpush2.msra.mxu0 0.0
      %7615 = vmatprep.subr.mxu0 0.0
      %7616 = vmatpush2.msra.mxu0 0.0
      %7617 = vmatprep.subr.mxu0 0.0
      %7618 = vmatpush2.msra.mxu0 0.0
      %7619 = vmatprep.subr.mxu0 0.0
      %7620 = vmatpush2.msra.mxu0 0.0
      %7621 = vmatprep.subr.mxu0 %v7357
      %7622 = vmatpush2.msra.mxu0 %v7356
      %7623 = vmatprep.subr.mxu0 %v7355
      %7624 = vmatpush2.msra.mxu0 %v7354
      %7625 = vmatprep.subr.mxu0 %v7353
      %7626 = vmatpush2.msra.mxu0 %v7352
      %7627 = vmatprep.subr.mxu0 %v7351
      %7628 = vmatpush2.msra.mxu0 %v7350
      %7629 = vmatprep.subr.mxu0 %v7349
      %7630 = vmatpush2.msra.mxu0 %v7348
      %7631 = vmatprep.subr.mxu0 %v7347
      %7632 = vmatpush2.msra.mxu0 %v7346
      %7633 = vmatprep.subr.mxu0 %v7345
      %7634 = vmatpush2.msra.mxu0 %v7344
      %7635 = vmatprep.mubr.f32.mxu0 %v7559
      %7636 = vmatmul.mubr.f32.gmra.mxu0 %v7300
      %v7637 = vpop.f32.mrf.mxu0
      %v7638 = vadd.f32 %v7525, %v7637
      %v7639 = vpop.f32.mrf.mxu0
      %v7640 = vadd.f32 %v7527, %v7639
      %7641 = vmatprep.mubr.f32.mxu0 %v7561
      %7642 = vmatmul.mubr.f32.gmra.mxu0 %v7302
      %v7643 = vpop.f32.mrf.mxu0
      %v7644 = vadd.f32 %v7531, %v7643
      %v7645 = vpop.f32.mrf.mxu0
      %v7646 = vadd.f32 %v7533, %v7645
      %7647 = vmatprep.mubr.f32.mxu0 %v7563
      %7648 = vmatmul.mubr.f32.gmra.mxu0 %v7304
      %v7649 = vpop.f32.mrf.mxu0
      %v7650 = vadd.f32 %v7537, %v7649
      %v7651 = vpop.f32.mrf.mxu0
      %v7652 = vadd.f32 %v7539, %v7651
      %7653 = vmatprep.mubr.f32.mxu0 %v7565
      %7654 = vmatmul.mubr.f32.gmra.mxu0 %v7306
      %v7655 = vpop.f32.mrf.mxu0
      %v7656 = vadd.f32 %v7543, %v7655
      %v7657 = vpop.f32.mrf.mxu0
      %v7658 = vadd.f32 %v7545, %v7657
      %7659 = vmatprep.mubr.f32.mxu0 %v7567
      %7660 = vmatmul.mubr.f32.gmra.mxu0 %v7308
      %v7661 = vpop.f32.mrf.mxu0
      %v7662 = vadd.f32 %v7549, %v7661
      %v7663 = vpop.f32.mrf.mxu0
      %v7664 = vadd.f32 %v7551, %v7663
      %7665 = vmatprep.mubr.f32.mxu0 %v7569
      %7666 = vmatmul.mubr.f32.gmra.mxu0 %v7310
      %v7667 = vpop.f32.mrf.mxu0
      %v7668 = vadd.f32 %v7555, %v7667
      %v7669 = vpop.f32.mrf.mxu0
      %v7670 = vadd.f32 %v7557, %v7669
      %7671 = vdwg.mxu0
      %s7672 = scalar_lea.vmem %s9, 736
      %v7673 = vld [vmem:[%s7672] sm:$0xff]
      %v7674 = vld [vmem:[%s7672 + $0x8] sm:$0xff]
      %v7675 = vld [vmem:[%s7672 + $0x10] sm:$0xff]
      %v7676 = vld [vmem:[%s7672 + $0x18] sm:$0xff]
      %v7677 = vld [vmem:[%s7672 + $0x20] sm:$0xff]
      %v7678 = vld [vmem:[%s7672 + $0x28] sm:$0xff]
      %v7679 = vld [vmem:[%s7672 + $0x30] sm:$0xff]
      %v7680 = vld [vmem:[%s7672 + $0x38] sm:$0xff]
      %v7681 = vld [vmem:[%s7672 + $0x40] sm:$0xff]
      %v7682 = vld [vmem:[%s7672 + $0x48] sm:$0xff]
      %v7683 = vld [vmem:[%s7672 + $0x50] sm:$0xff]
      %v7684 = vld [vmem:[%s7672 + $0x58] sm:$0xff]
      %v7685 = vld [vmem:[%s7672 + $0x60] sm:$0xff]
      %v7686 = vld [vmem:[%s7672 + $0x68] sm:$0xff]
      %v7687 = vld [vmem:[%s7672 + $0x70] sm:$0xff]
      %v7688 = vld [vmem:[%s7672 + $0x78] sm:$0xff]
      %v7689 = vld [vmem:[%s7672 + $0x80] sm:$0xff]
      %v7690 = vld [vmem:[%s7672 + $0x88] sm:$0xff]
      %v7691 = vld [vmem:[%s7672 + $0x90] sm:$0xff]
      %v7692 = vld [vmem:[%s7672 + $0x98] sm:$0xff]
      %v7693 = vld [vmem:[%s7672 + $0xa0] sm:$0xff]
      %v7694 = vld [vmem:[%s7672 + $0xa8] sm:$0xff]
      %v7695 = vld [vmem:[%s7672 + $0xb0] sm:$0xff]
      %v7696 = vld [vmem:[%s7672 + $0xb8] sm:$0xff]
      %v7697 = vld [vmem:[%s7672 + $0xc0] sm:$0xff]
      %v7698 = vld [vmem:[%s7672 + $0xc8] sm:$0xff]
      %v7699 = vld [vmem:[%s7672 + $0xd0] sm:$0xff]
      %v7700 = vld [vmem:[%s7672 + $0xd8] sm:$0xff]
      %v7701 = vld [vmem:[%s7672 + $0xe0] sm:$0xff]
      %v7702 = vld [vmem:[%s7672 + $0xe8] sm:$0xff]
      %v7703 = vld [vmem:[%s7672 + $0xf0] sm:$0xff]
      %v7704 = vld [vmem:[%s7672 + $0xf8] sm:$0xff]
      %v7705 = vld [vmem:[%s7672 + $0x100] sm:$0xff]
      %v7706 = vld [vmem:[%s7672 + $0x108] sm:$0xff]
      %v7707 = vld [vmem:[%s7672 + $0x110] sm:$0xff]
      %v7708 = vld [vmem:[%s7672 + $0x118] sm:$0xff]
      %v7709 = vld [vmem:[%s7672 + $0x120] sm:$0xff]
      %v7710 = vld [vmem:[%s7672 + $0x128] sm:$0xff]
      %v7711 = vld [vmem:[%s7672 + $0x130] sm:$0xff]
      %v7712 = vld [vmem:[%s7672 + $0x138] sm:$0xff]
      %v7713 = vld [vmem:[%s7672 + $0x140] sm:$0xff]
      %v7714 = vld [vmem:[%s7672 + $0x148] sm:$0xff]
      %v7715 = vld [vmem:[%s7672 + $0x150] sm:$0xff]
      %v7716 = vld [vmem:[%s7672 + $0x158] sm:$0xff]
      %v7717 = vld [vmem:[%s7672 + $0x160] sm:$0xff]
      %v7718 = vld [vmem:[%s7672 + $0x168] sm:$0xff]
      %v7719 = vrot.slane %v7300, 2
      %v7720 = vrot.slane %v7302, 2
      %v7721 = vsel %vm1845, %v7719, %v7720
      %v7722 = vrot.slane %v7301, 2
      %v7723 = vrot.slane %v7303, 2
      %v7724 = vsel %vm1845, %v7722, %v7723
      %v7725 = vrot.slane %v7304, 2
      %v7726 = vsel %vm1845, %v7720, %v7725
      %v7727 = vrot.slane %v7305, 2
      %v7728 = vsel %vm1845, %v7723, %v7727
      %v7729 = vrot.slane %v7306, 2
      %v7730 = vsel %vm1845, %v7725, %v7729
      %v7731 = vrot.slane %v7307, 2
      %v7732 = vsel %vm1845, %v7727, %v7731
      %v7733 = vrot.slane %v7308, 2
      %v7734 = vsel %vm1845, %v7729, %v7733
      %v7735 = vrot.slane %v7309, 2
      %v7736 = vsel %vm1845, %v7731, %v7735
      %v7737 = vrot.slane %v7310, 2
      %v7738 = vsel %vm1845, %v7733, %v7737
      %v7739 = vrot.slane %v7311, 2
      %v7740 = vsel %vm1845, %v7735, %v7739
      %v7747 = vsel %vm7445, %v7724, 0
      %v7749 = vsel %vm7445, %v7728, 0
      %v7751 = vsel %vm7445, %v7732, 0
      %v7753 = vsel %vm7445, %v7736, 0
      %v7755 = vsel %vm7445, %v7740, 0
      %v7757 = vsel %vm7445, %v7739, 0
      %7759 = vmatprep.subr.mxu0 %v7704
      %7760 = vmatpush1.msra.mxu0 %v7703
      %7761 = vmatprep.subr.mxu0 %v7702
      %7762 = vmatpush1.msra.mxu0 %v7701
      %7763 = vmatprep.subr.mxu0 %v7700
      %7764 = vmatpush1.msra.mxu0 %v7699
      %7765 = vmatprep.subr.mxu0 %v7698
      %7766 = vmatpush1.msra.mxu0 %v7697
      %7767 = vmatprep.subr.mxu0 %v7696
      %7768 = vmatpush1.msra.mxu0 %v7695
      %7769 = vmatprep.subr.mxu0 %v7694
      %7770 = vmatpush1.msra.mxu0 %v7693
      %7771 = vmatprep.subr.mxu0 %v7692
      %7772 = vmatpush1.msra.mxu0 %v7691
      %7773 = vmatprep.subr.mxu0 %v7690
      %7774 = vmatpush1.msra.mxu0 %v7689
      %7775 = vmatprep.subr.mxu0 %v7688
      %7776 = vmatpush1.msra.mxu0 %v7687
      %7777 = vmatprep.subr.mxu0 %v7686
      %7778 = vmatpush1.msra.mxu0 %v7685
      %7779 = vmatprep.subr.mxu0 %v7684
      %7780 = vmatpush1.msra.mxu0 %v7683
      %7781 = vmatprep.subr.mxu0 %v7682
      %7782 = vmatpush1.msra.mxu0 %v7681
      %7783 = vmatprep.subr.mxu0 %v7680
      %7784 = vmatpush1.msra.mxu0 %v7679
      %7785 = vmatprep.subr.mxu0 %v7678
      %7786 = vmatpush1.msra.mxu0 %v7677
      %7787 = vmatprep.subr.mxu0 %v7676
      %7788 = vmatpush1.msra.mxu0 %v7675
      %7789 = vmatprep.subr.mxu0 %v7674
      %7790 = vmatpush1.msra.mxu0 %v7673
      %7791 = vmatprep.subr.mxu0 0.0
      %7792 = vmatpush2.msra.mxu0 0.0
      %7793 = vmatprep.subr.mxu0 0.0
      %7794 = vmatpush2.msra.mxu0 0.0
      %7795 = vmatprep.subr.mxu0 0.0
      %7796 = vmatpush2.msra.mxu0 0.0
      %7797 = vmatprep.subr.mxu0 0.0
      %7798 = vmatpush2.msra.mxu0 0.0
      %7799 = vmatprep.subr.mxu0 0.0
      %7800 = vmatpush2.msra.mxu0 0.0
      %7801 = vmatprep.subr.mxu0 0.0
      %7802 = vmatpush2.msra.mxu0 0.0
      %7803 = vmatprep.subr.mxu0 0.0
      %7804 = vmatpush2.msra.mxu0 0.0
      %7805 = vmatprep.subr.mxu0 0.0
      %7806 = vmatpush2.msra.mxu0 0.0
      %7807 = vmatprep.subr.mxu0 0.0
      %7808 = vmatpush2.msra.mxu0 0.0
      %7809 = vmatprep.subr.mxu0 %v7718
      %7810 = vmatpush2.msra.mxu0 %v7717
      %7811 = vmatprep.subr.mxu0 %v7716
      %7812 = vmatpush2.msra.mxu0 %v7715
      %7813 = vmatprep.subr.mxu0 %v7714
      %7814 = vmatpush2.msra.mxu0 %v7713
      %7815 = vmatprep.subr.mxu0 %v7712
      %7816 = vmatpush2.msra.mxu0 %v7711
      %7817 = vmatprep.subr.mxu0 %v7710
      %7818 = vmatpush2.msra.mxu0 %v7709
      %7819 = vmatprep.subr.mxu0 %v7708
      %7820 = vmatpush2.msra.mxu0 %v7707
      %7821 = vmatprep.subr.mxu0 %v7706
      %7822 = vmatpush2.msra.mxu0 %v7705
      %7823 = vmatprep.mubr.f32.mxu0 %v7747
      %7824 = vmatmul.mubr.f32.gmra.mxu0 %v7721
      %v7825 = vpop.f32.mrf.mxu0
      %v7826 = vadd.f32 0.0, %v7825
      %v7827 = vpop.f32.mrf.mxu0
      %v7828 = vadd.f32 0.0, %v7827
      %7829 = vmatprep.mubr.f32.mxu0 %v7749
      %7830 = vmatmul.mubr.f32.gmra.mxu0 %v7726
      %v7831 = vpop.f32.mrf.mxu0
      %v7832 = vadd.f32 0.0, %v7831
      %v7833 = vpop.f32.mrf.mxu0
      %v7834 = vadd.f32 0.0, %v7833
      %7835 = vmatprep.mubr.f32.mxu0 %v7751
      %7836 = vmatmul.mubr.f32.gmra.mxu0 %v7730
      %v7837 = vpop.f32.mrf.mxu0
      %v7838 = vadd.f32 0.0, %v7837
      %v7839 = vpop.f32.mrf.mxu0
      %v7840 = vadd.f32 0.0, %v7839
      %7841 = vmatprep.mubr.f32.mxu0 %v7753
      %7842 = vmatmul.mubr.f32.gmra.mxu0 %v7734
      %v7843 = vpop.f32.mrf.mxu0
      %v7844 = vadd.f32 0.0, %v7843
      %v7845 = vpop.f32.mrf.mxu0
      %v7846 = vadd.f32 0.0, %v7845
      %7847 = vmatprep.mubr.f32.mxu0 %v7755
      %7848 = vmatmul.mubr.f32.gmra.mxu0 %v7738
      %v7849 = vpop.f32.mrf.mxu0
      %v7850 = vadd.f32 0.0, %v7849
      %v7851 = vpop.f32.mrf.mxu0
      %v7852 = vadd.f32 0.0, %v7851
      %7853 = vmatprep.mubr.f32.mxu0 %v7757
      %7854 = vmatmul.mubr.f32.gmra.mxu0 %v7737
      %v7855 = vpop.f32.mrf.mxu0
      %v7856 = vadd.f32 0.0, %v7855
      %v7857 = vpop.f32.mrf.mxu0
      %v7858 = vadd.f32 0.0, %v7857
      %7859 = vdwg.mxu0
      %v7860 = vadd.f32 %v7638, %v7826
      %v7861 = vadd.f32 %v7640, %v7828
      %v7862 = vadd.f32 %v7644, %v7832
      %v7863 = vadd.f32 %v7646, %v7834
      %v7864 = vadd.f32 %v7650, %v7838
      %v7865 = vadd.f32 %v7652, %v7840
      %v7866 = vadd.f32 %v7656, %v7844
      %v7867 = vadd.f32 %v7658, %v7846
      %v7868 = vadd.f32 %v7662, %v7850
      %v7869 = vadd.f32 %v7664, %v7852
      %v7870 = vadd.f32 %v7668, %v7856
      %v7871 = vadd.f32 %v7670, %v7858
      %v7884 = vrot.slane %v7860, 1
      %v7885 = vrot.slane %v7862, 1
      %v7886 = vsel %vm756, %v7884, %v7885
      %v7887 = vrot.slane %v7861, 1
      %v7888 = vrot.slane %v7863, 1
      %v7889 = vsel %vm756, %v7887, %v7888
      %v7890 = vrot.slane %v7864, 1
      %v7891 = vsel %vm756, %v7885, %v7890
      %v7892 = vrot.slane %v7865, 1
      %v7893 = vsel %vm756, %v7888, %v7892
      %v7894 = vrot.slane %v7866, 1
      %v7895 = vsel %vm756, %v7890, %v7894
      %v7896 = vrot.slane %v7867, 1
      %v7897 = vsel %vm756, %v7892, %v7896
      %v7898 = vrot.slane %v7868, 1
      %v7899 = vsel %vm756, %v7894, %v7898
      %v7900 = vrot.slane %v7869, 1
      %v7901 = vsel %vm756, %v7896, %v7900
      %v7902 = vrot.slane %v7870, 1
      %v7903 = vsel %vm756, %v7898, %v7902
      %v7904 = vrot.slane %v7871, 1
      %v7905 = vsel %vm756, %v7900, %v7904
      %v7918 = vmax.f32 %v7860, %v7886
      %v7919 = vmax.f32 %v7861, %v7889
      %v7920 = vmax.f32 %v7862, %v7891
      %v7921 = vmax.f32 %v7863, %v7893
      %v7922 = vmax.f32 %v7864, %v7895
      %v7923 = vmax.f32 %v7865, %v7897
      %v7924 = vmax.f32 %v7866, %v7899
      %v7925 = vmax.f32 %v7867, %v7901
      %v7926 = vmax.f32 %v7868, %v7903
      %v7927 = vmax.f32 %v7869, %v7905
      %v7928 = vmax.f32 %v7870, %v7902
      %v7929 = vmax.f32 %v7871, %v7904
      %v7930 = vld [vmem:[%s10] sm:$0xff]
      %v7931 = vld [vmem:[%s10 + $0x8] sm:$0xff]
      %v7932 = vld [vmem:[%s10 + $0x10] sm:$0xff]
      %v7933 = vld [vmem:[%s10 + $0x18] sm:$0xff]
      %v7934 = vld [vmem:[%s10 + $0x20] sm:$0xff]
      %v7935 = vld [vmem:[%s10 + $0x28] sm:$0xff]
      %v7936 = vld [vmem:[%s10 + $0x30] sm:$0xff]
      %v7937 = vld [vmem:[%s10 + $0x38] sm:$0xff]
      %v7938 = vld [vmem:[%s10 + $0x40] sm:$0xff]
      %v7939 = vld [vmem:[%s10 + $0x48] sm:$0xff]
      %v7940 = vld [vmem:[%s10 + $0x50] sm:$0xff]
      %v7941 = vld [vmem:[%s10 + $0x58] sm:$0xff]
      %v7942 = vld [vmem:[%s10 + $0x60] sm:$0xff]
      %v7943 = vld [vmem:[%s10 + $0x68] sm:$0xff]
      %v7944 = vld [vmem:[%s10 + $0x70] sm:$0xff]
      %v7945 = vld [vmem:[%s10 + $0x78] sm:$0xff]
      %v7946 = vld [vmem:[%s10 + $0x80] sm:$0xff]
      %v7947 = vld [vmem:[%s10 + $0x88] sm:$0xff]
      %v7948 = vld [vmem:[%s10 + $0x90] sm:$0xff]
      %v7949 = vld [vmem:[%s10 + $0x98] sm:$0xff]
      %v7950 = vld [vmem:[%s10 + $0xa0] sm:$0x7f]
      %vm7951 = vcmask 318464
      %v7953 = vsel %vm7951, %v7919, 0
      %v7956 = vsel %vm7951, %v7921, 0
      %v7959 = vsel %vm7951, %v7923, 0
      %v7962 = vsel %vm7951, %v7925, 0
      %v7965 = vsel %vm7951, %v7927, 0
      %v7968 = vsel %vm7951, %v7929, 0
      %v7971 = vsel %vm756, %v7950, 0
      %7973 = vmatprep.subr.mxu0 0.0
      %7974 = vmatpush1.msra.mxu0 %v7945
      %7975 = vmatprep.subr.mxu0 0.0
      %7976 = vmatpush1.msra.mxu0 %v7944
      %7977 = vmatprep.subr.mxu0 0.0
      %7978 = vmatpush1.msra.mxu0 %v7943
      %7979 = vmatprep.subr.mxu0 0.0
      %7980 = vmatpush1.msra.mxu0 %v7942
      %7981 = vmatprep.subr.mxu0 0.0
      %7982 = vmatpush1.msra.mxu0 %v7941
      %7983 = vmatprep.subr.mxu0 0.0
      %7984 = vmatpush1.msra.mxu0 %v7940
      %7985 = vmatprep.subr.mxu0 0.0
      %7986 = vmatpush1.msra.mxu0 %v7939
      %7987 = vmatprep.subr.mxu0 0.0
      %7988 = vmatpush1.msra.mxu0 %v7938
      %7989 = vmatprep.subr.mxu0 0.0
      %7990 = vmatpush1.msra.mxu0 %v7937
      %7991 = vmatprep.subr.mxu0 0.0
      %7992 = vmatpush1.msra.mxu0 %v7936
      %7993 = vmatprep.subr.mxu0 0.0
      %7994 = vmatpush1.msra.mxu0 %v7935
      %7995 = vmatprep.subr.mxu0 0.0
      %7996 = vmatpush1.msra.mxu0 %v7934
      %7997 = vmatprep.subr.mxu0 0.0
      %7998 = vmatpush1.msra.mxu0 %v7933
      %7999 = vmatprep.subr.mxu0 0.0
      %8000 = vmatpush1.msra.mxu0 %v7932
      %8001 = vmatprep.subr.mxu0 0.0
      %8002 = vmatpush1.msra.mxu0 %v7931
      %8003 = vmatprep.subr.mxu0 0.0
      %8004 = vmatpush1.msra.mxu0 %v7930
      %8005 = vmatprep.subr.mxu0 0.0
      %8006 = vmatpush2.msra.mxu0 0.0
      %8007 = vmatprep.subr.mxu0 0.0
      %8008 = vmatpush2.msra.mxu0 0.0
      %8009 = vmatprep.subr.mxu0 0.0
      %8010 = vmatpush2.msra.mxu0 0.0
      %8011 = vmatprep.subr.mxu0 0.0
      %8012 = vmatpush2.msra.mxu0 0.0
      %8013 = vmatprep.subr.mxu0 0.0
      %8014 = vmatpush2.msra.mxu0 0.0
      %8015 = vmatprep.subr.mxu0 0.0
      %8016 = vmatpush2.msra.mxu0 0.0
      %8017 = vmatprep.subr.mxu0 0.0
      %8018 = vmatpush2.msra.mxu0 0.0
      %8019 = vmatprep.subr.mxu0 0.0
      %8020 = vmatpush2.msra.mxu0 0.0
      %8021 = vmatprep.subr.mxu0 0.0
      %8022 = vmatpush2.msra.mxu0 0.0
      %8023 = vmatprep.subr.mxu0 0.0
      %8024 = vmatpush2.msra.mxu0 0.0
      %8025 = vmatprep.subr.mxu0 0.0
      %8026 = vmatpush2.msra.mxu0 0.0
      %8027 = vmatprep.subr.mxu0 0.0
      %8028 = vmatpush2.msra.mxu0 %v7971
      %8029 = vmatprep.subr.mxu0 0.0
      %8030 = vmatpush2.msra.mxu0 %v7949
      %8031 = vmatprep.subr.mxu0 0.0
      %8032 = vmatpush2.msra.mxu0 %v7948
      %8033 = vmatprep.subr.mxu0 0.0
      %8034 = vmatpush2.msra.mxu0 %v7947
      %8035 = vmatprep.subr.mxu0 0.0
      %8036 = vmatpush2.msra.mxu0 %v7946
      %8037 = vmatprep.mubr.f32.mxu0 %v7953
      %8038 = vmatmul.mubr.f32.gmra.mxu0 %v7918
      %v8039 = vpop.f32.mrf.mxu0
      %v8040 = vadd.f32 0.0, %v8039
      %v8041 = vpop.f32.mrf.mxu0
      %8042 = vmatprep.mubr.f32.mxu0 %v7956
      %8043 = vmatmul.mubr.f32.gmra.mxu0 %v7920
      %v8044 = vpop.f32.mrf.mxu0
      %v8045 = vadd.f32 0.0, %v8044
      %v8046 = vpop.f32.mrf.mxu0
      %8047 = vmatprep.mubr.f32.mxu0 %v7959
      %8048 = vmatmul.mubr.f32.gmra.mxu0 %v7922
      %v8049 = vpop.f32.mrf.mxu0
      %v8050 = vadd.f32 0.0, %v8049
      %v8051 = vpop.f32.mrf.mxu0
      %8052 = vmatprep.mubr.f32.mxu0 %v7962
      %8053 = vmatmul.mubr.f32.gmra.mxu0 %v7924
      %v8054 = vpop.f32.mrf.mxu0
      %v8055 = vadd.f32 0.0, %v8054
      %v8056 = vpop.f32.mrf.mxu0
      %8057 = vmatprep.mubr.f32.mxu0 %v7965
      %8058 = vmatmul.mubr.f32.gmra.mxu0 %v7926
      %v8059 = vpop.f32.mrf.mxu0
      %v8060 = vadd.f32 0.0, %v8059
      %v8061 = vpop.f32.mrf.mxu0
      %8062 = vmatprep.mubr.f32.mxu0 %v7968
      %8063 = vmatmul.mubr.f32.gmra.mxu0 %v7928
      %v8064 = vpop.f32.mrf.mxu0
      %v8065 = vadd.f32 0.0, %v8064
      %v8066 = vpop.f32.mrf.mxu0
      %8067 = vdwg.mxu0
      %8074 = vrot.lane.b32.xlu0 %v7918, 127
      %v8075 = vpop.permute.xlu0 %8074
      %8076 = vrot.lane.b32.xlu0 %v7919, 127
      %v8077 = vpop.permute.xlu0 %8076
      %8078 = vrot.lane.b32.xlu0 %v7920, 127
      %v8079 = vpop.permute.xlu0 %8078
      %8080 = vrot.lane.b32.xlu0 %v7921, 127
      %v8081 = vpop.permute.xlu0 %8080
      %8082 = vrot.lane.b32.xlu0 %v7922, 127
      %v8083 = vpop.permute.xlu0 %8082
      %8084 = vrot.lane.b32.xlu0 %v7923, 127
      %v8085 = vpop.permute.xlu0 %8084
      %8086 = vrot.lane.b32.xlu0 %v7924, 127
      %v8087 = vpop.permute.xlu0 %8086
      %8088 = vrot.lane.b32.xlu0 %v7925, 127
      %v8089 = vpop.permute.xlu0 %8088
      %8090 = vrot.lane.b32.xlu0 %v7926, 127
      %v8091 = vpop.permute.xlu0 %8090
      %8092 = vrot.lane.b32.xlu0 %v7927, 127
      %v8093 = vpop.permute.xlu0 %8092
      %8094 = vrot.lane.b32.xlu0 %v7928, 127
      %v8095 = vpop.permute.xlu0 %8094
      %8096 = vrot.lane.b32.xlu0 %v7929, 127
      %v8097 = vpop.permute.xlu0 %8096
      %v8098 = vsel %vm3868, %v8075, %v8077
      %v8099 = vsel %vm3868, %v8079, %v8081
      %v8100 = vsel %vm3868, %v8083, %v8085
      %v8101 = vsel %vm3868, %v8087, %v8089
      %v8102 = vsel %vm3868, %v8091, %v8093
      %v8103 = vsel %vm3868, %v8095, %v8097
      %v8110 = vsel %vm7951, %v8077, 0
      %v8112 = vsel %vm7951, %v8081, 0
      %v8114 = vsel %vm7951, %v8085, 0
      %v8116 = vsel %vm7951, %v8089, 0
      %v8118 = vsel %vm7951, %v8093, 0
      %v8120 = vsel %vm7951, %v8097, 0
      %8122 = vmatprep.subr.mxu0 0.0
      %8123 = vmatpush1.msra.mxu0 %v7945
      %8124 = vmatprep.subr.mxu0 0.0
      %8125 = vmatpush1.msra.mxu0 %v7944
      %8126 = vmatprep.subr.mxu0 0.0
      %8127 = vmatpush1.msra.mxu0 %v7943
      %8128 = vmatprep.subr.mxu0 0.0
      %8129 = vmatpush1.msra.mxu0 %v7942
      %8130 = vmatprep.subr.mxu0 0.0
      %8131 = vmatpush1.msra.mxu0 %v7941
      %8132 = vmatprep.subr.mxu0 0.0
      %8133 = vmatpush1.msra.mxu0 %v7940
      %8134 = vmatprep.subr.mxu0 0.0
      %8135 = vmatpush1.msra.mxu0 %v7939
      %8136 = vmatprep.subr.mxu0 0.0
      %8137 = vmatpush1.msra.mxu0 %v7938
      %8138 = vmatprep.subr.mxu0 0.0
      %8139 = vmatpush1.msra.mxu0 %v7937
      %8140 = vmatprep.subr.mxu0 0.0
      %8141 = vmatpush1.msra.mxu0 %v7936
      %8142 = vmatprep.subr.mxu0 0.0
      %8143 = vmatpush1.msra.mxu0 %v7935
      %8144 = vmatprep.subr.mxu0 0.0
      %8145 = vmatpush1.msra.mxu0 %v7934
      %8146 = vmatprep.subr.mxu0 0.0
      %8147 = vmatpush1.msra.mxu0 %v7933
      %8148 = vmatprep.subr.mxu0 0.0
      %8149 = vmatpush1.msra.mxu0 %v7932
      %8150 = vmatprep.subr.mxu0 0.0
      %8151 = vmatpush1.msra.mxu0 %v7931
      %8152 = vmatprep.subr.mxu0 0.0
      %8153 = vmatpush1.msra.mxu0 %v7930
      %8154 = vmatprep.subr.mxu0 0.0
      %8155 = vmatpush2.msra.mxu0 0.0
      %8156 = vmatprep.subr.mxu0 0.0
      %8157 = vmatpush2.msra.mxu0 0.0
      %8158 = vmatprep.subr.mxu0 0.0
      %8159 = vmatpush2.msra.mxu0 0.0
      %8160 = vmatprep.subr.mxu0 0.0
      %8161 = vmatpush2.msra.mxu0 0.0
      %8162 = vmatprep.subr.mxu0 0.0
      %8163 = vmatpush2.msra.mxu0 0.0
      %8164 = vmatprep.subr.mxu0 0.0
      %8165 = vmatpush2.msra.mxu0 0.0
      %8166 = vmatprep.subr.mxu0 0.0
      %8167 = vmatpush2.msra.mxu0 0.0
      %8168 = vmatprep.subr.mxu0 0.0
      %8169 = vmatpush2.msra.mxu0 0.0
      %8170 = vmatprep.subr.mxu0 0.0
      %8171 = vmatpush2.msra.mxu0 0.0
      %8172 = vmatprep.subr.mxu0 0.0
      %8173 = vmatpush2.msra.mxu0 0.0
      %8174 = vmatprep.subr.mxu0 0.0
      %8175 = vmatpush2.msra.mxu0 0.0
      %8176 = vmatprep.subr.mxu0 0.0
      %8177 = vmatpush2.msra.mxu0 %v7971
      %8178 = vmatprep.subr.mxu0 0.0
      %8179 = vmatpush2.msra.mxu0 %v7949
      %8180 = vmatprep.subr.mxu0 0.0
      %8181 = vmatpush2.msra.mxu0 %v7948
      %8182 = vmatprep.subr.mxu0 0.0
      %8183 = vmatpush2.msra.mxu0 %v7947
      %8184 = vmatprep.subr.mxu0 0.0
      %8185 = vmatpush2.msra.mxu0 %v7946
      %8186 = vmatprep.mubr.f32.mxu0 %v8110
      %8187 = vmatmul.mubr.f32.gmra.mxu0 %v8098
      %v8188 = vpop.f32.mrf.mxu0
      %v8189 = vadd.f32 0.0, %v8188
      %v8190 = vpop.f32.mrf.mxu0
      %8191 = vmatprep.mubr.f32.mxu0 %v8112
      %8192 = vmatmul.mubr.f32.gmra.mxu0 %v8099
      %v8193 = vpop.f32.mrf.mxu0
      %v8194 = vadd.f32 0.0, %v8193
      %v8195 = vpop.f32.mrf.mxu0
      %8196 = vmatprep.mubr.f32.mxu0 %v8114
      %8197 = vmatmul.mubr.f32.gmra.mxu0 %v8100
      %v8198 = vpop.f32.mrf.mxu0
      %v8199 = vadd.f32 0.0, %v8198
      %v8200 = vpop.f32.mrf.mxu0
      %8201 = vmatprep.mubr.f32.mxu0 %v8116
      %8202 = vmatmul.mubr.f32.gmra.mxu0 %v8101
      %v8203 = vpop.f32.mrf.mxu0
      %v8204 = vadd.f32 0.0, %v8203
      %v8205 = vpop.f32.mrf.mxu0
      %8206 = vmatprep.mubr.f32.mxu0 %v8118
      %8207 = vmatmul.mubr.f32.gmra.mxu0 %v8102
      %v8208 = vpop.f32.mrf.mxu0
      %v8209 = vadd.f32 0.0, %v8208
      %v8210 = vpop.f32.mrf.mxu0
      %8211 = vmatprep.mubr.f32.mxu0 %v8120
      %8212 = vmatmul.mubr.f32.gmra.mxu0 %v8103
      %v8213 = vpop.f32.mrf.mxu0
      %v8214 = vadd.f32 0.0, %v8213
      %v8215 = vpop.f32.mrf.mxu0
      %8216 = vdwg.mxu0
      %v8217 = vmax.f32 %v8040, %v8189
      %v8218 = vmax.f32 %v8045, %v8194
      %v8219 = vmax.f32 %v8050, %v8199
      %v8220 = vmax.f32 %v8055, %v8204
      %v8221 = vmax.f32 %v8060, %v8209
      %v8222 = vmax.f32 %v8065, %v8214
      %v8223 = vld [vmem:[%s11] sm:$0xff]
      %v8224 = vld [vmem:[%s11 + $0x8] sm:$0xff]
      %v8225 = vld [vmem:[%s11 + $0x10] sm:$0xf]
      %v8226 = vld [vmem:[%s12] sm:$0x1]
      %v8228 = vlaneseq
      %v8229 = vshrl.u32 %v8228, 7
      %v8230 = vsub.s32 0, %v8229
      %v8231 = vrot.slane %v8226, %v8230
      %vm8233 = vcmask 351232
      %v8235 = vsel %vm8233, %v8223, 0
      %v8238 = vsel %vm8233, %v8224, 0
      %v8241 = vsel %vm8233, %v8225, 0
      %vm8243 = vcmask 1042432
      %v8245 = vsel %vm8243, %v8222, 0
      %8247 = vmatprep.subr.mxu0 0.0
      %8248 = vmatpush1.msra.mxu0 0.0
      %8249 = vmatprep.subr.mxu0 0.0
      %8250 = vmatpush1.msra.mxu0 0.0
      %8251 = vmatprep.subr.mxu0 0.0
      %8252 = vmatpush1.msra.mxu0 0.0
      %8253 = vmatprep.subr.mxu0 0.0
      %8254 = vmatpush1.msra.mxu0 0.0
      %8255 = vmatprep.subr.mxu0 0.0
      %8256 = vmatpush1.msra.mxu0 0.0
      %8257 = vmatprep.subr.mxu0 0.0
      %8258 = vmatpush1.msra.mxu0 0.0
      %8259 = vmatprep.subr.mxu0 0.0
      %8260 = vmatpush1.msra.mxu0 0.0
      %8261 = vmatprep.subr.mxu0 0.0
      %8262 = vmatpush1.msra.mxu0 0.0
      %8263 = vmatprep.subr.mxu0 0.0
      %8264 = vmatpush1.msra.mxu0 0.0
      %8265 = vmatprep.subr.mxu0 0.0
      %8266 = vmatpush1.msra.mxu0 0.0
      %8267 = vmatprep.subr.mxu0 0.0
      %8268 = vmatpush1.msra.mxu0 %v8245
      %8269 = vmatprep.subr.mxu0 0.0
      %8270 = vmatpush1.msra.mxu0 %v8221
      %8271 = vmatprep.subr.mxu0 0.0
      %8272 = vmatpush1.msra.mxu0 %v8220
      %8273 = vmatprep.subr.mxu0 0.0
      %8274 = vmatpush1.msra.mxu0 %v8219
      %8275 = vmatprep.subr.mxu0 0.0
      %8276 = vmatpush1.msra.mxu0 %v8218
      %8277 = vmatprep.subr.mxu0 0.0
      %8278 = vmatpush1.msra.mxu0 %v8217
      %8279 = vmatprep.subr.mxu0 0.0
      %8280 = vmatpush2.msra.mxu0 0.0
      %8281 = vmatprep.subr.mxu0 0.0
      %8282 = vmatpush2.msra.mxu0 0.0
      %8283 = vmatprep.subr.mxu0 0.0
      %8284 = vmatpush2.msra.mxu0 0.0
      %8285 = vmatprep.subr.mxu0 0.0
      %8286 = vmatpush2.msra.mxu0 0.0
      %8287 = vmatprep.subr.mxu0 0.0
      %8288 = vmatpush2.msra.mxu0 0.0
      %8289 = vmatprep.subr.mxu0 0.0
      %8290 = vmatpush2.msra.mxu0 0.0
      %8291 = vmatprep.subr.mxu0 0.0
      %8292 = vmatpush2.msra.mxu0 0.0
      %8293 = vmatprep.subr.mxu0 0.0
      %8294 = vmatpush2.msra.mxu0 0.0
      %8295 = vmatprep.subr.mxu0 0.0
      %8296 = vmatpush2.msra.mxu0 0.0
      %8297 = vmatprep.subr.mxu0 0.0
      %8298 = vmatpush2.msra.mxu0 0.0
      %8299 = vmatprep.subr.mxu0 0.0
      %8300 = vmatpush2.msra.mxu0 0.0
      %8301 = vmatprep.subr.mxu0 0.0
      %8302 = vmatpush2.msra.mxu0 0.0
      %8303 = vmatprep.subr.mxu0 0.0
      %8304 = vmatpush2.msra.mxu0 0.0
      %8305 = vmatprep.subr.mxu0 0.0
      %8306 = vmatpush2.msra.mxu0 0.0
      %8307 = vmatprep.subr.mxu0 0.0
      %8308 = vmatpush2.msra.mxu0 0.0
      %8309 = vmatprep.subr.mxu0 0.0
      %8310 = vmatpush2.msra.mxu0 0.0
      %8311 = vmatprep.mubr.f32.mxu0 0.0
      %8312 = vmatmul.mubr.f32.gmra.mxu0 %v8235
      %v8313 = vpop.f32.mrf.mxu0
      %v8314 = vadd.f32 %v8231, %v8313
      %v8315 = vpop.f32.mrf.mxu0
      %8316 = vmatprep.mubr.f32.mxu0 0.0
      %8317 = vmatmul.mubr.f32.gmra.mxu0 %v8238
      %v8318 = vpop.f32.mrf.mxu0
      %v8319 = vadd.f32 %v8231, %v8318
      %v8320 = vpop.f32.mrf.mxu0
      %8321 = vmatprep.mubr.f32.mxu0 0.0
      %8322 = vmatmul.mubr.f32.gmra.mxu0 %v8241
      %v8323 = vpop.f32.mrf.mxu0
      %v8324 = vadd.f32 %v8231, %v8323
      %v8325 = vpop.f32.mrf.mxu0
      %8326 = vdwg.mxu0
      %v8327 = vmax.f32 %v8314, 0.0
      %v8328 = vmax.f32 %v8319, 0.0
      %v8329 = vmax.f32 %v8324, 0.0
      %v8330 = vld [vmem:[%s13] sm:$0xff]
      %v8331 = vld [vmem:[%s13 + $0x8] sm:$0xff]
      %v8332 = vld [vmem:[%s13 + $0x10] sm:$0xff]
      %v8333 = vld [vmem:[%s13 + $0x18] sm:$0xff]
      %v8334 = vld [vmem:[%s13 + $0x20] sm:$0xff]
      %v8335 = vld [vmem:[%s13 + $0x28] sm:$0xff]
      %v8336 = vld [vmem:[%s13 + $0x30] sm:$0xff]
      %v8337 = vld [vmem:[%s13 + $0x38] sm:$0xff]
      %v8338 = vld [vmem:[%s13 + $0x40] sm:$0xff]
      %v8339 = vld [vmem:[%s13 + $0x48] sm:$0xff]
      %v8340 = vld [vmem:[%s13 + $0x50] sm:$0xff]
      %v8341 = vld [vmem:[%s13 + $0x58] sm:$0xff]
      %v8342 = vld [vmem:[%s13 + $0x60] sm:$0xff]
      %v8343 = vld [vmem:[%s13 + $0x68] sm:$0xff]
      %v8344 = vld [vmem:[%s13 + $0x70] sm:$0xff]
      %v8345 = vld [vmem:[%s13 + $0x78] sm:$0xff]
      %v8346 = vld [vmem:[%s13 + $0x80] sm:$0xff]
      %v8347 = vld [vmem:[%s13 + $0x88] sm:$0xff]
      %v8348 = vld [vmem:[%s13 + $0x90] sm:$0xff]
      %v8349 = vld [vmem:[%s13 + $0x98] sm:$0xff]
      %v8350 = vld [vmem:[%s13 + $0xa0] sm:$0xff]
      %v8351 = vld [vmem:[%s13 + $0xa8] sm:$0xff]
      %v8352 = vld [vmem:[%s13 + $0xb0] sm:$0xff]
      %v8353 = vld [vmem:[%s13 + $0xb8] sm:$0xff]
      %v8354 = vld [vmem:[%s13 + $0xc0] sm:$0xff]
      %v8355 = vld [vmem:[%s13 + $0xc8] sm:$0xff]
      %v8356 = vld [vmem:[%s13 + $0xd0] sm:$0xff]
      %v8357 = vld [vmem:[%s13 + $0xd8] sm:$0xff]
      %v8358 = vld [vmem:[%s13 + $0xe0] sm:$0xff]
      %v8359 = vld [vmem:[%s13 + $0xe8] sm:$0xff]
      %v8360 = vld [vmem:[%s13 + $0xf0] sm:$0xff]
      %v8361 = vld [vmem:[%s13 + $0xf8] sm:$0xff]
      %v8362 = vld [vmem:[%s13 + $0x100] sm:$0xff]
      %v8363 = vld [vmem:[%s13 + $0x108] sm:$0xff]
      %v8364 = vld [vmem:[%s13 + $0x110] sm:$0xff]
      %v8365 = vld [vmem:[%s13 + $0x118] sm:$0xff]
      %v8366 = vld [vmem:[%s13 + $0x120] sm:$0xff]
      %v8367 = vld [vmem:[%s13 + $0x128] sm:$0xff]
      %v8368 = vld [vmem:[%s13 + $0x130] sm:$0xff]
      %v8369 = vld [vmem:[%s13 + $0x138] sm:$0xff]
      %s8370 = scalar_lea.vmem %s13, 320
      %v8371 = vld [vmem:[%s8370] sm:$0xff]
      %v8372 = vld [vmem:[%s8370 + $0x8] sm:$0xff]
      %v8373 = vld [vmem:[%s8370 + $0x10] sm:$0xff]
      %v8374 = vld [vmem:[%s8370 + $0x18] sm:$0xff]
      %v8375 = vld [vmem:[%s8370 + $0x20] sm:$0xff]
      %v8376 = vld [vmem:[%s8370 + $0x28] sm:$0xff]
      %v8377 = vld [vmem:[%s8370 + $0x30] sm:$0xff]
      %v8378 = vld [vmem:[%s8370 + $0x38] sm:$0xff]
      %v8379 = vld [vmem:[%s8370 + $0x40] sm:$0xff]
      %v8380 = vld [vmem:[%s8370 + $0x48] sm:$0xff]
      %v8381 = vld [vmem:[%s8370 + $0x50] sm:$0xff]
      %v8382 = vld [vmem:[%s8370 + $0x58] sm:$0xff]
      %v8383 = vld [vmem:[%s8370 + $0x60] sm:$0xff]
      %v8384 = vld [vmem:[%s8370 + $0x68] sm:$0xff]
      %v8385 = vld [vmem:[%s8370 + $0x70] sm:$0xff]
      %v8386 = vld [vmem:[%s8370 + $0x78] sm:$0xff]
      %v8387 = vld [vmem:[%s8370 + $0x80] sm:$0xff]
      %v8388 = vld [vmem:[%s8370 + $0x88] sm:$0xff]
      %v8389 = vld [vmem:[%s8370 + $0x90] sm:$0xff]
      %v8390 = vld [vmem:[%s8370 + $0x98] sm:$0xff]
      %v8391 = vld [vmem:[%s8370 + $0xa0] sm:$0xff]
      %v8392 = vld [vmem:[%s8370 + $0xa8] sm:$0xff]
      %v8393 = vld [vmem:[%s8370 + $0xb0] sm:$0xff]
      %v8394 = vld [vmem:[%s8370 + $0xb8] sm:$0xff]
      %v8395 = vld [vmem:[%s8370 + $0xc0] sm:$0xff]
      %v8396 = vld [vmem:[%s8370 + $0xc8] sm:$0xff]
      %v8397 = vld [vmem:[%s8370 + $0xd0] sm:$0xff]
      %v8398 = vld [vmem:[%s8370 + $0xd8] sm:$0xff]
      %v8399 = vld [vmem:[%s8370 + $0xe0] sm:$0xff]
      %v8400 = vld [vmem:[%s8370 + $0xe8] sm:$0xff]
      %v8401 = vld [vmem:[%s8370 + $0xf0] sm:$0xff]
      %v8402 = vld [vmem:[%s8370 + $0xf8] sm:$0xff]
      %v8403 = vld [vmem:[%s8370 + $0x100] sm:$0xff]
      %v8404 = vld [vmem:[%s8370 + $0x108] sm:$0xff]
      %v8405 = vld [vmem:[%s8370 + $0x110] sm:$0xff]
      %v8406 = vld [vmem:[%s8370 + $0x118] sm:$0xff]
      %v8407 = vld [vmem:[%s8370 + $0x120] sm:$0xff]
      %v8408 = vld [vmem:[%s8370 + $0x128] sm:$0xff]
      %v8409 = vld [vmem:[%s8370 + $0x130] sm:$0xff]
      %v8410 = vld [vmem:[%s8370 + $0x138] sm:$0xff]
      %v8412 = vrot.slane %v8327, 2
      %vm8413 = vcmask 654336
      %v8414 = vsel %vm8413, %v8412, 0
      %8416 = vmatprep.subr.mxu0 0.0
      %8417 = vmatpush1.msra.mxu0 0.0
      %8418 = vmatprep.subr.mxu0 0.0
      %8419 = vmatpush1.msra.mxu0 0.0
      %8420 = vmatprep.subr.mxu0 0.0
      %8421 = vmatpush1.msra.mxu0 0.0
      %8422 = vmatprep.subr.mxu0 0.0
      %8423 = vmatpush1.msra.mxu0 0.0
      %8424 = vmatprep.subr.mxu0 0.0
      %8425 = vmatpush1.msra.mxu0 0.0
      %8426 = vmatprep.subr.mxu0 0.0
      %8427 = vmatpush1.msra.mxu0 0.0
      %8428 = vmatprep.subr.mxu0 %v8408
      %8429 = vmatpush1.msra.mxu0 %v8407
      %8430 = vmatprep.subr.mxu0 %v8404
      %8431 = vmatpush1.msra.mxu0 %v8403
      %8432 = vmatprep.subr.mxu0 %v8400
      %8433 = vmatpush1.msra.mxu0 %v8399
      %8434 = vmatprep.subr.mxu0 %v8396
      %8435 = vmatpush1.msra.mxu0 %v8395
      %8436 = vmatprep.subr.mxu0 %v8392
      %8437 = vmatpush1.msra.mxu0 %v8391
      %8438 = vmatprep.subr.mxu0 %v8388
      %8439 = vmatpush1.msra.mxu0 %v8387
      %8440 = vmatprep.subr.mxu0 %v8384
      %8441 = vmatpush1.msra.mxu0 %v8383
      %8442 = vmatprep.subr.mxu0 %v8380
      %8443 = vmatpush1.msra.mxu0 %v8379
      %8444 = vmatprep.subr.mxu0 %v8376
      %8445 = vmatpush1.msra.mxu0 %v8375
      %8446 = vmatprep.subr.mxu0 %v8372
      %8447 = vmatpush1.msra.mxu0 %v8371
      %8448 = vmatprep.subr.mxu0 0.0
      %8449 = vmatpush2.msra.mxu0 0.0
      %8450 = vmatprep.subr.mxu0 0.0
      %8451 = vmatpush2.msra.mxu0 0.0
      %8452 = vmatprep.subr.mxu0 0.0
      %8453 = vmatpush2.msra.mxu0 0.0
      %8454 = vmatprep.subr.mxu0 0.0
      %8455 = vmatpush2.msra.mxu0 0.0
      %8456 = vmatprep.subr.mxu0 0.0
      %8457 = vmatpush2.msra.mxu0 0.0
      %8458 = vmatprep.subr.mxu0 0.0
      %8459 = vmatpush2.msra.mxu0 0.0
      %8460 = vmatprep.subr.mxu0 0.0
      %8461 = vmatpush2.msra.mxu0 0.0
      %8462 = vmatprep.subr.mxu0 0.0
      %8463 = vmatpush2.msra.mxu0 0.0
      %8464 = vmatprep.subr.mxu0 0.0
      %8465 = vmatpush2.msra.mxu0 0.0
      %8466 = vmatprep.subr.mxu0 0.0
      %8467 = vmatpush2.msra.mxu0 0.0
      %8468 = vmatprep.subr.mxu0 0.0
      %8469 = vmatpush2.msra.mxu0 0.0
      %8470 = vmatprep.subr.mxu0 0.0
      %8471 = vmatpush2.msra.mxu0 0.0
      %8472 = vmatprep.subr.mxu0 0.0
      %8473 = vmatpush2.msra.mxu0 0.0
      %8474 = vmatprep.subr.mxu0 0.0
      %8475 = vmatpush2.msra.mxu0 0.0
      %8476 = vmatprep.subr.mxu0 0.0
      %8477 = vmatpush2.msra.mxu0 0.0
      %8478 = vmatprep.subr.mxu0 0.0
      %8479 = vmatpush2.msra.mxu0 0.0
      %8480 = vmatprep.mubr.f32.mxu0 0.0
      %8481 = vmatmul.mubr.f32.gmra.mxu0 %v8414
      %v8482 = vpop.f32.mrf.mxu0
      %v8483 = vadd.f32 0.0, %v8482
      %v8484 = vpop.f32.mrf.mxu0
      %v8485 = vadd.f32 0.0, %v8484
      %8486 = vdwg.mxu0
      %8487 = vmatprep.subr.mxu0 0.0
      %8488 = vmatpush1.msra.mxu0 0.0
      %8489 = vmatprep.subr.mxu0 0.0
      %8490 = vmatpush1.msra.mxu0 0.0
      %8491 = vmatprep.subr.mxu0 0.0
      %8492 = vmatpush1.msra.mxu0 0.0
      %8493 = vmatprep.subr.mxu0 0.0
      %8494 = vmatpush1.msra.mxu0 0.0
      %8495 = vmatprep.subr.mxu0 0.0
      %8496 = vmatpush1.msra.mxu0 0.0
      %8497 = vmatprep.subr.mxu0 0.0
      %8498 = vmatpush1.msra.mxu0 0.0
      %8499 = vmatprep.subr.mxu0 %v8410
      %8500 = vmatpush1.msra.mxu0 %v8409
      %8501 = vmatprep.subr.mxu0 %v8406
      %8502 = vmatpush1.msra.mxu0 %v8405
      %8503 = vmatprep.subr.mxu0 %v8402
      %8504 = vmatpush1.msra.mxu0 %v8401
      %8505 = vmatprep.subr.mxu0 %v8398
      %8506 = vmatpush1.msra.mxu0 %v8397
      %8507 = vmatprep.subr.mxu0 %v8394
      %8508 = vmatpush1.msra.mxu0 %v8393
      %8509 = vmatprep.subr.mxu0 %v8390
      %8510 = vmatpush1.msra.mxu0 %v8389
      %8511 = vmatprep.subr.mxu0 %v8386
      %8512 = vmatpush1.msra.mxu0 %v8385
      %8513 = vmatprep.subr.mxu0 %v8382
      %8514 = vmatpush1.msra.mxu0 %v8381
      %8515 = vmatprep.subr.mxu0 %v8378
      %8516 = vmatpush1.msra.mxu0 %v8377
      %8517 = vmatprep.subr.mxu0 %v8374
      %8518 = vmatpush1.msra.mxu0 %v8373
      %8519 = vmatprep.subr.mxu0 0.0
      %8520 = vmatpush2.msra.mxu0 0.0
      %8521 = vmatprep.subr.mxu0 0.0
      %8522 = vmatpush2.msra.mxu0 0.0
      %8523 = vmatprep.subr.mxu0 0.0
      %8524 = vmatpush2.msra.mxu0 0.0
      %8525 = vmatprep.subr.mxu0 0.0
      %8526 = vmatpush2.msra.mxu0 0.0
      %8527 = vmatprep.subr.mxu0 0.0
      %8528 = vmatpush2.msra.mxu0 0.0
      %8529 = vmatprep.subr.mxu0 0.0
      %8530 = vmatpush2.msra.mxu0 0.0
      %8531 = vmatprep.subr.mxu0 0.0
      %8532 = vmatpush2.msra.mxu0 0.0
      %8533 = vmatprep.subr.mxu0 0.0
      %8534 = vmatpush2.msra.mxu0 0.0
      %8535 = vmatprep.subr.mxu0 0.0
      %8536 = vmatpush2.msra.mxu0 0.0
      %8537 = vmatprep.subr.mxu0 0.0
      %8538 = vmatpush2.msra.mxu0 0.0
      %8539 = vmatprep.subr.mxu0 0.0
      %8540 = vmatpush2.msra.mxu0 0.0
      %8541 = vmatprep.subr.mxu0 0.0
      %8542 = vmatpush2.msra.mxu0 0.0
      %8543 = vmatprep.subr.mxu0 0.0
      %8544 = vmatpush2.msra.mxu0 0.0
      %8545 = vmatprep.subr.mxu0 0.0
      %8546 = vmatpush2.msra.mxu0 0.0
      %8547 = vmatprep.subr.mxu0 0.0
      %8548 = vmatpush2.msra.mxu0 0.0
      %8549 = vmatprep.subr.mxu0 0.0
      %8550 = vmatpush2.msra.mxu0 0.0
      %8551 = vmatprep.mubr.f32.mxu0 0.0
      %8552 = vmatmul.mubr.f32.gmra.mxu0 %v8414
      %v8553 = vpop.f32.mrf.mxu0
      %v8554 = vadd.f32 0.0, %v8553
      %v8555 = vpop.f32.mrf.mxu0
      %v8556 = vadd.f32 0.0, %v8555
      %8557 = vdwg.mxu0
      %v8558 = vsel %vm8413, %v8327, 0
      %8560 = vmatprep.subr.mxu0 0.0
      %8561 = vmatpush1.msra.mxu0 0.0
      %8562 = vmatprep.subr.mxu0 0.0
      %8563 = vmatpush1.msra.mxu0 0.0
      %8564 = vmatprep.subr.mxu0 0.0
      %8565 = vmatpush1.msra.mxu0 0.0
      %8566 = vmatprep.subr.mxu0 0.0
      %8567 = vmatpush1.msra.mxu0 0.0
      %8568 = vmatprep.subr.mxu0 0.0
      %8569 = vmatpush1.msra.mxu0 0.0
      %8570 = vmatprep.subr.mxu0 0.0
      %8571 = vmatpush1.msra.mxu0 0.0
      %8572 = vmatprep.subr.mxu0 %v8367
      %8573 = vmatpush1.msra.mxu0 %v8366
      %8574 = vmatprep.subr.mxu0 %v8363
      %8575 = vmatpush1.msra.mxu0 %v8362
      %8576 = vmatprep.subr.mxu0 %v8359
      %8577 = vmatpush1.msra.mxu0 %v8358
      %8578 = vmatprep.subr.mxu0 %v8355
      %8579 = vmatpush1.msra.mxu0 %v8354
      %8580 = vmatprep.subr.mxu0 %v8351
      %8581 = vmatpush1.msra.mxu0 %v8350
      %8582 = vmatprep.subr.mxu0 %v8347
      %8583 = vmatpush1.msra.mxu0 %v8346
      %8584 = vmatprep.subr.mxu0 %v8343
      %8585 = vmatpush1.msra.mxu0 %v8342
      %8586 = vmatprep.subr.mxu0 %v8339
      %8587 = vmatpush1.msra.mxu0 %v8338
      %8588 = vmatprep.subr.mxu0 %v8335
      %8589 = vmatpush1.msra.mxu0 %v8334
      %8590 = vmatprep.subr.mxu0 %v8331
      %8591 = vmatpush1.msra.mxu0 %v8330
      %8592 = vmatprep.subr.mxu0 0.0
      %8593 = vmatpush2.msra.mxu0 0.0
      %8594 = vmatprep.subr.mxu0 0.0
      %8595 = vmatpush2.msra.mxu0 0.0
      %8596 = vmatprep.subr.mxu0 0.0
      %8597 = vmatpush2.msra.mxu0 0.0
      %8598 = vmatprep.subr.mxu0 0.0
      %8599 = vmatpush2.msra.mxu0 0.0
      %8600 = vmatprep.subr.mxu0 0.0
      %8601 = vmatpush2.msra.mxu0 0.0
      %8602 = vmatprep.subr.mxu0 0.0
      %8603 = vmatpush2.msra.mxu0 0.0
      %8604 = vmatprep.subr.mxu0 0.0
      %8605 = vmatpush2.msra.mxu0 0.0
      %8606 = vmatprep.subr.mxu0 0.0
      %8607 = vmatpush2.msra.mxu0 0.0
      %8608 = vmatprep.subr.mxu0 0.0
      %8609 = vmatpush2.msra.mxu0 0.0
      %8610 = vmatprep.subr.mxu0 0.0
      %8611 = vmatpush2.msra.mxu0 0.0
      %8612 = vmatprep.subr.mxu0 0.0
      %8613 = vmatpush2.msra.mxu0 0.0
      %8614 = vmatprep.subr.mxu0 0.0
      %8615 = vmatpush2.msra.mxu0 0.0
      %8616 = vmatprep.subr.mxu0 0.0
      %8617 = vmatpush2.msra.mxu0 0.0
      %8618 = vmatprep.subr.mxu0 0.0
      %8619 = vmatpush2.msra.mxu0 0.0
      %8620 = vmatprep.subr.mxu0 0.0
      %8621 = vmatpush2.msra.mxu0 0.0
      %8622 = vmatprep.subr.mxu0 0.0
      %8623 = vmatpush2.msra.mxu0 0.0
      %8624 = vmatprep.mubr.f32.mxu0 0.0
      %8625 = vmatmul.mubr.f32.gmra.mxu0 %v8558
      %v8626 = vpop.f32.mrf.mxu0
      %v8627 = vadd.f32 %v8483, %v8626
      %v8628 = vpop.f32.mrf.mxu0
      %v8629 = vadd.f32 %v8485, %v8628
      %8630 = vdwg.mxu0
      %8631 = vmatprep.subr.mxu0 0.0
      %8632 = vmatpush1.msra.mxu0 0.0
      %8633 = vmatprep.subr.mxu0 0.0
      %8634 = vmatpush1.msra.mxu0 0.0
      %8635 = vmatprep.subr.mxu0 0.0
      %8636 = vmatpush1.msra.mxu0 0.0
      %8637 = vmatprep.subr.mxu0 0.0
      %8638 = vmatpush1.msra.mxu0 0.0
      %8639 = vmatprep.subr.mxu0 0.0
      %8640 = vmatpush1.msra.mxu0 0.0
      %8641 = vmatprep.subr.mxu0 0.0
      %8642 = vmatpush1.msra.mxu0 0.0
      %8643 = vmatprep.subr.mxu0 %v8369
      %8644 = vmatpush1.msra.mxu0 %v8368
      %8645 = vmatprep.subr.mxu0 %v8365
      %8646 = vmatpush1.msra.mxu0 %v8364
      %8647 = vmatprep.subr.mxu0 %v8361
      %8648 = vmatpush1.msra.mxu0 %v8360
      %8649 = vmatprep.subr.mxu0 %v8357
      %8650 = vmatpush1.msra.mxu0 %v8356
      %8651 = vmatprep.subr.mxu0 %v8353
      %8652 = vmatpush1.msra.mxu0 %v8352
      %8653 = vmatprep.subr.mxu0 %v8349
      %8654 = vmatpush1.msra.mxu0 %v8348
      %8655 = vmatprep.subr.mxu0 %v8345
      %8656 = vmatpush1.msra.mxu0 %v8344
      %8657 = vmatprep.subr.mxu0 %v8341
      %8658 = vmatpush1.msra.mxu0 %v8340
      %8659 = vmatprep.subr.mxu0 %v8337
      %8660 = vmatpush1.msra.mxu0 %v8336
      %8661 = vmatprep.subr.mxu0 %v8333
      %8662 = vmatpush1.msra.mxu0 %v8332
      %8663 = vmatprep.subr.mxu0 0.0
      %8664 = vmatpush2.msra.mxu0 0.0
      %8665 = vmatprep.subr.mxu0 0.0
      %8666 = vmatpush2.msra.mxu0 0.0
      %8667 = vmatprep.subr.mxu0 0.0
      %8668 = vmatpush2.msra.mxu0 0.0
      %8669 = vmatprep.subr.mxu0 0.0
      %8670 = vmatpush2.msra.mxu0 0.0
      %8671 = vmatprep.subr.mxu0 0.0
      %8672 = vmatpush2.msra.mxu0 0.0
      %8673 = vmatprep.subr.mxu0 0.0
      %8674 = vmatpush2.msra.mxu0 0.0
      %8675 = vmatprep.subr.mxu0 0.0
      %8676 = vmatpush2.msra.mxu0 0.0
      %8677 = vmatprep.subr.mxu0 0.0
      %8678 = vmatpush2.msra.mxu0 0.0
      %8679 = vmatprep.subr.mxu0 0.0
      %8680 = vmatpush2.msra.mxu0 0.0
      %8681 = vmatprep.subr.mxu0 0.0
      %8682 = vmatpush2.msra.mxu0 0.0
      %8683 = vmatprep.subr.mxu0 0.0
      %8684 = vmatpush2.msra.mxu0 0.0
      %8685 = vmatprep.subr.mxu0 0.0
      %8686 = vmatpush2.msra.mxu0 0.0
      %8687 = vmatprep.subr.mxu0 0.0
      %8688 = vmatpush2.msra.mxu0 0.0
      %8689 = vmatprep.subr.mxu0 0.0
      %8690 = vmatpush2.msra.mxu0 0.0
      %8691 = vmatprep.subr.mxu0 0.0
      %8692 = vmatpush2.msra.mxu0 0.0
      %8693 = vmatprep.subr.mxu0 0.0
      %8694 = vmatpush2.msra.mxu0 0.0
      %8695 = vmatprep.mubr.f32.mxu0 0.0
      %8696 = vmatmul.mubr.f32.gmra.mxu0 %v8558
      %v8697 = vpop.f32.mrf.mxu0
      %v8698 = vadd.f32 %v8554, %v8697
      %v8699 = vpop.f32.mrf.mxu0
      %v8700 = vadd.f32 %v8556, %v8699
      %8701 = vdwg.mxu0
      %s8702 = scalar_lea.vmem %s13, 640
      %v8703 = vld [vmem:[%s8702] sm:$0xff]
      %v8704 = vld [vmem:[%s8702 + $0x8] sm:$0xff]
      %v8705 = vld [vmem:[%s8702 + $0x10] sm:$0xff]
      %v8706 = vld [vmem:[%s8702 + $0x18] sm:$0xff]
      %v8707 = vld [vmem:[%s8702 + $0x20] sm:$0xff]
      %v8708 = vld [vmem:[%s8702 + $0x28] sm:$0xff]
      %v8709 = vld [vmem:[%s8702 + $0x30] sm:$0xff]
      %v8710 = vld [vmem:[%s8702 + $0x38] sm:$0xff]
      %v8711 = vld [vmem:[%s8702 + $0x40] sm:$0xff]
      %v8712 = vld [vmem:[%s8702 + $0x48] sm:$0xff]
      %v8713 = vld [vmem:[%s8702 + $0x50] sm:$0xff]
      %v8714 = vld [vmem:[%s8702 + $0x58] sm:$0xff]
      %v8715 = vld [vmem:[%s8702 + $0x60] sm:$0xff]
      %v8716 = vld [vmem:[%s8702 + $0x68] sm:$0xff]
      %v8717 = vld [vmem:[%s8702 + $0x70] sm:$0xff]
      %v8718 = vld [vmem:[%s8702 + $0x78] sm:$0xff]
      %v8719 = vld [vmem:[%s8702 + $0x80] sm:$0xff]
      %v8720 = vld [vmem:[%s8702 + $0x88] sm:$0xff]
      %v8721 = vld [vmem:[%s8702 + $0x90] sm:$0xff]
      %v8722 = vld [vmem:[%s8702 + $0x98] sm:$0xff]
      %v8723 = vld [vmem:[%s8702 + $0xa0] sm:$0xff]
      %v8724 = vld [vmem:[%s8702 + $0xa8] sm:$0xff]
      %v8725 = vld [vmem:[%s8702 + $0xb0] sm:$0xff]
      %v8726 = vld [vmem:[%s8702 + $0xb8] sm:$0xff]
      %v8727 = vld [vmem:[%s8702 + $0xc0] sm:$0xff]
      %v8728 = vld [vmem:[%s8702 + $0xc8] sm:$0xff]
      %v8729 = vld [vmem:[%s8702 + $0xd0] sm:$0xff]
      %v8730 = vld [vmem:[%s8702 + $0xd8] sm:$0xff]
      %v8731 = vld [vmem:[%s8702 + $0xe0] sm:$0xff]
      %v8732 = vld [vmem:[%s8702 + $0xe8] sm:$0xff]
      %v8733 = vld [vmem:[%s8702 + $0xf0] sm:$0xff]
      %v8734 = vld [vmem:[%s8702 + $0xf8] sm:$0xff]
      %v8735 = vld [vmem:[%s8702 + $0x100] sm:$0xff]
      %v8736 = vld [vmem:[%s8702 + $0x108] sm:$0xff]
      %v8737 = vld [vmem:[%s8702 + $0x110] sm:$0xff]
      %v8738 = vld [vmem:[%s8702 + $0x118] sm:$0xff]
      %v8739 = vld [vmem:[%s8702 + $0x120] sm:$0xff]
      %v8740 = vld [vmem:[%s8702 + $0x128] sm:$0xff]
      %v8741 = vld [vmem:[%s8702 + $0x130] sm:$0xff]
      %v8742 = vld [vmem:[%s8702 + $0x138] sm:$0xff]
      %v8743 = vrot.slane %v8327, 4
      %v8744 = vsel %vm8413, %v8743, 0
      %8746 = vmatprep.subr.mxu0 0.0
      %8747 = vmatpush1.msra.mxu0 0.0
      %8748 = vmatprep.subr.mxu0 0.0
      %8749 = vmatpush1.msra.mxu0 0.0
      %8750 = vmatprep.subr.mxu0 0.0
      %8751 = vmatpush1.msra.mxu0 0.0
      %8752 = vmatprep.subr.mxu0 0.0
      %8753 = vmatpush1.msra.mxu0 0.0
      %8754 = vmatprep.subr.mxu0 0.0
      %8755 = vmatpush1.msra.mxu0 0.0
      %8756 = vmatprep.subr.mxu0 0.0
      %8757 = vmatpush1.msra.mxu0 0.0
      %8758 = vmatprep.subr.mxu0 %v8740
      %8759 = vmatpush1.msra.mxu0 %v8739
      %8760 = vmatprep.subr.mxu0 %v8736
      %8761 = vmatpush1.msra.mxu0 %v8735
      %8762 = vmatprep.subr.mxu0 %v8732
      %8763 = vmatpush1.msra.mxu0 %v8731
      %8764 = vmatprep.subr.mxu0 %v8728
      %8765 = vmatpush1.msra.mxu0 %v8727
      %8766 = vmatprep.subr.mxu0 %v8724
      %8767 = vmatpush1.msra.mxu0 %v8723
      %8768 = vmatprep.subr.mxu0 %v8720
      %8769 = vmatpush1.msra.mxu0 %v8719
      %8770 = vmatprep.subr.mxu0 %v8716
      %8771 = vmatpush1.msra.mxu0 %v8715
      %8772 = vmatprep.subr.mxu0 %v8712
      %8773 = vmatpush1.msra.mxu0 %v8711
      %8774 = vmatprep.subr.mxu0 %v8708
      %8775 = vmatpush1.msra.mxu0 %v8707
      %8776 = vmatprep.subr.mxu0 %v8704
      %8777 = vmatpush1.msra.mxu0 %v8703
      %8778 = vmatprep.subr.mxu0 0.0
      %8779 = vmatpush2.msra.mxu0 0.0
      %8780 = vmatprep.subr.mxu0 0.0
      %8781 = vmatpush2.msra.mxu0 0.0
      %8782 = vmatprep.subr.mxu0 0.0
      %8783 = vmatpush2.msra.mxu0 0.0
      %8784 = vmatprep.subr.mxu0 0.0
      %8785 = vmatpush2.msra.mxu0 0.0
      %8786 = vmatprep.subr.mxu0 0.0
      %8787 = vmatpush2.msra.mxu0 0.0
      %8788 = vmatprep.subr.mxu0 0.0
      %8789 = vmatpush2.msra.mxu0 0.0
      %8790 = vmatprep.subr.mxu0 0.0
      %8791 = vmatpush2.msra.mxu0 0.0
      %8792 = vmatprep.subr.mxu0 0.0
      %8793 = vmatpush2.msra.mxu0 0.0
      %8794 = vmatprep.subr.mxu0 0.0
      %8795 = vmatpush2.msra.mxu0 0.0
      %8796 = vmatprep.subr.mxu0 0.0
      %8797 = vmatpush2.msra.mxu0 0.0
      %8798 = vmatprep.subr.mxu0 0.0
      %8799 = vmatpush2.msra.mxu0 0.0
      %8800 = vmatprep.subr.mxu0 0.0
      %8801 = vmatpush2.msra.mxu0 0.0
      %8802 = vmatprep.subr.mxu0 0.0
      %8803 = vmatpush2.msra.mxu0 0.0
      %8804 = vmatprep.subr.mxu0 0.0
      %8805 = vmatpush2.msra.mxu0 0.0
      %8806 = vmatprep.subr.mxu0 0.0
      %8807 = vmatpush2.msra.mxu0 0.0
      %8808 = vmatprep.subr.mxu0 0.0
      %8809 = vmatpush2.msra.mxu0 0.0
      %8810 = vmatprep.mubr.f32.mxu0 0.0
      %8811 = vmatmul.mubr.f32.gmra.mxu0 %v8744
      %v8812 = vpop.f32.mrf.mxu0
      %v8813 = vadd.f32 0.0, %v8812
      %v8814 = vpop.f32.mrf.mxu0
      %v8815 = vadd.f32 0.0, %v8814
      %8816 = vdwg.mxu0
      %8817 = vmatprep.subr.mxu0 0.0
      %8818 = vmatpush1.msra.mxu0 0.0
      %8819 = vmatprep.subr.mxu0 0.0
      %8820 = vmatpush1.msra.mxu0 0.0
      %8821 = vmatprep.subr.mxu0 0.0
      %8822 = vmatpush1.msra.mxu0 0.0
      %8823 = vmatprep.subr.mxu0 0.0
      %8824 = vmatpush1.msra.mxu0 0.0
      %8825 = vmatprep.subr.mxu0 0.0
      %8826 = vmatpush1.msra.mxu0 0.0
      %8827 = vmatprep.subr.mxu0 0.0
      %8828 = vmatpush1.msra.mxu0 0.0
      %8829 = vmatprep.subr.mxu0 %v8742
      %8830 = vmatpush1.msra.mxu0 %v8741
      %8831 = vmatprep.subr.mxu0 %v8738
      %8832 = vmatpush1.msra.mxu0 %v8737
      %8833 = vmatprep.subr.mxu0 %v8734
      %8834 = vmatpush1.msra.mxu0 %v8733
      %8835 = vmatprep.subr.mxu0 %v8730
      %8836 = vmatpush1.msra.mxu0 %v8729
      %8837 = vmatprep.subr.mxu0 %v8726
      %8838 = vmatpush1.msra.mxu0 %v8725
      %8839 = vmatprep.subr.mxu0 %v8722
      %8840 = vmatpush1.msra.mxu0 %v8721
      %8841 = vmatprep.subr.mxu0 %v8718
      %8842 = vmatpush1.msra.mxu0 %v8717
      %8843 = vmatprep.subr.mxu0 %v8714
      %8844 = vmatpush1.msra.mxu0 %v8713
      %8845 = vmatprep.subr.mxu0 %v8710
      %8846 = vmatpush1.msra.mxu0 %v8709
      %8847 = vmatprep.subr.mxu0 %v8706
      %8848 = vmatpush1.msra.mxu0 %v8705
      %8849 = vmatprep.subr.mxu0 0.0
      %8850 = vmatpush2.msra.mxu0 0.0
      %8851 = vmatprep.subr.mxu0 0.0
      %8852 = vmatpush2.msra.mxu0 0.0
      %8853 = vmatprep.subr.mxu0 0.0
      %8854 = vmatpush2.msra.mxu0 0.0
      %8855 = vmatprep.subr.mxu0 0.0
      %8856 = vmatpush2.msra.mxu0 0.0
      %8857 = vmatprep.subr.mxu0 0.0
      %8858 = vmatpush2.msra.mxu0 0.0
      %8859 = vmatprep.subr.mxu0 0.0
      %8860 = vmatpush2.msra.mxu0 0.0
      %8861 = vmatprep.subr.mxu0 0.0
      %8862 = vmatpush2.msra.mxu0 0.0
      %8863 = vmatprep.subr.mxu0 0.0
      %8864 = vmatpush2.msra.mxu0 0.0
      %8865 = vmatprep.subr.mxu0 0.0
      %8866 = vmatpush2.msra.mxu0 0.0
      %8867 = vmatprep.subr.mxu0 0.0
      %8868 = vmatpush2.msra.mxu0 0.0
      %8869 = vmatprep.subr.mxu0 0.0
      %8870 = vmatpush2.msra.mxu0 0.0
      %8871 = vmatprep.subr.mxu0 0.0
      %8872 = vmatpush2.msra.mxu0 0.0
      %8873 = vmatprep.subr.mxu0 0.0
      %8874 = vmatpush2.msra.mxu0 0.0
      %8875 = vmatprep.subr.mxu0 0.0
      %8876 = vmatpush2.msra.mxu0 0.0
      %8877 = vmatprep.subr.mxu0 0.0
      %8878 = vmatpush2.msra.mxu0 0.0
      %8879 = vmatprep.subr.mxu0 0.0
      %8880 = vmatpush2.msra.mxu0 0.0
      %8881 = vmatprep.mubr.f32.mxu0 0.0
      %8882 = vmatmul.mubr.f32.gmra.mxu0 %v8744
      %v8883 = vpop.f32.mrf.mxu0
      %v8884 = vadd.f32 0.0, %v8883
      %v8885 = vpop.f32.mrf.mxu0
      %v8886 = vadd.f32 0.0, %v8885
      %8887 = vdwg.mxu0
      %v8888 = vadd.f32 %v8627, %v8813
      %v8889 = vadd.f32 %v8629, %v8815
      %v8890 = vadd.f32 %v8698, %v8884
      %v8891 = vadd.f32 %v8700, %v8886
      %s8892 = scalar_lea.vmem %s13, 960
      %v8893 = vld [vmem:[%s8892] sm:$0xff]
      %v8894 = vld [vmem:[%s8892 + $0x8] sm:$0xff]
      %v8895 = vld [vmem:[%s8892 + $0x10] sm:$0xff]
      %v8896 = vld [vmem:[%s8892 + $0x18] sm:$0xff]
      %v8897 = vld [vmem:[%s8892 + $0x20] sm:$0xff]
      %v8898 = vld [vmem:[%s8892 + $0x28] sm:$0xff]
      %v8899 = vld [vmem:[%s8892 + $0x30] sm:$0xff]
      %v8900 = vld [vmem:[%s8892 + $0x38] sm:$0xff]
      %v8901 = vld [vmem:[%s8892 + $0x40] sm:$0xff]
      %v8902 = vld [vmem:[%s8892 + $0x48] sm:$0xff]
      %v8903 = vld [vmem:[%s8892 + $0x50] sm:$0xff]
      %v8904 = vld [vmem:[%s8892 + $0x58] sm:$0xff]
      %v8905 = vld [vmem:[%s8892 + $0x60] sm:$0xff]
      %v8906 = vld [vmem:[%s8892 + $0x68] sm:$0xff]
      %v8907 = vld [vmem:[%s8892 + $0x70] sm:$0xff]
      %v8908 = vld [vmem:[%s8892 + $0x78] sm:$0xff]
      %v8909 = vld [vmem:[%s8892 + $0x80] sm:$0xff]
      %v8910 = vld [vmem:[%s8892 + $0x88] sm:$0xff]
      %v8911 = vld [vmem:[%s8892 + $0x90] sm:$0xff]
      %v8912 = vld [vmem:[%s8892 + $0x98] sm:$0xff]
      %v8913 = vld [vmem:[%s8892 + $0xa0] sm:$0xff]
      %v8914 = vld [vmem:[%s8892 + $0xa8] sm:$0xff]
      %v8915 = vld [vmem:[%s8892 + $0xb0] sm:$0xff]
      %v8916 = vld [vmem:[%s8892 + $0xb8] sm:$0xff]
      %v8917 = vld [vmem:[%s8892 + $0xc0] sm:$0xff]
      %v8918 = vld [vmem:[%s8892 + $0xc8] sm:$0xff]
      %v8919 = vld [vmem:[%s8892 + $0xd0] sm:$0xff]
      %v8920 = vld [vmem:[%s8892 + $0xd8] sm:$0xff]
      %v8921 = vld [vmem:[%s8892 + $0xe0] sm:$0xff]
      %v8922 = vld [vmem:[%s8892 + $0xe8] sm:$0xff]
      %v8923 = vld [vmem:[%s8892 + $0xf0] sm:$0xff]
      %v8924 = vld [vmem:[%s8892 + $0xf8] sm:$0xff]
      %v8925 = vld [vmem:[%s8892 + $0x100] sm:$0xff]
      %v8926 = vld [vmem:[%s8892 + $0x108] sm:$0xff]
      %v8927 = vld [vmem:[%s8892 + $0x110] sm:$0xff]
      %v8928 = vld [vmem:[%s8892 + $0x118] sm:$0xff]
      %v8929 = vld [vmem:[%s8892 + $0x120] sm:$0xff]
      %v8930 = vld [vmem:[%s8892 + $0x128] sm:$0xff]
      %v8931 = vld [vmem:[%s8892 + $0x130] sm:$0xff]
      %v8932 = vld [vmem:[%s8892 + $0x138] sm:$0xff]
      %v8933 = vrot.slane %v8327, 6
      %v8934 = vsel %vm8413, %v8933, 0
      %8936 = vmatprep.subr.mxu0 0.0
      %8937 = vmatpush1.msra.mxu0 0.0
      %8938 = vmatprep.subr.mxu0 0.0
      %8939 = vmatpush1.msra.mxu0 0.0
      %8940 = vmatprep.subr.mxu0 0.0
      %8941 = vmatpush1.msra.mxu0 0.0
      %8942 = vmatprep.subr.mxu0 0.0
      %8943 = vmatpush1.msra.mxu0 0.0
      %8944 = vmatprep.subr.mxu0 0.0
      %8945 = vmatpush1.msra.mxu0 0.0
      %8946 = vmatprep.subr.mxu0 0.0
      %8947 = vmatpush1.msra.mxu0 0.0
      %8948 = vmatprep.subr.mxu0 %v8930
      %8949 = vmatpush1.msra.mxu0 %v8929
      %8950 = vmatprep.subr.mxu0 %v8926
      %8951 = vmatpush1.msra.mxu0 %v8925
      %8952 = vmatprep.subr.mxu0 %v8922
      %8953 = vmatpush1.msra.mxu0 %v8921
      %8954 = vmatprep.subr.mxu0 %v8918
      %8955 = vmatpush1.msra.mxu0 %v8917
      %8956 = vmatprep.subr.mxu0 %v8914
      %8957 = vmatpush1.msra.mxu0 %v8913
      %8958 = vmatprep.subr.mxu0 %v8910
      %8959 = vmatpush1.msra.mxu0 %v8909
      %8960 = vmatprep.subr.mxu0 %v8906
      %8961 = vmatpush1.msra.mxu0 %v8905
      %8962 = vmatprep.subr.mxu0 %v8902
      %8963 = vmatpush1.msra.mxu0 %v8901
      %8964 = vmatprep.subr.mxu0 %v8898
      %8965 = vmatpush1.msra.mxu0 %v8897
      %8966 = vmatprep.subr.mxu0 %v8894
      %8967 = vmatpush1.msra.mxu0 %v8893
      %8968 = vmatprep.subr.mxu0 0.0
      %8969 = vmatpush2.msra.mxu0 0.0
      %8970 = vmatprep.subr.mxu0 0.0
      %8971 = vmatpush2.msra.mxu0 0.0
      %8972 = vmatprep.subr.mxu0 0.0
      %8973 = vmatpush2.msra.mxu0 0.0
      %8974 = vmatprep.subr.mxu0 0.0
      %8975 = vmatpush2.msra.mxu0 0.0
      %8976 = vmatprep.subr.mxu0 0.0
      %8977 = vmatpush2.msra.mxu0 0.0
      %8978 = vmatprep.subr.mxu0 0.0
      %8979 = vmatpush2.msra.mxu0 0.0
      %8980 = vmatprep.subr.mxu0 0.0
      %8981 = vmatpush2.msra.mxu0 0.0
      %8982 = vmatprep.subr.mxu0 0.0
      %8983 = vmatpush2.msra.mxu0 0.0
      %8984 = vmatprep.subr.mxu0 0.0
      %8985 = vmatpush2.msra.mxu0 0.0
      %8986 = vmatprep.subr.mxu0 0.0
      %8987 = vmatpush2.msra.mxu0 0.0
      %8988 = vmatprep.subr.mxu0 0.0
      %8989 = vmatpush2.msra.mxu0 0.0
      %8990 = vmatprep.subr.mxu0 0.0
      %8991 = vmatpush2.msra.mxu0 0.0
      %8992 = vmatprep.subr.mxu0 0.0
      %8993 = vmatpush2.msra.mxu0 0.0
      %8994 = vmatprep.subr.mxu0 0.0
      %8995 = vmatpush2.msra.mxu0 0.0
      %8996 = vmatprep.subr.mxu0 0.0
      %8997 = vmatpush2.msra.mxu0 0.0
      %8998 = vmatprep.subr.mxu0 0.0
      %8999 = vmatpush2.msra.mxu0 0.0
      %9000 = vmatprep.mubr.f32.mxu0 0.0
      %9001 = vmatmul.mubr.f32.gmra.mxu0 %v8934
      %v9002 = vpop.f32.mrf.mxu0
      %v9003 = vadd.f32 0.0, %v9002
      %v9004 = vpop.f32.mrf.mxu0
      %v9005 = vadd.f32 0.0, %v9004
      %9006 = vdwg.mxu0
      %9007 = vmatprep.subr.mxu0 0.0
      %9008 = vmatpush1.msra.mxu0 0.0
      %9009 = vmatprep.subr.mxu0 0.0
      %9010 = vmatpush1.msra.mxu0 0.0
      %9011 = vmatprep.subr.mxu0 0.0
      %9012 = vmatpush1.msra.mxu0 0.0
      %9013 = vmatprep.subr.mxu0 0.0
      %9014 = vmatpush1.msra.mxu0 0.0
      %9015 = vmatprep.subr.mxu0 0.0
      %9016 = vmatpush1.msra.mxu0 0.0
      %9017 = vmatprep.subr.mxu0 0.0
      %9018 = vmatpush1.msra.mxu0 0.0
      %9019 = vmatprep.subr.mxu0 %v8932
      %9020 = vmatpush1.msra.mxu0 %v8931
      %9021 = vmatprep.subr.mxu0 %v8928
      %9022 = vmatpush1.msra.mxu0 %v8927
      %9023 = vmatprep.subr.mxu0 %v8924
      %9024 = vmatpush1.msra.mxu0 %v8923
      %9025 = vmatprep.subr.mxu0 %v8920
      %9026 = vmatpush1.msra.mxu0 %v8919
      %9027 = vmatprep.subr.mxu0 %v8916
      %9028 = vmatpush1.msra.mxu0 %v8915
      %9029 = vmatprep.subr.mxu0 %v8912
      %9030 = vmatpush1.msra.mxu0 %v8911
      %9031 = vmatprep.subr.mxu0 %v8908
      %9032 = vmatpush1.msra.mxu0 %v8907
      %9033 = vmatprep.subr.mxu0 %v8904
      %9034 = vmatpush1.msra.mxu0 %v8903
      %9035 = vmatprep.subr.mxu0 %v8900
      %9036 = vmatpush1.msra.mxu0 %v8899
      %9037 = vmatprep.subr.mxu0 %v8896
      %9038 = vmatpush1.msra.mxu0 %v8895
      %9039 = vmatprep.subr.mxu0 0.0
      %9040 = vmatpush2.msra.mxu0 0.0
      %9041 = vmatprep.subr.mxu0 0.0
      %9042 = vmatpush2.msra.mxu0 0.0
      %9043 = vmatprep.subr.mxu0 0.0
      %9044 = vmatpush2.msra.mxu0 0.0
      %9045 = vmatprep.subr.mxu0 0.0
      %9046 = vmatpush2.msra.mxu0 0.0
      %9047 = vmatprep.subr.mxu0 0.0
      %9048 = vmatpush2.msra.mxu0 0.0
      %9049 = vmatprep.subr.mxu0 0.0
      %9050 = vmatpush2.msra.mxu0 0.0
      %9051 = vmatprep.subr.mxu0 0.0
      %9052 = vmatpush2.msra.mxu0 0.0
      %9053 = vmatprep.subr.mxu0 0.0
      %9054 = vmatpush2.msra.mxu0 0.0
      %9055 = vmatprep.subr.mxu0 0.0
      %9056 = vmatpush2.msra.mxu0 0.0
      %9057 = vmatprep.subr.mxu0 0.0
      %9058 = vmatpush2.msra.mxu0 0.0
      %9059 = vmatprep.subr.mxu0 0.0
      %9060 = vmatpush2.msra.mxu0 0.0
      %9061 = vmatprep.subr.mxu0 0.0
      %9062 = vmatpush2.msra.mxu0 0.0
      %9063 = vmatprep.subr.mxu0 0.0
      %9064 = vmatpush2.msra.mxu0 0.0
      %9065 = vmatprep.subr.mxu0 0.0
      %9066 = vmatpush2.msra.mxu0 0.0
      %9067 = vmatprep.subr.mxu0 0.0
      %9068 = vmatpush2.msra.mxu0 0.0
      %9069 = vmatprep.subr.mxu0 0.0
      %9070 = vmatpush2.msra.mxu0 0.0
      %9071 = vmatprep.mubr.f32.mxu0 0.0
      %9072 = vmatmul.mubr.f32.gmra.mxu0 %v8934
      %v9073 = vpop.f32.mrf.mxu0
      %v9074 = vadd.f32 0.0, %v9073
      %v9075 = vpop.f32.mrf.mxu0
      %v9076 = vadd.f32 0.0, %v9075
      %9077 = vdwg.mxu0
      %v9078 = vadd.f32 %v8888, %v9003
      %v9079 = vadd.f32 %v8889, %v9005
      %v9080 = vadd.f32 %v8890, %v9074
      %v9081 = vadd.f32 %v8891, %v9076
      %s9082 = scalar_lea.vmem %s13, 1280
      %v9083 = vld [vmem:[%s9082] sm:$0xff]
      %v9084 = vld [vmem:[%s9082 + $0x8] sm:$0xff]
      %v9085 = vld [vmem:[%s9082 + $0x10] sm:$0xff]
      %v9086 = vld [vmem:[%s9082 + $0x18] sm:$0xff]
      %v9087 = vld [vmem:[%s9082 + $0x20] sm:$0xff]
      %v9088 = vld [vmem:[%s9082 + $0x28] sm:$0xff]
      %v9089 = vld [vmem:[%s9082 + $0x30] sm:$0xff]
      %v9090 = vld [vmem:[%s9082 + $0x38] sm:$0xff]
      %v9091 = vld [vmem:[%s9082 + $0x40] sm:$0xff]
      %v9092 = vld [vmem:[%s9082 + $0x48] sm:$0xff]
      %v9093 = vld [vmem:[%s9082 + $0x50] sm:$0xff]
      %v9094 = vld [vmem:[%s9082 + $0x58] sm:$0xff]
      %v9095 = vld [vmem:[%s9082 + $0x60] sm:$0xff]
      %v9096 = vld [vmem:[%s9082 + $0x68] sm:$0xff]
      %v9097 = vld [vmem:[%s9082 + $0x70] sm:$0xff]
      %v9098 = vld [vmem:[%s9082 + $0x78] sm:$0xff]
      %v9099 = vld [vmem:[%s9082 + $0x80] sm:$0xff]
      %v9100 = vld [vmem:[%s9082 + $0x88] sm:$0xff]
      %v9101 = vld [vmem:[%s9082 + $0x90] sm:$0xff]
      %v9102 = vld [vmem:[%s9082 + $0x98] sm:$0xff]
      %v9103 = vld [vmem:[%s9082 + $0xa0] sm:$0xff]
      %v9104 = vld [vmem:[%s9082 + $0xa8] sm:$0xff]
      %v9105 = vld [vmem:[%s9082 + $0xb0] sm:$0xff]
      %v9106 = vld [vmem:[%s9082 + $0xb8] sm:$0xff]
      %v9107 = vld [vmem:[%s9082 + $0xc0] sm:$0xff]
      %v9108 = vld [vmem:[%s9082 + $0xc8] sm:$0xff]
      %v9109 = vld [vmem:[%s9082 + $0xd0] sm:$0xff]
      %v9110 = vld [vmem:[%s9082 + $0xd8] sm:$0xff]
      %v9111 = vld [vmem:[%s9082 + $0xe0] sm:$0xff]
      %v9112 = vld [vmem:[%s9082 + $0xe8] sm:$0xff]
      %v9113 = vld [vmem:[%s9082 + $0xf0] sm:$0xff]
      %v9114 = vld [vmem:[%s9082 + $0xf8] sm:$0xff]
      %v9115 = vld [vmem:[%s9082 + $0x100] sm:$0xff]
      %v9116 = vld [vmem:[%s9082 + $0x108] sm:$0xff]
      %v9117 = vld [vmem:[%s9082 + $0x110] sm:$0xff]
      %v9118 = vld [vmem:[%s9082 + $0x118] sm:$0xff]
      %v9119 = vld [vmem:[%s9082 + $0x120] sm:$0xff]
      %v9120 = vld [vmem:[%s9082 + $0x128] sm:$0xff]
      %v9121 = vld [vmem:[%s9082 + $0x130] sm:$0xff]
      %v9122 = vld [vmem:[%s9082 + $0x138] sm:$0xff]
      %v9124 = vsel %vm8413, %v8328, 0
      %9126 = vmatprep.subr.mxu0 0.0
      %9127 = vmatpush1.msra.mxu0 0.0
      %9128 = vmatprep.subr.mxu0 0.0
      %9129 = vmatpush1.msra.mxu0 0.0
      %9130 = vmatprep.subr.mxu0 0.0
      %9131 = vmatpush1.msra.mxu0 0.0
      %9132 = vmatprep.subr.mxu0 0.0
      %9133 = vmatpush1.msra.mxu0 0.0
      %9134 = vmatprep.subr.mxu0 0.0
      %9135 = vmatpush1.msra.mxu0 0.0
      %9136 = vmatprep.subr.mxu0 0.0
      %9137 = vmatpush1.msra.mxu0 0.0
      %9138 = vmatprep.subr.mxu0 %v9120
      %9139 = vmatpush1.msra.mxu0 %v9119
      %9140 = vmatprep.subr.mxu0 %v9116
      %9141 = vmatpush1.msra.mxu0 %v9115
      %9142 = vmatprep.subr.mxu0 %v9112
      %9143 = vmatpush1.msra.mxu0 %v9111
      %9144 = vmatprep.subr.mxu0 %v9108
      %9145 = vmatpush1.msra.mxu0 %v9107
      %9146 = vmatprep.subr.mxu0 %v9104
      %9147 = vmatpush1.msra.mxu0 %v9103
      %9148 = vmatprep.subr.mxu0 %v9100
      %9149 = vmatpush1.msra.mxu0 %v9099
      %9150 = vmatprep.subr.mxu0 %v9096
      %9151 = vmatpush1.msra.mxu0 %v9095
      %9152 = vmatprep.subr.mxu0 %v9092
      %9153 = vmatpush1.msra.mxu0 %v9091
      %9154 = vmatprep.subr.mxu0 %v9088
      %9155 = vmatpush1.msra.mxu0 %v9087
      %9156 = vmatprep.subr.mxu0 %v9084
      %9157 = vmatpush1.msra.mxu0 %v9083
      %9158 = vmatprep.subr.mxu0 0.0
      %9159 = vmatpush2.msra.mxu0 0.0
      %9160 = vmatprep.subr.mxu0 0.0
      %9161 = vmatpush2.msra.mxu0 0.0
      %9162 = vmatprep.subr.mxu0 0.0
      %9163 = vmatpush2.msra.mxu0 0.0
      %9164 = vmatprep.subr.mxu0 0.0
      %9165 = vmatpush2.msra.mxu0 0.0
      %9166 = vmatprep.subr.mxu0 0.0
      %9167 = vmatpush2.msra.mxu0 0.0
      %9168 = vmatprep.subr.mxu0 0.0
      %9169 = vmatpush2.msra.mxu0 0.0
      %9170 = vmatprep.subr.mxu0 0.0
      %9171 = vmatpush2.msra.mxu0 0.0
      %9172 = vmatprep.subr.mxu0 0.0
      %9173 = vmatpush2.msra.mxu0 0.0
      %9174 = vmatprep.subr.mxu0 0.0
      %9175 = vmatpush2.msra.mxu0 0.0
      %9176 = vmatprep.subr.mxu0 0.0
      %9177 = vmatpush2.msra.mxu0 0.0
      %9178 = vmatprep.subr.mxu0 0.0
      %9179 = vmatpush2.msra.mxu0 0.0
      %9180 = vmatprep.subr.mxu0 0.0
      %9181 = vmatpush2.msra.mxu0 0.0
      %9182 = vmatprep.subr.mxu0 0.0
      %9183 = vmatpush2.msra.mxu0 0.0
      %9184 = vmatprep.subr.mxu0 0.0
      %9185 = vmatpush2.msra.mxu0 0.0
      %9186 = vmatprep.subr.mxu0 0.0
      %9187 = vmatpush2.msra.mxu0 0.0
      %9188 = vmatprep.subr.mxu0 0.0
      %9189 = vmatpush2.msra.mxu0 0.0
      %9190 = vmatprep.mubr.f32.mxu0 0.0
      %9191 = vmatmul.mubr.f32.gmra.mxu0 %v9124
      %v9192 = vpop.f32.mrf.mxu0
      %v9193 = vadd.f32 0.0, %v9192
      %v9194 = vpop.f32.mrf.mxu0
      %v9195 = vadd.f32 0.0, %v9194
      %9196 = vdwg.mxu0
      %9197 = vmatprep.subr.mxu0 0.0
      %9198 = vmatpush1.msra.mxu0 0.0
      %9199 = vmatprep.subr.mxu0 0.0
      %9200 = vmatpush1.msra.mxu0 0.0
      %9201 = vmatprep.subr.mxu0 0.0
      %9202 = vmatpush1.msra.mxu0 0.0
      %9203 = vmatprep.subr.mxu0 0.0
      %9204 = vmatpush1.msra.mxu0 0.0
      %9205 = vmatprep.subr.mxu0 0.0
      %9206 = vmatpush1.msra.mxu0 0.0
      %9207 = vmatprep.subr.mxu0 0.0
      %9208 = vmatpush1.msra.mxu0 0.0
      %9209 = vmatprep.subr.mxu0 %v9122
      %9210 = vmatpush1.msra.mxu0 %v9121
      %9211 = vmatprep.subr.mxu0 %v9118
      %9212 = vmatpush1.msra.mxu0 %v9117
      %9213 = vmatprep.subr.mxu0 %v9114
      %9214 = vmatpush1.msra.mxu0 %v9113
      %9215 = vmatprep.subr.mxu0 %v9110
      %9216 = vmatpush1.msra.mxu0 %v9109
      %9217 = vmatprep.subr.mxu0 %v9106
      %9218 = vmatpush1.msra.mxu0 %v9105
      %9219 = vmatprep.subr.mxu0 %v9102
      %9220 = vmatpush1.msra.mxu0 %v9101
      %9221 = vmatprep.subr.mxu0 %v9098
      %9222 = vmatpush1.msra.mxu0 %v9097
      %9223 = vmatprep.subr.mxu0 %v9094
      %9224 = vmatpush1.msra.mxu0 %v9093
      %9225 = vmatprep.subr.mxu0 %v9090
      %9226 = vmatpush1.msra.mxu0 %v9089
      %9227 = vmatprep.subr.mxu0 %v9086
      %9228 = vmatpush1.msra.mxu0 %v9085
      %9229 = vmatprep.subr.mxu0 0.0
      %9230 = vmatpush2.msra.mxu0 0.0
      %9231 = vmatprep.subr.mxu0 0.0
      %9232 = vmatpush2.msra.mxu0 0.0
      %9233 = vmatprep.subr.mxu0 0.0
      %9234 = vmatpush2.msra.mxu0 0.0
      %9235 = vmatprep.subr.mxu0 0.0
      %9236 = vmatpush2.msra.mxu0 0.0
      %9237 = vmatprep.subr.mxu0 0.0
      %9238 = vmatpush2.msra.mxu0 0.0
      %9239 = vmatprep.subr.mxu0 0.0
      %9240 = vmatpush2.msra.mxu0 0.0
      %9241 = vmatprep.subr.mxu0 0.0
      %9242 = vmatpush2.msra.mxu0 0.0
      %9243 = vmatprep.subr.mxu0 0.0
      %9244 = vmatpush2.msra.mxu0 0.0
      %9245 = vmatprep.subr.mxu0 0.0
      %9246 = vmatpush2.msra.mxu0 0.0
      %9247 = vmatprep.subr.mxu0 0.0
      %9248 = vmatpush2.msra.mxu0 0.0
      %9249 = vmatprep.subr.mxu0 0.0
      %9250 = vmatpush2.msra.mxu0 0.0
      %9251 = vmatprep.subr.mxu0 0.0
      %9252 = vmatpush2.msra.mxu0 0.0
      %9253 = vmatprep.subr.mxu0 0.0
      %9254 = vmatpush2.msra.mxu0 0.0
      %9255 = vmatprep.subr.mxu0 0.0
      %9256 = vmatpush2.msra.mxu0 0.0
      %9257 = vmatprep.subr.mxu0 0.0
      %9258 = vmatpush2.msra.mxu0 0.0
      %9259 = vmatprep.subr.mxu0 0.0
      %9260 = vmatpush2.msra.mxu0 0.0
      %9261 = vmatprep.mubr.f32.mxu0 0.0
      %9262 = vmatmul.mubr.f32.gmra.mxu0 %v9124
      %v9263 = vpop.f32.mrf.mxu0
      %v9264 = vadd.f32 0.0, %v9263
      %v9265 = vpop.f32.mrf.mxu0
      %v9266 = vadd.f32 0.0, %v9265
      %9267 = vdwg.mxu0
      %v9268 = vadd.f32 %v9078, %v9193
      %v9269 = vadd.f32 %v9079, %v9195
      %v9270 = vadd.f32 %v9080, %v9264
      %v9271 = vadd.f32 %v9081, %v9266
      %s9272 = scalar_lea.vmem %s13, 1600
      %v9273 = vld [vmem:[%s9272] sm:$0xff]
      %v9274 = vld [vmem:[%s9272 + $0x8] sm:$0xff]
      %v9275 = vld [vmem:[%s9272 + $0x10] sm:$0xff]
      %v9276 = vld [vmem:[%s9272 + $0x18] sm:$0xff]
      %v9277 = vld [vmem:[%s9272 + $0x20] sm:$0xff]
      %v9278 = vld [vmem:[%s9272 + $0x28] sm:$0xff]
      %v9279 = vld [vmem:[%s9272 + $0x30] sm:$0xff]
      %v9280 = vld [vmem:[%s9272 + $0x38] sm:$0xff]
      %v9281 = vld [vmem:[%s9272 + $0x40] sm:$0xff]
      %v9282 = vld [vmem:[%s9272 + $0x48] sm:$0xff]
      %v9283 = vld [vmem:[%s9272 + $0x50] sm:$0xff]
      %v9284 = vld [vmem:[%s9272 + $0x58] sm:$0xff]
      %v9285 = vld [vmem:[%s9272 + $0x60] sm:$0xff]
      %v9286 = vld [vmem:[%s9272 + $0x68] sm:$0xff]
      %v9287 = vld [vmem:[%s9272 + $0x70] sm:$0xff]
      %v9288 = vld [vmem:[%s9272 + $0x78] sm:$0xff]
      %v9289 = vld [vmem:[%s9272 + $0x80] sm:$0xff]
      %v9290 = vld [vmem:[%s9272 + $0x88] sm:$0xff]
      %v9291 = vld [vmem:[%s9272 + $0x90] sm:$0xff]
      %v9292 = vld [vmem:[%s9272 + $0x98] sm:$0xff]
      %v9293 = vld [vmem:[%s9272 + $0xa0] sm:$0xff]
      %v9294 = vld [vmem:[%s9272 + $0xa8] sm:$0xff]
      %v9295 = vld [vmem:[%s9272 + $0xb0] sm:$0xff]
      %v9296 = vld [vmem:[%s9272 + $0xb8] sm:$0xff]
      %v9297 = vld [vmem:[%s9272 + $0xc0] sm:$0xff]
      %v9298 = vld [vmem:[%s9272 + $0xc8] sm:$0xff]
      %v9299 = vld [vmem:[%s9272 + $0xd0] sm:$0xff]
      %v9300 = vld [vmem:[%s9272 + $0xd8] sm:$0xff]
      %v9301 = vld [vmem:[%s9272 + $0xe0] sm:$0xff]
      %v9302 = vld [vmem:[%s9272 + $0xe8] sm:$0xff]
      %v9303 = vld [vmem:[%s9272 + $0xf0] sm:$0xff]
      %v9304 = vld [vmem:[%s9272 + $0xf8] sm:$0xff]
      %v9305 = vld [vmem:[%s9272 + $0x100] sm:$0xff]
      %v9306 = vld [vmem:[%s9272 + $0x108] sm:$0xff]
      %v9307 = vld [vmem:[%s9272 + $0x110] sm:$0xff]
      %v9308 = vld [vmem:[%s9272 + $0x118] sm:$0xff]
      %v9309 = vld [vmem:[%s9272 + $0x120] sm:$0xff]
      %v9310 = vld [vmem:[%s9272 + $0x128] sm:$0xff]
      %v9311 = vld [vmem:[%s9272 + $0x130] sm:$0xff]
      %v9312 = vld [vmem:[%s9272 + $0x138] sm:$0xff]
      %v9313 = vrot.slane %v8328, 2
      %v9314 = vsel %vm8413, %v9313, 0
      %9316 = vmatprep.subr.mxu0 0.0
      %9317 = vmatpush1.msra.mxu0 0.0
      %9318 = vmatprep.subr.mxu0 0.0
      %9319 = vmatpush1.msra.mxu0 0.0
      %9320 = vmatprep.subr.mxu0 0.0
      %9321 = vmatpush1.msra.mxu0 0.0
      %9322 = vmatprep.subr.mxu0 0.0
      %9323 = vmatpush1.msra.mxu0 0.0
      %9324 = vmatprep.subr.mxu0 0.0
      %9325 = vmatpush1.msra.mxu0 0.0
      %9326 = vmatprep.subr.mxu0 0.0
      %9327 = vmatpush1.msra.mxu0 0.0
      %9328 = vmatprep.subr.mxu0 %v9310
      %9329 = vmatpush1.msra.mxu0 %v9309
      %9330 = vmatprep.subr.mxu0 %v9306
      %9331 = vmatpush1.msra.mxu0 %v9305
      %9332 = vmatprep.subr.mxu0 %v9302
      %9333 = vmatpush1.msra.mxu0 %v9301
      %9334 = vmatprep.subr.mxu0 %v9298
      %9335 = vmatpush1.msra.mxu0 %v9297
      %9336 = vmatprep.subr.mxu0 %v9294
      %9337 = vmatpush1.msra.mxu0 %v9293
      %9338 = vmatprep.subr.mxu0 %v9290
      %9339 = vmatpush1.msra.mxu0 %v9289
      %9340 = vmatprep.subr.mxu0 %v9286
      %9341 = vmatpush1.msra.mxu0 %v9285
      %9342 = vmatprep.subr.mxu0 %v9282
      %9343 = vmatpush1.msra.mxu0 %v9281
      %9344 = vmatprep.subr.mxu0 %v9278
      %9345 = vmatpush1.msra.mxu0 %v9277
      %9346 = vmatprep.subr.mxu0 %v9274
      %9347 = vmatpush1.msra.mxu0 %v9273
      %9348 = vmatprep.subr.mxu0 0.0
      %9349 = vmatpush2.msra.mxu0 0.0
      %9350 = vmatprep.subr.mxu0 0.0
      %9351 = vmatpush2.msra.mxu0 0.0
      %9352 = vmatprep.subr.mxu0 0.0
      %9353 = vmatpush2.msra.mxu0 0.0
      %9354 = vmatprep.subr.mxu0 0.0
      %9355 = vmatpush2.msra.mxu0 0.0
      %9356 = vmatprep.subr.mxu0 0.0
      %9357 = vmatpush2.msra.mxu0 0.0
      %9358 = vmatprep.subr.mxu0 0.0
      %9359 = vmatpush2.msra.mxu0 0.0
      %9360 = vmatprep.subr.mxu0 0.0
      %9361 = vmatpush2.msra.mxu0 0.0
      %9362 = vmatprep.subr.mxu0 0.0
      %9363 = vmatpush2.msra.mxu0 0.0
      %9364 = vmatprep.subr.mxu0 0.0
      %9365 = vmatpush2.msra.mxu0 0.0
      %9366 = vmatprep.subr.mxu0 0.0
      %9367 = vmatpush2.msra.mxu0 0.0
      %9368 = vmatprep.subr.mxu0 0.0
      %9369 = vmatpush2.msra.mxu0 0.0
      %9370 = vmatprep.subr.mxu0 0.0
      %9371 = vmatpush2.msra.mxu0 0.0
      %9372 = vmatprep.subr.mxu0 0.0
      %9373 = vmatpush2.msra.mxu0 0.0
      %9374 = vmatprep.subr.mxu0 0.0
      %9375 = vmatpush2.msra.mxu0 0.0
      %9376 = vmatprep.subr.mxu0 0.0
      %9377 = vmatpush2.msra.mxu0 0.0
      %9378 = vmatprep.subr.mxu0 0.0
      %9379 = vmatpush2.msra.mxu0 0.0
      %9380 = vmatprep.mubr.f32.mxu0 0.0
      %9381 = vmatmul.mubr.f32.gmra.mxu0 %v9314
      %v9382 = vpop.f32.mrf.mxu0
      %v9383 = vadd.f32 0.0, %v9382
      %v9384 = vpop.f32.mrf.mxu0
      %v9385 = vadd.f32 0.0, %v9384
      %9386 = vdwg.mxu0
      %9387 = vmatprep.subr.mxu0 0.0
      %9388 = vmatpush1.msra.mxu0 0.0
      %9389 = vmatprep.subr.mxu0 0.0
      %9390 = vmatpush1.msra.mxu0 0.0
      %9391 = vmatprep.subr.mxu0 0.0
      %9392 = vmatpush1.msra.mxu0 0.0
      %9393 = vmatprep.subr.mxu0 0.0
      %9394 = vmatpush1.msra.mxu0 0.0
      %9395 = vmatprep.subr.mxu0 0.0
      %9396 = vmatpush1.msra.mxu0 0.0
      %9397 = vmatprep.subr.mxu0 0.0
      %9398 = vmatpush1.msra.mxu0 0.0
      %9399 = vmatprep.subr.mxu0 %v9312
      %9400 = vmatpush1.msra.mxu0 %v9311
      %9401 = vmatprep.subr.mxu0 %v9308
      %9402 = vmatpush1.msra.mxu0 %v9307
      %9403 = vmatprep.subr.mxu0 %v9304
      %9404 = vmatpush1.msra.mxu0 %v9303
      %9405 = vmatprep.subr.mxu0 %v9300
      %9406 = vmatpush1.msra.mxu0 %v9299
      %9407 = vmatprep.subr.mxu0 %v9296
      %9408 = vmatpush1.msra.mxu0 %v9295
      %9409 = vmatprep.subr.mxu0 %v9292
      %9410 = vmatpush1.msra.mxu0 %v9291
      %9411 = vmatprep.subr.mxu0 %v9288
      %9412 = vmatpush1.msra.mxu0 %v9287
      %9413 = vmatprep.subr.mxu0 %v9284
      %9414 = vmatpush1.msra.mxu0 %v9283
      %9415 = vmatprep.subr.mxu0 %v9280
      %9416 = vmatpush1.msra.mxu0 %v9279
      %9417 = vmatprep.subr.mxu0 %v9276
      %9418 = vmatpush1.msra.mxu0 %v9275
      %9419 = vmatprep.subr.mxu0 0.0
      %9420 = vmatpush2.msra.mxu0 0.0
      %9421 = vmatprep.subr.mxu0 0.0
      %9422 = vmatpush2.msra.mxu0 0.0
      %9423 = vmatprep.subr.mxu0 0.0
      %9424 = vmatpush2.msra.mxu0 0.0
      %9425 = vmatprep.subr.mxu0 0.0
      %9426 = vmatpush2.msra.mxu0 0.0
      %9427 = vmatprep.subr.mxu0 0.0
      %9428 = vmatpush2.msra.mxu0 0.0
      %9429 = vmatprep.subr.mxu0 0.0
      %9430 = vmatpush2.msra.mxu0 0.0
      %9431 = vmatprep.subr.mxu0 0.0
      %9432 = vmatpush2.msra.mxu0 0.0
      %9433 = vmatprep.subr.mxu0 0.0
      %9434 = vmatpush2.msra.mxu0 0.0
      %9435 = vmatprep.subr.mxu0 0.0
      %9436 = vmatpush2.msra.mxu0 0.0
      %9437 = vmatprep.subr.mxu0 0.0
      %9438 = vmatpush2.msra.mxu0 0.0
      %9439 = vmatprep.subr.mxu0 0.0
      %9440 = vmatpush2.msra.mxu0 0.0
      %9441 = vmatprep.subr.mxu0 0.0
      %9442 = vmatpush2.msra.mxu0 0.0
      %9443 = vmatprep.subr.mxu0 0.0
      %9444 = vmatpush2.msra.mxu0 0.0
      %9445 = vmatprep.subr.mxu0 0.0
      %9446 = vmatpush2.msra.mxu0 0.0
      %9447 = vmatprep.subr.mxu0 0.0
      %9448 = vmatpush2.msra.mxu0 0.0
      %9449 = vmatprep.subr.mxu0 0.0
      %9450 = vmatpush2.msra.mxu0 0.0
      %9451 = vmatprep.mubr.f32.mxu0 0.0
      %9452 = vmatmul.mubr.f32.gmra.mxu0 %v9314
      %v9453 = vpop.f32.mrf.mxu0
      %v9454 = vadd.f32 0.0, %v9453
      %v9455 = vpop.f32.mrf.mxu0
      %v9456 = vadd.f32 0.0, %v9455
      %9457 = vdwg.mxu0
      %v9458 = vadd.f32 %v9268, %v9383
      %v9459 = vadd.f32 %v9269, %v9385
      %v9460 = vadd.f32 %v9270, %v9454
      %v9461 = vadd.f32 %v9271, %v9456
      %s9462 = scalar_lea.vmem %s13, 1920
      %v9463 = vld [vmem:[%s9462] sm:$0xff]
      %v9464 = vld [vmem:[%s9462 + $0x8] sm:$0xff]
      %v9465 = vld [vmem:[%s9462 + $0x10] sm:$0xff]
      %v9466 = vld [vmem:[%s9462 + $0x18] sm:$0xff]
      %v9467 = vld [vmem:[%s9462 + $0x20] sm:$0xff]
      %v9468 = vld [vmem:[%s9462 + $0x28] sm:$0xff]
      %v9469 = vld [vmem:[%s9462 + $0x30] sm:$0xff]
      %v9470 = vld [vmem:[%s9462 + $0x38] sm:$0xff]
      %v9471 = vld [vmem:[%s9462 + $0x40] sm:$0xff]
      %v9472 = vld [vmem:[%s9462 + $0x48] sm:$0xff]
      %v9473 = vld [vmem:[%s9462 + $0x50] sm:$0xff]
      %v9474 = vld [vmem:[%s9462 + $0x58] sm:$0xff]
      %v9475 = vld [vmem:[%s9462 + $0x60] sm:$0xff]
      %v9476 = vld [vmem:[%s9462 + $0x68] sm:$0xff]
      %v9477 = vld [vmem:[%s9462 + $0x70] sm:$0xff]
      %v9478 = vld [vmem:[%s9462 + $0x78] sm:$0xff]
      %v9479 = vld [vmem:[%s9462 + $0x80] sm:$0xff]
      %v9480 = vld [vmem:[%s9462 + $0x88] sm:$0xff]
      %v9481 = vld [vmem:[%s9462 + $0x90] sm:$0xff]
      %v9482 = vld [vmem:[%s9462 + $0x98] sm:$0xff]
      %v9483 = vld [vmem:[%s9462 + $0xa0] sm:$0xff]
      %v9484 = vld [vmem:[%s9462 + $0xa8] sm:$0xff]
      %v9485 = vld [vmem:[%s9462 + $0xb0] sm:$0xff]
      %v9486 = vld [vmem:[%s9462 + $0xb8] sm:$0xff]
      %v9487 = vld [vmem:[%s9462 + $0xc0] sm:$0xff]
      %v9488 = vld [vmem:[%s9462 + $0xc8] sm:$0xff]
      %v9489 = vld [vmem:[%s9462 + $0xd0] sm:$0xff]
      %v9490 = vld [vmem:[%s9462 + $0xd8] sm:$0xff]
      %v9491 = vld [vmem:[%s9462 + $0xe0] sm:$0xff]
      %v9492 = vld [vmem:[%s9462 + $0xe8] sm:$0xff]
      %v9493 = vld [vmem:[%s9462 + $0xf0] sm:$0xff]
      %v9494 = vld [vmem:[%s9462 + $0xf8] sm:$0xff]
      %v9495 = vld [vmem:[%s9462 + $0x100] sm:$0xff]
      %v9496 = vld [vmem:[%s9462 + $0x108] sm:$0xff]
      %v9497 = vld [vmem:[%s9462 + $0x110] sm:$0xff]
      %v9498 = vld [vmem:[%s9462 + $0x118] sm:$0xff]
      %v9499 = vld [vmem:[%s9462 + $0x120] sm:$0xff]
      %v9500 = vld [vmem:[%s9462 + $0x128] sm:$0xff]
      %v9501 = vld [vmem:[%s9462 + $0x130] sm:$0xff]
      %v9502 = vld [vmem:[%s9462 + $0x138] sm:$0xff]
      %v9503 = vrot.slane %v8328, 4
      %v9504 = vsel %vm8413, %v9503, 0
      %9506 = vmatprep.subr.mxu0 0.0
      %9507 = vmatpush1.msra.mxu0 0.0
      %9508 = vmatprep.subr.mxu0 0.0
      %9509 = vmatpush1.msra.mxu0 0.0
      %9510 = vmatprep.subr.mxu0 0.0
      %9511 = vmatpush1.msra.mxu0 0.0
      %9512 = vmatprep.subr.mxu0 0.0
      %9513 = vmatpush1.msra.mxu0 0.0
      %9514 = vmatprep.subr.mxu0 0.0
      %9515 = vmatpush1.msra.mxu0 0.0
      %9516 = vmatprep.subr.mxu0 0.0
      %9517 = vmatpush1.msra.mxu0 0.0
      %9518 = vmatprep.subr.mxu0 %v9500
      %9519 = vmatpush1.msra.mxu0 %v9499
      %9520 = vmatprep.subr.mxu0 %v9496
      %9521 = vmatpush1.msra.mxu0 %v9495
      %9522 = vmatprep.subr.mxu0 %v9492
      %9523 = vmatpush1.msra.mxu0 %v9491
      %9524 = vmatprep.subr.mxu0 %v9488
      %9525 = vmatpush1.msra.mxu0 %v9487
      %9526 = vmatprep.subr.mxu0 %v9484
      %9527 = vmatpush1.msra.mxu0 %v9483
      %9528 = vmatprep.subr.mxu0 %v9480
      %9529 = vmatpush1.msra.mxu0 %v9479
      %9530 = vmatprep.subr.mxu0 %v9476
      %9531 = vmatpush1.msra.mxu0 %v9475
      %9532 = vmatprep.subr.mxu0 %v9472
      %9533 = vmatpush1.msra.mxu0 %v9471
      %9534 = vmatprep.subr.mxu0 %v9468
      %9535 = vmatpush1.msra.mxu0 %v9467
      %9536 = vmatprep.subr.mxu0 %v9464
      %9537 = vmatpush1.msra.mxu0 %v9463
      %9538 = vmatprep.subr.mxu0 0.0
      %9539 = vmatpush2.msra.mxu0 0.0
      %9540 = vmatprep.subr.mxu0 0.0
      %9541 = vmatpush2.msra.mxu0 0.0
      %9542 = vmatprep.subr.mxu0 0.0
      %9543 = vmatpush2.msra.mxu0 0.0
      %9544 = vmatprep.subr.mxu0 0.0
      %9545 = vmatpush2.msra.mxu0 0.0
      %9546 = vmatprep.subr.mxu0 0.0
      %9547 = vmatpush2.msra.mxu0 0.0
      %9548 = vmatprep.subr.mxu0 0.0
      %9549 = vmatpush2.msra.mxu0 0.0
      %9550 = vmatprep.subr.mxu0 0.0
      %9551 = vmatpush2.msra.mxu0 0.0
      %9552 = vmatprep.subr.mxu0 0.0
      %9553 = vmatpush2.msra.mxu0 0.0
      %9554 = vmatprep.subr.mxu0 0.0
      %9555 = vmatpush2.msra.mxu0 0.0
      %9556 = vmatprep.subr.mxu0 0.0
      %9557 = vmatpush2.msra.mxu0 0.0
      %9558 = vmatprep.subr.mxu0 0.0
      %9559 = vmatpush2.msra.mxu0 0.0
      %9560 = vmatprep.subr.mxu0 0.0
      %9561 = vmatpush2.msra.mxu0 0.0
      %9562 = vmatprep.subr.mxu0 0.0
      %9563 = vmatpush2.msra.mxu0 0.0
      %9564 = vmatprep.subr.mxu0 0.0
      %9565 = vmatpush2.msra.mxu0 0.0
      %9566 = vmatprep.subr.mxu0 0.0
      %9567 = vmatpush2.msra.mxu0 0.0
      %9568 = vmatprep.subr.mxu0 0.0
      %9569 = vmatpush2.msra.mxu0 0.0
      %9570 = vmatprep.mubr.f32.mxu0 0.0
      %9571 = vmatmul.mubr.f32.gmra.mxu0 %v9504
      %v9572 = vpop.f32.mrf.mxu0
      %v9573 = vadd.f32 0.0, %v9572
      %v9574 = vpop.f32.mrf.mxu0
      %v9575 = vadd.f32 0.0, %v9574
      %9576 = vdwg.mxu0
      %9577 = vmatprep.subr.mxu0 0.0
      %9578 = vmatpush1.msra.mxu0 0.0
      %9579 = vmatprep.subr.mxu0 0.0
      %9580 = vmatpush1.msra.mxu0 0.0
      %9581 = vmatprep.subr.mxu0 0.0
      %9582 = vmatpush1.msra.mxu0 0.0
      %9583 = vmatprep.subr.mxu0 0.0
      %9584 = vmatpush1.msra.mxu0 0.0
      %9585 = vmatprep.subr.mxu0 0.0
      %9586 = vmatpush1.msra.mxu0 0.0
      %9587 = vmatprep.subr.mxu0 0.0
      %9588 = vmatpush1.msra.mxu0 0.0
      %9589 = vmatprep.subr.mxu0 %v9502
      %9590 = vmatpush1.msra.mxu0 %v9501
      %9591 = vmatprep.subr.mxu0 %v9498
      %9592 = vmatpush1.msra.mxu0 %v9497
      %9593 = vmatprep.subr.mxu0 %v9494
      %9594 = vmatpush1.msra.mxu0 %v9493
      %9595 = vmatprep.subr.mxu0 %v9490
      %9596 = vmatpush1.msra.mxu0 %v9489
      %9597 = vmatprep.subr.mxu0 %v9486
      %9598 = vmatpush1.msra.mxu0 %v9485
      %9599 = vmatprep.subr.mxu0 %v9482
      %9600 = vmatpush1.msra.mxu0 %v9481
      %9601 = vmatprep.subr.mxu0 %v9478
      %9602 = vmatpush1.msra.mxu0 %v9477
      %9603 = vmatprep.subr.mxu0 %v9474
      %9604 = vmatpush1.msra.mxu0 %v9473
      %9605 = vmatprep.subr.mxu0 %v9470
      %9606 = vmatpush1.msra.mxu0 %v9469
      %9607 = vmatprep.subr.mxu0 %v9466
      %9608 = vmatpush1.msra.mxu0 %v9465
      %9609 = vmatprep.subr.mxu0 0.0
      %9610 = vmatpush2.msra.mxu0 0.0
      %9611 = vmatprep.subr.mxu0 0.0
      %9612 = vmatpush2.msra.mxu0 0.0
      %9613 = vmatprep.subr.mxu0 0.0
      %9614 = vmatpush2.msra.mxu0 0.0
      %9615 = vmatprep.subr.mxu0 0.0
      %9616 = vmatpush2.msra.mxu0 0.0
      %9617 = vmatprep.subr.mxu0 0.0
      %9618 = vmatpush2.msra.mxu0 0.0
      %9619 = vmatprep.subr.mxu0 0.0
      %9620 = vmatpush2.msra.mxu0 0.0
      %9621 = vmatprep.subr.mxu0 0.0
      %9622 = vmatpush2.msra.mxu0 0.0
      %9623 = vmatprep.subr.mxu0 0.0
      %9624 = vmatpush2.msra.mxu0 0.0
      %9625 = vmatprep.subr.mxu0 0.0
      %9626 = vmatpush2.msra.mxu0 0.0
      %9627 = vmatprep.subr.mxu0 0.0
      %9628 = vmatpush2.msra.mxu0 0.0
      %9629 = vmatprep.subr.mxu0 0.0
      %9630 = vmatpush2.msra.mxu0 0.0
      %9631 = vmatprep.subr.mxu0 0.0
      %9632 = vmatpush2.msra.mxu0 0.0
      %9633 = vmatprep.subr.mxu0 0.0
      %9634 = vmatpush2.msra.mxu0 0.0
      %9635 = vmatprep.subr.mxu0 0.0
      %9636 = vmatpush2.msra.mxu0 0.0
      %9637 = vmatprep.subr.mxu0 0.0
      %9638 = vmatpush2.msra.mxu0 0.0
      %9639 = vmatprep.subr.mxu0 0.0
      %9640 = vmatpush2.msra.mxu0 0.0
      %9641 = vmatprep.mubr.f32.mxu0 0.0
      %9642 = vmatmul.mubr.f32.gmra.mxu0 %v9504
      %v9643 = vpop.f32.mrf.mxu0
      %v9644 = vadd.f32 0.0, %v9643
      %v9645 = vpop.f32.mrf.mxu0
      %v9646 = vadd.f32 0.0, %v9645
      %9647 = vdwg.mxu0
      %v9648 = vadd.f32 %v9458, %v9573
      %v9649 = vadd.f32 %v9459, %v9575
      %v9650 = vadd.f32 %v9460, %v9644
      %v9651 = vadd.f32 %v9461, %v9646
      %s9652 = scalar_lea.vmem %s13, 2240
      %v9653 = vld [vmem:[%s9652] sm:$0xff]
      %v9654 = vld [vmem:[%s9652 + $0x8] sm:$0xff]
      %v9655 = vld [vmem:[%s9652 + $0x10] sm:$0xff]
      %v9656 = vld [vmem:[%s9652 + $0x18] sm:$0xff]
      %v9657 = vld [vmem:[%s9652 + $0x20] sm:$0xff]
      %v9658 = vld [vmem:[%s9652 + $0x28] sm:$0xff]
      %v9659 = vld [vmem:[%s9652 + $0x30] sm:$0xff]
      %v9660 = vld [vmem:[%s9652 + $0x38] sm:$0xff]
      %v9661 = vld [vmem:[%s9652 + $0x40] sm:$0xff]
      %v9662 = vld [vmem:[%s9652 + $0x48] sm:$0xff]
      %v9663 = vld [vmem:[%s9652 + $0x50] sm:$0xff]
      %v9664 = vld [vmem:[%s9652 + $0x58] sm:$0xff]
      %v9665 = vld [vmem:[%s9652 + $0x60] sm:$0xff]
      %v9666 = vld [vmem:[%s9652 + $0x68] sm:$0xff]
      %v9667 = vld [vmem:[%s9652 + $0x70] sm:$0xff]
      %v9668 = vld [vmem:[%s9652 + $0x78] sm:$0xff]
      %v9669 = vld [vmem:[%s9652 + $0x80] sm:$0xff]
      %v9670 = vld [vmem:[%s9652 + $0x88] sm:$0xff]
      %v9671 = vld [vmem:[%s9652 + $0x90] sm:$0xff]
      %v9672 = vld [vmem:[%s9652 + $0x98] sm:$0xff]
      %v9673 = vld [vmem:[%s9652 + $0xa0] sm:$0xff]
      %v9674 = vld [vmem:[%s9652 + $0xa8] sm:$0xff]
      %v9675 = vld [vmem:[%s9652 + $0xb0] sm:$0xff]
      %v9676 = vld [vmem:[%s9652 + $0xb8] sm:$0xff]
      %v9677 = vld [vmem:[%s9652 + $0xc0] sm:$0xff]
      %v9678 = vld [vmem:[%s9652 + $0xc8] sm:$0xff]
      %v9679 = vld [vmem:[%s9652 + $0xd0] sm:$0xff]
      %v9680 = vld [vmem:[%s9652 + $0xd8] sm:$0xff]
      %v9681 = vld [vmem:[%s9652 + $0xe0] sm:$0xff]
      %v9682 = vld [vmem:[%s9652 + $0xe8] sm:$0xff]
      %v9683 = vld [vmem:[%s9652 + $0xf0] sm:$0xff]
      %v9684 = vld [vmem:[%s9652 + $0xf8] sm:$0xff]
      %v9685 = vld [vmem:[%s9652 + $0x100] sm:$0xff]
      %v9686 = vld [vmem:[%s9652 + $0x108] sm:$0xff]
      %v9687 = vld [vmem:[%s9652 + $0x110] sm:$0xff]
      %v9688 = vld [vmem:[%s9652 + $0x118] sm:$0xff]
      %v9689 = vld [vmem:[%s9652 + $0x120] sm:$0xff]
      %v9690 = vld [vmem:[%s9652 + $0x128] sm:$0xff]
      %v9691 = vld [vmem:[%s9652 + $0x130] sm:$0xff]
      %v9692 = vld [vmem:[%s9652 + $0x138] sm:$0xff]
      %v9693 = vrot.slane %v8328, 6
      %v9694 = vsel %vm8413, %v9693, 0
      %9696 = vmatprep.subr.mxu0 0.0
      %9697 = vmatpush1.msra.mxu0 0.0
      %9698 = vmatprep.subr.mxu0 0.0
      %9699 = vmatpush1.msra.mxu0 0.0
      %9700 = vmatprep.subr.mxu0 0.0
      %9701 = vmatpush1.msra.mxu0 0.0
      %9702 = vmatprep.subr.mxu0 0.0
      %9703 = vmatpush1.msra.mxu0 0.0
      %9704 = vmatprep.subr.mxu0 0.0
      %9705 = vmatpush1.msra.mxu0 0.0
      %9706 = vmatprep.subr.mxu0 0.0
      %9707 = vmatpush1.msra.mxu0 0.0
      %9708 = vmatprep.subr.mxu0 %v9690
      %9709 = vmatpush1.msra.mxu0 %v9689
      %9710 = vmatprep.subr.mxu0 %v9686
      %9711 = vmatpush1.msra.mxu0 %v9685
      %9712 = vmatprep.subr.mxu0 %v9682
      %9713 = vmatpush1.msra.mxu0 %v9681
      %9714 = vmatprep.subr.mxu0 %v9678
      %9715 = vmatpush1.msra.mxu0 %v9677
      %9716 = vmatprep.subr.mxu0 %v9674
      %9717 = vmatpush1.msra.mxu0 %v9673
      %9718 = vmatprep.subr.mxu0 %v9670
      %9719 = vmatpush1.msra.mxu0 %v9669
      %9720 = vmatprep.subr.mxu0 %v9666
      %9721 = vmatpush1.msra.mxu0 %v9665
      %9722 = vmatprep.subr.mxu0 %v9662
      %9723 = vmatpush1.msra.mxu0 %v9661
      %9724 = vmatprep.subr.mxu0 %v9658
      %9725 = vmatpush1.msra.mxu0 %v9657
      %9726 = vmatprep.subr.mxu0 %v9654
      %9727 = vmatpush1.msra.mxu0 %v9653
      %9728 = vmatprep.subr.mxu0 0.0
      %9729 = vmatpush2.msra.mxu0 0.0
      %9730 = vmatprep.subr.mxu0 0.0
      %9731 = vmatpush2.msra.mxu0 0.0
      %9732 = vmatprep.subr.mxu0 0.0
      %9733 = vmatpush2.msra.mxu0 0.0
      %9734 = vmatprep.subr.mxu0 0.0
      %9735 = vmatpush2.msra.mxu0 0.0
      %9736 = vmatprep.subr.mxu0 0.0
      %9737 = vmatpush2.msra.mxu0 0.0
      %9738 = vmatprep.subr.mxu0 0.0
      %9739 = vmatpush2.msra.mxu0 0.0
      %9740 = vmatprep.subr.mxu0 0.0
      %9741 = vmatpush2.msra.mxu0 0.0
      %9742 = vmatprep.subr.mxu0 0.0
      %9743 = vmatpush2.msra.mxu0 0.0
      %9744 = vmatprep.subr.mxu0 0.0
      %9745 = vmatpush2.msra.mxu0 0.0
      %9746 = vmatprep.subr.mxu0 0.0
      %9747 = vmatpush2.msra.mxu0 0.0
      %9748 = vmatprep.subr.mxu0 0.0
      %9749 = vmatpush2.msra.mxu0 0.0
      %9750 = vmatprep.subr.mxu0 0.0
      %9751 = vmatpush2.msra.mxu0 0.0
      %9752 = vmatprep.subr.mxu0 0.0
      %9753 = vmatpush2.msra.mxu0 0.0
      %9754 = vmatprep.subr.mxu0 0.0
      %9755 = vmatpush2.msra.mxu0 0.0
      %9756 = vmatprep.subr.mxu0 0.0
      %9757 = vmatpush2.msra.mxu0 0.0
      %9758 = vmatprep.subr.mxu0 0.0
      %9759 = vmatpush2.msra.mxu0 0.0
      %9760 = vmatprep.mubr.f32.mxu0 0.0
      %9761 = vmatmul.mubr.f32.gmra.mxu0 %v9694
      %v9762 = vpop.f32.mrf.mxu0
      %v9763 = vadd.f32 0.0, %v9762
      %v9764 = vpop.f32.mrf.mxu0
      %v9765 = vadd.f32 0.0, %v9764
      %9766 = vdwg.mxu0
      %9767 = vmatprep.subr.mxu0 0.0
      %9768 = vmatpush1.msra.mxu0 0.0
      %9769 = vmatprep.subr.mxu0 0.0
      %9770 = vmatpush1.msra.mxu0 0.0
      %9771 = vmatprep.subr.mxu0 0.0
      %9772 = vmatpush1.msra.mxu0 0.0
      %9773 = vmatprep.subr.mxu0 0.0
      %9774 = vmatpush1.msra.mxu0 0.0
      %9775 = vmatprep.subr.mxu0 0.0
      %9776 = vmatpush1.msra.mxu0 0.0
      %9777 = vmatprep.subr.mxu0 0.0
      %9778 = vmatpush1.msra.mxu0 0.0
      %9779 = vmatprep.subr.mxu0 %v9692
      %9780 = vmatpush1.msra.mxu0 %v9691
      %9781 = vmatprep.subr.mxu0 %v9688
      %9782 = vmatpush1.msra.mxu0 %v9687
      %9783 = vmatprep.subr.mxu0 %v9684
      %9784 = vmatpush1.msra.mxu0 %v9683
      %9785 = vmatprep.subr.mxu0 %v9680
      %9786 = vmatpush1.msra.mxu0 %v9679
      %9787 = vmatprep.subr.mxu0 %v9676
      %9788 = vmatpush1.msra.mxu0 %v9675
      %9789 = vmatprep.subr.mxu0 %v9672
      %9790 = vmatpush1.msra.mxu0 %v9671
      %9791 = vmatprep.subr.mxu0 %v9668
      %9792 = vmatpush1.msra.mxu0 %v9667
      %9793 = vmatprep.subr.mxu0 %v9664
      %9794 = vmatpush1.msra.mxu0 %v9663
      %9795 = vmatprep.subr.mxu0 %v9660
      %9796 = vmatpush1.msra.mxu0 %v9659
      %9797 = vmatprep.subr.mxu0 %v9656
      %9798 = vmatpush1.msra.mxu0 %v9655
      %9799 = vmatprep.subr.mxu0 0.0
      %9800 = vmatpush2.msra.mxu0 0.0
      %9801 = vmatprep.subr.mxu0 0.0
      %9802 = vmatpush2.msra.mxu0 0.0
      %9803 = vmatprep.subr.mxu0 0.0
      %9804 = vmatpush2.msra.mxu0 0.0
      %9805 = vmatprep.subr.mxu0 0.0
      %9806 = vmatpush2.msra.mxu0 0.0
      %9807 = vmatprep.subr.mxu0 0.0
      %9808 = vmatpush2.msra.mxu0 0.0
      %9809 = vmatprep.subr.mxu0 0.0
      %9810 = vmatpush2.msra.mxu0 0.0
      %9811 = vmatprep.subr.mxu0 0.0
      %9812 = vmatpush2.msra.mxu0 0.0
      %9813 = vmatprep.subr.mxu0 0.0
      %9814 = vmatpush2.msra.mxu0 0.0
      %9815 = vmatprep.subr.mxu0 0.0
      %9816 = vmatpush2.msra.mxu0 0.0
      %9817 = vmatprep.subr.mxu0 0.0
      %9818 = vmatpush2.msra.mxu0 0.0
      %9819 = vmatprep.subr.mxu0 0.0
      %9820 = vmatpush2.msra.mxu0 0.0
      %9821 = vmatprep.subr.mxu0 0.0
      %9822 = vmatpush2.msra.mxu0 0.0
      %9823 = vmatprep.subr.mxu0 0.0
      %9824 = vmatpush2.msra.mxu0 0.0
      %9825 = vmatprep.subr.mxu0 0.0
      %9826 = vmatpush2.msra.mxu0 0.0
      %9827 = vmatprep.subr.mxu0 0.0
      %9828 = vmatpush2.msra.mxu0 0.0
      %9829 = vmatprep.subr.mxu0 0.0
      %9830 = vmatpush2.msra.mxu0 0.0
      %9831 = vmatprep.mubr.f32.mxu0 0.0
      %9832 = vmatmul.mubr.f32.gmra.mxu0 %v9694
      %v9833 = vpop.f32.mrf.mxu0
      %v9834 = vadd.f32 0.0, %v9833
      %v9835 = vpop.f32.mrf.mxu0
      %v9836 = vadd.f32 0.0, %v9835
      %9837 = vdwg.mxu0
      %v9838 = vadd.f32 %v9648, %v9763
      %v9839 = vadd.f32 %v9649, %v9765
      %v9840 = vadd.f32 %v9650, %v9834
      %v9841 = vadd.f32 %v9651, %v9836
      %s9842 = scalar_lea.vmem %s13, 2560
      %v9843 = vld [vmem:[%s9842] sm:$0xff]
      %v9844 = vld [vmem:[%s9842 + $0x8] sm:$0xff]
      %v9845 = vld [vmem:[%s9842 + $0x10] sm:$0xff]
      %v9846 = vld [vmem:[%s9842 + $0x18] sm:$0xff]
      %v9847 = vld [vmem:[%s9842 + $0x20] sm:$0xff]
      %v9848 = vld [vmem:[%s9842 + $0x28] sm:$0xff]
      %v9849 = vld [vmem:[%s9842 + $0x30] sm:$0xff]
      %v9850 = vld [vmem:[%s9842 + $0x38] sm:$0xff]
      %v9851 = vld [vmem:[%s9842 + $0x40] sm:$0xff]
      %v9852 = vld [vmem:[%s9842 + $0x48] sm:$0xff]
      %v9853 = vld [vmem:[%s9842 + $0x50] sm:$0xff]
      %v9854 = vld [vmem:[%s9842 + $0x58] sm:$0xff]
      %v9855 = vld [vmem:[%s9842 + $0x60] sm:$0xff]
      %v9856 = vld [vmem:[%s9842 + $0x68] sm:$0xff]
      %v9857 = vld [vmem:[%s9842 + $0x70] sm:$0xff]
      %v9858 = vld [vmem:[%s9842 + $0x78] sm:$0xff]
      %v9859 = vld [vmem:[%s9842 + $0x80] sm:$0xff]
      %v9860 = vld [vmem:[%s9842 + $0x88] sm:$0xff]
      %v9861 = vld [vmem:[%s9842 + $0x90] sm:$0xff]
      %v9862 = vld [vmem:[%s9842 + $0x98] sm:$0xff]
      %v9863 = vld [vmem:[%s9842 + $0xa0] sm:$0xff]
      %v9864 = vld [vmem:[%s9842 + $0xa8] sm:$0xff]
      %v9865 = vld [vmem:[%s9842 + $0xb0] sm:$0xff]
      %v9866 = vld [vmem:[%s9842 + $0xb8] sm:$0xff]
      %v9867 = vld [vmem:[%s9842 + $0xc0] sm:$0xff]
      %v9868 = vld [vmem:[%s9842 + $0xc8] sm:$0xff]
      %v9869 = vld [vmem:[%s9842 + $0xd0] sm:$0xff]
      %v9870 = vld [vmem:[%s9842 + $0xd8] sm:$0xff]
      %v9871 = vld [vmem:[%s9842 + $0xe0] sm:$0xff]
      %v9872 = vld [vmem:[%s9842 + $0xe8] sm:$0xff]
      %v9873 = vld [vmem:[%s9842 + $0xf0] sm:$0xff]
      %v9874 = vld [vmem:[%s9842 + $0xf8] sm:$0xff]
      %v9875 = vld [vmem:[%s9842 + $0x100] sm:$0xff]
      %v9876 = vld [vmem:[%s9842 + $0x108] sm:$0xff]
      %v9877 = vld [vmem:[%s9842 + $0x110] sm:$0xff]
      %v9878 = vld [vmem:[%s9842 + $0x118] sm:$0xff]
      %v9879 = vld [vmem:[%s9842 + $0x120] sm:$0xff]
      %v9880 = vld [vmem:[%s9842 + $0x128] sm:$0xff]
      %v9881 = vld [vmem:[%s9842 + $0x130] sm:$0xff]
      %v9882 = vld [vmem:[%s9842 + $0x138] sm:$0xff]
      %v9884 = vsel %vm8413, %v8329, 0
      %9886 = vmatprep.subr.mxu0 0.0
      %9887 = vmatpush1.msra.mxu0 0.0
      %9888 = vmatprep.subr.mxu0 0.0
      %9889 = vmatpush1.msra.mxu0 0.0
      %9890 = vmatprep.subr.mxu0 0.0
      %9891 = vmatpush1.msra.mxu0 0.0
      %9892 = vmatprep.subr.mxu0 0.0
      %9893 = vmatpush1.msra.mxu0 0.0
      %9894 = vmatprep.subr.mxu0 0.0
      %9895 = vmatpush1.msra.mxu0 0.0
      %9896 = vmatprep.subr.mxu0 0.0
      %9897 = vmatpush1.msra.mxu0 0.0
      %9898 = vmatprep.subr.mxu0 %v9880
      %9899 = vmatpush1.msra.mxu0 %v9879
      %9900 = vmatprep.subr.mxu0 %v9876
      %9901 = vmatpush1.msra.mxu0 %v9875
      %9902 = vmatprep.subr.mxu0 %v9872
      %9903 = vmatpush1.msra.mxu0 %v9871
      %9904 = vmatprep.subr.mxu0 %v9868
      %9905 = vmatpush1.msra.mxu0 %v9867
      %9906 = vmatprep.subr.mxu0 %v9864
      %9907 = vmatpush1.msra.mxu0 %v9863
      %9908 = vmatprep.subr.mxu0 %v9860
      %9909 = vmatpush1.msra.mxu0 %v9859
      %9910 = vmatprep.subr.mxu0 %v9856
      %9911 = vmatpush1.msra.mxu0 %v9855
      %9912 = vmatprep.subr.mxu0 %v9852
      %9913 = vmatpush1.msra.mxu0 %v9851
      %9914 = vmatprep.subr.mxu0 %v9848
      %9915 = vmatpush1.msra.mxu0 %v9847
      %9916 = vmatprep.subr.mxu0 %v9844
      %9917 = vmatpush1.msra.mxu0 %v9843
      %9918 = vmatprep.subr.mxu0 0.0
      %9919 = vmatpush2.msra.mxu0 0.0
      %9920 = vmatprep.subr.mxu0 0.0
      %9921 = vmatpush2.msra.mxu0 0.0
      %9922 = vmatprep.subr.mxu0 0.0
      %9923 = vmatpush2.msra.mxu0 0.0
      %9924 = vmatprep.subr.mxu0 0.0
      %9925 = vmatpush2.msra.mxu0 0.0
      %9926 = vmatprep.subr.mxu0 0.0
      %9927 = vmatpush2.msra.mxu0 0.0
      %9928 = vmatprep.subr.mxu0 0.0
      %9929 = vmatpush2.msra.mxu0 0.0
      %9930 = vmatprep.subr.mxu0 0.0
      %9931 = vmatpush2.msra.mxu0 0.0
      %9932 = vmatprep.subr.mxu0 0.0
      %9933 = vmatpush2.msra.mxu0 0.0
      %9934 = vmatprep.subr.mxu0 0.0
      %9935 = vmatpush2.msra.mxu0 0.0
      %9936 = vmatprep.subr.mxu0 0.0
      %9937 = vmatpush2.msra.mxu0 0.0
      %9938 = vmatprep.subr.mxu0 0.0
      %9939 = vmatpush2.msra.mxu0 0.0
      %9940 = vmatprep.subr.mxu0 0.0
      %9941 = vmatpush2.msra.mxu0 0.0
      %9942 = vmatprep.subr.mxu0 0.0
      %9943 = vmatpush2.msra.mxu0 0.0
      %9944 = vmatprep.subr.mxu0 0.0
      %9945 = vmatpush2.msra.mxu0 0.0
      %9946 = vmatprep.subr.mxu0 0.0
      %9947 = vmatpush2.msra.mxu0 0.0
      %9948 = vmatprep.subr.mxu0 0.0
      %9949 = vmatpush2.msra.mxu0 0.0
      %9950 = vmatprep.mubr.f32.mxu0 0.0
      %9951 = vmatmul.mubr.f32.gmra.mxu0 %v9884
      %v9952 = vpop.f32.mrf.mxu0
      %v9953 = vadd.f32 0.0, %v9952
      %v9954 = vpop.f32.mrf.mxu0
      %v9955 = vadd.f32 0.0, %v9954
      %9956 = vdwg.mxu0
      %9957 = vmatprep.subr.mxu0 0.0
      %9958 = vmatpush1.msra.mxu0 0.0
      %9959 = vmatprep.subr.mxu0 0.0
      %9960 = vmatpush1.msra.mxu0 0.0
      %9961 = vmatprep.subr.mxu0 0.0
      %9962 = vmatpush1.msra.mxu0 0.0
      %9963 = vmatprep.subr.mxu0 0.0
      %9964 = vmatpush1.msra.mxu0 0.0
      %9965 = vmatprep.subr.mxu0 0.0
      %9966 = vmatpush1.msra.mxu0 0.0
      %9967 = vmatprep.subr.mxu0 0.0
      %9968 = vmatpush1.msra.mxu0 0.0
      %9969 = vmatprep.subr.mxu0 %v9882
      %9970 = vmatpush1.msra.mxu0 %v9881
      %9971 = vmatprep.subr.mxu0 %v9878
      %9972 = vmatpush1.msra.mxu0 %v9877
      %9973 = vmatprep.subr.mxu0 %v9874
      %9974 = vmatpush1.msra.mxu0 %v9873
      %9975 = vmatprep.subr.mxu0 %v9870
      %9976 = vmatpush1.msra.mxu0 %v9869
      %9977 = vmatprep.subr.mxu0 %v9866
      %9978 = vmatpush1.msra.mxu0 %v9865
      %9979 = vmatprep.subr.mxu0 %v9862
      %9980 = vmatpush1.msra.mxu0 %v9861
      %9981 = vmatprep.subr.mxu0 %v9858
      %9982 = vmatpush1.msra.mxu0 %v9857
      %9983 = vmatprep.subr.mxu0 %v9854
      %9984 = vmatpush1.msra.mxu0 %v9853
      %9985 = vmatprep.subr.mxu0 %v9850
      %9986 = vmatpush1.msra.mxu0 %v9849
      %9987 = vmatprep.subr.mxu0 %v9846
      %9988 = vmatpush1.msra.mxu0 %v9845
      %9989 = vmatprep.subr.mxu0 0.0
      %9990 = vmatpush2.msra.mxu0 0.0
      %9991 = vmatprep.subr.mxu0 0.0
      %9992 = vmatpush2.msra.mxu0 0.0
      %9993 = vmatprep.subr.mxu0 0.0
      %9994 = vmatpush2.msra.mxu0 0.0
      %9995 = vmatprep.subr.mxu0 0.0
      %9996 = vmatpush2.msra.mxu0 0.0
      %9997 = vmatprep.subr.mxu0 0.0
      %9998 = vmatpush2.msra.mxu0 0.0
      %9999 = vmatprep.subr.mxu0 0.0
      %10000 = vmatpush2.msra.mxu0 0.0
      %10001 = vmatprep.subr.mxu0 0.0
      %10002 = vmatpush2.msra.mxu0 0.0
      %10003 = vmatprep.subr.mxu0 0.0
      %10004 = vmatpush2.msra.mxu0 0.0
      %10005 = vmatprep.subr.mxu0 0.0
      %10006 = vmatpush2.msra.mxu0 0.0
      %10007 = vmatprep.subr.mxu0 0.0
      %10008 = vmatpush2.msra.mxu0 0.0
      %10009 = vmatprep.subr.mxu0 0.0
      %10010 = vmatpush2.msra.mxu0 0.0
      %10011 = vmatprep.subr.mxu0 0.0
      %10012 = vmatpush2.msra.mxu0 0.0
      %10013 = vmatprep.subr.mxu0 0.0
      %10014 = vmatpush2.msra.mxu0 0.0
      %10015 = vmatprep.subr.mxu0 0.0
      %10016 = vmatpush2.msra.mxu0 0.0
      %10017 = vmatprep.subr.mxu0 0.0
      %10018 = vmatpush2.msra.mxu0 0.0
      %10019 = vmatprep.subr.mxu0 0.0
      %10020 = vmatpush2.msra.mxu0 0.0
      %10021 = vmatprep.mubr.f32.mxu0 0.0
      %10022 = vmatmul.mubr.f32.gmra.mxu0 %v9884
      %v10023 = vpop.f32.mrf.mxu0
      %v10024 = vadd.f32 0.0, %v10023
      %v10025 = vpop.f32.mrf.mxu0
      %v10026 = vadd.f32 0.0, %v10025
      %10027 = vdwg.mxu0
      %v10028 = vadd.f32 %v9838, %v9953
      %v10029 = vadd.f32 %v9839, %v9955
      %v10030 = vadd.f32 %v9840, %v10024
      %v10031 = vadd.f32 %v9841, %v10026
      %s10032 = scalar_lea.vmem %s13, 2880
      %v10033 = vld [vmem:[%s10032] sm:$0xff]
      %v10034 = vld [vmem:[%s10032 + $0x8] sm:$0xff]
      %v10035 = vld [vmem:[%s10032 + $0x10] sm:$0xff]
      %v10036 = vld [vmem:[%s10032 + $0x18] sm:$0xff]
      %v10037 = vld [vmem:[%s10032 + $0x20] sm:$0xff]
      %v10038 = vld [vmem:[%s10032 + $0x28] sm:$0xff]
      %v10039 = vld [vmem:[%s10032 + $0x30] sm:$0xff]
      %v10040 = vld [vmem:[%s10032 + $0x38] sm:$0xff]
      %v10041 = vld [vmem:[%s10032 + $0x40] sm:$0xff]
      %v10042 = vld [vmem:[%s10032 + $0x48] sm:$0xff]
      %v10043 = vld [vmem:[%s10032 + $0x50] sm:$0xff]
      %v10044 = vld [vmem:[%s10032 + $0x58] sm:$0xff]
      %v10045 = vld [vmem:[%s10032 + $0x60] sm:$0xff]
      %v10046 = vld [vmem:[%s10032 + $0x68] sm:$0xff]
      %v10047 = vld [vmem:[%s10032 + $0x70] sm:$0xff]
      %v10048 = vld [vmem:[%s10032 + $0x78] sm:$0xff]
      %v10049 = vld [vmem:[%s10032 + $0x80] sm:$0xff]
      %v10050 = vld [vmem:[%s10032 + $0x88] sm:$0xff]
      %v10051 = vld [vmem:[%s10032 + $0x90] sm:$0xff]
      %v10052 = vld [vmem:[%s10032 + $0x98] sm:$0xff]
      %v10053 = vld [vmem:[%s10032 + $0xa0] sm:$0xff]
      %v10054 = vld [vmem:[%s10032 + $0xa8] sm:$0xff]
      %v10055 = vld [vmem:[%s10032 + $0xb0] sm:$0xff]
      %v10056 = vld [vmem:[%s10032 + $0xb8] sm:$0xff]
      %v10057 = vld [vmem:[%s10032 + $0xc0] sm:$0xff]
      %v10058 = vld [vmem:[%s10032 + $0xc8] sm:$0xff]
      %v10059 = vld [vmem:[%s10032 + $0xd0] sm:$0xff]
      %v10060 = vld [vmem:[%s10032 + $0xd8] sm:$0xff]
      %v10061 = vld [vmem:[%s10032 + $0xe0] sm:$0xff]
      %v10062 = vld [vmem:[%s10032 + $0xe8] sm:$0xff]
      %v10063 = vld [vmem:[%s10032 + $0xf0] sm:$0xff]
      %v10064 = vld [vmem:[%s10032 + $0xf8] sm:$0xff]
      %v10065 = vld [vmem:[%s10032 + $0x100] sm:$0xff]
      %v10066 = vld [vmem:[%s10032 + $0x108] sm:$0xff]
      %v10067 = vld [vmem:[%s10032 + $0x110] sm:$0xff]
      %v10068 = vld [vmem:[%s10032 + $0x118] sm:$0xff]
      %v10069 = vld [vmem:[%s10032 + $0x120] sm:$0xff]
      %v10070 = vld [vmem:[%s10032 + $0x128] sm:$0xff]
      %v10071 = vld [vmem:[%s10032 + $0x130] sm:$0xff]
      %v10072 = vld [vmem:[%s10032 + $0x138] sm:$0xff]
      %v10073 = vrot.slane %v8329, 2
      %v10074 = vsel %vm8413, %v10073, 0
      %10076 = vmatprep.subr.mxu0 0.0
      %10077 = vmatpush1.msra.mxu0 0.0
      %10078 = vmatprep.subr.mxu0 0.0
      %10079 = vmatpush1.msra.mxu0 0.0
      %10080 = vmatprep.subr.mxu0 0.0
      %10081 = vmatpush1.msra.mxu0 0.0
      %10082 = vmatprep.subr.mxu0 0.0
      %10083 = vmatpush1.msra.mxu0 0.0
      %10084 = vmatprep.subr.mxu0 0.0
      %10085 = vmatpush1.msra.mxu0 0.0
      %10086 = vmatprep.subr.mxu0 0.0
      %10087 = vmatpush1.msra.mxu0 0.0
      %10088 = vmatprep.subr.mxu0 %v10070
      %10089 = vmatpush1.msra.mxu0 %v10069
      %10090 = vmatprep.subr.mxu0 %v10066
      %10091 = vmatpush1.msra.mxu0 %v10065
      %10092 = vmatprep.subr.mxu0 %v10062
      %10093 = vmatpush1.msra.mxu0 %v10061
      %10094 = vmatprep.subr.mxu0 %v10058
      %10095 = vmatpush1.msra.mxu0 %v10057
      %10096 = vmatprep.subr.mxu0 %v10054
      %10097 = vmatpush1.msra.mxu0 %v10053
      %10098 = vmatprep.subr.mxu0 %v10050
      %10099 = vmatpush1.msra.mxu0 %v10049
      %10100 = vmatprep.subr.mxu0 %v10046
      %10101 = vmatpush1.msra.mxu0 %v10045
      %10102 = vmatprep.subr.mxu0 %v10042
      %10103 = vmatpush1.msra.mxu0 %v10041
      %10104 = vmatprep.subr.mxu0 %v10038
      %10105 = vmatpush1.msra.mxu0 %v10037
      %10106 = vmatprep.subr.mxu0 %v10034
      %10107 = vmatpush1.msra.mxu0 %v10033
      %10108 = vmatprep.subr.mxu0 0.0
      %10109 = vmatpush2.msra.mxu0 0.0
      %10110 = vmatprep.subr.mxu0 0.0
      %10111 = vmatpush2.msra.mxu0 0.0
      %10112 = vmatprep.subr.mxu0 0.0
      %10113 = vmatpush2.msra.mxu0 0.0
      %10114 = vmatprep.subr.mxu0 0.0
      %10115 = vmatpush2.msra.mxu0 0.0
      %10116 = vmatprep.subr.mxu0 0.0
      %10117 = vmatpush2.msra.mxu0 0.0
      %10118 = vmatprep.subr.mxu0 0.0
      %10119 = vmatpush2.msra.mxu0 0.0
      %10120 = vmatprep.subr.mxu0 0.0
      %10121 = vmatpush2.msra.mxu0 0.0
      %10122 = vmatprep.subr.mxu0 0.0
      %10123 = vmatpush2.msra.mxu0 0.0
      %10124 = vmatprep.subr.mxu0 0.0
      %10125 = vmatpush2.msra.mxu0 0.0
      %10126 = vmatprep.subr.mxu0 0.0
      %10127 = vmatpush2.msra.mxu0 0.0
      %10128 = vmatprep.subr.mxu0 0.0
      %10129 = vmatpush2.msra.mxu0 0.0
      %10130 = vmatprep.subr.mxu0 0.0
      %10131 = vmatpush2.msra.mxu0 0.0
      %10132 = vmatprep.subr.mxu0 0.0
      %10133 = vmatpush2.msra.mxu0 0.0
      %10134 = vmatprep.subr.mxu0 0.0
      %10135 = vmatpush2.msra.mxu0 0.0
      %10136 = vmatprep.subr.mxu0 0.0
      %10137 = vmatpush2.msra.mxu0 0.0
      %10138 = vmatprep.subr.mxu0 0.0
      %10139 = vmatpush2.msra.mxu0 0.0
      %10140 = vmatprep.mubr.f32.mxu0 0.0
      %10141 = vmatmul.mubr.f32.gmra.mxu0 %v10074
      %v10142 = vpop.f32.mrf.mxu0
      %v10143 = vadd.f32 0.0, %v10142
      %v10144 = vpop.f32.mrf.mxu0
      %v10145 = vadd.f32 0.0, %v10144
      %10146 = vdwg.mxu0
      %10147 = vmatprep.subr.mxu0 0.0
      %10148 = vmatpush1.msra.mxu0 0.0
      %10149 = vmatprep.subr.mxu0 0.0
      %10150 = vmatpush1.msra.mxu0 0.0
      %10151 = vmatprep.subr.mxu0 0.0
      %10152 = vmatpush1.msra.mxu0 0.0
      %10153 = vmatprep.subr.mxu0 0.0
      %10154 = vmatpush1.msra.mxu0 0.0
      %10155 = vmatprep.subr.mxu0 0.0
      %10156 = vmatpush1.msra.mxu0 0.0
      %10157 = vmatprep.subr.mxu0 0.0
      %10158 = vmatpush1.msra.mxu0 0.0
      %10159 = vmatprep.subr.mxu0 %v10072
      %10160 = vmatpush1.msra.mxu0 %v10071
      %10161 = vmatprep.subr.mxu0 %v10068
      %10162 = vmatpush1.msra.mxu0 %v10067
      %10163 = vmatprep.subr.mxu0 %v10064
      %10164 = vmatpush1.msra.mxu0 %v10063
      %10165 = vmatprep.subr.mxu0 %v10060
      %10166 = vmatpush1.msra.mxu0 %v10059
      %10167 = vmatprep.subr.mxu0 %v10056
      %10168 = vmatpush1.msra.mxu0 %v10055
      %10169 = vmatprep.subr.mxu0 %v10052
      %10170 = vmatpush1.msra.mxu0 %v10051
      %10171 = vmatprep.subr.mxu0 %v10048
      %10172 = vmatpush1.msra.mxu0 %v10047
      %10173 = vmatprep.subr.mxu0 %v10044
      %10174 = vmatpush1.msra.mxu0 %v10043
      %10175 = vmatprep.subr.mxu0 %v10040
      %10176 = vmatpush1.msra.mxu0 %v10039
      %10177 = vmatprep.subr.mxu0 %v10036
      %10178 = vmatpush1.msra.mxu0 %v10035
      %10179 = vmatprep.subr.mxu0 0.0
      %10180 = vmatpush2.msra.mxu0 0.0
      %10181 = vmatprep.subr.mxu0 0.0
      %10182 = vmatpush2.msra.mxu0 0.0
      %10183 = vmatprep.subr.mxu0 0.0
      %10184 = vmatpush2.msra.mxu0 0.0
      %10185 = vmatprep.subr.mxu0 0.0
      %10186 = vmatpush2.msra.mxu0 0.0
      %10187 = vmatprep.subr.mxu0 0.0
      %10188 = vmatpush2.msra.mxu0 0.0
      %10189 = vmatprep.subr.mxu0 0.0
      %10190 = vmatpush2.msra.mxu0 0.0
      %10191 = vmatprep.subr.mxu0 0.0
      %10192 = vmatpush2.msra.mxu0 0.0
      %10193 = vmatprep.subr.mxu0 0.0
      %10194 = vmatpush2.msra.mxu0 0.0
      %10195 = vmatprep.subr.mxu0 0.0
      %10196 = vmatpush2.msra.mxu0 0.0
      %10197 = vmatprep.subr.mxu0 0.0
      %10198 = vmatpush2.msra.mxu0 0.0
      %10199 = vmatprep.subr.mxu0 0.0
      %10200 = vmatpush2.msra.mxu0 0.0
      %10201 = vmatprep.subr.mxu0 0.0
      %10202 = vmatpush2.msra.mxu0 0.0
      %10203 = vmatprep.subr.mxu0 0.0
      %10204 = vmatpush2.msra.mxu0 0.0
      %10205 = vmatprep.subr.mxu0 0.0
      %10206 = vmatpush2.msra.mxu0 0.0
      %10207 = vmatprep.subr.mxu0 0.0
      %10208 = vmatpush2.msra.mxu0 0.0
      %10209 = vmatprep.subr.mxu0 0.0
      %10210 = vmatpush2.msra.mxu0 0.0
      %10211 = vmatprep.mubr.f32.mxu0 0.0
      %10212 = vmatmul.mubr.f32.gmra.mxu0 %v10074
      %v10213 = vpop.f32.mrf.mxu0
      %v10214 = vadd.f32 0.0, %v10213
      %v10215 = vpop.f32.mrf.mxu0
      %v10216 = vadd.f32 0.0, %v10215
      %10217 = vdwg.mxu0
      %v10218 = vadd.f32 %v10028, %v10143
      %v10219 = vadd.f32 %v10029, %v10145
      %v10220 = vadd.f32 %v10030, %v10214
      %v10221 = vadd.f32 %v10031, %v10216
      %v10222 = vld [vmem:[%s14] sm:$0xf]
      %v10224 = vlaneseq
      %v10225 = vshrl.u32 %v10224, 7
      %v10226 = vsub.s32 0, %v10225
      %v10227 = vrot.slane %v10222, %v10226
      %v10228 = vlaneseq
      %v10229 = vshrl.u32 %v10228, 7
      %v10230 = vsub.s32 1, %v10229
      %v10231 = vrot.slane %v10222, %v10230
      %v10232 = vlaneseq
      %v10233 = vshrl.u32 %v10232, 7
      %v10234 = vsub.s32 2, %v10233
      %v10235 = vrot.slane %v10222, %v10234
      %v10236 = vlaneseq
      %v10237 = vshrl.u32 %v10236, 7
      %v10238 = vsub.s32 3, %v10237
      %v10239 = vrot.slane %v10222, %v10238
      %v10244 = vadd.f32 %v10218, %v10227
      %v10245 = vadd.f32 %v10219, %v10231
      %v10246 = vadd.f32 %v10220, %v10235
      %v10247 = vadd.f32 %v10221, %v10239
      %v10248 = vmax.f32 %v10244, 0.0
      %v10249 = vmax.f32 %v10245, 0.0
      %v10250 = vmax.f32 %v10246, 0.0
      %v10251 = vmax.f32 %v10247, 0.0
      %v10252 = vld [vmem:[%s15] sm:$0xff]
      %v10253 = vld [vmem:[%s15 + $0x8] sm:$0xff]
      %v10254 = vld [vmem:[%s15 + $0x10] sm:$0xff]
      %v10255 = vld [vmem:[%s15 + $0x18] sm:$0xff]
      %v10256 = vld [vmem:[%s15 + $0x20] sm:$0xff]
      %v10257 = vld [vmem:[%s15 + $0x28] sm:$0xff]
      %v10258 = vld [vmem:[%s15 + $0x30] sm:$0xff]
      %v10259 = vld [vmem:[%s15 + $0x38] sm:$0xff]
      %v10260 = vld [vmem:[%s15 + $0x40] sm:$0xff]
      %v10261 = vld [vmem:[%s15 + $0x48] sm:$0xff]
      %v10262 = vld [vmem:[%s15 + $0x50] sm:$0xff]
      %v10263 = vld [vmem:[%s15 + $0x58] sm:$0xff]
      %v10264 = vld [vmem:[%s15 + $0x60] sm:$0xff]
      %v10265 = vld [vmem:[%s15 + $0x68] sm:$0xff]
      %v10266 = vld [vmem:[%s15 + $0x70] sm:$0xff]
      %v10267 = vld [vmem:[%s15 + $0x78] sm:$0xff]
      %v10268 = vld [vmem:[%s15 + $0x80] sm:$0xff]
      %v10269 = vld [vmem:[%s15 + $0x88] sm:$0xff]
      %v10270 = vld [vmem:[%s15 + $0x90] sm:$0xff]
      %v10271 = vld [vmem:[%s15 + $0x98] sm:$0xff]
      %v10272 = vld [vmem:[%s15 + $0xa0] sm:$0xff]
      %v10273 = vld [vmem:[%s15 + $0xa8] sm:$0xff]
      %v10274 = vld [vmem:[%s15 + $0xb0] sm:$0xff]
      %v10275 = vld [vmem:[%s15 + $0xb8] sm:$0xff]
      %v10276 = vld [vmem:[%s15 + $0xc0] sm:$0xff]
      %v10277 = vld [vmem:[%s15 + $0xc8] sm:$0xff]
      %v10278 = vld [vmem:[%s15 + $0xd0] sm:$0xff]
      %v10279 = vld [vmem:[%s15 + $0xd8] sm:$0xff]
      %v10280 = vld [vmem:[%s15 + $0xe0] sm:$0xff]
      %v10281 = vld [vmem:[%s15 + $0xe8] sm:$0xff]
      %v10282 = vld [vmem:[%s15 + $0xf0] sm:$0xff]
      %v10283 = vld [vmem:[%s15 + $0xf8] sm:$0xff]
      %v10284 = vld [vmem:[%s15 + $0x100] sm:$0xff]
      %v10285 = vld [vmem:[%s15 + $0x108] sm:$0xff]
      %v10286 = vld [vmem:[%s15 + $0x110] sm:$0xff]
      %v10287 = vld [vmem:[%s15 + $0x118] sm:$0xff]
      %v10288 = vld [vmem:[%s15 + $0x120] sm:$0xff]
      %v10289 = vld [vmem:[%s15 + $0x128] sm:$0xff]
      %v10290 = vld [vmem:[%s15 + $0x130] sm:$0xff]
      %v10291 = vld [vmem:[%s15 + $0x138] sm:$0xff]
      %v10292 = vld [vmem:[%s15 + $0x140] sm:$0xff]
      %v10293 = vld [vmem:[%s15 + $0x148] sm:$0xff]
      %v10294 = vld [vmem:[%s15 + $0x150] sm:$0xff]
      %v10295 = vld [vmem:[%s15 + $0x158] sm:$0xff]
      %v10296 = vld [vmem:[%s15 + $0x160] sm:$0xff]
      %v10297 = vld [vmem:[%s15 + $0x168] sm:$0xff]
      %v10298 = vld [vmem:[%s15 + $0x170] sm:$0xff]
      %v10299 = vld [vmem:[%s15 + $0x178] sm:$0xff]
      %v10300 = vld [vmem:[%s15 + $0x180] sm:$0xff]
      %v10301 = vld [vmem:[%s15 + $0x188] sm:$0xff]
      %v10302 = vld [vmem:[%s15 + $0x190] sm:$0xff]
      %v10303 = vld [vmem:[%s15 + $0x198] sm:$0xff]
      %v10304 = vld [vmem:[%s15 + $0x1a0] sm:$0xff]
      %v10305 = vld [vmem:[%s15 + $0x1a8] sm:$0xff]
      %v10306 = vld [vmem:[%s15 + $0x1b0] sm:$0xff]
      %v10307 = vld [vmem:[%s15 + $0x1b8] sm:$0xff]
      %v10308 = vld [vmem:[%s15 + $0x1c0] sm:$0xff]
      %v10309 = vld [vmem:[%s15 + $0x1c8] sm:$0xff]
      %v10310 = vld [vmem:[%s15 + $0x1d0] sm:$0xff]
      %v10311 = vld [vmem:[%s15 + $0x1d8] sm:$0xff]
      %v10312 = vld [vmem:[%s15 + $0x1e0] sm:$0xff]
      %v10313 = vld [vmem:[%s15 + $0x1e8] sm:$0xff]
      %v10314 = vld [vmem:[%s15 + $0x1f0] sm:$0xff]
      %v10315 = vld [vmem:[%s15 + $0x1f8] sm:$0xff]
      %v10316 = vld [vmem:[%s15 + $0x200] sm:$0xff]
      %v10317 = vld [vmem:[%s15 + $0x208] sm:$0xff]
      %v10318 = vld [vmem:[%s15 + $0x210] sm:$0xff]
      %v10319 = vld [vmem:[%s15 + $0x218] sm:$0xff]
      %v10320 = vld [vmem:[%s15 + $0x220] sm:$0xff]
      %v10321 = vld [vmem:[%s15 + $0x228] sm:$0xff]
      %v10322 = vld [vmem:[%s15 + $0x230] sm:$0xff]
      %v10323 = vld [vmem:[%s15 + $0x238] sm:$0xff]
      %v10324 = vld [vmem:[%s15 + $0x240] sm:$0xff]
      %v10325 = vld [vmem:[%s15 + $0x248] sm:$0xff]
      %v10326 = vld [vmem:[%s15 + $0x250] sm:$0xff]
      %v10327 = vld [vmem:[%s15 + $0x258] sm:$0xff]
      %v10328 = vld [vmem:[%s15 + $0x260] sm:$0xff]
      %v10329 = vld [vmem:[%s15 + $0x268] sm:$0xff]
      %v10330 = vld [vmem:[%s15 + $0x270] sm:$0xff]
      %v10331 = vld [vmem:[%s15 + $0x278] sm:$0xff]
      %v10332 = vld [vmem:[%s15 + $0x280] sm:$0xff]
      %v10333 = vld [vmem:[%s15 + $0x288] sm:$0xff]
      %v10334 = vld [vmem:[%s15 + $0x290] sm:$0xff]
      %v10335 = vld [vmem:[%s15 + $0x298] sm:$0xff]
      %v10336 = vld [vmem:[%s15 + $0x2a0] sm:$0xff]
      %v10337 = vld [vmem:[%s15 + $0x2a8] sm:$0xff]
      %v10338 = vld [vmem:[%s15 + $0x2b0] sm:$0xff]
      %v10339 = vld [vmem:[%s15 + $0x2b8] sm:$0xff]
      %v10340 = vld [vmem:[%s15 + $0x2c0] sm:$0xff]
      %v10341 = vld [vmem:[%s15 + $0x2c8] sm:$0xff]
      %v10342 = vld [vmem:[%s15 + $0x2d0] sm:$0xff]
      %v10343 = vld [vmem:[%s15 + $0x2d8] sm:$0xff]
      %v10344 = vld [vmem:[%s15 + $0x2e0] sm:$0xff]
      %v10345 = vld [vmem:[%s15 + $0x2e8] sm:$0xff]
      %v10346 = vld [vmem:[%s15 + $0x2f0] sm:$0xff]
      %v10347 = vld [vmem:[%s15 + $0x2f8] sm:$0xff]
      %v10348 = vld [vmem:[%s15 + $0x300] sm:$0xff]
      %v10349 = vld [vmem:[%s15 + $0x308] sm:$0xff]
      %v10350 = vld [vmem:[%s15 + $0x310] sm:$0xff]
      %v10351 = vld [vmem:[%s15 + $0x318] sm:$0xff]
      %v10352 = vld [vmem:[%s15 + $0x320] sm:$0xff]
      %v10353 = vld [vmem:[%s15 + $0x328] sm:$0xff]
      %v10354 = vld [vmem:[%s15 + $0x330] sm:$0xff]
      %v10355 = vld [vmem:[%s15 + $0x338] sm:$0xff]
      %v10356 = vld [vmem:[%s15 + $0x340] sm:$0xff]
      %v10357 = vld [vmem:[%s15 + $0x348] sm:$0xff]
      %v10358 = vld [vmem:[%s15 + $0x350] sm:$0xff]
      %v10359 = vld [vmem:[%s15 + $0x358] sm:$0xff]
      %v10360 = vld [vmem:[%s15 + $0x360] sm:$0xff]
      %v10361 = vld [vmem:[%s15 + $0x368] sm:$0xff]
      %v10362 = vld [vmem:[%s15 + $0x370] sm:$0xff]
      %v10363 = vld [vmem:[%s15 + $0x378] sm:$0xff]
      %v10364 = vld [vmem:[%s15 + $0x380] sm:$0xff]
      %v10365 = vld [vmem:[%s15 + $0x388] sm:$0xff]
      %v10366 = vld [vmem:[%s15 + $0x390] sm:$0xff]
      %v10367 = vld [vmem:[%s15 + $0x398] sm:$0xff]
      %v10368 = vld [vmem:[%s15 + $0x3a0] sm:$0xff]
      %v10369 = vld [vmem:[%s15 + $0x3a8] sm:$0xff]
      %v10370 = vld [vmem:[%s15 + $0x3b0] sm:$0xff]
      %v10371 = vld [vmem:[%s15 + $0x3b8] sm:$0xff]
      %v10372 = vld [vmem:[%s15 + $0x3c0] sm:$0xff]
      %v10373 = vld [vmem:[%s15 + $0x3c8] sm:$0xff]
      %v10374 = vld [vmem:[%s15 + $0x3d0] sm:$0xff]
      %v10375 = vld [vmem:[%s15 + $0x3d8] sm:$0xff]
      %v10376 = vld [vmem:[%s15 + $0x3e0] sm:$0xff]
      %v10377 = vld [vmem:[%s15 + $0x3e8] sm:$0xff]
      %v10378 = vld [vmem:[%s15 + $0x3f0] sm:$0xff]
      %v10379 = vld [vmem:[%s15 + $0x3f8] sm:$0xff]
      %v10380 = vld [vmem:[%s15 + $0x400] sm:$0xff]
      %v10381 = vld [vmem:[%s15 + $0x408] sm:$0xff]
      %v10382 = vld [vmem:[%s15 + $0x410] sm:$0xff]
      %v10383 = vld [vmem:[%s15 + $0x418] sm:$0xff]
      %v10384 = vld [vmem:[%s15 + $0x420] sm:$0xff]
      %v10385 = vld [vmem:[%s15 + $0x428] sm:$0xff]
      %v10386 = vld [vmem:[%s15 + $0x430] sm:$0xff]
      %v10387 = vld [vmem:[%s15 + $0x438] sm:$0xff]
      %v10388 = vld [vmem:[%s15 + $0x440] sm:$0xff]
      %v10389 = vld [vmem:[%s15 + $0x448] sm:$0xff]
      %v10390 = vld [vmem:[%s15 + $0x450] sm:$0xff]
      %v10391 = vld [vmem:[%s15 + $0x458] sm:$0xff]
      %v10392 = vld [vmem:[%s15 + $0x460] sm:$0xff]
      %v10393 = vld [vmem:[%s15 + $0x468] sm:$0xff]
      %v10394 = vld [vmem:[%s15 + $0x470] sm:$0xff]
      %v10395 = vld [vmem:[%s15 + $0x478] sm:$0xff]
      %v10396 = vld [vmem:[%s15 + $0x480] sm:$0xff]
      %v10397 = vld [vmem:[%s15 + $0x488] sm:$0xff]
      %v10398 = vld [vmem:[%s15 + $0x490] sm:$0xff]
      %v10399 = vld [vmem:[%s15 + $0x498] sm:$0xff]
      %v10400 = vld [vmem:[%s15 + $0x4a0] sm:$0xff]
      %v10401 = vld [vmem:[%s15 + $0x4a8] sm:$0xff]
      %v10402 = vld [vmem:[%s15 + $0x4b0] sm:$0xff]
      %v10403 = vld [vmem:[%s15 + $0x4b8] sm:$0xff]
      %v10404 = vld [vmem:[%s15 + $0x4c0] sm:$0xff]
      %v10405 = vld [vmem:[%s15 + $0x4c8] sm:$0xff]
      %v10406 = vld [vmem:[%s15 + $0x4d0] sm:$0xff]
      %v10407 = vld [vmem:[%s15 + $0x4d8] sm:$0xff]
      %v10408 = vld [vmem:[%s15 + $0x4e0] sm:$0xff]
      %v10409 = vld [vmem:[%s15 + $0x4e8] sm:$0xff]
      %v10410 = vld [vmem:[%s15 + $0x4f0] sm:$0xff]
      %v10411 = vld [vmem:[%s15 + $0x4f8] sm:$0xff]
      %v10412 = vld [vmem:[%s15 + $0x500] sm:$0xff]
      %v10413 = vld [vmem:[%s15 + $0x508] sm:$0xff]
      %v10414 = vld [vmem:[%s15 + $0x510] sm:$0xff]
      %v10415 = vld [vmem:[%s15 + $0x518] sm:$0xff]
      %v10416 = vld [vmem:[%s15 + $0x520] sm:$0xff]
      %v10417 = vld [vmem:[%s15 + $0x528] sm:$0xff]
      %v10418 = vld [vmem:[%s15 + $0x530] sm:$0xff]
      %v10419 = vld [vmem:[%s15 + $0x538] sm:$0xff]
      %v10420 = vld [vmem:[%s15 + $0x540] sm:$0xff]
      %v10421 = vld [vmem:[%s15 + $0x548] sm:$0xff]
      %v10422 = vld [vmem:[%s15 + $0x550] sm:$0xff]
      %v10423 = vld [vmem:[%s15 + $0x558] sm:$0xff]
      %v10424 = vld [vmem:[%s15 + $0x560] sm:$0xff]
      %v10425 = vld [vmem:[%s15 + $0x568] sm:$0xff]
      %v10426 = vld [vmem:[%s15 + $0x570] sm:$0xff]
      %v10427 = vld [vmem:[%s15 + $0x578] sm:$0xff]
      %v10428 = vld [vmem:[%s15 + $0x580] sm:$0xff]
      %v10429 = vld [vmem:[%s15 + $0x588] sm:$0xff]
      %v10430 = vld [vmem:[%s15 + $0x590] sm:$0xff]
      %v10431 = vld [vmem:[%s15 + $0x598] sm:$0xff]
      %v10432 = vld [vmem:[%s15 + $0x5a0] sm:$0xff]
      %v10433 = vld [vmem:[%s15 + $0x5a8] sm:$0xff]
      %v10434 = vld [vmem:[%s15 + $0x5b0] sm:$0xff]
      %v10435 = vld [vmem:[%s15 + $0x5b8] sm:$0xff]
      %v10436 = vld [vmem:[%s15 + $0x5c0] sm:$0xff]
      %v10437 = vld [vmem:[%s15 + $0x5c8] sm:$0xff]
      %v10438 = vld [vmem:[%s15 + $0x5d0] sm:$0xff]
      %v10439 = vld [vmem:[%s15 + $0x5d8] sm:$0xff]
      %v10440 = vld [vmem:[%s15 + $0x5e0] sm:$0xff]
      %v10441 = vld [vmem:[%s15 + $0x5e8] sm:$0xff]
      %v10442 = vld [vmem:[%s15 + $0x5f0] sm:$0xff]
      %v10443 = vld [vmem:[%s15 + $0x5f8] sm:$0xff]
      %v10444 = vld [vmem:[%s15 + $0x600] sm:$0xff]
      %v10445 = vld [vmem:[%s15 + $0x608] sm:$0xff]
      %v10446 = vld [vmem:[%s15 + $0x610] sm:$0xff]
      %v10447 = vld [vmem:[%s15 + $0x618] sm:$0xff]
      %v10448 = vld [vmem:[%s15 + $0x620] sm:$0xff]
      %v10449 = vld [vmem:[%s15 + $0x628] sm:$0xff]
      %v10450 = vld [vmem:[%s15 + $0x630] sm:$0xff]
      %v10451 = vld [vmem:[%s15 + $0x638] sm:$0xff]
      %v10452 = vld [vmem:[%s15 + $0x640] sm:$0xff]
      %v10453 = vld [vmem:[%s15 + $0x648] sm:$0xff]
      %v10454 = vld [vmem:[%s15 + $0x650] sm:$0xff]
      %v10455 = vld [vmem:[%s15 + $0x658] sm:$0xff]
      %v10456 = vld [vmem:[%s15 + $0x660] sm:$0xff]
      %v10457 = vld [vmem:[%s15 + $0x668] sm:$0xff]
      %v10458 = vld [vmem:[%s15 + $0x670] sm:$0xff]
      %v10459 = vld [vmem:[%s15 + $0x678] sm:$0xff]
      %v10460 = vld [vmem:[%s15 + $0x680] sm:$0xff]
      %v10461 = vld [vmem:[%s15 + $0x688] sm:$0xff]
      %v10462 = vld [vmem:[%s15 + $0x690] sm:$0xff]
      %v10463 = vld [vmem:[%s15 + $0x698] sm:$0xff]
      %v10464 = vld [vmem:[%s15 + $0x6a0] sm:$0xff]
      %v10465 = vld [vmem:[%s15 + $0x6a8] sm:$0xff]
      %v10466 = vld [vmem:[%s15 + $0x6b0] sm:$0xff]
      %v10467 = vld [vmem:[%s15 + $0x6b8] sm:$0xff]
      %v10468 = vld [vmem:[%s15 + $0x6c0] sm:$0xff]
      %v10469 = vld [vmem:[%s15 + $0x6c8] sm:$0xff]
      %v10470 = vld [vmem:[%s15 + $0x6d0] sm:$0xff]
      %v10471 = vld [vmem:[%s15 + $0x6d8] sm:$0xff]
      %v10472 = vld [vmem:[%s15 + $0x6e0] sm:$0xff]
      %v10473 = vld [vmem:[%s15 + $0x6e8] sm:$0xff]
      %v10474 = vld [vmem:[%s15 + $0x6f0] sm:$0xff]
      %v10475 = vld [vmem:[%s15 + $0x6f8] sm:$0xff]
      %v10476 = vld [vmem:[%s15 + $0x700] sm:$0xff]
      %v10477 = vld [vmem:[%s15 + $0x708] sm:$0xff]
      %v10478 = vld [vmem:[%s15 + $0x710] sm:$0xff]
      %v10479 = vld [vmem:[%s15 + $0x718] sm:$0xff]
      %v10480 = vld [vmem:[%s15 + $0x720] sm:$0xff]
      %v10481 = vld [vmem:[%s15 + $0x728] sm:$0xff]
      %v10482 = vld [vmem:[%s15 + $0x730] sm:$0xff]
      %v10483 = vld [vmem:[%s15 + $0x738] sm:$0xff]
      %v10484 = vld [vmem:[%s15 + $0x740] sm:$0xff]
      %v10485 = vld [vmem:[%s15 + $0x748] sm:$0xff]
      %v10486 = vld [vmem:[%s15 + $0x750] sm:$0xff]
      %v10487 = vld [vmem:[%s15 + $0x758] sm:$0xff]
      %v10488 = vld [vmem:[%s15 + $0x760] sm:$0xff]
      %v10489 = vld [vmem:[%s15 + $0x768] sm:$0xff]
      %v10490 = vld [vmem:[%s15 + $0x770] sm:$0xff]
      %v10491 = vld [vmem:[%s15 + $0x778] sm:$0xff]
      %v10492 = vld [vmem:[%s15 + $0x780] sm:$0xff]
      %v10493 = vld [vmem:[%s15 + $0x788] sm:$0xff]
      %v10494 = vld [vmem:[%s15 + $0x790] sm:$0xff]
      %v10495 = vld [vmem:[%s15 + $0x798] sm:$0xff]
      %v10496 = vld [vmem:[%s15 + $0x7a0] sm:$0xff]
      %v10497 = vld [vmem:[%s15 + $0x7a8] sm:$0xff]
      %v10498 = vld [vmem:[%s15 + $0x7b0] sm:$0xff]
      %v10499 = vld [vmem:[%s15 + $0x7b8] sm:$0xff]
      %v10500 = vld [vmem:[%s15 + $0x7c0] sm:$0xf]
      %v10501 = vld [vmem:[%s15 + $0x7c8] sm:$0xf]
      %v10502 = vld [vmem:[%s15 + $0x7d0] sm:$0xf]
      %v10503 = vld [vmem:[%s15 + $0x7d8] sm:$0xf]
      %v10504 = vld [vmem:[%s16] sm:$0xf]
      %v10506 = vlaneseq
      %v10507 = vshrl.u32 %v10506, 7
      %v10508 = vsub.s32 0, %v10507
      %v10509 = vrot.slane %v10504, %v10508
      %v10510 = vlaneseq
      %v10511 = vshrl.u32 %v10510, 7
      %v10512 = vsub.s32 1, %v10511
      %v10513 = vrot.slane %v10504, %v10512
      %v10514 = vlaneseq
      %v10515 = vshrl.u32 %v10514, 7
      %v10516 = vsub.s32 2, %v10515
      %v10517 = vrot.slane %v10504, %v10516
      %v10518 = vlaneseq
      %v10519 = vshrl.u32 %v10518, 7
      %v10520 = vsub.s32 3, %v10519
      %v10521 = vrot.slane %v10504, %v10520
      %vm10526 = vcmask 949248
      %v10528 = vsel %vm10526, %v10251, 0
      %v10531 = vsel %vm857, %v10500, 0
      %v10534 = vsel %vm857, %v10501, 0
      %v10537 = vsel %vm857, %v10502, 0
      %v10540 = vsel %vm857, %v10503, 0
      %10542 = vmatprep.subr.mxu0 %v10313
      %10543 = vmatpush1.msra.mxu0 %v10312
      %10544 = vmatprep.subr.mxu0 %v10309
      %10545 = vmatpush1.msra.mxu0 %v10308
      %10546 = vmatprep.subr.mxu0 %v10305
      %10547 = vmatpush1.msra.mxu0 %v10304
      %10548 = vmatprep.subr.mxu0 %v10301
      %10549 = vmatpush1.msra.mxu0 %v10300
      %10550 = vmatprep.subr.mxu0 %v10297
      %10551 = vmatpush1.msra.mxu0 %v10296
      %10552 = vmatprep.subr.mxu0 %v10293
      %10553 = vmatpush1.msra.mxu0 %v10292
      %10554 = vmatprep.subr.mxu0 %v10289
      %10555 = vmatpush1.msra.mxu0 %v10288
      %10556 = vmatprep.subr.mxu0 %v10285
      %10557 = vmatpush1.msra.mxu0 %v10284
      %10558 = vmatprep.subr.mxu0 %v10281
      %10559 = vmatpush1.msra.mxu0 %v10280
      %10560 = vmatprep.subr.mxu0 %v10277
      %10561 = vmatpush1.msra.mxu0 %v10276
      %10562 = vmatprep.subr.mxu0 %v10273
      %10563 = vmatpush1.msra.mxu0 %v10272
      %10564 = vmatprep.subr.mxu0 %v10269
      %10565 = vmatpush1.msra.mxu0 %v10268
      %10566 = vmatprep.subr.mxu0 %v10265
      %10567 = vmatpush1.msra.mxu0 %v10264
      %10568 = vmatprep.subr.mxu0 %v10261
      %10569 = vmatpush1.msra.mxu0 %v10260
      %10570 = vmatprep.subr.mxu0 %v10257
      %10571 = vmatpush1.msra.mxu0 %v10256
      %10572 = vmatprep.subr.mxu0 %v10253
      %10573 = vmatpush1.msra.mxu0 %v10252
      %10574 = vmatprep.subr.mxu0 %v10377
      %10575 = vmatpush2.msra.mxu0 %v10376
      %10576 = vmatprep.subr.mxu0 %v10373
      %10577 = vmatpush2.msra.mxu0 %v10372
      %10578 = vmatprep.subr.mxu0 %v10369
      %10579 = vmatpush2.msra.mxu0 %v10368
      %10580 = vmatprep.subr.mxu0 %v10365
      %10581 = vmatpush2.msra.mxu0 %v10364
      %10582 = vmatprep.subr.mxu0 %v10361
      %10583 = vmatpush2.msra.mxu0 %v10360
      %10584 = vmatprep.subr.mxu0 %v10357
      %10585 = vmatpush2.msra.mxu0 %v10356
      %10586 = vmatprep.subr.mxu0 %v10353
      %10587 = vmatpush2.msra.mxu0 %v10352
      %10588 = vmatprep.subr.mxu0 %v10349
      %10589 = vmatpush2.msra.mxu0 %v10348
      %10590 = vmatprep.subr.mxu0 %v10345
      %10591 = vmatpush2.msra.mxu0 %v10344
      %10592 = vmatprep.subr.mxu0 %v10341
      %10593 = vmatpush2.msra.mxu0 %v10340
      %10594 = vmatprep.subr.mxu0 %v10337
      %10595 = vmatpush2.msra.mxu0 %v10336
      %10596 = vmatprep.subr.mxu0 %v10333
      %10597 = vmatpush2.msra.mxu0 %v10332
      %10598 = vmatprep.subr.mxu0 %v10329
      %10599 = vmatpush2.msra.mxu0 %v10328
      %10600 = vmatprep.subr.mxu0 %v10325
      %10601 = vmatpush2.msra.mxu0 %v10324
      %10602 = vmatprep.subr.mxu0 %v10321
      %10603 = vmatpush2.msra.mxu0 %v10320
      %10604 = vmatprep.subr.mxu0 %v10317
      %10605 = vmatpush2.msra.mxu0 %v10316
      %10606 = vmatprep.mubr.f32.mxu0 %v10249
      %10607 = vmatmul.mubr.f32.gmra.mxu0 %v10248
      %v10608 = vpop.f32.mrf.mxu0
      %v10609 = vadd.f32 %v10509, %v10608
      %v10610 = vpop.f32.mrf.mxu0
      %v10611 = vadd.f32 %v10513, %v10610
      %10612 = vdwg.mxu0
      %10613 = vmatprep.subr.mxu0 %v10441
      %10614 = vmatpush1.msra.mxu0 %v10440
      %10615 = vmatprep.subr.mxu0 %v10437
      %10616 = vmatpush1.msra.mxu0 %v10436
      %10617 = vmatprep.subr.mxu0 %v10433
      %10618 = vmatpush1.msra.mxu0 %v10432
      %10619 = vmatprep.subr.mxu0 %v10429
      %10620 = vmatpush1.msra.mxu0 %v10428
      %10621 = vmatprep.subr.mxu0 %v10425
      %10622 = vmatpush1.msra.mxu0 %v10424
      %10623 = vmatprep.subr.mxu0 %v10421
      %10624 = vmatpush1.msra.mxu0 %v10420
      %10625 = vmatprep.subr.mxu0 %v10417
      %10626 = vmatpush1.msra.mxu0 %v10416
      %10627 = vmatprep.subr.mxu0 %v10413
      %10628 = vmatpush1.msra.mxu0 %v10412
      %10629 = vmatprep.subr.mxu0 %v10409
      %10630 = vmatpush1.msra.mxu0 %v10408
      %10631 = vmatprep.subr.mxu0 %v10405
      %10632 = vmatpush1.msra.mxu0 %v10404
      %10633 = vmatprep.subr.mxu0 %v10401
      %10634 = vmatpush1.msra.mxu0 %v10400
      %10635 = vmatprep.subr.mxu0 %v10397
      %10636 = vmatpush1.msra.mxu0 %v10396
      %10637 = vmatprep.subr.mxu0 %v10393
      %10638 = vmatpush1.msra.mxu0 %v10392
      %10639 = vmatprep.subr.mxu0 %v10389
      %10640 = vmatpush1.msra.mxu0 %v10388
      %10641 = vmatprep.subr.mxu0 %v10385
      %10642 = vmatpush1.msra.mxu0 %v10384
      %10643 = vmatprep.subr.mxu0 %v10381
      %10644 = vmatpush1.msra.mxu0 %v10380
      %10645 = vmatprep.subr.mxu0 0.0
      %10646 = vmatpush2.msra.mxu0 0.0
      %10647 = vmatprep.subr.mxu0 %v10534
      %10648 = vmatpush2.msra.mxu0 %v10531
      %10649 = vmatprep.subr.mxu0 %v10497
      %10650 = vmatpush2.msra.mxu0 %v10496
      %10651 = vmatprep.subr.mxu0 %v10493
      %10652 = vmatpush2.msra.mxu0 %v10492
      %10653 = vmatprep.subr.mxu0 %v10489
      %10654 = vmatpush2.msra.mxu0 %v10488
      %10655 = vmatprep.subr.mxu0 %v10485
      %10656 = vmatpush2.msra.mxu0 %v10484
      %10657 = vmatprep.subr.mxu0 %v10481
      %10658 = vmatpush2.msra.mxu0 %v10480
      %10659 = vmatprep.subr.mxu0 %v10477
      %10660 = vmatpush2.msra.mxu0 %v10476
      %10661 = vmatprep.subr.mxu0 %v10473
      %10662 = vmatpush2.msra.mxu0 %v10472
      %10663 = vmatprep.subr.mxu0 %v10469
      %10664 = vmatpush2.msra.mxu0 %v10468
      %10665 = vmatprep.subr.mxu0 %v10465
      %10666 = vmatpush2.msra.mxu0 %v10464
      %10667 = vmatprep.subr.mxu0 %v10461
      %10668 = vmatpush2.msra.mxu0 %v10460
      %10669 = vmatprep.subr.mxu0 %v10457
      %10670 = vmatpush2.msra.mxu0 %v10456
      %10671 = vmatprep.subr.mxu0 %v10453
      %10672 = vmatpush2.msra.mxu0 %v10452
      %10673 = vmatprep.subr.mxu0 %v10449
      %10674 = vmatpush2.msra.mxu0 %v10448
      %10675 = vmatprep.subr.mxu0 %v10445
      %10676 = vmatpush2.msra.mxu0 %v10444
      %10677 = vmatprep.mubr.f32.mxu0 %v10528
      %10678 = vmatmul.mubr.f32.gmra.mxu0 %v10250
      %v10679 = vpop.f32.mrf.mxu0
      %v10680 = vadd.f32 %v10609, %v10679
      %v10681 = vpop.f32.mrf.mxu0
      %v10682 = vadd.f32 %v10611, %v10681
      %10683 = vdwg.mxu0
      %10684 = vmatprep.subr.mxu0 %v10315
      %10685 = vmatpush1.msra.mxu0 %v10314
      %10686 = vmatprep.subr.mxu0 %v10311
      %10687 = vmatpush1.msra.mxu0 %v10310
      %10688 = vmatprep.subr.mxu0 %v10307
      %10689 = vmatpush1.msra.mxu0 %v10306
      %10690 = vmatprep.subr.mxu0 %v10303
      %10691 = vmatpush1.msra.mxu0 %v10302
      %10692 = vmatprep.subr.mxu0 %v10299
      %10693 = vmatpush1.msra.mxu0 %v10298
      %10694 = vmatprep.subr.mxu0 %v10295
      %10695 = vmatpush1.msra.mxu0 %v10294
      %10696 = vmatprep.subr.mxu0 %v10291
      %10697 = vmatpush1.msra.mxu0 %v10290
      %10698 = vmatprep.subr.mxu0 %v10287
      %10699 = vmatpush1.msra.mxu0 %v10286
      %10700 = vmatprep.subr.mxu0 %v10283
      %10701 = vmatpush1.msra.mxu0 %v10282
      %10702 = vmatprep.subr.mxu0 %v10279
      %10703 = vmatpush1.msra.mxu0 %v10278
      %10704 = vmatprep.subr.mxu0 %v10275
      %10705 = vmatpush1.msra.mxu0 %v10274
      %10706 = vmatprep.subr.mxu0 %v10271
      %10707 = vmatpush1.msra.mxu0 %v10270
      %10708 = vmatprep.subr.mxu0 %v10267
      %10709 = vmatpush1.msra.mxu0 %v10266
      %10710 = vmatprep.subr.mxu0 %v10263
      %10711 = vmatpush1.msra.mxu0 %v10262
      %10712 = vmatprep.subr.mxu0 %v10259
      %10713 = vmatpush1.msra.mxu0 %v10258
      %10714 = vmatprep.subr.mxu0 %v10255
      %10715 = vmatpush1.msra.mxu0 %v10254
      %10716 = vmatprep.subr.mxu0 %v10379
      %10717 = vmatpush2.msra.mxu0 %v10378
      %10718 = vmatprep.subr.mxu0 %v10375
      %10719 = vmatpush2.msra.mxu0 %v10374
      %10720 = vmatprep.subr.mxu0 %v10371
      %10721 = vmatpush2.msra.mxu0 %v10370
      %10722 = vmatprep.subr.mxu0 %v10367
      %10723 = vmatpush2.msra.mxu0 %v10366
      %10724 = vmatprep.subr.mxu0 %v10363
      %10725 = vmatpush2.msra.mxu0 %v10362
      %10726 = vmatprep.subr.mxu0 %v10359
      %10727 = vmatpush2.msra.mxu0 %v10358
      %10728 = vmatprep.subr.mxu0 %v10355
      %10729 = vmatpush2.msra.mxu0 %v10354
      %10730 = vmatprep.subr.mxu0 %v10351
      %10731 = vmatpush2.msra.mxu0 %v10350
      %10732 = vmatprep.subr.mxu0 %v10347
      %10733 = vmatpush2.msra.mxu0 %v10346
      %10734 = vmatprep.subr.mxu0 %v10343
      %10735 = vmatpush2.msra.mxu0 %v10342
      %10736 = vmatprep.subr.mxu0 %v10339
      %10737 = vmatpush2.msra.mxu0 %v10338
      %10738 = vmatprep.subr.mxu0 %v10335
      %10739 = vmatpush2.msra.mxu0 %v10334
      %10740 = vmatprep.subr.mxu0 %v10331
      %10741 = vmatpush2.msra.mxu0 %v10330
      %10742 = vmatprep.subr.mxu0 %v10327
      %10743 = vmatpush2.msra.mxu0 %v10326
      %10744 = vmatprep.subr.mxu0 %v10323
      %10745 = vmatpush2.msra.mxu0 %v10322
      %10746 = vmatprep.subr.mxu0 %v10319
      %10747 = vmatpush2.msra.mxu0 %v10318
      %10748 = vmatprep.mubr.f32.mxu0 %v10249
      %10749 = vmatmul.mubr.f32.gmra.mxu0 %v10248
      %v10750 = vpop.f32.mrf.mxu0
      %v10751 = vadd.f32 %v10517, %v10750
      %v10752 = vpop.f32.mrf.mxu0
      %v10753 = vadd.f32 %v10521, %v10752
      %10754 = vdwg.mxu0
      %10755 = vmatprep.subr.mxu0 %v10443
      %10756 = vmatpush1.msra.mxu0 %v10442
      %10757 = vmatprep.subr.mxu0 %v10439
      %10758 = vmatpush1.msra.mxu0 %v10438
      %10759 = vmatprep.subr.mxu0 %v10435
      %10760 = vmatpush1.msra.mxu0 %v10434
      %10761 = vmatprep.subr.mxu0 %v10431
      %10762 = vmatpush1.msra.mxu0 %v10430
      %10763 = vmatprep.subr.mxu0 %v10427
      %10764 = vmatpush1.msra.mxu0 %v10426
      %10765 = vmatprep.subr.mxu0 %v10423
      %10766 = vmatpush1.msra.mxu0 %v10422
      %10767 = vmatprep.subr.mxu0 %v10419
      %10768 = vmatpush1.msra.mxu0 %v10418
      %10769 = vmatprep.subr.mxu0 %v10415
      %10770 = vmatpush1.msra.mxu0 %v10414
      %10771 = vmatprep.subr.mxu0 %v10411
      %10772 = vmatpush1.msra.mxu0 %v10410
      %10773 = vmatprep.subr.mxu0 %v10407
      %10774 = vmatpush1.msra.mxu0 %v10406
      %10775 = vmatprep.subr.mxu0 %v10403
      %10776 = vmatpush1.msra.mxu0 %v10402
      %10777 = vmatprep.subr.mxu0 %v10399
      %10778 = vmatpush1.msra.mxu0 %v10398
      %10779 = vmatprep.subr.mxu0 %v10395
      %10780 = vmatpush1.msra.mxu0 %v10394
      %10781 = vmatprep.subr.mxu0 %v10391
      %10782 = vmatpush1.msra.mxu0 %v10390
      %10783 = vmatprep.subr.mxu0 %v10387
      %10784 = vmatpush1.msra.mxu0 %v10386
      %10785 = vmatprep.subr.mxu0 %v10383
      %10786 = vmatpush1.msra.mxu0 %v10382
      %10787 = vmatprep.subr.mxu0 0.0
      %10788 = vmatpush2.msra.mxu0 0.0
      %10789 = vmatprep.subr.mxu0 %v10540
      %10790 = vmatpush2.msra.mxu0 %v10537
      %10791 = vmatprep.subr.mxu0 %v10499
      %10792 = vmatpush2.msra.mxu0 %v10498
      %10793 = vmatprep.subr.mxu0 %v10495
      %10794 = vmatpush2.msra.mxu0 %v10494
      %10795 = vmatprep.subr.mxu0 %v10491
      %10796 = vmatpush2.msra.mxu0 %v10490
      %10797 = vmatprep.subr.mxu0 %v10487
      %10798 = vmatpush2.msra.mxu0 %v10486
      %10799 = vmatprep.subr.mxu0 %v10483
      %10800 = vmatpush2.msra.mxu0 %v10482
      %10801 = vmatprep.subr.mxu0 %v10479
      %10802 = vmatpush2.msra.mxu0 %v10478
      %10803 = vmatprep.subr.mxu0 %v10475
      %10804 = vmatpush2.msra.mxu0 %v10474
      %10805 = vmatprep.subr.mxu0 %v10471
      %10806 = vmatpush2.msra.mxu0 %v10470
      %10807 = vmatprep.subr.mxu0 %v10467
      %10808 = vmatpush2.msra.mxu0 %v10466
      %10809 = vmatprep.subr.mxu0 %v10463
      %10810 = vmatpush2.msra.mxu0 %v10462
      %10811 = vmatprep.subr.mxu0 %v10459
      %10812 = vmatpush2.msra.mxu0 %v10458
      %10813 = vmatprep.subr.mxu0 %v10455
      %10814 = vmatpush2.msra.mxu0 %v10454
      %10815 = vmatprep.subr.mxu0 %v10451
      %10816 = vmatpush2.msra.mxu0 %v10450
      %10817 = vmatprep.subr.mxu0 %v10447
      %10818 = vmatpush2.msra.mxu0 %v10446
      %10819 = vmatprep.mubr.f32.mxu0 %v10528
      %10820 = vmatmul.mubr.f32.gmra.mxu0 %v10250
      %v10821 = vpop.f32.mrf.mxu0
      %v10822 = vadd.f32 %v10751, %v10821
      %v10823 = vpop.f32.mrf.mxu0
      %v10824 = vadd.f32 %v10753, %v10823
      %10825 = vdwg.mxu0
      %v10826 = vld [vmem:[%s17] sm:$0xff]
      %v10827 = vld [vmem:[%s17 + $0x8] sm:$0xff]
      %v10828 = vld [vmem:[%s17 + $0x10] sm:$0xff]
      %v10829 = vld [vmem:[%s17 + $0x18] sm:$0xff]
      %v10830 = vld [vmem:[%s17 + $0x20] sm:$0xff]
      %v10831 = vld [vmem:[%s17 + $0x28] sm:$0xff]
      %v10832 = vld [vmem:[%s17 + $0x30] sm:$0xff]
      %v10833 = vld [vmem:[%s17 + $0x38] sm:$0xff]
      %v10834 = vld [vmem:[%s17 + $0x40] sm:$0xff]
      %v10835 = vld [vmem:[%s17 + $0x48] sm:$0xff]
      %v10836 = vld [vmem:[%s17 + $0x50] sm:$0xff]
      %v10837 = vld [vmem:[%s17 + $0x58] sm:$0xff]
      %v10838 = vld [vmem:[%s17 + $0x60] sm:$0xff]
      %v10839 = vld [vmem:[%s17 + $0x68] sm:$0xff]
      %v10840 = vld [vmem:[%s17 + $0x70] sm:$0xff]
      %v10841 = vld [vmem:[%s17 + $0x78] sm:$0xff]
      %v10842 = vld [vmem:[%s17 + $0x80] sm:$0xff]
      %v10843 = vld [vmem:[%s17 + $0x88] sm:$0xff]
      %v10844 = vld [vmem:[%s17 + $0x90] sm:$0xff]
      %v10845 = vld [vmem:[%s17 + $0x98] sm:$0xff]
      %v10846 = vld [vmem:[%s17 + $0xa0] sm:$0xff]
      %v10847 = vld [vmem:[%s17 + $0xa8] sm:$0xff]
      %v10848 = vld [vmem:[%s17 + $0xb0] sm:$0xff]
      %v10849 = vld [vmem:[%s17 + $0xb8] sm:$0xff]
      %v10850 = vld [vmem:[%s17 + $0xc0] sm:$0xff]
      %v10851 = vld [vmem:[%s17 + $0xc8] sm:$0xff]
      %v10852 = vld [vmem:[%s17 + $0xd0] sm:$0xff]
      %v10853 = vld [vmem:[%s17 + $0xd8] sm:$0xff]
      %v10854 = vld [vmem:[%s17 + $0xe0] sm:$0xff]
      %v10855 = vld [vmem:[%s17 + $0xe8] sm:$0xff]
      %v10856 = vld [vmem:[%s17 + $0xf0] sm:$0xff]
      %v10857 = vld [vmem:[%s17 + $0xf8] sm:$0xff]
      %v10858 = vld [vmem:[%s17 + $0x100] sm:$0xff]
      %v10859 = vld [vmem:[%s17 + $0x108] sm:$0xff]
      %v10860 = vld [vmem:[%s17 + $0x110] sm:$0xff]
      %v10861 = vld [vmem:[%s17 + $0x118] sm:$0xff]
      %v10862 = vld [vmem:[%s17 + $0x120] sm:$0xff]
      %v10863 = vld [vmem:[%s17 + $0x128] sm:$0xff]
      %v10864 = vld [vmem:[%s17 + $0x130] sm:$0xff]
      %v10865 = vld [vmem:[%s17 + $0x138] sm:$0xff]
      %v10866 = vld [vmem:[%s17 + $0x140] sm:$0xff]
      %v10867 = vld [vmem:[%s17 + $0x148] sm:$0xff]
      %v10868 = vld [vmem:[%s17 + $0x150] sm:$0xff]
      %v10869 = vld [vmem:[%s17 + $0x158] sm:$0xff]
      %v10870 = vld [vmem:[%s17 + $0x160] sm:$0xff]
      %v10871 = vld [vmem:[%s17 + $0x168] sm:$0xff]
      %v10872 = vld [vmem:[%s17 + $0x170] sm:$0xff]
      %v10873 = vld [vmem:[%s17 + $0x178] sm:$0xff]
      %v10874 = vld [vmem:[%s17 + $0x180] sm:$0xff]
      %v10875 = vld [vmem:[%s17 + $0x188] sm:$0xff]
      %v10876 = vld [vmem:[%s17 + $0x190] sm:$0xff]
      %v10877 = vld [vmem:[%s17 + $0x198] sm:$0xff]
      %v10878 = vld [vmem:[%s17 + $0x1a0] sm:$0xff]
      %v10879 = vld [vmem:[%s17 + $0x1a8] sm:$0xff]
      %v10880 = vld [vmem:[%s17 + $0x1b0] sm:$0xff]
      %v10881 = vld [vmem:[%s17 + $0x1b8] sm:$0xff]
      %v10882 = vld [vmem:[%s17 + $0x1c0] sm:$0xff]
      %v10883 = vld [vmem:[%s17 + $0x1c8] sm:$0xff]
      %v10884 = vld [vmem:[%s17 + $0x1d0] sm:$0xff]
      %v10885 = vld [vmem:[%s17 + $0x1d8] sm:$0xff]
      %v10886 = vld [vmem:[%s17 + $0x1e0] sm:$0xff]
      %v10887 = vld [vmem:[%s17 + $0x1e8] sm:$0xff]
      %v10888 = vld [vmem:[%s17 + $0x1f0] sm:$0xf]
      %v10889 = vld [vmem:[%s18] sm:$0x1]
      %v10891 = vlaneseq
      %v10892 = vshrl.u32 %v10891, 7
      %v10893 = vsub.s32 0, %v10892
      %v10894 = vrot.slane %v10889, %v10893
      %v10897 = vsel %vm10526, %v10824, 0
      %v10900 = vsel %vm857, %v10888, 0
      %10902 = vmatprep.subr.mxu0 0.0
      %10903 = vmatpush1.msra.mxu0 %v10841
      %10904 = vmatprep.subr.mxu0 0.0
      %10905 = vmatpush1.msra.mxu0 %v10840
      %10906 = vmatprep.subr.mxu0 0.0
      %10907 = vmatpush1.msra.mxu0 %v10839
      %10908 = vmatprep.subr.mxu0 0.0
      %10909 = vmatpush1.msra.mxu0 %v10838
      %10910 = vmatprep.subr.mxu0 0.0
      %10911 = vmatpush1.msra.mxu0 %v10837
      %10912 = vmatprep.subr.mxu0 0.0
      %10913 = vmatpush1.msra.mxu0 %v10836
      %10914 = vmatprep.subr.mxu0 0.0
      %10915 = vmatpush1.msra.mxu0 %v10835
      %10916 = vmatprep.subr.mxu0 0.0
      %10917 = vmatpush1.msra.mxu0 %v10834
      %10918 = vmatprep.subr.mxu0 0.0
      %10919 = vmatpush1.msra.mxu0 %v10833
      %10920 = vmatprep.subr.mxu0 0.0
      %10921 = vmatpush1.msra.mxu0 %v10832
      %10922 = vmatprep.subr.mxu0 0.0
      %10923 = vmatpush1.msra.mxu0 %v10831
      %10924 = vmatprep.subr.mxu0 0.0
      %10925 = vmatpush1.msra.mxu0 %v10830
      %10926 = vmatprep.subr.mxu0 0.0
      %10927 = vmatpush1.msra.mxu0 %v10829
      %10928 = vmatprep.subr.mxu0 0.0
      %10929 = vmatpush1.msra.mxu0 %v10828
      %10930 = vmatprep.subr.mxu0 0.0
      %10931 = vmatpush1.msra.mxu0 %v10827
      %10932 = vmatprep.subr.mxu0 0.0
      %10933 = vmatpush1.msra.mxu0 %v10826
      %10934 = vmatprep.subr.mxu0 0.0
      %10935 = vmatpush2.msra.mxu0 %v10857
      %10936 = vmatprep.subr.mxu0 0.0
      %10937 = vmatpush2.msra.mxu0 %v10856
      %10938 = vmatprep.subr.mxu0 0.0
      %10939 = vmatpush2.msra.mxu0 %v10855
      %10940 = vmatprep.subr.mxu0 0.0
      %10941 = vmatpush2.msra.mxu0 %v10854
      %10942 = vmatprep.subr.mxu0 0.0
      %10943 = vmatpush2.msra.mxu0 %v10853
      %10944 = vmatprep.subr.mxu0 0.0
      %10945 = vmatpush2.msra.mxu0 %v10852
      %10946 = vmatprep.subr.mxu0 0.0
      %10947 = vmatpush2.msra.mxu0 %v10851
      %10948 = vmatprep.subr.mxu0 0.0
      %10949 = vmatpush2.msra.mxu0 %v10850
      %10950 = vmatprep.subr.mxu0 0.0
      %10951 = vmatpush2.msra.mxu0 %v10849
      %10952 = vmatprep.subr.mxu0 0.0
      %10953 = vmatpush2.msra.mxu0 %v10848
      %10954 = vmatprep.subr.mxu0 0.0
      %10955 = vmatpush2.msra.mxu0 %v10847
      %10956 = vmatprep.subr.mxu0 0.0
      %10957 = vmatpush2.msra.mxu0 %v10846
      %10958 = vmatprep.subr.mxu0 0.0
      %10959 = vmatpush2.msra.mxu0 %v10845
      %10960 = vmatprep.subr.mxu0 0.0
      %10961 = vmatpush2.msra.mxu0 %v10844
      %10962 = vmatprep.subr.mxu0 0.0
      %10963 = vmatpush2.msra.mxu0 %v10843
      %10964 = vmatprep.subr.mxu0 0.0
      %10965 = vmatpush2.msra.mxu0 %v10842
      %10966 = vmatprep.mubr.f32.mxu0 %v10682
      %10967 = vmatmul.mubr.f32.gmra.mxu0 %v10680
      %v10968 = vpop.f32.mrf.mxu0
      %v10969 = vadd.f32 %v10894, %v10968
      %v10970 = vpop.f32.mrf.mxu0
      %10971 = vdwg.mxu0
      %10972 = vmatprep.subr.mxu0 0.0
      %10973 = vmatpush1.msra.mxu0 %v10873
      %10974 = vmatprep.subr.mxu0 0.0
      %10975 = vmatpush1.msra.mxu0 %v10872
      %10976 = vmatprep.subr.mxu0 0.0
      %10977 = vmatpush1.msra.mxu0 %v10871
      %10978 = vmatprep.subr.mxu0 0.0
      %10979 = vmatpush1.msra.mxu0 %v10870
      %10980 = vmatprep.subr.mxu0 0.0
      %10981 = vmatpush1.msra.mxu0 %v10869
      %10982 = vmatprep.subr.mxu0 0.0
      %10983 = vmatpush1.msra.mxu0 %v10868
      %10984 = vmatprep.subr.mxu0 0.0
      %10985 = vmatpush1.msra.mxu0 %v10867
      %10986 = vmatprep.subr.mxu0 0.0
      %10987 = vmatpush1.msra.mxu0 %v10866
      %10988 = vmatprep.subr.mxu0 0.0
      %10989 = vmatpush1.msra.mxu0 %v10865
      %10990 = vmatprep.subr.mxu0 0.0
      %10991 = vmatpush1.msra.mxu0 %v10864
      %10992 = vmatprep.subr.mxu0 0.0
      %10993 = vmatpush1.msra.mxu0 %v10863
      %10994 = vmatprep.subr.mxu0 0.0
      %10995 = vmatpush1.msra.mxu0 %v10862
      %10996 = vmatprep.subr.mxu0 0.0
      %10997 = vmatpush1.msra.mxu0 %v10861
      %10998 = vmatprep.subr.mxu0 0.0
      %10999 = vmatpush1.msra.mxu0 %v10860
      %11000 = vmatprep.subr.mxu0 0.0
      %11001 = vmatpush1.msra.mxu0 %v10859
      %11002 = vmatprep.subr.mxu0 0.0
      %11003 = vmatpush1.msra.mxu0 %v10858
      %11004 = vmatprep.subr.mxu0 0.0
      %11005 = vmatpush2.msra.mxu0 0.0
      %11006 = vmatprep.subr.mxu0 0.0
      %11007 = vmatpush2.msra.mxu0 %v10900
      %11008 = vmatprep.subr.mxu0 0.0
      %11009 = vmatpush2.msra.mxu0 %v10887
      %11010 = vmatprep.subr.mxu0 0.0
      %11011 = vmatpush2.msra.mxu0 %v10886
      %11012 = vmatprep.subr.mxu0 0.0
      %11013 = vmatpush2.msra.mxu0 %v10885
      %11014 = vmatprep.subr.mxu0 0.0
      %11015 = vmatpush2.msra.mxu0 %v10884
      %11016 = vmatprep.subr.mxu0 0.0
      %11017 = vmatpush2.msra.mxu0 %v10883
      %11018 = vmatprep.subr.mxu0 0.0
      %11019 = vmatpush2.msra.mxu0 %v10882
      %11020 = vmatprep.subr.mxu0 0.0
      %11021 = vmatpush2.msra.mxu0 %v10881
      %11022 = vmatprep.subr.mxu0 0.0
      %11023 = vmatpush2.msra.mxu0 %v10880
      %11024 = vmatprep.subr.mxu0 0.0
      %11025 = vmatpush2.msra.mxu0 %v10879
      %11026 = vmatprep.subr.mxu0 0.0
      %11027 = vmatpush2.msra.mxu0 %v10878
      %11028 = vmatprep.subr.mxu0 0.0
      %11029 = vmatpush2.msra.mxu0 %v10877
      %11030 = vmatprep.subr.mxu0 0.0
      %11031 = vmatpush2.msra.mxu0 %v10876
      %11032 = vmatprep.subr.mxu0 0.0
      %11033 = vmatpush2.msra.mxu0 %v10875
      %11034 = vmatprep.subr.mxu0 0.0
      %11035 = vmatpush2.msra.mxu0 %v10874
      %11036 = vmatprep.mubr.f32.mxu0 %v10897
      %11037 = vmatmul.mubr.f32.gmra.mxu0 %v10822
      %v11038 = vpop.f32.mrf.mxu0
      %v11039 = vadd.f32 %v10969, %v11038
      %v11040 = vpop.f32.mrf.mxu0
      %11041 = vdwg.mxu0
      %vm11042 = vcmask 33792
      %11043 = vst.msk [vmem:[%s600] sm:$0x3] %vm11042, %v11039
      %p11044 = scmp.lt.s32.totalorder %s30, 1
      %s11045 = scalar_select %p11044, %s30, 1
      %s11046 = smul.addr %s11045, 2
      %s11047 = scalar_lea.vmem %s19, %s11046
      // Predicated region
      $region97: #{siamese_forward.1} parent=95 // pred_check
        %p11048 = pneg %p452
      $region98: #{siamese_forward.1} parent=95 // pred_check_branch
        %11050 = sbr.rel (%p11048) target = $region100
      $region99: #{siamese_forward.1} parent=95 // pred_region
        _
      $region100: #{siamese_forward.1} parent=95 // pred_fallthru
        _
    $region96: #{siamese_forward.1} parent=5 // pred_fallthru
      _
    %p11051 = scmp.le.s32.totalorder 2, %s25
    // Predicated region
    $region101: #{siamese_forward.1} parent=5 // pred_check
      %p11052 = pneg %p11051
    $region102: #{siamese_forward.1} parent=5 // pred_check_branch
      %11054 = sbr.rel (%p11052) target = $region104
    $region103: #{siamese_forward.1} parent=5 // pred_region
      %s11055 = ssub.s32 %s25, 2
      // Predicated region
      $region105: #{siamese_forward.1} parent=103 // pred_check
        %p11056 = pneg %p458
      $region106: #{siamese_forward.1} parent=103 // pred_check_branch
        %11058 = sbr.rel (%p11056) target = $region108
      $region107: #{siamese_forward.1} parent=103 // pred_region
        %p11059 = scmp.lt.s32.totalorder %s31, 1
        %s11060 = scalar_select %p11059, %s31, 1
        %s11061 = smul.addr %s11060, 2
        %s11062 = scalar_lea.vmem %s19, %s11061
      $region108: #{siamese_forward.1} parent=103 // pred_fallthru
        _
    $region104: #{siamese_forward.1} parent=5 // pred_fallthru
      _
  $region6: #{siamese_forward.1} parent=0 // loop_footer
    %s29 = sadd.s32 1, %s25
  $region7: #{siamese_forward.1} parent=0 // loop_footer_branch
    %24 = sbr.rel target = $region3
  $region8: #{siamese_forward.1} parent=0 // loop_exit
    _

</llo_original>
